<compile_context>
chip_gen: v6e
topology: v6e:2x2x1
jax: 0.10.0
libtpu: 0.0.40
codegen_flags: <defaults>
</compile_context>

<pallas_src>
import functools

import numpy as np

import jax
import jax.numpy as jnp
from jax.experimental import pallas as pl
from jax.experimental.pallas import tpu as pltpu


def _round_up(x, m):
    return (x + m - 1) // m * m


_VMEM_BUDGET = 36 * 1024 * 1024      # conservative per-tile budget (all gens)
_VMEM_LIMIT_CAP = 48 * 1024 * 1024   # <= ~48 MiB scoped is safe even on v7x


# ---------------------------------------------------------------------------
# Fused kernel: both channels' conv (+bias, ReLU), channel-sum, masked
# max-pool over time and the final FC — for every filter size at once.
# One grid step per batch tile.
# ---------------------------------------------------------------------------
def _fused_cnn_kernel(x_ref, w_ref, b_ref, lout_ref, fcw_ref, fcb_ref,
                      o_ref, ns_ref, *, Lp, Bt, max_fs):
    """
    x_ref    : (Bt*Lp + tail, E)   raw embedding rows (zero-padded per sequence)
    w_ref    : (max_fs, E, F_pack) packed conv weights (taps right-aligned)
    b_ref    : (1, F_pack)         packed conv bias
    lout_ref : (1, F_pack) int32   valid output length per packed filter column
    fcw_ref  : (F_pack, O_pad)     FC weight (rows follow the packed columns)
    fcb_ref  : (1, O_pad)          FC bias
    o_ref    : (Bt, O_pad)         output block (lane-dense)
    ns_ref   : (Bt*Lp + tail, E)   scratch: non-static (max_norm=3) channel
    """
    hp = jax.lax.Precision.HIGHEST
    M = Bt * Lp
    F_pack = b_ref.shape[1]

    # Non-static channel = max_norm(3.0) renorm of the raw rows, computed
    # in-kernel so the embeddings are DMA'd from HBM exactly once.
    xr = x_ref[...]
    norm = jnp.sqrt(jnp.sum(xr * xr, axis=1, keepdims=True))      # (Mt, 1)
    scale = jnp.where(norm > 3.0, 3.0 / (norm + 1e-7), 1.0)
    ns_ref[...] = xr * scale                                      # tail stays 0

    # All filter sizes at once: max_fs shifted matmuls per channel.  Tap
    # windows are read directly from the refs (static offsets -> no
    # materialize-then-slice copies); missing taps are zero columns in w_ref.
    acc_ns = jnp.zeros((M, F_pack), jnp.float32)
    acc_st = jnp.zeros((M, F_pack), jnp.float32)
    for k in range(max_fs):
        wk = w_ref[k]                                             # (E, F_pack)
        acc_ns = acc_ns + jnp.dot(ns_ref[pl.ds(k, M), :], wk,
                                  preferred_element_type=jnp.float32,
                                  precision=hp)
        acc_st = acc_st + jnp.dot(x_ref[pl.ds(k, M), :], wk,
                                  preferred_element_type=jnp.float32,
                                  precision=hp)

    bias = b_ref[...]                                             # (1, F_pack)
    # Per-channel bias + ReLU, then channel sum (once, for all filter sizes).
    summed = (jnp.maximum(acc_ns + bias, 0.0) +
              jnp.maximum(acc_st + bias, 0.0))                    # (M, F_pack)

    # Masked max-pool over time.  Each packed column has its own valid output
    # length (L + fs - 1).  ReLU outputs are >= 0, so masking with 0 is exact.
    s3 = summed.reshape(Bt, Lp, F_pack)
    t_idx = jax.lax.broadcasted_iota(jnp.int32, (Lp, F_pack), 0)  # built once
    mask = t_idx < lout_ref[...]                                  # (Lp, F_pack)
    pooled = jnp.max(jnp.where(mask[None], s3, 0.0), axis=1)      # (Bt, F_pack)

    # Fused FC: a single matmul for all filter sizes (replaces concat + fc op).
    o_ref[...] = (jnp.dot(pooled, fcw_ref[...],
                          preferred_element_type=jnp.float32,
                          precision=hp) + fcb_ref[...])


# ---------------------------------------------------------------------------
# VMEM-aware batch tiling.
# ---------------------------------------------------------------------------
def _vmem_footprint_bytes(Bt, *, Lp, tail_rows, E, F_pack, O_pad, max_fs):
    El = _round_up(E, 128)            # lane padding of the embedding dim
    Mt = Bt * Lp + tail_rows
    M = Bt * Lp
    x_blk = Mt * El * 4 * 2           # double-buffered input block
    ns = Mt * El * 4                  # non-static scratch (single buffer)
    acc = 4 * M * F_pack * 4          # acc_ns/acc_st + elementwise temps
    w = (max_fs * E * F_pack + 2 * F_pack + F_pack * O_pad + O_pad) * 4 * 2
    out = Bt * O_pad * 4 * 2
    return x_blk + ns + acc + w + out


def _batch_tiling(B, footprint):
    """>= 2 tiles when B >= 16 (v7x has 2 TCs; enables pipelining everywhere),
    and cap the per-tile VMEM footprint against _VMEM_BUDGET."""
    if B < 16:
        return B, 1
    Bt = min(64, _round_up(-(-B // 2), 8))
    while Bt > 8 and footprint(Bt) > _VMEM_BUDGET:
        Bt -= 8
    return Bt, -(-B // Bt)


# ---------------------------------------------------------------------------
# Full forward (embedding gather / layout glue in JAX, everything else fused).
# ---------------------------------------------------------------------------
def cnn_forward(text, params, filter_sizes):
    filter_sizes = tuple(filter_sizes)
    n_fs = len(filter_sizes)
    max_fs = max(filter_sizes)
    max_pad = max_fs - 1

    emb_table = params["embedding"]                      # (V, E)
    rows = emb_table[text].astype(jnp.float32)           # (B, L, E) one gather
    B, L, E = rows.shape

    F = params[f"conv_b_{filter_sizes[0]}"].shape[0]
    O = params["fc_b"].shape[0]
    F_all = n_fs * F
    F_pack = _round_up(F_all, 128)                       # one packed filter blk
    O_pad = _round_up(O, 128)

    Lp = _round_up(L + 2 * max_pad, 8)                   # padded per-seq length
    right_pad = Lp - L - max_pad                         # >= max_pad
    tail_rows = _round_up(max_pad, 8)                    # tap overhang, 8-align

    footprint = functools.partial(
        _vmem_footprint_bytes, Lp=Lp, tail_rows=tail_rows, E=E,
        F_pack=F_pack, O_pad=O_pad, max_fs=max_fs)
    Bt, n_tiles = _batch_tiling(B, footprint)
    B_pad = n_tiles * Bt
    Mt = Bt * Lp + tail_rows
    vmem_limit = int(min(max(2 * footprint(Bt), 32 * 1024 * 1024),
                         _VMEM_LIMIT_CAP))

    # Layout: per tile, Bt sequences each padded to Lp (max_pad left zeros,
    # >= max_pad right zeros) + an 8-aligned zero tail for the tap overhang.
    e = jnp.pad(rows, ((0, B_pad - B), (max_pad, right_pad), (0, 0)))
    e = e.reshape(n_tiles, Bt * Lp, E)
    tail = jnp.zeros((n_tiles, tail_rows, E), jnp.float32)
    x = jnp.concatenate([e, tail], axis=1).reshape(n_tiles * Mt, E)

    # Pack every filter size into one 128-lane filter block.  Shorter filters'
    # taps are right-aligned within max_fs (leading taps zero); together with
    # the shared max_pad left padding this reproduces Conv2d(padding=fs-1).
    w_pack = jnp.zeros((max_fs, E, F_pack), jnp.float32)
    b_pack = jnp.zeros((1, F_pack), jnp.float32)
    lout_np = np.zeros((1, F_pack), np.int32)
    for j, fs in enumerate(filter_sizes):
        c0, c1 = j * F, (j + 1) * F
        w_pack = w_pack.at[max_fs - fs:, :, c0:c1].set(
            params[f"conv_w_{fs}"].astype(jnp.float32))
        b_pack = b_pack.at[0, c0:c1].set(
            params[f"conv_b_{fs}"].astype(jnp.float32))
        lout_np[0, c0:c1] = L + fs - 1                   # valid output length
    lout = jnp.asarray(lout_np)

    fc_w = jnp.zeros((F_pack, O_pad), jnp.float32).at[:F_all, :O].set(
        params["fc_w"].astype(jnp.float32))
    fc_b = jnp.zeros((1, O_pad), jnp.float32).at[0, :O].set(
        params["fc_b"].astype(jnp.float32))

    kernel = functools.partial(_fused_cnn_kernel, Lp=Lp, Bt=Bt, max_fs=max_fs)

    out_pad = pl.pallas_call(
        kernel,
        out_shape=jax.ShapeDtypeStruct((B_pad, O_pad), jnp.float32),
        grid=(n_tiles,),
        in_specs=[
            pl.BlockSpec((Mt, E), lambda i: (i, 0)),
            pl.BlockSpec((max_fs, E, F_pack), lambda i: (0, 0, 0)),
            pl.BlockSpec((1, F_pack), lambda i: (0, 0)),
            pl.BlockSpec((1, F_pack), lambda i: (0, 0)),
            pl.BlockSpec((F_pack, O_pad), lambda i: (0, 0)),
            pl.BlockSpec((1, O_pad), lambda i: (0, 0)),
        ],
        out_specs=pl.BlockSpec((Bt, O_pad), lambda i: (i, 0)),
        scratch_shapes=[pltpu.VMEM((Mt, E), jnp.float32)],
        compiler_params=pltpu.CompilerParams(
            dimension_semantics=("parallel",),
            vmem_limit_bytes=vmem_limit),
    )(x, w_pack, b_pack, lout, fc_w, fc_b)

    # dropout == identity (eval mode)
    return out_pad[:B, :O]


# ---------------------------------------------------------------------------
# Pure-JAX reference (same math, no Pallas) for the correctness check.
# ---------------------------------------------------------------------------
def cnn_forward_ref(text, params, filter_sizes):
    hp = jax.lax.Precision.HIGHEST
    emb_table = params["embedding"]
    rows = emb_table[text].astype(jnp.float32)
    norms = jnp.sqrt(jnp.sum(rows * rows, axis=-1, keepdims=True))
    scale = jnp.where(norms > 3.0, 3.0 / (norms + 1e-7), 1.0)
    emb_nonstatic = rows * scale
    emb_static = rows

    pooled = []
    for fs in filter_sizes:
        pad = fs - 1
        ns_p = jnp.pad(emb_nonstatic, ((0, 0), (pad, pad), (0, 0)))
        st_p = jnp.pad(emb_static, ((0, 0), (pad, pad), (0, 0)))
        w = params[f"conv_w_{fs}"]
        b = params[f"conv_b_{fs}"]
        Lout = ns_p.shape[1] - fs + 1
        acc_ns = sum(jnp.einsum("ble,ef->blf", ns_p[:, k:k + Lout], w[k],
                                precision=hp) for k in range(fs))
        acc_st = sum(jnp.einsum("ble,ef->blf", st_p[:, k:k + Lout], w[k],
                                precision=hp) for k in range(fs))
        conved = jnp.maximum(acc_ns + b, 0.0) + jnp.maximum(acc_st + b, 0.0)
        pooled.append(jnp.max(conved, axis=1))
    cat = jnp.concatenate(pooled, axis=1)
    return jnp.dot(cat, params["fc_w"], precision=hp) + params["fc_b"]


if __name__ == "__main__":
    # Small, deterministic configuration
    B, L = 2, 8               # batch, sequence length
    V, E = 50, 32             # vocab size, embedding dim
    F_ = 4                    # n_filters
    filter_sizes = (3, 4, 5)
    O = 3                     # output_dim
    pad_idx = 0

    key = jax.random.PRNGKey(0)
    k_emb, k_txt, k_fc, *k_convs = jax.random.split(key, 3 + len(filter_sizes))

    pretrained = jax.random.normal(k_emb, (V, E), jnp.float32)
    pretrained = pretrained.at[pad_idx].set(0.0)  # padding row is zeros

    params = {"embedding": pretrained}
    for fs, kc in zip(filter_sizes, k_convs):
        kw, kb = jax.random.split(kc)
        params[f"conv_w_{fs}"] = 0.1 * jax.random.normal(kw, (fs, E, F_), jnp.float32)
        params[f"conv_b_{fs}"] = 0.1 * jax.random.normal(kb, (F_,), jnp.float32)
    kfw, kfb = jax.random.split(k_fc)
    D = len(filter_sizes) * F_
    params["fc_w"] = 0.1 * jax.random.normal(kfw, (D, O), jnp.float32)
    params["fc_b"] = 0.1 * jax.random.normal(kfb, (O,), jnp.float32)

    text = jax.random.randint(k_txt, (B, L), 0, V, dtype=jnp.int32)

    fwd = jax.jit(functools.partial(cnn_forward, filter_sizes=filter_sizes))
    out = jax.block_until_ready(fwd(text, params))
    ref = jax.block_until_ready(cnn_forward_ref(text, params, filter_sizes))

    assert out.shape == (B, O), out.shape
    # Both sides run f32 / HIGHEST-precision matmuls; 1e-3 leaves headroom for
    # accumulation-order differences while still catching structural errors.
    assert jnp.allclose(out, ref, atol=1e-3, rtol=1e-3), (out, ref)
    print("KERNEL_OK")
</pallas_src>

<mosaic_0001>
module attributes {stable_mosaic.version = 11 : i64} {
  func.func @_fused_cnn_kernel(%arg0: i32, %arg1: memref<40x32xf32, #tpu.memory_space<vmem>>, %arg2: memref<5x32x128xf32, #tpu.memory_space<vmem>>, %arg3: memref<1x128xf32, #tpu.memory_space<vmem>>, %arg4: memref<1x128xi32, #tpu.memory_space<vmem>>, %arg5: memref<128x128xf32, #tpu.memory_space<vmem>>, %arg6: memref<1x128xf32, #tpu.memory_space<vmem>>, %arg7: memref<2x128xf32, #tpu.memory_space<vmem>>, %arg8: memref<40x32xf32, #tpu.memory_space<vmem>>) attributes {dimension_semantics = [#tpu.dimension_semantics<parallel>], iteration_bounds = array<i64: 1>, scalar_prefetch = 0 : i64, scratch_operands = 1 : i64, tpu.core_type = #tpu.core_type<tc>, window_params = [{transform_indices = @transform_0, window_bounds = array<i64: 40, 32>}, {pipeline_mode = #tpu.pipeline_mode<synchronous>, transform_indices = @transform_1, window_bounds = array<i64: 5, 32, 128>}, {pipeline_mode = #tpu.pipeline_mode<synchronous>, transform_indices = @transform_2, window_bounds = array<i64: 1, 128>}, {pipeline_mode = #tpu.pipeline_mode<synchronous>, transform_indices = @transform_3, window_bounds = array<i64: 1, 128>}, {pipeline_mode = #tpu.pipeline_mode<synchronous>, transform_indices = @transform_4, window_bounds = array<i64: 128, 128>}, {pipeline_mode = #tpu.pipeline_mode<synchronous>, transform_indices = @transform_5, window_bounds = array<i64: 1, 128>}, {transform_indices = @transform_6, window_bounds = array<i64: 2, 128>}]} {
    %c0 = arith.constant 0 : index
    %c0_0 = arith.constant 0 : index
    %0 = vector.load %arg1[%c0, %c0_0] : memref<40x32xf32, #tpu.memory_space<vmem>>, vector<40x32xf32>
    %1 = arith.mulf %0, %0 : vector<40x32xf32>
    %cst = arith.constant dense<0.000000e+00> : vector<40xf32>
    %2 = vector.multi_reduction <add>, %1, %cst [1] : vector<40x32xf32> to vector<40xf32>
    %3 = vector.shape_cast %2 : vector<40xf32> to vector<40x1xf32>
    %4 = math.sqrt %3 : vector<40x1xf32>
    %cst_1 = arith.constant 3.000000e+00 : f32
    %5 = vector.broadcast %cst_1 : f32 to vector<40x1xf32>
    %6 = arith.cmpf ogt, %4, %5 : vector<40x1xf32>
    %cst_2 = arith.constant 1.000000e-07 : f32
    %7 = vector.broadcast %cst_2 : f32 to vector<40x1xf32>
    %8 = arith.addf %4, %7 : vector<40x1xf32>
    %cst_3 = arith.constant 3.000000e+00 : f32
    %9 = vector.broadcast %cst_3 : f32 to vector<40x1xf32>
    %10 = arith.divf %9, %8 : vector<40x1xf32>
    %cst_4 = arith.constant 1.000000e+00 : f32
    %11 = vector.broadcast %cst_4 : f32 to vector<40x1xf32>
    %12 = arith.select %6, %10, %11 : vector<40x1xi1>, vector<40x1xf32>
    %13 = vector.broadcast %12 : vector<40x1xf32> to vector<40x32xf32>
    %14 = arith.mulf %0, %13 : vector<40x32xf32>
    %c0_5 = arith.constant 0 : index
    %c0_6 = arith.constant 0 : index
    %15 = vector.load %arg8[%c0_5, %c0_6] : memref<40x32xf32, #tpu.memory_space<vmem>>, vector<40x32xf32>
    tpu.vector_store %arg8[%c0_5, %c0_6], %14 {strides = array<i32>} : memref<40x32xf32, #tpu.memory_space<vmem>>, vector<40x32xf32>,
    %cst_7 = arith.constant 0.000000e+00 : f32
    %16 = vector.broadcast %cst_7 : f32 to vector<32x128xf32>
    %cst_8 = arith.constant 0.000000e+00 : f32
    %17 = vector.broadcast %cst_8 : f32 to vector<32x128xf32>
    %c0_9 = arith.constant 0 : index
    %c0_10 = arith.constant 0 : index
    %c0_11 = arith.constant 0 : index
    %18 = vector.load %arg2[%c0_9, %c0_10, %c0_11] : memref<5x32x128xf32, #tpu.memory_space<vmem>>, vector<1x32x128xf32>
    %19 = vector.shape_cast %18 : vector<1x32x128xf32> to vector<32x128xf32>
    %c0_12 = arith.constant 0 : index
    %c0_13 = arith.constant 0 : index
    %20 = vector.load %arg8[%c0_12, %c0_13] : memref<40x32xf32, #tpu.memory_space<vmem>>, vector<32x32xf32>
    %cst_14 = arith.constant dense<0.000000e+00> : vector<32x128xf32>
    %21 = tpu.matmul %20, %19, %cst_14 {dimension_numbers = #tpu.dot_dimension_numbers<[1], [0], [0], [1], [0, 0, 1, 1], [], []>, precision = #tpu.contract_precision<fp32>} : vector<32x32xf32>, vector<32x128xf32>, vector<32x128xf32> -> vector<32x128xf32>
    %22 = arith.addf %16, %21 : vector<32x128xf32>
    %c0_15 = arith.constant 0 : index
    %c0_16 = arith.constant 0 : index
    %23 = vector.load %arg1[%c0_15, %c0_16] : memref<40x32xf32, #tpu.memory_space<vmem>>, vector<32x32xf32>
    %cst_17 = arith.constant dense<0.000000e+00> : vector<32x128xf32>
    %24 = tpu.matmul %23, %19, %cst_17 {dimension_numbers = #tpu.dot_dimension_numbers<[1], [0], [0], [1], [0, 0, 1, 1], [], []>, precision = #tpu.contract_precision<fp32>} : vector<32x32xf32>, vector<32x128xf32>, vector<32x128xf32> -> vector<32x128xf32>
    %25 = arith.addf %17, %24 : vector<32x128xf32>
    %c1 = arith.constant 1 : index
    %c0_18 = arith.constant 0 : index
    %c0_19 = arith.constant 0 : index
    %26 = vector.load %arg2[%c1, %c0_18, %c0_19] : memref<5x32x128xf32, #tpu.memory_space<vmem>>, vector<1x32x128xf32>
    %27 = vector.shape_cast %26 : vector<1x32x128xf32> to vector<32x128xf32>
    %c1_20 = arith.constant 1 : index
    %c0_21 = arith.constant 0 : index
    %28 = vector.load %arg8[%c1_20, %c0_21] : memref<40x32xf32, #tpu.memory_space<vmem>>, vector<32x32xf32>
    %cst_22 = arith.constant dense<0.000000e+00> : vector<32x128xf32>
    %29 = tpu.matmul %28, %27, %cst_22 {dimension_numbers = #tpu.dot_dimension_numbers<[1], [0], [0], [1], [0, 0, 1, 1], [], []>, precision = #tpu.contract_precision<fp32>} : vector<32x32xf32>, vector<32x128xf32>, vector<32x128xf32> -> vector<32x128xf32>
    %30 = arith.addf %22, %29 : vector<32x128xf32>
    %c1_23 = arith.constant 1 : index
    %c0_24 = arith.constant 0 : index
    %31 = vector.load %arg1[%c1_23, %c0_24] : memref<40x32xf32, #tpu.memory_space<vmem>>, vector<32x32xf32>
    %cst_25 = arith.constant dense<0.000000e+00> : vector<32x128xf32>
    %32 = tpu.matmul %31, %27, %cst_25 {dimension_numbers = #tpu.dot_dimension_numbers<[1], [0], [0], [1], [0, 0, 1, 1], [], []>, precision = #tpu.contract_precision<fp32>} : vector<32x32xf32>, vector<32x128xf32>, vector<32x128xf32> -> vector<32x128xf32>
    %33 = arith.addf %25, %32 : vector<32x128xf32>
    %c2 = arith.constant 2 : index
    %c0_26 = arith.constant 0 : index
    %c0_27 = arith.constant 0 : index
    %34 = vector.load %arg2[%c2, %c0_26, %c0_27] : memref<5x32x128xf32, #tpu.memory_space<vmem>>, vector<1x32x128xf32>
    %35 = vector.shape_cast %34 : vector<1x32x128xf32> to vector<32x128xf32>
    %c2_28 = arith.constant 2 : index
    %c0_29 = arith.constant 0 : index
    %36 = vector.load %arg8[%c2_28, %c0_29] : memref<40x32xf32, #tpu.memory_space<vmem>>, vector<32x32xf32>
    %cst_30 = arith.constant dense<0.000000e+00> : vector<32x128xf32>
    %37 = tpu.matmul %36, %35, %cst_30 {dimension_numbers = #tpu.dot_dimension_numbers<[1], [0], [0], [1], [0, 0, 1, 1], [], []>, precision = #tpu.contract_precision<fp32>} : vector<32x32xf32>, vector<32x128xf32>, vector<32x128xf32> -> vector<32x128xf32>
    %38 = arith.addf %30, %37 : vector<32x128xf32>
    %c2_31 = arith.constant 2 : index
    %c0_32 = arith.constant 0 : index
    %39 = vector.load %arg1[%c2_31, %c0_32] : memref<40x32xf32, #tpu.memory_space<vmem>>, vector<32x32xf32>
    %cst_33 = arith.constant dense<0.000000e+00> : vector<32x128xf32>
    %40 = tpu.matmul %39, %35, %cst_33 {dimension_numbers = #tpu.dot_dimension_numbers<[1], [0], [0], [1], [0, 0, 1, 1], [], []>, precision = #tpu.contract_precision<fp32>} : vector<32x32xf32>, vector<32x128xf32>, vector<32x128xf32> -> vector<32x128xf32>
    %41 = arith.addf %33, %40 : vector<32x128xf32>
    %c3 = arith.constant 3 : index
    %c0_34 = arith.constant 0 : index
    %c0_35 = arith.constant 0 : index
    %42 = vector.load %arg2[%c3, %c0_34, %c0_35] : memref<5x32x128xf32, #tpu.memory_space<vmem>>, vector<1x32x128xf32>
    %43 = vector.shape_cast %42 : vector<1x32x128xf32> to vector<32x128xf32>
    %c3_36 = arith.constant 3 : index
    %c0_37 = arith.constant 0 : index
    %44 = vector.load %arg8[%c3_36, %c0_37] : memref<40x32xf32, #tpu.memory_space<vmem>>, vector<32x32xf32>
    %cst_38 = arith.constant dense<0.000000e+00> : vector<32x128xf32>
    %45 = tpu.matmul %44, %43, %cst_38 {dimension_numbers = #tpu.dot_dimension_numbers<[1], [0], [0], [1], [0, 0, 1, 1], [], []>, precision = #tpu.contract_precision<fp32>} : vector<32x32xf32>, vector<32x128xf32>, vector<32x128xf32> -> vector<32x128xf32>
    %46 = arith.addf %38, %45 : vector<32x128xf32>
    %c3_39 = arith.constant 3 : index
    %c0_40 = arith.constant 0 : index
    %47 = vector.load %arg1[%c3_39, %c0_40] : memref<40x32xf32, #tpu.memory_space<vmem>>, vector<32x32xf32>
    %cst_41 = arith.constant dense<0.000000e+00> : vector<32x128xf32>
    %48 = tpu.matmul %47, %43, %cst_41 {dimension_numbers = #tpu.dot_dimension_numbers<[1], [0], [0], [1], [0, 0, 1, 1], [], []>, precision = #tpu.contract_precision<fp32>} : vector<32x32xf32>, vector<32x128xf32>, vector<32x128xf32> -> vector<32x128xf32>
    %49 = arith.addf %41, %48 : vector<32x128xf32>
    %c4 = arith.constant 4 : index
    %c0_42 = arith.constant 0 : index
    %c0_43 = arith.constant 0 : index
    %50 = vector.load %arg2[%c4, %c0_42, %c0_43] : memref<5x32x128xf32, #tpu.memory_space<vmem>>, vector<1x32x128xf32>
    %51 = vector.shape_cast %50 : vector<1x32x128xf32> to vector<32x128xf32>
    %c4_44 = arith.constant 4 : index
    %c0_45 = arith.constant 0 : index
    %52 = vector.load %arg8[%c4_44, %c0_45] : memref<40x32xf32, #tpu.memory_space<vmem>>, vector<32x32xf32>
    %cst_46 = arith.constant dense<0.000000e+00> : vector<32x128xf32>
    %53 = tpu.matmul %52, %51, %cst_46 {dimension_numbers = #tpu.dot_dimension_numbers<[1], [0], [0], [1], [0, 0, 1, 1], [], []>, precision = #tpu.contract_precision<fp32>} : vector<32x32xf32>, vector<32x128xf32>, vector<32x128xf32> -> vector<32x128xf32>
    %54 = arith.addf %46, %53 : vector<32x128xf32>
    %c4_47 = arith.constant 4 : index
    %c0_48 = arith.constant 0 : index
    %55 = vector.load %arg1[%c4_47, %c0_48] : memref<40x32xf32, #tpu.memory_space<vmem>>, vector<32x32xf32>
    %cst_49 = arith.constant dense<0.000000e+00> : vector<32x128xf32>
    %56 = tpu.matmul %55, %51, %cst_49 {dimension_numbers = #tpu.dot_dimension_numbers<[1], [0], [0], [1], [0, 0, 1, 1], [], []>, precision = #tpu.contract_precision<fp32>} : vector<32x32xf32>, vector<32x128xf32>, vector<32x128xf32> -> vector<32x128xf32>
    %57 = arith.addf %49, %56 : vector<32x128xf32>
    %c0_50 = arith.constant 0 : index
    %c0_51 = arith.constant 0 : index
    %58 = vector.load %arg3[%c0_50, %c0_51] : memref<1x128xf32, #tpu.memory_space<vmem>>, vector<1x128xf32>
    %59 = vector.broadcast %58 : vector<1x128xf32> to vector<32x128xf32>
    %60 = arith.addf %54, %59 : vector<32x128xf32>
    %cst_52 = arith.constant 0.000000e+00 : f32
    %61 = vector.broadcast %cst_52 : f32 to vector<32x128xf32>
    %62 = arith.maximumf %60, %61 : vector<32x128xf32>
    %63 = vector.broadcast %58 : vector<1x128xf32> to vector<32x128xf32>
    %64 = arith.addf %57, %63 : vector<32x128xf32>
    %cst_53 = arith.constant 0.000000e+00 : f32
    %65 = vector.broadcast %cst_53 : f32 to vector<32x128xf32>
    %66 = arith.maximumf %64, %65 : vector<32x128xf32>
    %67 = arith.addf %62, %66 : vector<32x128xf32>
    %68 = vector.shape_cast %67 : vector<32x128xf32> to vector<2x16x128xf32>
    %69 = tpu.iota {dimensions = array<i32: 0>} : vector<16x128xi32>
    %c0_54 = arith.constant 0 : index
    %c0_55 = arith.constant 0 : index
    %70 = vector.load %arg4[%c0_54, %c0_55] : memref<1x128xi32, #tpu.memory_space<vmem>>, vector<1x128xi32>
    %71 = vector.broadcast %70 : vector<1x128xi32> to vector<16x128xi32>
    %72 = arith.cmpi slt, %69, %71 : vector<16x128xi32>
    %73 = vector.shape_cast %72 : vector<16x128xi1> to vector<1x16x128xi1>
    %cst_56 = arith.constant 0.000000e+00 : f32
    %74 = vector.shape_cast %73 : vector<1x16x128xi1> to vector<1x16x128xi1>
    %75 = vector.broadcast %74 : vector<1x16x128xi1> to vector<2x16x128xi1>
    %76 = vector.broadcast %cst_56 : f32 to vector<2x16x128xf32>
    %77 = arith.select %75, %68, %76 : vector<2x16x128xi1>, vector<2x16x128xf32>
    %cst_57 = arith.constant dense<0xFF800000> : vector<2x128xf32>
    %78 = vector.multi_reduction <maximumf>, %77, %cst_57 [1] : vector<2x16x128xf32> to vector<2x128xf32>
    %c0_58 = arith.constant 0 : index
    %c0_59 = arith.constant 0 : index
    %79 = vector.load %arg5[%c0_58, %c0_59] : memref<128x128xf32, #tpu.memory_space<vmem>>, vector<128x128xf32>
    %cst_60 = arith.constant dense<0.000000e+00> : vector<2x128xf32>
    %80 = tpu.matmul %78, %79, %cst_60 {dimension_numbers = #tpu.dot_dimension_numbers<[1], [0], [0], [1], [0, 0, 1, 1], [], []>, precision = #tpu.contract_precision<fp32>} : vector<2x128xf32>, vector<128x128xf32>, vector<2x128xf32> -> vector<2x128xf32>
    %c0_61 = arith.constant 0 : index
    %c0_62 = arith.constant 0 : index
    %81 = vector.load %arg6[%c0_61, %c0_62] : memref<1x128xf32, #tpu.memory_space<vmem>>, vector<1x128xf32>
    %82 = vector.broadcast %81 : vector<1x128xf32> to vector<2x128xf32>
    %83 = arith.addf %80, %82 : vector<2x128xf32>
    %c0_63 = arith.constant 0 : index
    %c0_64 = arith.constant 0 : index
    %84 = vector.load %arg7[%c0_63, %c0_64] : memref<2x128xf32, #tpu.memory_space<vmem>>, vector<2x128xf32>
    tpu.vector_store %arg7[%c0_63, %c0_64], %83 {strides = array<i32>} : memref<2x128xf32, #tpu.memory_space<vmem>>, vector<2x128xf32>,
    return
  }
  func.func @transform_0(%arg0: i32) -> (i32, i32) {
    %c0_i32 = arith.constant 0 : i32
    %c0_i32_0 = arith.constant 0 : i32
    return %arg0, %c0_i32 : i32, i32
  }
  func.func @transform_1(%arg0: i32) -> (i32, i32, i32) {
    %c0_i32 = arith.constant 0 : i32
    %c0_i32_0 = arith.constant 0 : i32
    %c0_i32_1 = arith.constant 0 : i32
    %c0_i32_2 = arith.constant 0 : i32
    return %c0_i32, %c0_i32_0, %c0_i32_1 : i32, i32, i32
  }
  func.func @transform_2(%arg0: i32) -> (i32, i32) {
    %c0_i32 = arith.constant 0 : i32
    %c0_i32_0 = arith.constant 0 : i32
    %c0_i32_1 = arith.constant 0 : i32
    return %c0_i32, %c0_i32_0 : i32, i32
  }
  func.func @transform_3(%arg0: i32) -> (i32, i32) {
    %c0_i32 = arith.constant 0 : i32
    %c0_i32_0 = arith.constant 0 : i32
    %c0_i32_1 = arith.constant 0 : i32
    return %c0_i32, %c0_i32_0 : i32, i32
  }
  func.func @transform_4(%arg0: i32) -> (i32, i32) {
    %c0_i32 = arith.constant 0 : i32
    %c0_i32_0 = arith.constant 0 : i32
    %c0_i32_1 = arith.constant 0 : i32
    return %c0_i32, %c0_i32_0 : i32, i32
  }
  func.func @transform_5(%arg0: i32) -> (i32, i32) {
    %c0_i32 = arith.constant 0 : i32
    %c0_i32_0 = arith.constant 0 : i32
    %c0_i32_1 = arith.constant 0 : i32
    return %c0_i32, %c0_i32_0 : i32, i32
  }
  func.func @transform_6(%arg0: i32) -> (i32, i32) {
    %c0_i32 = arith.constant 0 : i32
    %c0_i32_0 = arith.constant 0 : i32
    return %arg0, %c0_i32 : i32, i32
  }
}

</mosaic_0001>

<llo_original>
// kernel: cnn_forward.1
$region0: #{cnn_forward.1}
  #allocation0 [shape = 'u32[]', space=smem, size = 0x4, offset = 0x4, fixed_abs, tag = 'smem constant byte address 0x4 - core index']
  #allocation1 [shape = 'u32[144,128]{1,0:T(1,128)}', space=vmem, size = 0x12000, scoped, tag = 'internal scratch']
  #allocation2 [shape = 'f32[40,32]{1,0:T(8,128)}', space=vmem, size = 0x5000, scoped, tag = 'scratch operand']
  %s0 = inlined_call_operand.vmem [shape: f32[40,32], index: 0, kind: input, shape index: {}]
  %s1 = inlined_call_operand.vmem [shape: f32[5,32,128], index: 1, kind: input, shape index: {}]
  %s2 = inlined_call_operand.vmem [shape: f32[1,128], index: 2, kind: input, shape index: {}]
  %s3 = inlined_call_operand.vmem [shape: s32[1,128], index: 3, kind: input, shape index: {}]
  %s4 = inlined_call_operand.vmem [shape: f32[128,128], index: 4, kind: input, shape index: {}]
  %s5 = inlined_call_operand.vmem [shape: f32[1,128], index: 5, kind: input, shape index: {}]
  %s6 = inlined_call_operand.hbm [shape: f32[2,128], index: 6, kind: output, shape index: {}]
  %s7 = sld [smem:[#allocation0]]
  $region34: #{cnn_forward.1} parent=0
    _
  %s9 = ssub.s32 1, %s7
  %s10 = scalar_select 0, %s9, %s7
  $region1: #{cnn_forward.1} parent=0
    #allocation3 [shape = 'u8[1024]{0}', space=vmem, size = 0x400, scoped, tag = 'output window, operand 0, single buffered']
    #allocation4 [shape = 's32[1]{0}', space=sflag, size = 0x4, scoped, tag = 'scoped memory for cnn_forward.1']
    %11 = vsyncpa [#allocation4], 0
    // Predicated region
    $region2: #{cnn_forward.1} parent=1 // pred_check
      _
    $region3: #{cnn_forward.1} parent=1 // pred_check_branch
      %13 = sbr.rel (0) target = $region5
    $region4: #{cnn_forward.1} parent=1 // pred_region
      _
    $region5: #{cnn_forward.1} parent=1 // pred_fallthru
      _
    // Predicated region
    $region6: #{cnn_forward.1} parent=1 // pred_check
      _
    $region7: #{cnn_forward.1} parent=1 // pred_check_branch
      %15 = sbr.rel (0) target = $region9
    $region8: #{cnn_forward.1} parent=1 // pred_region
      _
    $region9: #{cnn_forward.1} parent=1 // pred_fallthru
      _
    // Predicated region
    $region10: #{cnn_forward.1} parent=1 // pred_check
      _
    $region11: #{cnn_forward.1} parent=1 // pred_check_branch
      %17 = sbr.rel (0) target = $region13
    $region12: #{cnn_forward.1} parent=1 // pred_region
      _
    $region13: #{cnn_forward.1} parent=1 // pred_fallthru
      _
    // Predicated region
    $region14: #{cnn_forward.1} parent=1 // pred_check
      _
    $region15: #{cnn_forward.1} parent=1 // pred_check_branch
      %19 = sbr.rel (0) target = $region17
    $region16: #{cnn_forward.1} parent=1 // pred_region
      _
    $region17: #{cnn_forward.1} parent=1 // pred_fallthru
      _
    // Predicated region
    $region18: #{cnn_forward.1} parent=1 // pred_check
      _
    $region19: #{cnn_forward.1} parent=1 // pred_check_branch
      %21 = sbr.rel (0) target = $region21
    $region20: #{cnn_forward.1} parent=1 // pred_region
      _
    $region21: #{cnn_forward.1} parent=1 // pred_fallthru
      _
    // Predicated region
    $region22: #{cnn_forward.1} parent=1 // pred_check
      _
    $region23: #{cnn_forward.1} parent=1 // pred_check_branch
      %23 = sbr.rel (0) target = $region25
    $region24: #{cnn_forward.1} parent=1 // pred_region
      _
    $region25: #{cnn_forward.1} parent=1 // pred_fallthru
      _
    %v24 = vld [vmem:[%s0] sm:$0xff]
    %v25 = vld [vmem:[%s0 + $0x8] sm:$0xff]
    %v26 = vld [vmem:[%s0 + $0x10] sm:$0xff]
    %v27 = vld [vmem:[%s0 + $0x18] sm:$0xff]
    %v28 = vld [vmem:[%s0 + $0x20] sm:$0xff]
    %v29 = vmul.f32 %v24, %v24
    %v30 = vmul.f32 %v25, %v25
    %v31 = vmul.f32 %v26, %v26
    %v32 = vmul.f32 %v27, %v27
    %v33 = vmul.f32 %v28, %v28
    %vm34 = vcmask 261120
    %v35 = vsel %vm34, %v29, 0.0
    %36 = vadd.xlane.f32.xlu0 %v35
    %v37 = vpop.xlane.xlu0 %36
    %v38 = vsel %vm34, %v30, 0.0
    %39 = vadd.xlane.f32.xlu0 %v38
    %v40 = vpop.xlane.xlu0 %39
    %v41 = vsel %vm34, %v31, 0.0
    %42 = vadd.xlane.f32.xlu0 %v41
    %v43 = vpop.xlane.xlu0 %42
    %v44 = vsel %vm34, %v32, 0.0
    %45 = vadd.xlane.f32.xlu0 %v44
    %v46 = vpop.xlane.xlu0 %45
    %v47 = vsel %vm34, %v33, 0.0
    %48 = vadd.xlane.f32.xlu0 %v47
    %v49 = vpop.xlane.xlu0 %48
    %v50 = vrsqrt.pop %v37
    %v51 = vmul.f32 %v37, %v50
    %vm52 = vcmp.eq.f32.partialorder %v37, inf
    %v53 = vsel %vm52, %v37, %v51
    %vm54 = vcmp.eq.f32.partialorder %v37, 0.0
    %v55 = vand.u32 %v37, 2147483648
    %v56 = vsel %vm54, %v55, %v53
    %v57 = vrsqrt.pop %v40
    %v58 = vmul.f32 %v40, %v57
    %vm59 = vcmp.eq.f32.partialorder %v40, inf
    %v60 = vsel %vm59, %v40, %v58
    %vm61 = vcmp.eq.f32.partialorder %v40, 0.0
    %v62 = vand.u32 %v40, 2147483648
    %v63 = vsel %vm61, %v62, %v60
    %v64 = vrsqrt.pop %v43
    %v65 = vmul.f32 %v43, %v64
    %vm66 = vcmp.eq.f32.partialorder %v43, inf
    %v67 = vsel %vm66, %v43, %v65
    %vm68 = vcmp.eq.f32.partialorder %v43, 0.0
    %v69 = vand.u32 %v43, 2147483648
    %v70 = vsel %vm68, %v69, %v67
    %v71 = vrsqrt.pop %v46
    %v72 = vmul.f32 %v46, %v71
    %vm73 = vcmp.eq.f32.partialorder %v46, inf
    %v74 = vsel %vm73, %v46, %v72
    %vm75 = vcmp.eq.f32.partialorder %v46, 0.0
    %v76 = vand.u32 %v46, 2147483648
    %v77 = vsel %vm75, %v76, %v74
    %v78 = vrsqrt.pop %v49
    %v79 = vmul.f32 %v49, %v78
    %vm80 = vcmp.eq.f32.partialorder %v49, inf
    %v81 = vsel %vm80, %v49, %v79
    %vm82 = vcmp.eq.f32.partialorder %v49, 0.0
    %v83 = vand.u32 %v49, 2147483648
    %v84 = vsel %vm82, %v83, %v81
    %vm85 = vcmp.gt.f32.partialorder %v56, 3.0
    %vm86 = vcmp.gt.f32.partialorder %v63, 3.0
    %vm87 = vcmp.gt.f32.partialorder %v70, 3.0
    %vm88 = vcmp.gt.f32.partialorder %v77, 3.0
    %vm89 = vcmp.gt.f32.partialorder %v84, 3.0
    %v90 = vadd.f32 %v56, 1e-07
    %v91 = vadd.f32 %v63, 1e-07
    %v92 = vadd.f32 %v70, 1e-07
    %v93 = vadd.f32 %v77, 1e-07
    %v94 = vadd.f32 %v84, 1e-07
    %v95 = vrcp.pop %v90
    %v96 = vmul.f32 3.0, %v95
    %v97 = vrcp.pop %v91
    %v98 = vmul.f32 3.0, %v97
    %v99 = vrcp.pop %v92
    %v100 = vmul.f32 3.0, %v99
    %v101 = vrcp.pop %v93
    %v102 = vmul.f32 3.0, %v101
    %v103 = vrcp.pop %v94
    %v104 = vmul.f32 3.0, %v103
    %v105 = vsel %vm85, %v96, 1.0
    %v106 = vsel %vm86, %v98, 1.0
    %v107 = vsel %vm87, %v100, 1.0
    %v108 = vsel %vm88, %v102, 1.0
    %v109 = vsel %vm89, %v104, 1.0
    %v110 = vmul.f32 %v24, %v105
    %v111 = vmul.f32 %v25, %v106
    %v112 = vmul.f32 %v26, %v107
    %v113 = vmul.f32 %v27, %v108
    %v114 = vmul.f32 %v28, %v109
    %115 = vst.msk [vmem:[#allocation2] sm:$0xff] %vm34, %v110
    %116 = vst.msk [vmem:[#allocation2 + $0x8] sm:$0xff] %vm34, %v111
    %117 = vst.msk [vmem:[#allocation2 + $0x10] sm:$0xff] %vm34, %v112
    %118 = vst.msk [vmem:[#allocation2 + $0x18] sm:$0xff] %vm34, %v113
    %119 = vst.msk [vmem:[#allocation2 + $0x20] sm:$0xff] %vm34, %v114
    %v120 = vld [vmem:[%s1] sm:$0xff]
    %v121 = vld [vmem:[%s1 + $0x8] sm:$0xff]
    %v122 = vld [vmem:[%s1 + $0x10] sm:$0xff]
    %v123 = vld [vmem:[%s1 + $0x18] sm:$0xff]
    %v124 = vld [vmem:[#allocation2] sm:$0xff]
    %v125 = vld [vmem:[#allocation2 + $0x8] sm:$0xff]
    %v126 = vld [vmem:[#allocation2 + $0x10] sm:$0xff]
    %v127 = vld [vmem:[#allocation2 + $0x18] sm:$0xff]
    %v128 = vld [vmem:[%s0] sm:$0xff]
    %v129 = vld [vmem:[%s0 + $0x8] sm:$0xff]
    %v130 = vld [vmem:[%s0 + $0x10] sm:$0xff]
    %v131 = vld [vmem:[%s0 + $0x18] sm:$0xff]
    %s132 = scalar_lea.vmem %s1, 32
    %v133 = vld [vmem:[%s132] sm:$0xff]
    %v134 = vld [vmem:[%s132 + $0x8] sm:$0xff]
    %v135 = vld [vmem:[%s132 + $0x10] sm:$0xff]
    %v136 = vld [vmem:[%s132 + $0x18] sm:$0xff]
    %v137 = vld [vmem:[#allocation2 + $0x1] sm:$0xff]
    %v138 = vld [vmem:[#allocation2 + $0x9] sm:$0xff]
    %v139 = vld [vmem:[#allocation2 + $0x11] sm:$0xff]
    %v140 = vld [vmem:[#allocation2 + $0x19] sm:$0xff]
    %v142 = vsel %vm34, %v137, 0
    %v145 = vsel %vm34, %v138, 0
    %v148 = vsel %vm34, %v139, 0
    %v151 = vsel %vm34, %v140, 0
    %153 = vmatprep.subr.mxu0 0.0
    %154 = vmatpush1.msra.mxu0 0.0
    %155 = vmatprep.subr.mxu0 0.0
    %156 = vmatpush1.msra.mxu0 0.0
    %157 = vmatprep.subr.mxu0 0.0
    %158 = vmatpush1.msra.mxu0 0.0
    %159 = vmatprep.subr.mxu0 0.0
    %160 = vmatpush1.msra.mxu0 0.0
    %161 = vmatprep.subr.mxu0 0.0
    %162 = vmatpush1.msra.mxu0 0.0
    %163 = vmatprep.subr.mxu0 0.0
    %164 = vmatpush1.msra.mxu0 0.0
    %165 = vmatprep.subr.mxu0 0.0
    %166 = vmatpush1.msra.mxu0 0.0
    %167 = vmatprep.subr.mxu0 0.0
    %168 = vmatpush1.msra.mxu0 0.0
    %169 = vmatprep.subr.mxu0 0.0
    %170 = vmatpush1.msra.mxu0 0.0
    %171 = vmatprep.subr.mxu0 0.0
    %172 = vmatpush1.msra.mxu0 0.0
    %173 = vmatprep.subr.mxu0 0.0
    %174 = vmatpush1.msra.mxu0 0.0
    %175 = vmatprep.subr.mxu0 0.0
    %176 = vmatpush1.msra.mxu0 0.0
    %177 = vmatprep.subr.mxu0 0.0
    %v178 = vand.u32 %v136, 4294901760
    %179 = vmatpush1.msra.mxu0 %v178
    %180 = vmatprep.subr.mxu0 0.0
    %v181 = vand.u32 %v135, 4294901760
    %182 = vmatpush1.msra.mxu0 %v181
    %183 = vmatprep.subr.mxu0 0.0
    %v184 = vand.u32 %v134, 4294901760
    %185 = vmatpush1.msra.mxu0 %v184
    %186 = vmatprep.subr.mxu0 0.0
    %v187 = vand.u32 %v133, 4294901760
    %188 = vmatpush1.msra.mxu0 %v187
    %189 = vmatprep.subr.mxu0 0.0
    %190 = vmatpush2.msra.mxu0 0.0
    %191 = vmatprep.subr.mxu0 0.0
    %192 = vmatpush2.msra.mxu0 0.0
    %193 = vmatprep.subr.mxu0 0.0
    %194 = vmatpush2.msra.mxu0 0.0
    %195 = vmatprep.subr.mxu0 0.0
    %196 = vmatpush2.msra.mxu0 0.0
    %197 = vmatprep.subr.mxu0 0.0
    %198 = vmatpush2.msra.mxu0 0.0
    %199 = vmatprep.subr.mxu0 0.0
    %200 = vmatpush2.msra.mxu0 0.0
    %201 = vmatprep.subr.mxu0 0.0
    %202 = vmatpush2.msra.mxu0 0.0
    %203 = vmatprep.subr.mxu0 0.0
    %204 = vmatpush2.msra.mxu0 0.0
    %205 = vmatprep.subr.mxu0 0.0
    %206 = vmatpush2.msra.mxu0 0.0
    %207 = vmatprep.subr.mxu0 0.0
    %208 = vmatpush2.msra.mxu0 0.0
    %209 = vmatprep.subr.mxu0 0.0
    %210 = vmatpush2.msra.mxu0 0.0
    %211 = vmatprep.subr.mxu0 0.0
    %212 = vmatpush2.msra.mxu0 0.0
    %213 = vmatprep.subr.mxu0 0.0
    %214 = vmatpush2.msra.mxu0 0.0
    %215 = vmatprep.subr.mxu0 0.0
    %216 = vmatpush2.msra.mxu0 0.0
    %217 = vmatprep.subr.mxu0 0.0
    %218 = vmatpush2.msra.mxu0 0.0
    %219 = vmatprep.subr.mxu0 0.0
    %220 = vmatpush2.msra.mxu0 0.0
    %221 = vmatprep.mubr.f32.mxu0 0.0
    %v222 = vand.u32 %v142, 4294901760
    %v223 = vsub.f32 %v142, %v222
    %v224 = vand.u32 %v223, 4294901760
    %v225 = vsub.f32 %v223, %v224
    %v226 = vand.u32 %v225, 4294901760
    %227 = vmatmul.mubr.f32.gmra.mxu0 %v226
    %v228 = vpop.f32.mrf.mxu0
    %v229 = vadd.f32 0.0, %v228
    %v230 = vpop.f32.mrf.mxu0
    %231 = vmatprep.mubr.f32.mxu0 0.0
    %v232 = vand.u32 %v145, 4294901760
    %v233 = vsub.f32 %v145, %v232
    %v234 = vand.u32 %v233, 4294901760
    %v235 = vsub.f32 %v233, %v234
    %v236 = vand.u32 %v235, 4294901760
    %237 = vmatmul.mubr.f32.gmra.mxu0 %v236
    %v238 = vpop.f32.mrf.mxu0
    %v239 = vadd.f32 0.0, %v238
    %v240 = vpop.f32.mrf.mxu0
    %241 = vmatprep.mubr.f32.mxu0 0.0
    %v242 = vand.u32 %v148, 4294901760
    %v243 = vsub.f32 %v148, %v242
    %v244 = vand.u32 %v243, 4294901760
    %v245 = vsub.f32 %v243, %v244
    %v246 = vand.u32 %v245, 4294901760
    %247 = vmatmul.mubr.f32.gmra.mxu0 %v246
    %v248 = vpop.f32.mrf.mxu0
    %v249 = vadd.f32 0.0, %v248
    %v250 = vpop.f32.mrf.mxu0
    %251 = vmatprep.mubr.f32.mxu0 0.0
    %v252 = vand.u32 %v151, 4294901760
    %v253 = vsub.f32 %v151, %v252
    %v254 = vand.u32 %v253, 4294901760
    %v255 = vsub.f32 %v253, %v254
    %v256 = vand.u32 %v255, 4294901760
    %257 = vmatmul.mubr.f32.gmra.mxu0 %v256
    %v258 = vpop.f32.mrf.mxu0
    %v259 = vadd.f32 0.0, %v258
    %v260 = vpop.f32.mrf.mxu0
    %261 = vdwg.mxu0
    %262 = vmatprep.subr.mxu0 0.0
    %263 = vmatpush1.msra.mxu0 0.0
    %264 = vmatprep.subr.mxu0 0.0
    %265 = vmatpush1.msra.mxu0 0.0
    %266 = vmatprep.subr.mxu0 0.0
    %267 = vmatpush1.msra.mxu0 0.0
    %268 = vmatprep.subr.mxu0 0.0
    %269 = vmatpush1.msra.mxu0 0.0
    %270 = vmatprep.subr.mxu0 0.0
    %271 = vmatpush1.msra.mxu0 0.0
    %272 = vmatprep.subr.mxu0 0.0
    %273 = vmatpush1.msra.mxu0 0.0
    %274 = vmatprep.subr.mxu0 0.0
    %275 = vmatpush1.msra.mxu0 0.0
    %276 = vmatprep.subr.mxu0 0.0
    %277 = vmatpush1.msra.mxu0 0.0
    %278 = vmatprep.subr.mxu0 0.0
    %279 = vmatpush1.msra.mxu0 0.0
    %280 = vmatprep.subr.mxu0 0.0
    %281 = vmatpush1.msra.mxu0 0.0
    %282 = vmatprep.subr.mxu0 0.0
    %283 = vmatpush1.msra.mxu0 0.0
    %284 = vmatprep.subr.mxu0 0.0
    %285 = vmatpush1.msra.mxu0 0.0
    %286 = vmatprep.subr.mxu0 0.0
    %v287 = vand.u32 %v136, 4294901760
    %v288 = vsub.f32 %v136, %v287
    %v289 = vand.u32 %v288, 4294901760
    %v290 = vsub.f32 %v288, %v289
    %v291 = vand.u32 %v290, 4294901760
    %292 = vmatpush1.msra.mxu0 %v291
    %293 = vmatprep.subr.mxu0 0.0
    %v294 = vand.u32 %v135, 4294901760
    %v295 = vsub.f32 %v135, %v294
    %v296 = vand.u32 %v295, 4294901760
    %v297 = vsub.f32 %v295, %v296
    %v298 = vand.u32 %v297, 4294901760
    %299 = vmatpush1.msra.mxu0 %v298
    %300 = vmatprep.subr.mxu0 0.0
    %v301 = vand.u32 %v134, 4294901760
    %v302 = vsub.f32 %v134, %v301
    %v303 = vand.u32 %v302, 4294901760
    %v304 = vsub.f32 %v302, %v303
    %v305 = vand.u32 %v304, 4294901760
    %306 = vmatpush1.msra.mxu0 %v305
    %307 = vmatprep.subr.mxu0 0.0
    %v308 = vand.u32 %v133, 4294901760
    %v309 = vsub.f32 %v133, %v308
    %v310 = vand.u32 %v309, 4294901760
    %v311 = vsub.f32 %v309, %v310
    %v312 = vand.u32 %v311, 4294901760
    %313 = vmatpush1.msra.mxu0 %v312
    %314 = vmatprep.subr.mxu0 0.0
    %315 = vmatpush2.msra.mxu0 0.0
    %316 = vmatprep.subr.mxu0 0.0
    %317 = vmatpush2.msra.mxu0 0.0
    %318 = vmatprep.subr.mxu0 0.0
    %319 = vmatpush2.msra.mxu0 0.0
    %320 = vmatprep.subr.mxu0 0.0
    %321 = vmatpush2.msra.mxu0 0.0
    %322 = vmatprep.subr.mxu0 0.0
    %323 = vmatpush2.msra.mxu0 0.0
    %324 = vmatprep.subr.mxu0 0.0
    %325 = vmatpush2.msra.mxu0 0.0
    %326 = vmatprep.subr.mxu0 0.0
    %327 = vmatpush2.msra.mxu0 0.0
    %328 = vmatprep.subr.mxu0 0.0
    %329 = vmatpush2.msra.mxu0 0.0
    %330 = vmatprep.subr.mxu0 0.0
    %331 = vmatpush2.msra.mxu0 0.0
    %332 = vmatprep.subr.mxu0 0.0
    %333 = vmatpush2.msra.mxu0 0.0
    %334 = vmatprep.subr.mxu0 0.0
    %335 = vmatpush2.msra.mxu0 0.0
    %336 = vmatprep.subr.mxu0 0.0
    %337 = vmatpush2.msra.mxu0 0.0
    %338 = vmatprep.subr.mxu0 0.0
    %339 = vmatpush2.msra.mxu0 0.0
    %340 = vmatprep.subr.mxu0 0.0
    %341 = vmatpush2.msra.mxu0 0.0
    %342 = vmatprep.subr.mxu0 0.0
    %343 = vmatpush2.msra.mxu0 0.0
    %344 = vmatprep.subr.mxu0 0.0
    %345 = vmatpush2.msra.mxu0 0.0
    %346 = vmatprep.mubr.f32.mxu0 0.0
    %v347 = vand.u32 %v142, 4294901760
    %348 = vmatmul.mubr.f32.gmra.mxu0 %v347
    %v349 = vpop.f32.mrf.mxu0
    %v350 = vadd.f32 %v229, %v349
    %v351 = vpop.f32.mrf.mxu0
    %352 = vmatprep.mubr.f32.mxu0 0.0
    %v353 = vand.u32 %v145, 4294901760
    %354 = vmatmul.mubr.f32.gmra.mxu0 %v353
    %v355 = vpop.f32.mrf.mxu0
    %v356 = vadd.f32 %v239, %v355
    %v357 = vpop.f32.mrf.mxu0
    %358 = vmatprep.mubr.f32.mxu0 0.0
    %v359 = vand.u32 %v148, 4294901760
    %360 = vmatmul.mubr.f32.gmra.mxu0 %v359
    %v361 = vpop.f32.mrf.mxu0
    %v362 = vadd.f32 %v249, %v361
    %v363 = vpop.f32.mrf.mxu0
    %364 = vmatprep.mubr.f32.mxu0 0.0
    %v365 = vand.u32 %v151, 4294901760
    %366 = vmatmul.mubr.f32.gmra.mxu0 %v365
    %v367 = vpop.f32.mrf.mxu0
    %v368 = vadd.f32 %v259, %v367
    %v369 = vpop.f32.mrf.mxu0
    %370 = vdwg.mxu0
    %371 = vmatprep.subr.mxu0 0.0
    %372 = vmatpush1.msra.mxu0 0.0
    %373 = vmatprep.subr.mxu0 0.0
    %374 = vmatpush1.msra.mxu0 0.0
    %375 = vmatprep.subr.mxu0 0.0
    %376 = vmatpush1.msra.mxu0 0.0
    %377 = vmatprep.subr.mxu0 0.0
    %378 = vmatpush1.msra.mxu0 0.0
    %379 = vmatprep.subr.mxu0 0.0
    %380 = vmatpush1.msra.mxu0 0.0
    %381 = vmatprep.subr.mxu0 0.0
    %382 = vmatpush1.msra.mxu0 0.0
    %383 = vmatprep.subr.mxu0 0.0
    %384 = vmatpush1.msra.mxu0 0.0
    %385 = vmatprep.subr.mxu0 0.0
    %386 = vmatpush1.msra.mxu0 0.0
    %387 = vmatprep.subr.mxu0 0.0
    %388 = vmatpush1.msra.mxu0 0.0
    %389 = vmatprep.subr.mxu0 0.0
    %390 = vmatpush1.msra.mxu0 0.0
    %391 = vmatprep.subr.mxu0 0.0
    %392 = vmatpush1.msra.mxu0 0.0
    %393 = vmatprep.subr.mxu0 0.0
    %394 = vmatpush1.msra.mxu0 0.0
    %395 = vmatprep.subr.mxu0 0.0
    %v396 = vand.u32 %v136, 4294901760
    %v397 = vsub.f32 %v136, %v396
    %398 = vmatpush1.msra.mxu0 %v397
    %399 = vmatprep.subr.mxu0 0.0
    %v400 = vand.u32 %v135, 4294901760
    %v401 = vsub.f32 %v135, %v400
    %402 = vmatpush1.msra.mxu0 %v401
    %403 = vmatprep.subr.mxu0 0.0
    %v404 = vand.u32 %v134, 4294901760
    %v405 = vsub.f32 %v134, %v404
    %406 = vmatpush1.msra.mxu0 %v405
    %407 = vmatprep.subr.mxu0 0.0
    %v408 = vand.u32 %v133, 4294901760
    %v409 = vsub.f32 %v133, %v408
    %410 = vmatpush1.msra.mxu0 %v409
    %411 = vmatprep.subr.mxu0 0.0
    %412 = vmatpush2.msra.mxu0 0.0
    %413 = vmatprep.subr.mxu0 0.0
    %414 = vmatpush2.msra.mxu0 0.0
    %415 = vmatprep.subr.mxu0 0.0
    %416 = vmatpush2.msra.mxu0 0.0
    %417 = vmatprep.subr.mxu0 0.0
    %418 = vmatpush2.msra.mxu0 0.0
    %419 = vmatprep.subr.mxu0 0.0
    %420 = vmatpush2.msra.mxu0 0.0
    %421 = vmatprep.subr.mxu0 0.0
    %422 = vmatpush2.msra.mxu0 0.0
    %423 = vmatprep.subr.mxu0 0.0
    %424 = vmatpush2.msra.mxu0 0.0
    %425 = vmatprep.subr.mxu0 0.0
    %426 = vmatpush2.msra.mxu0 0.0
    %427 = vmatprep.subr.mxu0 0.0
    %428 = vmatpush2.msra.mxu0 0.0
    %429 = vmatprep.subr.mxu0 0.0
    %430 = vmatpush2.msra.mxu0 0.0
    %431 = vmatprep.subr.mxu0 0.0
    %432 = vmatpush2.msra.mxu0 0.0
    %433 = vmatprep.subr.mxu0 0.0
    %434 = vmatpush2.msra.mxu0 0.0
    %435 = vmatprep.subr.mxu0 0.0
    %436 = vmatpush2.msra.mxu0 0.0
    %437 = vmatprep.subr.mxu0 0.0
    %438 = vmatpush2.msra.mxu0 0.0
    %439 = vmatprep.subr.mxu0 0.0
    %440 = vmatpush2.msra.mxu0 0.0
    %441 = vmatprep.subr.mxu0 0.0
    %442 = vmatpush2.msra.mxu0 0.0
    %443 = vmatprep.mubr.f32.mxu0 0.0
    %v444 = vand.u32 %v142, 4294901760
    %v445 = vsub.f32 %v142, %v444
    %446 = vmatmul.mubr.f32.gmra.mxu0 %v445
    %v447 = vpop.f32.mrf.mxu0
    %v448 = vadd.f32 %v350, %v447
    %v449 = vpop.f32.mrf.mxu0
    %450 = vmatprep.mubr.f32.mxu0 0.0
    %v451 = vand.u32 %v145, 4294901760
    %v452 = vsub.f32 %v145, %v451
    %453 = vmatmul.mubr.f32.gmra.mxu0 %v452
    %v454 = vpop.f32.mrf.mxu0
    %v455 = vadd.f32 %v356, %v454
    %v456 = vpop.f32.mrf.mxu0
    %457 = vmatprep.mubr.f32.mxu0 0.0
    %v458 = vand.u32 %v148, 4294901760
    %v459 = vsub.f32 %v148, %v458
    %460 = vmatmul.mubr.f32.gmra.mxu0 %v459
    %v461 = vpop.f32.mrf.mxu0
    %v462 = vadd.f32 %v362, %v461
    %v463 = vpop.f32.mrf.mxu0
    %464 = vmatprep.mubr.f32.mxu0 0.0
    %v465 = vand.u32 %v151, 4294901760
    %v466 = vsub.f32 %v151, %v465
    %467 = vmatmul.mubr.f32.gmra.mxu0 %v466
    %v468 = vpop.f32.mrf.mxu0
    %v469 = vadd.f32 %v368, %v468
    %v470 = vpop.f32.mrf.mxu0
    %471 = vdwg.mxu0
    %472 = vmatprep.subr.mxu0 0.0
    %473 = vmatpush1.msra.mxu0 0.0
    %474 = vmatprep.subr.mxu0 0.0
    %475 = vmatpush1.msra.mxu0 0.0
    %476 = vmatprep.subr.mxu0 0.0
    %477 = vmatpush1.msra.mxu0 0.0
    %478 = vmatprep.subr.mxu0 0.0
    %479 = vmatpush1.msra.mxu0 0.0
    %480 = vmatprep.subr.mxu0 0.0
    %481 = vmatpush1.msra.mxu0 0.0
    %482 = vmatprep.subr.mxu0 0.0
    %483 = vmatpush1.msra.mxu0 0.0
    %484 = vmatprep.subr.mxu0 0.0
    %485 = vmatpush1.msra.mxu0 0.0
    %486 = vmatprep.subr.mxu0 0.0
    %487 = vmatpush1.msra.mxu0 0.0
    %488 = vmatprep.subr.mxu0 0.0
    %489 = vmatpush1.msra.mxu0 0.0
    %490 = vmatprep.subr.mxu0 0.0
    %491 = vmatpush1.msra.mxu0 0.0
    %492 = vmatprep.subr.mxu0 0.0
    %493 = vmatpush1.msra.mxu0 0.0
    %494 = vmatprep.subr.mxu0 0.0
    %495 = vmatpush1.msra.mxu0 0.0
    %496 = vmatprep.subr.mxu0 0.0
    %v497 = vand.u32 %v136, 4294901760
    %498 = vmatpush1.msra.mxu0 %v497
    %499 = vmatprep.subr.mxu0 0.0
    %v500 = vand.u32 %v135, 4294901760
    %501 = vmatpush1.msra.mxu0 %v500
    %502 = vmatprep.subr.mxu0 0.0
    %v503 = vand.u32 %v134, 4294901760
    %504 = vmatpush1.msra.mxu0 %v503
    %505 = vmatprep.subr.mxu0 0.0
    %v506 = vand.u32 %v133, 4294901760
    %507 = vmatpush1.msra.mxu0 %v506
    %508 = vmatprep.subr.mxu0 0.0
    %509 = vmatpush2.msra.mxu0 0.0
    %510 = vmatprep.subr.mxu0 0.0
    %511 = vmatpush2.msra.mxu0 0.0
    %512 = vmatprep.subr.mxu0 0.0
    %513 = vmatpush2.msra.mxu0 0.0
    %514 = vmatprep.subr.mxu0 0.0
    %515 = vmatpush2.msra.mxu0 0.0
    %516 = vmatprep.subr.mxu0 0.0
    %517 = vmatpush2.msra.mxu0 0.0
    %518 = vmatprep.subr.mxu0 0.0
    %519 = vmatpush2.msra.mxu0 0.0
    %520 = vmatprep.subr.mxu0 0.0
    %521 = vmatpush2.msra.mxu0 0.0
    %522 = vmatprep.subr.mxu0 0.0
    %523 = vmatpush2.msra.mxu0 0.0
    %524 = vmatprep.subr.mxu0 0.0
    %525 = vmatpush2.msra.mxu0 0.0
    %526 = vmatprep.subr.mxu0 0.0
    %527 = vmatpush2.msra.mxu0 0.0
    %528 = vmatprep.subr.mxu0 0.0
    %529 = vmatpush2.msra.mxu0 0.0
    %530 = vmatprep.subr.mxu0 0.0
    %531 = vmatpush2.msra.mxu0 0.0
    %532 = vmatprep.subr.mxu0 0.0
    %533 = vmatpush2.msra.mxu0 0.0
    %534 = vmatprep.subr.mxu0 0.0
    %535 = vmatpush2.msra.mxu0 0.0
    %536 = vmatprep.subr.mxu0 0.0
    %537 = vmatpush2.msra.mxu0 0.0
    %538 = vmatprep.subr.mxu0 0.0
    %539 = vmatpush2.msra.mxu0 0.0
    %540 = vmatprep.mubr.f32.mxu0 0.0
    %v541 = vand.u32 %v142, 4294901760
    %v542 = vsub.f32 %v142, %v541
    %v543 = vand.u32 %v542, 4294901760
    %544 = vmatmul.mubr.f32.gmra.mxu0 %v543
    %v545 = vpop.f32.mrf.mxu0
    %v546 = vadd.f32 %v448, %v545
    %v547 = vpop.f32.mrf.mxu0
    %548 = vmatprep.mubr.f32.mxu0 0.0
    %v549 = vand.u32 %v145, 4294901760
    %v550 = vsub.f32 %v145, %v549
    %v551 = vand.u32 %v550, 4294901760
    %552 = vmatmul.mubr.f32.gmra.mxu0 %v551
    %v553 = vpop.f32.mrf.mxu0
    %v554 = vadd.f32 %v455, %v553
    %v555 = vpop.f32.mrf.mxu0
    %556 = vmatprep.mubr.f32.mxu0 0.0
    %v557 = vand.u32 %v148, 4294901760
    %v558 = vsub.f32 %v148, %v557
    %v559 = vand.u32 %v558, 4294901760
    %560 = vmatmul.mubr.f32.gmra.mxu0 %v559
    %v561 = vpop.f32.mrf.mxu0
    %v562 = vadd.f32 %v462, %v561
    %v563 = vpop.f32.mrf.mxu0
    %564 = vmatprep.mubr.f32.mxu0 0.0
    %v565 = vand.u32 %v151, 4294901760
    %v566 = vsub.f32 %v151, %v565
    %v567 = vand.u32 %v566, 4294901760
    %568 = vmatmul.mubr.f32.gmra.mxu0 %v567
    %v569 = vpop.f32.mrf.mxu0
    %v570 = vadd.f32 %v469, %v569
    %v571 = vpop.f32.mrf.mxu0
    %572 = vdwg.mxu0
    %573 = vmatprep.subr.mxu0 0.0
    %574 = vmatpush1.msra.mxu0 0.0
    %575 = vmatprep.subr.mxu0 0.0
    %576 = vmatpush1.msra.mxu0 0.0
    %577 = vmatprep.subr.mxu0 0.0
    %578 = vmatpush1.msra.mxu0 0.0
    %579 = vmatprep.subr.mxu0 0.0
    %580 = vmatpush1.msra.mxu0 0.0
    %581 = vmatprep.subr.mxu0 0.0
    %582 = vmatpush1.msra.mxu0 0.0
    %583 = vmatprep.subr.mxu0 0.0
    %584 = vmatpush1.msra.mxu0 0.0
    %585 = vmatprep.subr.mxu0 0.0
    %586 = vmatpush1.msra.mxu0 0.0
    %587 = vmatprep.subr.mxu0 0.0
    %588 = vmatpush1.msra.mxu0 0.0
    %589 = vmatprep.subr.mxu0 0.0
    %590 = vmatpush1.msra.mxu0 0.0
    %591 = vmatprep.subr.mxu0 0.0
    %592 = vmatpush1.msra.mxu0 0.0
    %593 = vmatprep.subr.mxu0 0.0
    %594 = vmatpush1.msra.mxu0 0.0
    %595 = vmatprep.subr.mxu0 0.0
    %596 = vmatpush1.msra.mxu0 0.0
    %597 = vmatprep.subr.mxu0 0.0
    %v598 = vand.u32 %v136, 4294901760
    %v599 = vsub.f32 %v136, %v598
    %v600 = vand.u32 %v599, 4294901760
    %601 = vmatpush1.msra.mxu0 %v600
    %602 = vmatprep.subr.mxu0 0.0
    %v603 = vand.u32 %v135, 4294901760
    %v604 = vsub.f32 %v135, %v603
    %v605 = vand.u32 %v604, 4294901760
    %606 = vmatpush1.msra.mxu0 %v605
    %607 = vmatprep.subr.mxu0 0.0
    %v608 = vand.u32 %v134, 4294901760
    %v609 = vsub.f32 %v134, %v608
    %v610 = vand.u32 %v609, 4294901760
    %611 = vmatpush1.msra.mxu0 %v610
    %612 = vmatprep.subr.mxu0 0.0
    %v613 = vand.u32 %v133, 4294901760
    %v614 = vsub.f32 %v133, %v613
    %v615 = vand.u32 %v614, 4294901760
    %616 = vmatpush1.msra.mxu0 %v615
    %617 = vmatprep.subr.mxu0 0.0
    %618 = vmatpush2.msra.mxu0 0.0
    %619 = vmatprep.subr.mxu0 0.0
    %620 = vmatpush2.msra.mxu0 0.0
    %621 = vmatprep.subr.mxu0 0.0
    %622 = vmatpush2.msra.mxu0 0.0
    %623 = vmatprep.subr.mxu0 0.0
    %624 = vmatpush2.msra.mxu0 0.0
    %625 = vmatprep.subr.mxu0 0.0
    %626 = vmatpush2.msra.mxu0 0.0
    %627 = vmatprep.subr.mxu0 0.0
    %628 = vmatpush2.msra.mxu0 0.0
    %629 = vmatprep.subr.mxu0 0.0
    %630 = vmatpush2.msra.mxu0 0.0
    %631 = vmatprep.subr.mxu0 0.0
    %632 = vmatpush2.msra.mxu0 0.0
    %633 = vmatprep.subr.mxu0 0.0
    %634 = vmatpush2.msra.mxu0 0.0
    %635 = vmatprep.subr.mxu0 0.0
    %636 = vmatpush2.msra.mxu0 0.0
    %637 = vmatprep.subr.mxu0 0.0
    %638 = vmatpush2.msra.mxu0 0.0
    %639 = vmatprep.subr.mxu0 0.0
    %640 = vmatpush2.msra.mxu0 0.0
    %641 = vmatprep.subr.mxu0 0.0
    %642 = vmatpush2.msra.mxu0 0.0
    %643 = vmatprep.subr.mxu0 0.0
    %644 = vmatpush2.msra.mxu0 0.0
    %645 = vmatprep.subr.mxu0 0.0
    %646 = vmatpush2.msra.mxu0 0.0
    %647 = vmatprep.subr.mxu0 0.0
    %648 = vmatpush2.msra.mxu0 0.0
    %649 = vmatprep.mubr.f32.mxu0 0.0
    %v650 = vand.u32 %v142, 4294901760
    %651 = vmatmul.mubr.f32.gmra.mxu0 %v650
    %v652 = vpop.f32.mrf.mxu0
    %v653 = vadd.f32 %v546, %v652
    %v654 = vpop.f32.mrf.mxu0
    %655 = vmatprep.mubr.f32.mxu0 0.0
    %v656 = vand.u32 %v145, 4294901760
    %657 = vmatmul.mubr.f32.gmra.mxu0 %v656
    %v658 = vpop.f32.mrf.mxu0
    %v659 = vadd.f32 %v554, %v658
    %v660 = vpop.f32.mrf.mxu0
    %661 = vmatprep.mubr.f32.mxu0 0.0
    %v662 = vand.u32 %v148, 4294901760
    %663 = vmatmul.mubr.f32.gmra.mxu0 %v662
    %v664 = vpop.f32.mrf.mxu0
    %v665 = vadd.f32 %v562, %v664
    %v666 = vpop.f32.mrf.mxu0
    %667 = vmatprep.mubr.f32.mxu0 0.0
    %v668 = vand.u32 %v151, 4294901760
    %669 = vmatmul.mubr.f32.gmra.mxu0 %v668
    %v670 = vpop.f32.mrf.mxu0
    %v671 = vadd.f32 %v570, %v670
    %v672 = vpop.f32.mrf.mxu0
    %673 = vdwg.mxu0
    %674 = vmatprep.subr.mxu0 0.0
    %675 = vmatpush1.msra.mxu0 0.0
    %676 = vmatprep.subr.mxu0 0.0
    %677 = vmatpush1.msra.mxu0 0.0
    %678 = vmatprep.subr.mxu0 0.0
    %679 = vmatpush1.msra.mxu0 0.0
    %680 = vmatprep.subr.mxu0 0.0
    %681 = vmatpush1.msra.mxu0 0.0
    %682 = vmatprep.subr.mxu0 0.0
    %683 = vmatpush1.msra.mxu0 0.0
    %684 = vmatprep.subr.mxu0 0.0
    %685 = vmatpush1.msra.mxu0 0.0
    %686 = vmatprep.subr.mxu0 0.0
    %687 = vmatpush1.msra.mxu0 0.0
    %688 = vmatprep.subr.mxu0 0.0
    %689 = vmatpush1.msra.mxu0 0.0
    %690 = vmatprep.subr.mxu0 0.0
    %691 = vmatpush1.msra.mxu0 0.0
    %692 = vmatprep.subr.mxu0 0.0
    %693 = vmatpush1.msra.mxu0 0.0
    %694 = vmatprep.subr.mxu0 0.0
    %695 = vmatpush1.msra.mxu0 0.0
    %696 = vmatprep.subr.mxu0 0.0
    %697 = vmatpush1.msra.mxu0 0.0
    %698 = vmatprep.subr.mxu0 0.0
    %v699 = vand.u32 %v136, 4294901760
    %700 = vmatpush1.msra.mxu0 %v699
    %701 = vmatprep.subr.mxu0 0.0
    %v702 = vand.u32 %v135, 4294901760
    %703 = vmatpush1.msra.mxu0 %v702
    %704 = vmatprep.subr.mxu0 0.0
    %v705 = vand.u32 %v134, 4294901760
    %706 = vmatpush1.msra.mxu0 %v705
    %707 = vmatprep.subr.mxu0 0.0
    %v708 = vand.u32 %v133, 4294901760
    %709 = vmatpush1.msra.mxu0 %v708
    %710 = vmatprep.subr.mxu0 0.0
    %711 = vmatpush2.msra.mxu0 0.0
    %712 = vmatprep.subr.mxu0 0.0
    %713 = vmatpush2.msra.mxu0 0.0
    %714 = vmatprep.subr.mxu0 0.0
    %715 = vmatpush2.msra.mxu0 0.0
    %716 = vmatprep.subr.mxu0 0.0
    %717 = vmatpush2.msra.mxu0 0.0
    %718 = vmatprep.subr.mxu0 0.0
    %719 = vmatpush2.msra.mxu0 0.0
    %720 = vmatprep.subr.mxu0 0.0
    %721 = vmatpush2.msra.mxu0 0.0
    %722 = vmatprep.subr.mxu0 0.0
    %723 = vmatpush2.msra.mxu0 0.0
    %724 = vmatprep.subr.mxu0 0.0
    %725 = vmatpush2.msra.mxu0 0.0
    %726 = vmatprep.subr.mxu0 0.0
    %727 = vmatpush2.msra.mxu0 0.0
    %728 = vmatprep.subr.mxu0 0.0
    %729 = vmatpush2.msra.mxu0 0.0
    %730 = vmatprep.subr.mxu0 0.0
    %731 = vmatpush2.msra.mxu0 0.0
    %732 = vmatprep.subr.mxu0 0.0
    %733 = vmatpush2.msra.mxu0 0.0
    %734 = vmatprep.subr.mxu0 0.0
    %735 = vmatpush2.msra.mxu0 0.0
    %736 = vmatprep.subr.mxu0 0.0
    %737 = vmatpush2.msra.mxu0 0.0
    %738 = vmatprep.subr.mxu0 0.0
    %739 = vmatpush2.msra.mxu0 0.0
    %740 = vmatprep.subr.mxu0 0.0
    %741 = vmatpush2.msra.mxu0 0.0
    %742 = vmatprep.mubr.f32.mxu0 0.0
    %v743 = vand.u32 %v142, 4294901760
    %744 = vmatmul.mubr.f32.gmra.mxu0 %v743
    %v745 = vpop.f32.mrf.mxu0
    %v746 = vadd.f32 %v653, %v745
    %v747 = vpop.f32.mrf.mxu0
    %748 = vmatprep.mubr.f32.mxu0 0.0
    %v749 = vand.u32 %v145, 4294901760
    %750 = vmatmul.mubr.f32.gmra.mxu0 %v749
    %v751 = vpop.f32.mrf.mxu0
    %v752 = vadd.f32 %v659, %v751
    %v753 = vpop.f32.mrf.mxu0
    %754 = vmatprep.mubr.f32.mxu0 0.0
    %v755 = vand.u32 %v148, 4294901760
    %756 = vmatmul.mubr.f32.gmra.mxu0 %v755
    %v757 = vpop.f32.mrf.mxu0
    %v758 = vadd.f32 %v665, %v757
    %v759 = vpop.f32.mrf.mxu0
    %760 = vmatprep.mubr.f32.mxu0 0.0
    %v761 = vand.u32 %v151, 4294901760
    %762 = vmatmul.mubr.f32.gmra.mxu0 %v761
    %v763 = vpop.f32.mrf.mxu0
    %v764 = vadd.f32 %v671, %v763
    %v765 = vpop.f32.mrf.mxu0
    %766 = vdwg.mxu0
    %v768 = vsel %vm34, %v124, 0
    %v771 = vsel %vm34, %v125, 0
    %v774 = vsel %vm34, %v126, 0
    %v777 = vsel %vm34, %v127, 0
    %779 = vmatprep.subr.mxu0 0.0
    %780 = vmatpush1.msra.mxu0 0.0
    %781 = vmatprep.subr.mxu0 0.0
    %782 = vmatpush1.msra.mxu0 0.0
    %783 = vmatprep.subr.mxu0 0.0
    %784 = vmatpush1.msra.mxu0 0.0
    %785 = vmatprep.subr.mxu0 0.0
    %786 = vmatpush1.msra.mxu0 0.0
    %787 = vmatprep.subr.mxu0 0.0
    %788 = vmatpush1.msra.mxu0 0.0
    %789 = vmatprep.subr.mxu0 0.0
    %790 = vmatpush1.msra.mxu0 0.0
    %791 = vmatprep.subr.mxu0 0.0
    %792 = vmatpush1.msra.mxu0 0.0
    %793 = vmatprep.subr.mxu0 0.0
    %794 = vmatpush1.msra.mxu0 0.0
    %795 = vmatprep.subr.mxu0 0.0
    %796 = vmatpush1.msra.mxu0 0.0
    %797 = vmatprep.subr.mxu0 0.0
    %798 = vmatpush1.msra.mxu0 0.0
    %799 = vmatprep.subr.mxu0 0.0
    %800 = vmatpush1.msra.mxu0 0.0
    %801 = vmatprep.subr.mxu0 0.0
    %802 = vmatpush1.msra.mxu0 0.0
    %803 = vmatprep.subr.mxu0 0.0
    %v804 = vand.u32 %v123, 4294901760
    %805 = vmatpush1.msra.mxu0 %v804
    %806 = vmatprep.subr.mxu0 0.0
    %v807 = vand.u32 %v122, 4294901760
    %808 = vmatpush1.msra.mxu0 %v807
    %809 = vmatprep.subr.mxu0 0.0
    %v810 = vand.u32 %v121, 4294901760
    %811 = vmatpush1.msra.mxu0 %v810
    %812 = vmatprep.subr.mxu0 0.0
    %v813 = vand.u32 %v120, 4294901760
    %814 = vmatpush1.msra.mxu0 %v813
    %815 = vmatprep.subr.mxu0 0.0
    %816 = vmatpush2.msra.mxu0 0.0
    %817 = vmatprep.subr.mxu0 0.0
    %818 = vmatpush2.msra.mxu0 0.0
    %819 = vmatprep.subr.mxu0 0.0
    %820 = vmatpush2.msra.mxu0 0.0
    %821 = vmatprep.subr.mxu0 0.0
    %822 = vmatpush2.msra.mxu0 0.0
    %823 = vmatprep.subr.mxu0 0.0
    %824 = vmatpush2.msra.mxu0 0.0
    %825 = vmatprep.subr.mxu0 0.0
    %826 = vmatpush2.msra.mxu0 0.0
    %827 = vmatprep.subr.mxu0 0.0
    %828 = vmatpush2.msra.mxu0 0.0
    %829 = vmatprep.subr.mxu0 0.0
    %830 = vmatpush2.msra.mxu0 0.0
    %831 = vmatprep.subr.mxu0 0.0
    %832 = vmatpush2.msra.mxu0 0.0
    %833 = vmatprep.subr.mxu0 0.0
    %834 = vmatpush2.msra.mxu0 0.0
    %835 = vmatprep.subr.mxu0 0.0
    %836 = vmatpush2.msra.mxu0 0.0
    %837 = vmatprep.subr.mxu0 0.0
    %838 = vmatpush2.msra.mxu0 0.0
    %839 = vmatprep.subr.mxu0 0.0
    %840 = vmatpush2.msra.mxu0 0.0
    %841 = vmatprep.subr.mxu0 0.0
    %842 = vmatpush2.msra.mxu0 0.0
    %843 = vmatprep.subr.mxu0 0.0
    %844 = vmatpush2.msra.mxu0 0.0
    %845 = vmatprep.subr.mxu0 0.0
    %846 = vmatpush2.msra.mxu0 0.0
    %847 = vmatprep.mubr.f32.mxu0 0.0
    %v848 = vand.u32 %v768, 4294901760
    %v849 = vsub.f32 %v768, %v848
    %v850 = vand.u32 %v849, 4294901760
    %v851 = vsub.f32 %v849, %v850
    %v852 = vand.u32 %v851, 4294901760
    %853 = vmatmul.mubr.f32.gmra.mxu0 %v852
    %v854 = vpop.f32.mrf.mxu0
    %v855 = vadd.f32 %v746, %v854
    %v856 = vpop.f32.mrf.mxu0
    %857 = vmatprep.mubr.f32.mxu0 0.0
    %v858 = vand.u32 %v771, 4294901760
    %v859 = vsub.f32 %v771, %v858
    %v860 = vand.u32 %v859, 4294901760
    %v861 = vsub.f32 %v859, %v860
    %v862 = vand.u32 %v861, 4294901760
    %863 = vmatmul.mubr.f32.gmra.mxu0 %v862
    %v864 = vpop.f32.mrf.mxu0
    %v865 = vadd.f32 %v752, %v864
    %v866 = vpop.f32.mrf.mxu0
    %867 = vmatprep.mubr.f32.mxu0 0.0
    %v868 = vand.u32 %v774, 4294901760
    %v869 = vsub.f32 %v774, %v868
    %v870 = vand.u32 %v869, 4294901760
    %v871 = vsub.f32 %v869, %v870
    %v872 = vand.u32 %v871, 4294901760
    %873 = vmatmul.mubr.f32.gmra.mxu0 %v872
    %v874 = vpop.f32.mrf.mxu0
    %v875 = vadd.f32 %v758, %v874
    %v876 = vpop.f32.mrf.mxu0
    %877 = vmatprep.mubr.f32.mxu0 0.0
    %v878 = vand.u32 %v777, 4294901760
    %v879 = vsub.f32 %v777, %v878
    %v880 = vand.u32 %v879, 4294901760
    %v881 = vsub.f32 %v879, %v880
    %v882 = vand.u32 %v881, 4294901760
    %883 = vmatmul.mubr.f32.gmra.mxu0 %v882
    %v884 = vpop.f32.mrf.mxu0
    %v885 = vadd.f32 %v764, %v884
    %v886 = vpop.f32.mrf.mxu0
    %887 = vdwg.mxu0
    %888 = vmatprep.subr.mxu0 0.0
    %889 = vmatpush1.msra.mxu0 0.0
    %890 = vmatprep.subr.mxu0 0.0
    %891 = vmatpush1.msra.mxu0 0.0
    %892 = vmatprep.subr.mxu0 0.0
    %893 = vmatpush1.msra.mxu0 0.0
    %894 = vmatprep.subr.mxu0 0.0
    %895 = vmatpush1.msra.mxu0 0.0
    %896 = vmatprep.subr.mxu0 0.0
    %897 = vmatpush1.msra.mxu0 0.0
    %898 = vmatprep.subr.mxu0 0.0
    %899 = vmatpush1.msra.mxu0 0.0
    %900 = vmatprep.subr.mxu0 0.0
    %901 = vmatpush1.msra.mxu0 0.0
    %902 = vmatprep.subr.mxu0 0.0
    %903 = vmatpush1.msra.mxu0 0.0
    %904 = vmatprep.subr.mxu0 0.0
    %905 = vmatpush1.msra.mxu0 0.0
    %906 = vmatprep.subr.mxu0 0.0
    %907 = vmatpush1.msra.mxu0 0.0
    %908 = vmatprep.subr.mxu0 0.0
    %909 = vmatpush1.msra.mxu0 0.0
    %910 = vmatprep.subr.mxu0 0.0
    %911 = vmatpush1.msra.mxu0 0.0
    %912 = vmatprep.subr.mxu0 0.0
    %v913 = vand.u32 %v123, 4294901760
    %v914 = vsub.f32 %v123, %v913
    %v915 = vand.u32 %v914, 4294901760
    %v916 = vsub.f32 %v914, %v915
    %v917 = vand.u32 %v916, 4294901760
    %918 = vmatpush1.msra.mxu0 %v917
    %919 = vmatprep.subr.mxu0 0.0
    %v920 = vand.u32 %v122, 4294901760
    %v921 = vsub.f32 %v122, %v920
    %v922 = vand.u32 %v921, 4294901760
    %v923 = vsub.f32 %v921, %v922
    %v924 = vand.u32 %v923, 4294901760
    %925 = vmatpush1.msra.mxu0 %v924
    %926 = vmatprep.subr.mxu0 0.0
    %v927 = vand.u32 %v121, 4294901760
    %v928 = vsub.f32 %v121, %v927
    %v929 = vand.u32 %v928, 4294901760
    %v930 = vsub.f32 %v928, %v929
    %v931 = vand.u32 %v930, 4294901760
    %932 = vmatpush1.msra.mxu0 %v931
    %933 = vmatprep.subr.mxu0 0.0
    %v934 = vand.u32 %v120, 4294901760
    %v935 = vsub.f32 %v120, %v934
    %v936 = vand.u32 %v935, 4294901760
    %v937 = vsub.f32 %v935, %v936
    %v938 = vand.u32 %v937, 4294901760
    %939 = vmatpush1.msra.mxu0 %v938
    %940 = vmatprep.subr.mxu0 0.0
    %941 = vmatpush2.msra.mxu0 0.0
    %942 = vmatprep.subr.mxu0 0.0
    %943 = vmatpush2.msra.mxu0 0.0
    %944 = vmatprep.subr.mxu0 0.0
    %945 = vmatpush2.msra.mxu0 0.0
    %946 = vmatprep.subr.mxu0 0.0
    %947 = vmatpush2.msra.mxu0 0.0
    %948 = vmatprep.subr.mxu0 0.0
    %949 = vmatpush2.msra.mxu0 0.0
    %950 = vmatprep.subr.mxu0 0.0
    %951 = vmatpush2.msra.mxu0 0.0
    %952 = vmatprep.subr.mxu0 0.0
    %953 = vmatpush2.msra.mxu0 0.0
    %954 = vmatprep.subr.mxu0 0.0
    %955 = vmatpush2.msra.mxu0 0.0
    %956 = vmatprep.subr.mxu0 0.0
    %957 = vmatpush2.msra.mxu0 0.0
    %958 = vmatprep.subr.mxu0 0.0
    %959 = vmatpush2.msra.mxu0 0.0
    %960 = vmatprep.subr.mxu0 0.0
    %961 = vmatpush2.msra.mxu0 0.0
    %962 = vmatprep.subr.mxu0 0.0
    %963 = vmatpush2.msra.mxu0 0.0
    %964 = vmatprep.subr.mxu0 0.0
    %965 = vmatpush2.msra.mxu0 0.0
    %966 = vmatprep.subr.mxu0 0.0
    %967 = vmatpush2.msra.mxu0 0.0
    %968 = vmatprep.subr.mxu0 0.0
    %969 = vmatpush2.msra.mxu0 0.0
    %970 = vmatprep.subr.mxu0 0.0
    %971 = vmatpush2.msra.mxu0 0.0
    %972 = vmatprep.mubr.f32.mxu0 0.0
    %v973 = vand.u32 %v768, 4294901760
    %974 = vmatmul.mubr.f32.gmra.mxu0 %v973
    %v975 = vpop.f32.mrf.mxu0
    %v976 = vadd.f32 %v855, %v975
    %v977 = vpop.f32.mrf.mxu0
    %978 = vmatprep.mubr.f32.mxu0 0.0
    %v979 = vand.u32 %v771, 4294901760
    %980 = vmatmul.mubr.f32.gmra.mxu0 %v979
    %v981 = vpop.f32.mrf.mxu0
    %v982 = vadd.f32 %v865, %v981
    %v983 = vpop.f32.mrf.mxu0
    %984 = vmatprep.mubr.f32.mxu0 0.0
    %v985 = vand.u32 %v774, 4294901760
    %986 = vmatmul.mubr.f32.gmra.mxu0 %v985
    %v987 = vpop.f32.mrf.mxu0
    %v988 = vadd.f32 %v875, %v987
    %v989 = vpop.f32.mrf.mxu0
    %990 = vmatprep.mubr.f32.mxu0 0.0
    %v991 = vand.u32 %v777, 4294901760
    %992 = vmatmul.mubr.f32.gmra.mxu0 %v991
    %v993 = vpop.f32.mrf.mxu0
    %v994 = vadd.f32 %v885, %v993
    %v995 = vpop.f32.mrf.mxu0
    %996 = vdwg.mxu0
    %997 = vmatprep.subr.mxu0 0.0
    %998 = vmatpush1.msra.mxu0 0.0
    %999 = vmatprep.subr.mxu0 0.0
    %1000 = vmatpush1.msra.mxu0 0.0
    %1001 = vmatprep.subr.mxu0 0.0
    %1002 = vmatpush1.msra.mxu0 0.0
    %1003 = vmatprep.subr.mxu0 0.0
    %1004 = vmatpush1.msra.mxu0 0.0
    %1005 = vmatprep.subr.mxu0 0.0
    %1006 = vmatpush1.msra.mxu0 0.0
    %1007 = vmatprep.subr.mxu0 0.0
    %1008 = vmatpush1.msra.mxu0 0.0
    %1009 = vmatprep.subr.mxu0 0.0
    %1010 = vmatpush1.msra.mxu0 0.0
    %1011 = vmatprep.subr.mxu0 0.0
    %1012 = vmatpush1.msra.mxu0 0.0
    %1013 = vmatprep.subr.mxu0 0.0
    %1014 = vmatpush1.msra.mxu0 0.0
    %1015 = vmatprep.subr.mxu0 0.0
    %1016 = vmatpush1.msra.mxu0 0.0
    %1017 = vmatprep.subr.mxu0 0.0
    %1018 = vmatpush1.msra.mxu0 0.0
    %1019 = vmatprep.subr.mxu0 0.0
    %1020 = vmatpush1.msra.mxu0 0.0
    %1021 = vmatprep.subr.mxu0 0.0
    %v1022 = vand.u32 %v123, 4294901760
    %v1023 = vsub.f32 %v123, %v1022
    %1024 = vmatpush1.msra.mxu0 %v1023
    %1025 = vmatprep.subr.mxu0 0.0
    %v1026 = vand.u32 %v122, 4294901760
    %v1027 = vsub.f32 %v122, %v1026
    %1028 = vmatpush1.msra.mxu0 %v1027
    %1029 = vmatprep.subr.mxu0 0.0
    %v1030 = vand.u32 %v121, 4294901760
    %v1031 = vsub.f32 %v121, %v1030
    %1032 = vmatpush1.msra.mxu0 %v1031
    %1033 = vmatprep.subr.mxu0 0.0
    %v1034 = vand.u32 %v120, 4294901760
    %v1035 = vsub.f32 %v120, %v1034
    %1036 = vmatpush1.msra.mxu0 %v1035
    %1037 = vmatprep.subr.mxu0 0.0
    %1038 = vmatpush2.msra.mxu0 0.0
    %1039 = vmatprep.subr.mxu0 0.0
    %1040 = vmatpush2.msra.mxu0 0.0
    %1041 = vmatprep.subr.mxu0 0.0
    %1042 = vmatpush2.msra.mxu0 0.0
    %1043 = vmatprep.subr.mxu0 0.0
    %1044 = vmatpush2.msra.mxu0 0.0
    %1045 = vmatprep.subr.mxu0 0.0
    %1046 = vmatpush2.msra.mxu0 0.0
    %1047 = vmatprep.subr.mxu0 0.0
    %1048 = vmatpush2.msra.mxu0 0.0
    %1049 = vmatprep.subr.mxu0 0.0
    %1050 = vmatpush2.msra.mxu0 0.0
    %1051 = vmatprep.subr.mxu0 0.0
    %1052 = vmatpush2.msra.mxu0 0.0
    %1053 = vmatprep.subr.mxu0 0.0
    %1054 = vmatpush2.msra.mxu0 0.0
    %1055 = vmatprep.subr.mxu0 0.0
    %1056 = vmatpush2.msra.mxu0 0.0
    %1057 = vmatprep.subr.mxu0 0.0
    %1058 = vmatpush2.msra.mxu0 0.0
    %1059 = vmatprep.subr.mxu0 0.0
    %1060 = vmatpush2.msra.mxu0 0.0
    %1061 = vmatprep.subr.mxu0 0.0
    %1062 = vmatpush2.msra.mxu0 0.0
    %1063 = vmatprep.subr.mxu0 0.0
    %1064 = vmatpush2.msra.mxu0 0.0
    %1065 = vmatprep.subr.mxu0 0.0
    %1066 = vmatpush2.msra.mxu0 0.0
    %1067 = vmatprep.subr.mxu0 0.0
    %1068 = vmatpush2.msra.mxu0 0.0
    %1069 = vmatprep.mubr.f32.mxu0 0.0
    %v1070 = vand.u32 %v768, 4294901760
    %v1071 = vsub.f32 %v768, %v1070
    %1072 = vmatmul.mubr.f32.gmra.mxu0 %v1071
    %v1073 = vpop.f32.mrf.mxu0
    %v1074 = vadd.f32 %v976, %v1073
    %v1075 = vpop.f32.mrf.mxu0
    %1076 = vmatprep.mubr.f32.mxu0 0.0
    %v1077 = vand.u32 %v771, 4294901760
    %v1078 = vsub.f32 %v771, %v1077
    %1079 = vmatmul.mubr.f32.gmra.mxu0 %v1078
    %v1080 = vpop.f32.mrf.mxu0
    %v1081 = vadd.f32 %v982, %v1080
    %v1082 = vpop.f32.mrf.mxu0
    %1083 = vmatprep.mubr.f32.mxu0 0.0
    %v1084 = vand.u32 %v774, 4294901760
    %v1085 = vsub.f32 %v774, %v1084
    %1086 = vmatmul.mubr.f32.gmra.mxu0 %v1085
    %v1087 = vpop.f32.mrf.mxu0
    %v1088 = vadd.f32 %v988, %v1087
    %v1089 = vpop.f32.mrf.mxu0
    %1090 = vmatprep.mubr.f32.mxu0 0.0
    %v1091 = vand.u32 %v777, 4294901760
    %v1092 = vsub.f32 %v777, %v1091
    %1093 = vmatmul.mubr.f32.gmra.mxu0 %v1092
    %v1094 = vpop.f32.mrf.mxu0
    %v1095 = vadd.f32 %v994, %v1094
    %v1096 = vpop.f32.mrf.mxu0
    %1097 = vdwg.mxu0
    %1098 = vmatprep.subr.mxu0 0.0
    %1099 = vmatpush1.msra.mxu0 0.0
    %1100 = vmatprep.subr.mxu0 0.0
    %1101 = vmatpush1.msra.mxu0 0.0
    %1102 = vmatprep.subr.mxu0 0.0
    %1103 = vmatpush1.msra.mxu0 0.0
    %1104 = vmatprep.subr.mxu0 0.0
    %1105 = vmatpush1.msra.mxu0 0.0
    %1106 = vmatprep.subr.mxu0 0.0
    %1107 = vmatpush1.msra.mxu0 0.0
    %1108 = vmatprep.subr.mxu0 0.0
    %1109 = vmatpush1.msra.mxu0 0.0
    %1110 = vmatprep.subr.mxu0 0.0
    %1111 = vmatpush1.msra.mxu0 0.0
    %1112 = vmatprep.subr.mxu0 0.0
    %1113 = vmatpush1.msra.mxu0 0.0
    %1114 = vmatprep.subr.mxu0 0.0
    %1115 = vmatpush1.msra.mxu0 0.0
    %1116 = vmatprep.subr.mxu0 0.0
    %1117 = vmatpush1.msra.mxu0 0.0
    %1118 = vmatprep.subr.mxu0 0.0
    %1119 = vmatpush1.msra.mxu0 0.0
    %1120 = vmatprep.subr.mxu0 0.0
    %1121 = vmatpush1.msra.mxu0 0.0
    %1122 = vmatprep.subr.mxu0 0.0
    %v1123 = vand.u32 %v123, 4294901760
    %1124 = vmatpush1.msra.mxu0 %v1123
    %1125 = vmatprep.subr.mxu0 0.0
    %v1126 = vand.u32 %v122, 4294901760
    %1127 = vmatpush1.msra.mxu0 %v1126
    %1128 = vmatprep.subr.mxu0 0.0
    %v1129 = vand.u32 %v121, 4294901760
    %1130 = vmatpush1.msra.mxu0 %v1129
    %1131 = vmatprep.subr.mxu0 0.0
    %v1132 = vand.u32 %v120, 4294901760
    %1133 = vmatpush1.msra.mxu0 %v1132
    %1134 = vmatprep.subr.mxu0 0.0
    %1135 = vmatpush2.msra.mxu0 0.0
    %1136 = vmatprep.subr.mxu0 0.0
    %1137 = vmatpush2.msra.mxu0 0.0
    %1138 = vmatprep.subr.mxu0 0.0
    %1139 = vmatpush2.msra.mxu0 0.0
    %1140 = vmatprep.subr.mxu0 0.0
    %1141 = vmatpush2.msra.mxu0 0.0
    %1142 = vmatprep.subr.mxu0 0.0
    %1143 = vmatpush2.msra.mxu0 0.0
    %1144 = vmatprep.subr.mxu0 0.0
    %1145 = vmatpush2.msra.mxu0 0.0
    %1146 = vmatprep.subr.mxu0 0.0
    %1147 = vmatpush2.msra.mxu0 0.0
    %1148 = vmatprep.subr.mxu0 0.0
    %1149 = vmatpush2.msra.mxu0 0.0
    %1150 = vmatprep.subr.mxu0 0.0
    %1151 = vmatpush2.msra.mxu0 0.0
    %1152 = vmatprep.subr.mxu0 0.0
    %1153 = vmatpush2.msra.mxu0 0.0
    %1154 = vmatprep.subr.mxu0 0.0
    %1155 = vmatpush2.msra.mxu0 0.0
    %1156 = vmatprep.subr.mxu0 0.0
    %1157 = vmatpush2.msra.mxu0 0.0
    %1158 = vmatprep.subr.mxu0 0.0
    %1159 = vmatpush2.msra.mxu0 0.0
    %1160 = vmatprep.subr.mxu0 0.0
    %1161 = vmatpush2.msra.mxu0 0.0
    %1162 = vmatprep.subr.mxu0 0.0
    %1163 = vmatpush2.msra.mxu0 0.0
    %1164 = vmatprep.subr.mxu0 0.0
    %1165 = vmatpush2.msra.mxu0 0.0
    %1166 = vmatprep.mubr.f32.mxu0 0.0
    %v1167 = vand.u32 %v768, 4294901760
    %v1168 = vsub.f32 %v768, %v1167
    %v1169 = vand.u32 %v1168, 4294901760
    %1170 = vmatmul.mubr.f32.gmra.mxu0 %v1169
    %v1171 = vpop.f32.mrf.mxu0
    %v1172 = vadd.f32 %v1074, %v1171
    %v1173 = vpop.f32.mrf.mxu0
    %1174 = vmatprep.mubr.f32.mxu0 0.0
    %v1175 = vand.u32 %v771, 4294901760
    %v1176 = vsub.f32 %v771, %v1175
    %v1177 = vand.u32 %v1176, 4294901760
    %1178 = vmatmul.mubr.f32.gmra.mxu0 %v1177
    %v1179 = vpop.f32.mrf.mxu0
    %v1180 = vadd.f32 %v1081, %v1179
    %v1181 = vpop.f32.mrf.mxu0
    %1182 = vmatprep.mubr.f32.mxu0 0.0
    %v1183 = vand.u32 %v774, 4294901760
    %v1184 = vsub.f32 %v774, %v1183
    %v1185 = vand.u32 %v1184, 4294901760
    %1186 = vmatmul.mubr.f32.gmra.mxu0 %v1185
    %v1187 = vpop.f32.mrf.mxu0
    %v1188 = vadd.f32 %v1088, %v1187
    %v1189 = vpop.f32.mrf.mxu0
    %1190 = vmatprep.mubr.f32.mxu0 0.0
    %v1191 = vand.u32 %v777, 4294901760
    %v1192 = vsub.f32 %v777, %v1191
    %v1193 = vand.u32 %v1192, 4294901760
    %1194 = vmatmul.mubr.f32.gmra.mxu0 %v1193
    %v1195 = vpop.f32.mrf.mxu0
    %v1196 = vadd.f32 %v1095, %v1195
    %v1197 = vpop.f32.mrf.mxu0
    %1198 = vdwg.mxu0
    %1199 = vmatprep.subr.mxu0 0.0
    %1200 = vmatpush1.msra.mxu0 0.0
    %1201 = vmatprep.subr.mxu0 0.0
    %1202 = vmatpush1.msra.mxu0 0.0
    %1203 = vmatprep.subr.mxu0 0.0
    %1204 = vmatpush1.msra.mxu0 0.0
    %1205 = vmatprep.subr.mxu0 0.0
    %1206 = vmatpush1.msra.mxu0 0.0
    %1207 = vmatprep.subr.mxu0 0.0
    %1208 = vmatpush1.msra.mxu0 0.0
    %1209 = vmatprep.subr.mxu0 0.0
    %1210 = vmatpush1.msra.mxu0 0.0
    %1211 = vmatprep.subr.mxu0 0.0
    %1212 = vmatpush1.msra.mxu0 0.0
    %1213 = vmatprep.subr.mxu0 0.0
    %1214 = vmatpush1.msra.mxu0 0.0
    %1215 = vmatprep.subr.mxu0 0.0
    %1216 = vmatpush1.msra.mxu0 0.0
    %1217 = vmatprep.subr.mxu0 0.0
    %1218 = vmatpush1.msra.mxu0 0.0
    %1219 = vmatprep.subr.mxu0 0.0
    %1220 = vmatpush1.msra.mxu0 0.0
    %1221 = vmatprep.subr.mxu0 0.0
    %1222 = vmatpush1.msra.mxu0 0.0
    %1223 = vmatprep.subr.mxu0 0.0
    %v1224 = vand.u32 %v123, 4294901760
    %v1225 = vsub.f32 %v123, %v1224
    %v1226 = vand.u32 %v1225, 4294901760
    %1227 = vmatpush1.msra.mxu0 %v1226
    %1228 = vmatprep.subr.mxu0 0.0
    %v1229 = vand.u32 %v122, 4294901760
    %v1230 = vsub.f32 %v122, %v1229
    %v1231 = vand.u32 %v1230, 4294901760
    %1232 = vmatpush1.msra.mxu0 %v1231
    %1233 = vmatprep.subr.mxu0 0.0
    %v1234 = vand.u32 %v121, 4294901760
    %v1235 = vsub.f32 %v121, %v1234
    %v1236 = vand.u32 %v1235, 4294901760
    %1237 = vmatpush1.msra.mxu0 %v1236
    %1238 = vmatprep.subr.mxu0 0.0
    %v1239 = vand.u32 %v120, 4294901760
    %v1240 = vsub.f32 %v120, %v1239
    %v1241 = vand.u32 %v1240, 4294901760
    %1242 = vmatpush1.msra.mxu0 %v1241
    %1243 = vmatprep.subr.mxu0 0.0
    %1244 = vmatpush2.msra.mxu0 0.0
    %1245 = vmatprep.subr.mxu0 0.0
    %1246 = vmatpush2.msra.mxu0 0.0
    %1247 = vmatprep.subr.mxu0 0.0
    %1248 = vmatpush2.msra.mxu0 0.0
    %1249 = vmatprep.subr.mxu0 0.0
    %1250 = vmatpush2.msra.mxu0 0.0
    %1251 = vmatprep.subr.mxu0 0.0
    %1252 = vmatpush2.msra.mxu0 0.0
    %1253 = vmatprep.subr.mxu0 0.0
    %1254 = vmatpush2.msra.mxu0 0.0
    %1255 = vmatprep.subr.mxu0 0.0
    %1256 = vmatpush2.msra.mxu0 0.0
    %1257 = vmatprep.subr.mxu0 0.0
    %1258 = vmatpush2.msra.mxu0 0.0
    %1259 = vmatprep.subr.mxu0 0.0
    %1260 = vmatpush2.msra.mxu0 0.0
    %1261 = vmatprep.subr.mxu0 0.0
    %1262 = vmatpush2.msra.mxu0 0.0
    %1263 = vmatprep.subr.mxu0 0.0
    %1264 = vmatpush2.msra.mxu0 0.0
    %1265 = vmatprep.subr.mxu0 0.0
    %1266 = vmatpush2.msra.mxu0 0.0
    %1267 = vmatprep.subr.mxu0 0.0
    %1268 = vmatpush2.msra.mxu0 0.0
    %1269 = vmatprep.subr.mxu0 0.0
    %1270 = vmatpush2.msra.mxu0 0.0
    %1271 = vmatprep.subr.mxu0 0.0
    %1272 = vmatpush2.msra.mxu0 0.0
    %1273 = vmatprep.subr.mxu0 0.0
    %1274 = vmatpush2.msra.mxu0 0.0
    %1275 = vmatprep.mubr.f32.mxu0 0.0
    %v1276 = vand.u32 %v768, 4294901760
    %1277 = vmatmul.mubr.f32.gmra.mxu0 %v1276
    %v1278 = vpop.f32.mrf.mxu0
    %v1279 = vadd.f32 %v1172, %v1278
    %v1280 = vpop.f32.mrf.mxu0
    %1281 = vmatprep.mubr.f32.mxu0 0.0
    %v1282 = vand.u32 %v771, 4294901760
    %1283 = vmatmul.mubr.f32.gmra.mxu0 %v1282
    %v1284 = vpop.f32.mrf.mxu0
    %v1285 = vadd.f32 %v1180, %v1284
    %v1286 = vpop.f32.mrf.mxu0
    %1287 = vmatprep.mubr.f32.mxu0 0.0
    %v1288 = vand.u32 %v774, 4294901760
    %1289 = vmatmul.mubr.f32.gmra.mxu0 %v1288
    %v1290 = vpop.f32.mrf.mxu0
    %v1291 = vadd.f32 %v1188, %v1290
    %v1292 = vpop.f32.mrf.mxu0
    %1293 = vmatprep.mubr.f32.mxu0 0.0
    %v1294 = vand.u32 %v777, 4294901760
    %1295 = vmatmul.mubr.f32.gmra.mxu0 %v1294
    %v1296 = vpop.f32.mrf.mxu0
    %v1297 = vadd.f32 %v1196, %v1296
    %v1298 = vpop.f32.mrf.mxu0
    %1299 = vdwg.mxu0
    %1300 = vmatprep.subr.mxu0 0.0
    %1301 = vmatpush1.msra.mxu0 0.0
    %1302 = vmatprep.subr.mxu0 0.0
    %1303 = vmatpush1.msra.mxu0 0.0
    %1304 = vmatprep.subr.mxu0 0.0
    %1305 = vmatpush1.msra.mxu0 0.0
    %1306 = vmatprep.subr.mxu0 0.0
    %1307 = vmatpush1.msra.mxu0 0.0
    %1308 = vmatprep.subr.mxu0 0.0
    %1309 = vmatpush1.msra.mxu0 0.0
    %1310 = vmatprep.subr.mxu0 0.0
    %1311 = vmatpush1.msra.mxu0 0.0
    %1312 = vmatprep.subr.mxu0 0.0
    %1313 = vmatpush1.msra.mxu0 0.0
    %1314 = vmatprep.subr.mxu0 0.0
    %1315 = vmatpush1.msra.mxu0 0.0
    %1316 = vmatprep.subr.mxu0 0.0
    %1317 = vmatpush1.msra.mxu0 0.0
    %1318 = vmatprep.subr.mxu0 0.0
    %1319 = vmatpush1.msra.mxu0 0.0
    %1320 = vmatprep.subr.mxu0 0.0
    %1321 = vmatpush1.msra.mxu0 0.0
    %1322 = vmatprep.subr.mxu0 0.0
    %1323 = vmatpush1.msra.mxu0 0.0
    %1324 = vmatprep.subr.mxu0 0.0
    %v1325 = vand.u32 %v123, 4294901760
    %1326 = vmatpush1.msra.mxu0 %v1325
    %1327 = vmatprep.subr.mxu0 0.0
    %v1328 = vand.u32 %v122, 4294901760
    %1329 = vmatpush1.msra.mxu0 %v1328
    %1330 = vmatprep.subr.mxu0 0.0
    %v1331 = vand.u32 %v121, 4294901760
    %1332 = vmatpush1.msra.mxu0 %v1331
    %1333 = vmatprep.subr.mxu0 0.0
    %v1334 = vand.u32 %v120, 4294901760
    %1335 = vmatpush1.msra.mxu0 %v1334
    %1336 = vmatprep.subr.mxu0 0.0
    %1337 = vmatpush2.msra.mxu0 0.0
    %1338 = vmatprep.subr.mxu0 0.0
    %1339 = vmatpush2.msra.mxu0 0.0
    %1340 = vmatprep.subr.mxu0 0.0
    %1341 = vmatpush2.msra.mxu0 0.0
    %1342 = vmatprep.subr.mxu0 0.0
    %1343 = vmatpush2.msra.mxu0 0.0
    %1344 = vmatprep.subr.mxu0 0.0
    %1345 = vmatpush2.msra.mxu0 0.0
    %1346 = vmatprep.subr.mxu0 0.0
    %1347 = vmatpush2.msra.mxu0 0.0
    %1348 = vmatprep.subr.mxu0 0.0
    %1349 = vmatpush2.msra.mxu0 0.0
    %1350 = vmatprep.subr.mxu0 0.0
    %1351 = vmatpush2.msra.mxu0 0.0
    %1352 = vmatprep.subr.mxu0 0.0
    %1353 = vmatpush2.msra.mxu0 0.0
    %1354 = vmatprep.subr.mxu0 0.0
    %1355 = vmatpush2.msra.mxu0 0.0
    %1356 = vmatprep.subr.mxu0 0.0
    %1357 = vmatpush2.msra.mxu0 0.0
    %1358 = vmatprep.subr.mxu0 0.0
    %1359 = vmatpush2.msra.mxu0 0.0
    %1360 = vmatprep.subr.mxu0 0.0
    %1361 = vmatpush2.msra.mxu0 0.0
    %1362 = vmatprep.subr.mxu0 0.0
    %1363 = vmatpush2.msra.mxu0 0.0
    %1364 = vmatprep.subr.mxu0 0.0
    %1365 = vmatpush2.msra.mxu0 0.0
    %1366 = vmatprep.subr.mxu0 0.0
    %1367 = vmatpush2.msra.mxu0 0.0
    %1368 = vmatprep.mubr.f32.mxu0 0.0
    %v1369 = vand.u32 %v768, 4294901760
    %1370 = vmatmul.mubr.f32.gmra.mxu0 %v1369
    %v1371 = vpop.f32.mrf.mxu0
    %v1372 = vadd.f32 %v1279, %v1371
    %v1373 = vpop.f32.mrf.mxu0
    %1374 = vmatprep.mubr.f32.mxu0 0.0
    %v1375 = vand.u32 %v771, 4294901760
    %1376 = vmatmul.mubr.f32.gmra.mxu0 %v1375
    %v1377 = vpop.f32.mrf.mxu0
    %v1378 = vadd.f32 %v1285, %v1377
    %v1379 = vpop.f32.mrf.mxu0
    %1380 = vmatprep.mubr.f32.mxu0 0.0
    %v1381 = vand.u32 %v774, 4294901760
    %1382 = vmatmul.mubr.f32.gmra.mxu0 %v1381
    %v1383 = vpop.f32.mrf.mxu0
    %v1384 = vadd.f32 %v1291, %v1383
    %v1385 = vpop.f32.mrf.mxu0
    %1386 = vmatprep.mubr.f32.mxu0 0.0
    %v1387 = vand.u32 %v777, 4294901760
    %1388 = vmatmul.mubr.f32.gmra.mxu0 %v1387
    %v1389 = vpop.f32.mrf.mxu0
    %v1390 = vadd.f32 %v1297, %v1389
    %v1391 = vpop.f32.mrf.mxu0
    %1392 = vdwg.mxu0
    %v1393 = vld [vmem:[%s0 + $0x1] sm:$0xff]
    %v1394 = vld [vmem:[%s0 + $0x9] sm:$0xff]
    %v1395 = vld [vmem:[%s0 + $0x11] sm:$0xff]
    %v1396 = vld [vmem:[%s0 + $0x19] sm:$0xff]
    %v1398 = vsel %vm34, %v1393, 0
    %v1401 = vsel %vm34, %v1394, 0
    %v1404 = vsel %vm34, %v1395, 0
    %v1407 = vsel %vm34, %v1396, 0
    %1409 = vmatprep.subr.mxu0 0.0
    %1410 = vmatpush1.msra.mxu0 0.0
    %1411 = vmatprep.subr.mxu0 0.0
    %1412 = vmatpush1.msra.mxu0 0.0
    %1413 = vmatprep.subr.mxu0 0.0
    %1414 = vmatpush1.msra.mxu0 0.0
    %1415 = vmatprep.subr.mxu0 0.0
    %1416 = vmatpush1.msra.mxu0 0.0
    %1417 = vmatprep.subr.mxu0 0.0
    %1418 = vmatpush1.msra.mxu0 0.0
    %1419 = vmatprep.subr.mxu0 0.0
    %1420 = vmatpush1.msra.mxu0 0.0
    %1421 = vmatprep.subr.mxu0 0.0
    %1422 = vmatpush1.msra.mxu0 0.0
    %1423 = vmatprep.subr.mxu0 0.0
    %1424 = vmatpush1.msra.mxu0 0.0
    %1425 = vmatprep.subr.mxu0 0.0
    %1426 = vmatpush1.msra.mxu0 0.0
    %1427 = vmatprep.subr.mxu0 0.0
    %1428 = vmatpush1.msra.mxu0 0.0
    %1429 = vmatprep.subr.mxu0 0.0
    %1430 = vmatpush1.msra.mxu0 0.0
    %1431 = vmatprep.subr.mxu0 0.0
    %1432 = vmatpush1.msra.mxu0 0.0
    %1433 = vmatprep.subr.mxu0 0.0
    %v1434 = vand.u32 %v136, 4294901760
    %1435 = vmatpush1.msra.mxu0 %v1434
    %1436 = vmatprep.subr.mxu0 0.0
    %v1437 = vand.u32 %v135, 4294901760
    %1438 = vmatpush1.msra.mxu0 %v1437
    %1439 = vmatprep.subr.mxu0 0.0
    %v1440 = vand.u32 %v134, 4294901760
    %1441 = vmatpush1.msra.mxu0 %v1440
    %1442 = vmatprep.subr.mxu0 0.0
    %v1443 = vand.u32 %v133, 4294901760
    %1444 = vmatpush1.msra.mxu0 %v1443
    %1445 = vmatprep.subr.mxu0 0.0
    %1446 = vmatpush2.msra.mxu0 0.0
    %1447 = vmatprep.subr.mxu0 0.0
    %1448 = vmatpush2.msra.mxu0 0.0
    %1449 = vmatprep.subr.mxu0 0.0
    %1450 = vmatpush2.msra.mxu0 0.0
    %1451 = vmatprep.subr.mxu0 0.0
    %1452 = vmatpush2.msra.mxu0 0.0
    %1453 = vmatprep.subr.mxu0 0.0
    %1454 = vmatpush2.msra.mxu0 0.0
    %1455 = vmatprep.subr.mxu0 0.0
    %1456 = vmatpush2.msra.mxu0 0.0
    %1457 = vmatprep.subr.mxu0 0.0
    %1458 = vmatpush2.msra.mxu0 0.0
    %1459 = vmatprep.subr.mxu0 0.0
    %1460 = vmatpush2.msra.mxu0 0.0
    %1461 = vmatprep.subr.mxu0 0.0
    %1462 = vmatpush2.msra.mxu0 0.0
    %1463 = vmatprep.subr.mxu0 0.0
    %1464 = vmatpush2.msra.mxu0 0.0
    %1465 = vmatprep.subr.mxu0 0.0
    %1466 = vmatpush2.msra.mxu0 0.0
    %1467 = vmatprep.subr.mxu0 0.0
    %1468 = vmatpush2.msra.mxu0 0.0
    %1469 = vmatprep.subr.mxu0 0.0
    %1470 = vmatpush2.msra.mxu0 0.0
    %1471 = vmatprep.subr.mxu0 0.0
    %1472 = vmatpush2.msra.mxu0 0.0
    %1473 = vmatprep.subr.mxu0 0.0
    %1474 = vmatpush2.msra.mxu0 0.0
    %1475 = vmatprep.subr.mxu0 0.0
    %1476 = vmatpush2.msra.mxu0 0.0
    %1477 = vmatprep.mubr.f32.mxu0 0.0
    %v1478 = vand.u32 %v1398, 4294901760
    %v1479 = vsub.f32 %v1398, %v1478
    %v1480 = vand.u32 %v1479, 4294901760
    %v1481 = vsub.f32 %v1479, %v1480
    %v1482 = vand.u32 %v1481, 4294901760
    %1483 = vmatmul.mubr.f32.gmra.mxu0 %v1482
    %v1484 = vpop.f32.mrf.mxu0
    %v1485 = vadd.f32 0.0, %v1484
    %v1486 = vpop.f32.mrf.mxu0
    %1487 = vmatprep.mubr.f32.mxu0 0.0
    %v1488 = vand.u32 %v1401, 4294901760
    %v1489 = vsub.f32 %v1401, %v1488
    %v1490 = vand.u32 %v1489, 4294901760
    %v1491 = vsub.f32 %v1489, %v1490
    %v1492 = vand.u32 %v1491, 4294901760
    %1493 = vmatmul.mubr.f32.gmra.mxu0 %v1492
    %v1494 = vpop.f32.mrf.mxu0
    %v1495 = vadd.f32 0.0, %v1494
    %v1496 = vpop.f32.mrf.mxu0
    %1497 = vmatprep.mubr.f32.mxu0 0.0
    %v1498 = vand.u32 %v1404, 4294901760
    %v1499 = vsub.f32 %v1404, %v1498
    %v1500 = vand.u32 %v1499, 4294901760
    %v1501 = vsub.f32 %v1499, %v1500
    %v1502 = vand.u32 %v1501, 4294901760
    %1503 = vmatmul.mubr.f32.gmra.mxu0 %v1502
    %v1504 = vpop.f32.mrf.mxu0
    %v1505 = vadd.f32 0.0, %v1504
    %v1506 = vpop.f32.mrf.mxu0
    %1507 = vmatprep.mubr.f32.mxu0 0.0
    %v1508 = vand.u32 %v1407, 4294901760
    %v1509 = vsub.f32 %v1407, %v1508
    %v1510 = vand.u32 %v1509, 4294901760
    %v1511 = vsub.f32 %v1509, %v1510
    %v1512 = vand.u32 %v1511, 4294901760
    %1513 = vmatmul.mubr.f32.gmra.mxu0 %v1512
    %v1514 = vpop.f32.mrf.mxu0
    %v1515 = vadd.f32 0.0, %v1514
    %v1516 = vpop.f32.mrf.mxu0
    %1517 = vdwg.mxu0
    %1518 = vmatprep.subr.mxu0 0.0
    %1519 = vmatpush1.msra.mxu0 0.0
    %1520 = vmatprep.subr.mxu0 0.0
    %1521 = vmatpush1.msra.mxu0 0.0
    %1522 = vmatprep.subr.mxu0 0.0
    %1523 = vmatpush1.msra.mxu0 0.0
    %1524 = vmatprep.subr.mxu0 0.0
    %1525 = vmatpush1.msra.mxu0 0.0
    %1526 = vmatprep.subr.mxu0 0.0
    %1527 = vmatpush1.msra.mxu0 0.0
    %1528 = vmatprep.subr.mxu0 0.0
    %1529 = vmatpush1.msra.mxu0 0.0
    %1530 = vmatprep.subr.mxu0 0.0
    %1531 = vmatpush1.msra.mxu0 0.0
    %1532 = vmatprep.subr.mxu0 0.0
    %1533 = vmatpush1.msra.mxu0 0.0
    %1534 = vmatprep.subr.mxu0 0.0
    %1535 = vmatpush1.msra.mxu0 0.0
    %1536 = vmatprep.subr.mxu0 0.0
    %1537 = vmatpush1.msra.mxu0 0.0
    %1538 = vmatprep.subr.mxu0 0.0
    %1539 = vmatpush1.msra.mxu0 0.0
    %1540 = vmatprep.subr.mxu0 0.0
    %1541 = vmatpush1.msra.mxu0 0.0
    %1542 = vmatprep.subr.mxu0 0.0
    %v1543 = vand.u32 %v136, 4294901760
    %v1544 = vsub.f32 %v136, %v1543
    %v1545 = vand.u32 %v1544, 4294901760
    %v1546 = vsub.f32 %v1544, %v1545
    %v1547 = vand.u32 %v1546, 4294901760
    %1548 = vmatpush1.msra.mxu0 %v1547
    %1549 = vmatprep.subr.mxu0 0.0
    %v1550 = vand.u32 %v135, 4294901760
    %v1551 = vsub.f32 %v135, %v1550
    %v1552 = vand.u32 %v1551, 4294901760
    %v1553 = vsub.f32 %v1551, %v1552
    %v1554 = vand.u32 %v1553, 4294901760
    %1555 = vmatpush1.msra.mxu0 %v1554
    %1556 = vmatprep.subr.mxu0 0.0
    %v1557 = vand.u32 %v134, 4294901760
    %v1558 = vsub.f32 %v134, %v1557
    %v1559 = vand.u32 %v1558, 4294901760
    %v1560 = vsub.f32 %v1558, %v1559
    %v1561 = vand.u32 %v1560, 4294901760
    %1562 = vmatpush1.msra.mxu0 %v1561
    %1563 = vmatprep.subr.mxu0 0.0
    %v1564 = vand.u32 %v133, 4294901760
    %v1565 = vsub.f32 %v133, %v1564
    %v1566 = vand.u32 %v1565, 4294901760
    %v1567 = vsub.f32 %v1565, %v1566
    %v1568 = vand.u32 %v1567, 4294901760
    %1569 = vmatpush1.msra.mxu0 %v1568
    %1570 = vmatprep.subr.mxu0 0.0
    %1571 = vmatpush2.msra.mxu0 0.0
    %1572 = vmatprep.subr.mxu0 0.0
    %1573 = vmatpush2.msra.mxu0 0.0
    %1574 = vmatprep.subr.mxu0 0.0
    %1575 = vmatpush2.msra.mxu0 0.0
    %1576 = vmatprep.subr.mxu0 0.0
    %1577 = vmatpush2.msra.mxu0 0.0
    %1578 = vmatprep.subr.mxu0 0.0
    %1579 = vmatpush2.msra.mxu0 0.0
    %1580 = vmatprep.subr.mxu0 0.0
    %1581 = vmatpush2.msra.mxu0 0.0
    %1582 = vmatprep.subr.mxu0 0.0
    %1583 = vmatpush2.msra.mxu0 0.0
    %1584 = vmatprep.subr.mxu0 0.0
    %1585 = vmatpush2.msra.mxu0 0.0
    %1586 = vmatprep.subr.mxu0 0.0
    %1587 = vmatpush2.msra.mxu0 0.0
    %1588 = vmatprep.subr.mxu0 0.0
    %1589 = vmatpush2.msra.mxu0 0.0
    %1590 = vmatprep.subr.mxu0 0.0
    %1591 = vmatpush2.msra.mxu0 0.0
    %1592 = vmatprep.subr.mxu0 0.0
    %1593 = vmatpush2.msra.mxu0 0.0
    %1594 = vmatprep.subr.mxu0 0.0
    %1595 = vmatpush2.msra.mxu0 0.0
    %1596 = vmatprep.subr.mxu0 0.0
    %1597 = vmatpush2.msra.mxu0 0.0
    %1598 = vmatprep.subr.mxu0 0.0
    %1599 = vmatpush2.msra.mxu0 0.0
    %1600 = vmatprep.subr.mxu0 0.0
    %1601 = vmatpush2.msra.mxu0 0.0
    %1602 = vmatprep.mubr.f32.mxu0 0.0
    %v1603 = vand.u32 %v1398, 4294901760
    %1604 = vmatmul.mubr.f32.gmra.mxu0 %v1603
    %v1605 = vpop.f32.mrf.mxu0
    %v1606 = vadd.f32 %v1485, %v1605
    %v1607 = vpop.f32.mrf.mxu0
    %1608 = vmatprep.mubr.f32.mxu0 0.0
    %v1609 = vand.u32 %v1401, 4294901760
    %1610 = vmatmul.mubr.f32.gmra.mxu0 %v1609
    %v1611 = vpop.f32.mrf.mxu0
    %v1612 = vadd.f32 %v1495, %v1611
    %v1613 = vpop.f32.mrf.mxu0
    %1614 = vmatprep.mubr.f32.mxu0 0.0
    %v1615 = vand.u32 %v1404, 4294901760
    %1616 = vmatmul.mubr.f32.gmra.mxu0 %v1615
    %v1617 = vpop.f32.mrf.mxu0
    %v1618 = vadd.f32 %v1505, %v1617
    %v1619 = vpop.f32.mrf.mxu0
    %1620 = vmatprep.mubr.f32.mxu0 0.0
    %v1621 = vand.u32 %v1407, 4294901760
    %1622 = vmatmul.mubr.f32.gmra.mxu0 %v1621
    %v1623 = vpop.f32.mrf.mxu0
    %v1624 = vadd.f32 %v1515, %v1623
    %v1625 = vpop.f32.mrf.mxu0
    %1626 = vdwg.mxu0
    %1627 = vmatprep.subr.mxu0 0.0
    %1628 = vmatpush1.msra.mxu0 0.0
    %1629 = vmatprep.subr.mxu0 0.0
    %1630 = vmatpush1.msra.mxu0 0.0
    %1631 = vmatprep.subr.mxu0 0.0
    %1632 = vmatpush1.msra.mxu0 0.0
    %1633 = vmatprep.subr.mxu0 0.0
    %1634 = vmatpush1.msra.mxu0 0.0
    %1635 = vmatprep.subr.mxu0 0.0
    %1636 = vmatpush1.msra.mxu0 0.0
    %1637 = vmatprep.subr.mxu0 0.0
    %1638 = vmatpush1.msra.mxu0 0.0
    %1639 = vmatprep.subr.mxu0 0.0
    %1640 = vmatpush1.msra.mxu0 0.0
    %1641 = vmatprep.subr.mxu0 0.0
    %1642 = vmatpush1.msra.mxu0 0.0
    %1643 = vmatprep.subr.mxu0 0.0
    %1644 = vmatpush1.msra.mxu0 0.0
    %1645 = vmatprep.subr.mxu0 0.0
    %1646 = vmatpush1.msra.mxu0 0.0
    %1647 = vmatprep.subr.mxu0 0.0
    %1648 = vmatpush1.msra.mxu0 0.0
    %1649 = vmatprep.subr.mxu0 0.0
    %1650 = vmatpush1.msra.mxu0 0.0
    %1651 = vmatprep.subr.mxu0 0.0
    %v1652 = vand.u32 %v136, 4294901760
    %v1653 = vsub.f32 %v136, %v1652
    %1654 = vmatpush1.msra.mxu0 %v1653
    %1655 = vmatprep.subr.mxu0 0.0
    %v1656 = vand.u32 %v135, 4294901760
    %v1657 = vsub.f32 %v135, %v1656
    %1658 = vmatpush1.msra.mxu0 %v1657
    %1659 = vmatprep.subr.mxu0 0.0
    %v1660 = vand.u32 %v134, 4294901760
    %v1661 = vsub.f32 %v134, %v1660
    %1662 = vmatpush1.msra.mxu0 %v1661
    %1663 = vmatprep.subr.mxu0 0.0
    %v1664 = vand.u32 %v133, 4294901760
    %v1665 = vsub.f32 %v133, %v1664
    %1666 = vmatpush1.msra.mxu0 %v1665
    %1667 = vmatprep.subr.mxu0 0.0
    %1668 = vmatpush2.msra.mxu0 0.0
    %1669 = vmatprep.subr.mxu0 0.0
    %1670 = vmatpush2.msra.mxu0 0.0
    %1671 = vmatprep.subr.mxu0 0.0
    %1672 = vmatpush2.msra.mxu0 0.0
    %1673 = vmatprep.subr.mxu0 0.0
    %1674 = vmatpush2.msra.mxu0 0.0
    %1675 = vmatprep.subr.mxu0 0.0
    %1676 = vmatpush2.msra.mxu0 0.0
    %1677 = vmatprep.subr.mxu0 0.0
    %1678 = vmatpush2.msra.mxu0 0.0
    %1679 = vmatprep.subr.mxu0 0.0
    %1680 = vmatpush2.msra.mxu0 0.0
    %1681 = vmatprep.subr.mxu0 0.0
    %1682 = vmatpush2.msra.mxu0 0.0
    %1683 = vmatprep.subr.mxu0 0.0
    %1684 = vmatpush2.msra.mxu0 0.0
    %1685 = vmatprep.subr.mxu0 0.0
    %1686 = vmatpush2.msra.mxu0 0.0
    %1687 = vmatprep.subr.mxu0 0.0
    %1688 = vmatpush2.msra.mxu0 0.0
    %1689 = vmatprep.subr.mxu0 0.0
    %1690 = vmatpush2.msra.mxu0 0.0
    %1691 = vmatprep.subr.mxu0 0.0
    %1692 = vmatpush2.msra.mxu0 0.0
    %1693 = vmatprep.subr.mxu0 0.0
    %1694 = vmatpush2.msra.mxu0 0.0
    %1695 = vmatprep.subr.mxu0 0.0
    %1696 = vmatpush2.msra.mxu0 0.0
    %1697 = vmatprep.subr.mxu0 0.0
    %1698 = vmatpush2.msra.mxu0 0.0
    %1699 = vmatprep.mubr.f32.mxu0 0.0
    %v1700 = vand.u32 %v1398, 4294901760
    %v1701 = vsub.f32 %v1398, %v1700
    %1702 = vmatmul.mubr.f32.gmra.mxu0 %v1701
    %v1703 = vpop.f32.mrf.mxu0
    %v1704 = vadd.f32 %v1606, %v1703
    %v1705 = vpop.f32.mrf.mxu0
    %1706 = vmatprep.mubr.f32.mxu0 0.0
    %v1707 = vand.u32 %v1401, 4294901760
    %v1708 = vsub.f32 %v1401, %v1707
    %1709 = vmatmul.mubr.f32.gmra.mxu0 %v1708
    %v1710 = vpop.f32.mrf.mxu0
    %v1711 = vadd.f32 %v1612, %v1710
    %v1712 = vpop.f32.mrf.mxu0
    %1713 = vmatprep.mubr.f32.mxu0 0.0
    %v1714 = vand.u32 %v1404, 4294901760
    %v1715 = vsub.f32 %v1404, %v1714
    %1716 = vmatmul.mubr.f32.gmra.mxu0 %v1715
    %v1717 = vpop.f32.mrf.mxu0
    %v1718 = vadd.f32 %v1618, %v1717
    %v1719 = vpop.f32.mrf.mxu0
    %1720 = vmatprep.mubr.f32.mxu0 0.0
    %v1721 = vand.u32 %v1407, 4294901760
    %v1722 = vsub.f32 %v1407, %v1721
    %1723 = vmatmul.mubr.f32.gmra.mxu0 %v1722
    %v1724 = vpop.f32.mrf.mxu0
    %v1725 = vadd.f32 %v1624, %v1724
    %v1726 = vpop.f32.mrf.mxu0
    %1727 = vdwg.mxu0
    %1728 = vmatprep.subr.mxu0 0.0
    %1729 = vmatpush1.msra.mxu0 0.0
    %1730 = vmatprep.subr.mxu0 0.0
    %1731 = vmatpush1.msra.mxu0 0.0
    %1732 = vmatprep.subr.mxu0 0.0
    %1733 = vmatpush1.msra.mxu0 0.0
    %1734 = vmatprep.subr.mxu0 0.0
    %1735 = vmatpush1.msra.mxu0 0.0
    %1736 = vmatprep.subr.mxu0 0.0
    %1737 = vmatpush1.msra.mxu0 0.0
    %1738 = vmatprep.subr.mxu0 0.0
    %1739 = vmatpush1.msra.mxu0 0.0
    %1740 = vmatprep.subr.mxu0 0.0
    %1741 = vmatpush1.msra.mxu0 0.0
    %1742 = vmatprep.subr.mxu0 0.0
    %1743 = vmatpush1.msra.mxu0 0.0
    %1744 = vmatprep.subr.mxu0 0.0
    %1745 = vmatpush1.msra.mxu0 0.0
    %1746 = vmatprep.subr.mxu0 0.0
    %1747 = vmatpush1.msra.mxu0 0.0
    %1748 = vmatprep.subr.mxu0 0.0
    %1749 = vmatpush1.msra.mxu0 0.0
    %1750 = vmatprep.subr.mxu0 0.0
    %1751 = vmatpush1.msra.mxu0 0.0
    %1752 = vmatprep.subr.mxu0 0.0
    %v1753 = vand.u32 %v136, 4294901760
    %1754 = vmatpush1.msra.mxu0 %v1753
    %1755 = vmatprep.subr.mxu0 0.0
    %v1756 = vand.u32 %v135, 4294901760
    %1757 = vmatpush1.msra.mxu0 %v1756
    %1758 = vmatprep.subr.mxu0 0.0
    %v1759 = vand.u32 %v134, 4294901760
    %1760 = vmatpush1.msra.mxu0 %v1759
    %1761 = vmatprep.subr.mxu0 0.0
    %v1762 = vand.u32 %v133, 4294901760
    %1763 = vmatpush1.msra.mxu0 %v1762
    %1764 = vmatprep.subr.mxu0 0.0
    %1765 = vmatpush2.msra.mxu0 0.0
    %1766 = vmatprep.subr.mxu0 0.0
    %1767 = vmatpush2.msra.mxu0 0.0
    %1768 = vmatprep.subr.mxu0 0.0
    %1769 = vmatpush2.msra.mxu0 0.0
    %1770 = vmatprep.subr.mxu0 0.0
    %1771 = vmatpush2.msra.mxu0 0.0
    %1772 = vmatprep.subr.mxu0 0.0
    %1773 = vmatpush2.msra.mxu0 0.0
    %1774 = vmatprep.subr.mxu0 0.0
    %1775 = vmatpush2.msra.mxu0 0.0
    %1776 = vmatprep.subr.mxu0 0.0
    %1777 = vmatpush2.msra.mxu0 0.0
    %1778 = vmatprep.subr.mxu0 0.0
    %1779 = vmatpush2.msra.mxu0 0.0
    %1780 = vmatprep.subr.mxu0 0.0
    %1781 = vmatpush2.msra.mxu0 0.0
    %1782 = vmatprep.subr.mxu0 0.0
    %1783 = vmatpush2.msra.mxu0 0.0
    %1784 = vmatprep.subr.mxu0 0.0
    %1785 = vmatpush2.msra.mxu0 0.0
    %1786 = vmatprep.subr.mxu0 0.0
    %1787 = vmatpush2.msra.mxu0 0.0
    %1788 = vmatprep.subr.mxu0 0.0
    %1789 = vmatpush2.msra.mxu0 0.0
    %1790 = vmatprep.subr.mxu0 0.0
    %1791 = vmatpush2.msra.mxu0 0.0
    %1792 = vmatprep.subr.mxu0 0.0
    %1793 = vmatpush2.msra.mxu0 0.0
    %1794 = vmatprep.subr.mxu0 0.0
    %1795 = vmatpush2.msra.mxu0 0.0
    %1796 = vmatprep.mubr.f32.mxu0 0.0
    %v1797 = vand.u32 %v1398, 4294901760
    %v1798 = vsub.f32 %v1398, %v1797
    %v1799 = vand.u32 %v1798, 4294901760
    %1800 = vmatmul.mubr.f32.gmra.mxu0 %v1799
    %v1801 = vpop.f32.mrf.mxu0
    %v1802 = vadd.f32 %v1704, %v1801
    %v1803 = vpop.f32.mrf.mxu0
    %1804 = vmatprep.mubr.f32.mxu0 0.0
    %v1805 = vand.u32 %v1401, 4294901760
    %v1806 = vsub.f32 %v1401, %v1805
    %v1807 = vand.u32 %v1806, 4294901760
    %1808 = vmatmul.mubr.f32.gmra.mxu0 %v1807
    %v1809 = vpop.f32.mrf.mxu0
    %v1810 = vadd.f32 %v1711, %v1809
    %v1811 = vpop.f32.mrf.mxu0
    %1812 = vmatprep.mubr.f32.mxu0 0.0
    %v1813 = vand.u32 %v1404, 4294901760
    %v1814 = vsub.f32 %v1404, %v1813
    %v1815 = vand.u32 %v1814, 4294901760
    %1816 = vmatmul.mubr.f32.gmra.mxu0 %v1815
    %v1817 = vpop.f32.mrf.mxu0
    %v1818 = vadd.f32 %v1718, %v1817
    %v1819 = vpop.f32.mrf.mxu0
    %1820 = vmatprep.mubr.f32.mxu0 0.0
    %v1821 = vand.u32 %v1407, 4294901760
    %v1822 = vsub.f32 %v1407, %v1821
    %v1823 = vand.u32 %v1822, 4294901760
    %1824 = vmatmul.mubr.f32.gmra.mxu0 %v1823
    %v1825 = vpop.f32.mrf.mxu0
    %v1826 = vadd.f32 %v1725, %v1825
    %v1827 = vpop.f32.mrf.mxu0
    %1828 = vdwg.mxu0
    %1829 = vmatprep.subr.mxu0 0.0
    %1830 = vmatpush1.msra.mxu0 0.0
    %1831 = vmatprep.subr.mxu0 0.0
    %1832 = vmatpush1.msra.mxu0 0.0
    %1833 = vmatprep.subr.mxu0 0.0
    %1834 = vmatpush1.msra.mxu0 0.0
    %1835 = vmatprep.subr.mxu0 0.0
    %1836 = vmatpush1.msra.mxu0 0.0
    %1837 = vmatprep.subr.mxu0 0.0
    %1838 = vmatpush1.msra.mxu0 0.0
    %1839 = vmatprep.subr.mxu0 0.0
    %1840 = vmatpush1.msra.mxu0 0.0
    %1841 = vmatprep.subr.mxu0 0.0
    %1842 = vmatpush1.msra.mxu0 0.0
    %1843 = vmatprep.subr.mxu0 0.0
    %1844 = vmatpush1.msra.mxu0 0.0
    %1845 = vmatprep.subr.mxu0 0.0
    %1846 = vmatpush1.msra.mxu0 0.0
    %1847 = vmatprep.subr.mxu0 0.0
    %1848 = vmatpush1.msra.mxu0 0.0
    %1849 = vmatprep.subr.mxu0 0.0
    %1850 = vmatpush1.msra.mxu0 0.0
    %1851 = vmatprep.subr.mxu0 0.0
    %1852 = vmatpush1.msra.mxu0 0.0
    %1853 = vmatprep.subr.mxu0 0.0
    %v1854 = vand.u32 %v136, 4294901760
    %v1855 = vsub.f32 %v136, %v1854
    %v1856 = vand.u32 %v1855, 4294901760
    %1857 = vmatpush1.msra.mxu0 %v1856
    %1858 = vmatprep.subr.mxu0 0.0
    %v1859 = vand.u32 %v135, 4294901760
    %v1860 = vsub.f32 %v135, %v1859
    %v1861 = vand.u32 %v1860, 4294901760
    %1862 = vmatpush1.msra.mxu0 %v1861
    %1863 = vmatprep.subr.mxu0 0.0
    %v1864 = vand.u32 %v134, 4294901760
    %v1865 = vsub.f32 %v134, %v1864
    %v1866 = vand.u32 %v1865, 4294901760
    %1867 = vmatpush1.msra.mxu0 %v1866
    %1868 = vmatprep.subr.mxu0 0.0
    %v1869 = vand.u32 %v133, 4294901760
    %v1870 = vsub.f32 %v133, %v1869
    %v1871 = vand.u32 %v1870, 4294901760
    %1872 = vmatpush1.msra.mxu0 %v1871
    %1873 = vmatprep.subr.mxu0 0.0
    %1874 = vmatpush2.msra.mxu0 0.0
    %1875 = vmatprep.subr.mxu0 0.0
    %1876 = vmatpush2.msra.mxu0 0.0
    %1877 = vmatprep.subr.mxu0 0.0
    %1878 = vmatpush2.msra.mxu0 0.0
    %1879 = vmatprep.subr.mxu0 0.0
    %1880 = vmatpush2.msra.mxu0 0.0
    %1881 = vmatprep.subr.mxu0 0.0
    %1882 = vmatpush2.msra.mxu0 0.0
    %1883 = vmatprep.subr.mxu0 0.0
    %1884 = vmatpush2.msra.mxu0 0.0
    %1885 = vmatprep.subr.mxu0 0.0
    %1886 = vmatpush2.msra.mxu0 0.0
    %1887 = vmatprep.subr.mxu0 0.0
    %1888 = vmatpush2.msra.mxu0 0.0
    %1889 = vmatprep.subr.mxu0 0.0
    %1890 = vmatpush2.msra.mxu0 0.0
    %1891 = vmatprep.subr.mxu0 0.0
    %1892 = vmatpush2.msra.mxu0 0.0
    %1893 = vmatprep.subr.mxu0 0.0
    %1894 = vmatpush2.msra.mxu0 0.0
    %1895 = vmatprep.subr.mxu0 0.0
    %1896 = vmatpush2.msra.mxu0 0.0
    %1897 = vmatprep.subr.mxu0 0.0
    %1898 = vmatpush2.msra.mxu0 0.0
    %1899 = vmatprep.subr.mxu0 0.0
    %1900 = vmatpush2.msra.mxu0 0.0
    %1901 = vmatprep.subr.mxu0 0.0
    %1902 = vmatpush2.msra.mxu0 0.0
    %1903 = vmatprep.subr.mxu0 0.0
    %1904 = vmatpush2.msra.mxu0 0.0
    %1905 = vmatprep.mubr.f32.mxu0 0.0
    %v1906 = vand.u32 %v1398, 4294901760
    %1907 = vmatmul.mubr.f32.gmra.mxu0 %v1906
    %v1908 = vpop.f32.mrf.mxu0
    %v1909 = vadd.f32 %v1802, %v1908
    %v1910 = vpop.f32.mrf.mxu0
    %1911 = vmatprep.mubr.f32.mxu0 0.0
    %v1912 = vand.u32 %v1401, 4294901760
    %1913 = vmatmul.mubr.f32.gmra.mxu0 %v1912
    %v1914 = vpop.f32.mrf.mxu0
    %v1915 = vadd.f32 %v1810, %v1914
    %v1916 = vpop.f32.mrf.mxu0
    %1917 = vmatprep.mubr.f32.mxu0 0.0
    %v1918 = vand.u32 %v1404, 4294901760
    %1919 = vmatmul.mubr.f32.gmra.mxu0 %v1918
    %v1920 = vpop.f32.mrf.mxu0
    %v1921 = vadd.f32 %v1818, %v1920
    %v1922 = vpop.f32.mrf.mxu0
    %1923 = vmatprep.mubr.f32.mxu0 0.0
    %v1924 = vand.u32 %v1407, 4294901760
    %1925 = vmatmul.mubr.f32.gmra.mxu0 %v1924
    %v1926 = vpop.f32.mrf.mxu0
    %v1927 = vadd.f32 %v1826, %v1926
    %v1928 = vpop.f32.mrf.mxu0
    %1929 = vdwg.mxu0
    %1930 = vmatprep.subr.mxu0 0.0
    %1931 = vmatpush1.msra.mxu0 0.0
    %1932 = vmatprep.subr.mxu0 0.0
    %1933 = vmatpush1.msra.mxu0 0.0
    %1934 = vmatprep.subr.mxu0 0.0
    %1935 = vmatpush1.msra.mxu0 0.0
    %1936 = vmatprep.subr.mxu0 0.0
    %1937 = vmatpush1.msra.mxu0 0.0
    %1938 = vmatprep.subr.mxu0 0.0
    %1939 = vmatpush1.msra.mxu0 0.0
    %1940 = vmatprep.subr.mxu0 0.0
    %1941 = vmatpush1.msra.mxu0 0.0
    %1942 = vmatprep.subr.mxu0 0.0
    %1943 = vmatpush1.msra.mxu0 0.0
    %1944 = vmatprep.subr.mxu0 0.0
    %1945 = vmatpush1.msra.mxu0 0.0
    %1946 = vmatprep.subr.mxu0 0.0
    %1947 = vmatpush1.msra.mxu0 0.0
    %1948 = vmatprep.subr.mxu0 0.0
    %1949 = vmatpush1.msra.mxu0 0.0
    %1950 = vmatprep.subr.mxu0 0.0
    %1951 = vmatpush1.msra.mxu0 0.0
    %1952 = vmatprep.subr.mxu0 0.0
    %1953 = vmatpush1.msra.mxu0 0.0
    %1954 = vmatprep.subr.mxu0 0.0
    %v1955 = vand.u32 %v136, 4294901760
    %1956 = vmatpush1.msra.mxu0 %v1955
    %1957 = vmatprep.subr.mxu0 0.0
    %v1958 = vand.u32 %v135, 4294901760
    %1959 = vmatpush1.msra.mxu0 %v1958
    %1960 = vmatprep.subr.mxu0 0.0
    %v1961 = vand.u32 %v134, 4294901760
    %1962 = vmatpush1.msra.mxu0 %v1961
    %1963 = vmatprep.subr.mxu0 0.0
    %v1964 = vand.u32 %v133, 4294901760
    %1965 = vmatpush1.msra.mxu0 %v1964
    %1966 = vmatprep.subr.mxu0 0.0
    %1967 = vmatpush2.msra.mxu0 0.0
    %1968 = vmatprep.subr.mxu0 0.0
    %1969 = vmatpush2.msra.mxu0 0.0
    %1970 = vmatprep.subr.mxu0 0.0
    %1971 = vmatpush2.msra.mxu0 0.0
    %1972 = vmatprep.subr.mxu0 0.0
    %1973 = vmatpush2.msra.mxu0 0.0
    %1974 = vmatprep.subr.mxu0 0.0
    %1975 = vmatpush2.msra.mxu0 0.0
    %1976 = vmatprep.subr.mxu0 0.0
    %1977 = vmatpush2.msra.mxu0 0.0
    %1978 = vmatprep.subr.mxu0 0.0
    %1979 = vmatpush2.msra.mxu0 0.0
    %1980 = vmatprep.subr.mxu0 0.0
    %1981 = vmatpush2.msra.mxu0 0.0
    %1982 = vmatprep.subr.mxu0 0.0
    %1983 = vmatpush2.msra.mxu0 0.0
    %1984 = vmatprep.subr.mxu0 0.0
    %1985 = vmatpush2.msra.mxu0 0.0
    %1986 = vmatprep.subr.mxu0 0.0
    %1987 = vmatpush2.msra.mxu0 0.0
    %1988 = vmatprep.subr.mxu0 0.0
    %1989 = vmatpush2.msra.mxu0 0.0
    %1990 = vmatprep.subr.mxu0 0.0
    %1991 = vmatpush2.msra.mxu0 0.0
    %1992 = vmatprep.subr.mxu0 0.0
    %1993 = vmatpush2.msra.mxu0 0.0
    %1994 = vmatprep.subr.mxu0 0.0
    %1995 = vmatpush2.msra.mxu0 0.0
    %1996 = vmatprep.subr.mxu0 0.0
    %1997 = vmatpush2.msra.mxu0 0.0
    %1998 = vmatprep.mubr.f32.mxu0 0.0
    %v1999 = vand.u32 %v1398, 4294901760
    %2000 = vmatmul.mubr.f32.gmra.mxu0 %v1999
    %v2001 = vpop.f32.mrf.mxu0
    %v2002 = vadd.f32 %v1909, %v2001
    %v2003 = vpop.f32.mrf.mxu0
    %2004 = vmatprep.mubr.f32.mxu0 0.0
    %v2005 = vand.u32 %v1401, 4294901760
    %2006 = vmatmul.mubr.f32.gmra.mxu0 %v2005
    %v2007 = vpop.f32.mrf.mxu0
    %v2008 = vadd.f32 %v1915, %v2007
    %v2009 = vpop.f32.mrf.mxu0
    %2010 = vmatprep.mubr.f32.mxu0 0.0
    %v2011 = vand.u32 %v1404, 4294901760
    %2012 = vmatmul.mubr.f32.gmra.mxu0 %v2011
    %v2013 = vpop.f32.mrf.mxu0
    %v2014 = vadd.f32 %v1921, %v2013
    %v2015 = vpop.f32.mrf.mxu0
    %2016 = vmatprep.mubr.f32.mxu0 0.0
    %v2017 = vand.u32 %v1407, 4294901760
    %2018 = vmatmul.mubr.f32.gmra.mxu0 %v2017
    %v2019 = vpop.f32.mrf.mxu0
    %v2020 = vadd.f32 %v1927, %v2019
    %v2021 = vpop.f32.mrf.mxu0
    %2022 = vdwg.mxu0
    %v2024 = vsel %vm34, %v128, 0
    %v2027 = vsel %vm34, %v129, 0
    %v2030 = vsel %vm34, %v130, 0
    %v2033 = vsel %vm34, %v131, 0
    %2035 = vmatprep.subr.mxu0 0.0
    %2036 = vmatpush1.msra.mxu0 0.0
    %2037 = vmatprep.subr.mxu0 0.0
    %2038 = vmatpush1.msra.mxu0 0.0
    %2039 = vmatprep.subr.mxu0 0.0
    %2040 = vmatpush1.msra.mxu0 0.0
    %2041 = vmatprep.subr.mxu0 0.0
    %2042 = vmatpush1.msra.mxu0 0.0
    %2043 = vmatprep.subr.mxu0 0.0
    %2044 = vmatpush1.msra.mxu0 0.0
    %2045 = vmatprep.subr.mxu0 0.0
    %2046 = vmatpush1.msra.mxu0 0.0
    %2047 = vmatprep.subr.mxu0 0.0
    %2048 = vmatpush1.msra.mxu0 0.0
    %2049 = vmatprep.subr.mxu0 0.0
    %2050 = vmatpush1.msra.mxu0 0.0
    %2051 = vmatprep.subr.mxu0 0.0
    %2052 = vmatpush1.msra.mxu0 0.0
    %2053 = vmatprep.subr.mxu0 0.0
    %2054 = vmatpush1.msra.mxu0 0.0
    %2055 = vmatprep.subr.mxu0 0.0
    %2056 = vmatpush1.msra.mxu0 0.0
    %2057 = vmatprep.subr.mxu0 0.0
    %2058 = vmatpush1.msra.mxu0 0.0
    %2059 = vmatprep.subr.mxu0 0.0
    %v2060 = vand.u32 %v123, 4294901760
    %2061 = vmatpush1.msra.mxu0 %v2060
    %2062 = vmatprep.subr.mxu0 0.0
    %v2063 = vand.u32 %v122, 4294901760
    %2064 = vmatpush1.msra.mxu0 %v2063
    %2065 = vmatprep.subr.mxu0 0.0
    %v2066 = vand.u32 %v121, 4294901760
    %2067 = vmatpush1.msra.mxu0 %v2066
    %2068 = vmatprep.subr.mxu0 0.0
    %v2069 = vand.u32 %v120, 4294901760
    %2070 = vmatpush1.msra.mxu0 %v2069
    %2071 = vmatprep.subr.mxu0 0.0
    %2072 = vmatpush2.msra.mxu0 0.0
    %2073 = vmatprep.subr.mxu0 0.0
    %2074 = vmatpush2.msra.mxu0 0.0
    %2075 = vmatprep.subr.mxu0 0.0
    %2076 = vmatpush2.msra.mxu0 0.0
    %2077 = vmatprep.subr.mxu0 0.0
    %2078 = vmatpush2.msra.mxu0 0.0
    %2079 = vmatprep.subr.mxu0 0.0
    %2080 = vmatpush2.msra.mxu0 0.0
    %2081 = vmatprep.subr.mxu0 0.0
    %2082 = vmatpush2.msra.mxu0 0.0
    %2083 = vmatprep.subr.mxu0 0.0
    %2084 = vmatpush2.msra.mxu0 0.0
    %2085 = vmatprep.subr.mxu0 0.0
    %2086 = vmatpush2.msra.mxu0 0.0
    %2087 = vmatprep.subr.mxu0 0.0
    %2088 = vmatpush2.msra.mxu0 0.0
    %2089 = vmatprep.subr.mxu0 0.0
    %2090 = vmatpush2.msra.mxu0 0.0
    %2091 = vmatprep.subr.mxu0 0.0
    %2092 = vmatpush2.msra.mxu0 0.0
    %2093 = vmatprep.subr.mxu0 0.0
    %2094 = vmatpush2.msra.mxu0 0.0
    %2095 = vmatprep.subr.mxu0 0.0
    %2096 = vmatpush2.msra.mxu0 0.0
    %2097 = vmatprep.subr.mxu0 0.0
    %2098 = vmatpush2.msra.mxu0 0.0
    %2099 = vmatprep.subr.mxu0 0.0
    %2100 = vmatpush2.msra.mxu0 0.0
    %2101 = vmatprep.subr.mxu0 0.0
    %2102 = vmatpush2.msra.mxu0 0.0
    %2103 = vmatprep.mubr.f32.mxu0 0.0
    %v2104 = vand.u32 %v2024, 4294901760
    %v2105 = vsub.f32 %v2024, %v2104
    %v2106 = vand.u32 %v2105, 4294901760
    %v2107 = vsub.f32 %v2105, %v2106
    %v2108 = vand.u32 %v2107, 4294901760
    %2109 = vmatmul.mubr.f32.gmra.mxu0 %v2108
    %v2110 = vpop.f32.mrf.mxu0
    %v2111 = vadd.f32 %v2002, %v2110
    %v2112 = vpop.f32.mrf.mxu0
    %2113 = vmatprep.mubr.f32.mxu0 0.0
    %v2114 = vand.u32 %v2027, 4294901760
    %v2115 = vsub.f32 %v2027, %v2114
    %v2116 = vand.u32 %v2115, 4294901760
    %v2117 = vsub.f32 %v2115, %v2116
    %v2118 = vand.u32 %v2117, 4294901760
    %2119 = vmatmul.mubr.f32.gmra.mxu0 %v2118
    %v2120 = vpop.f32.mrf.mxu0
    %v2121 = vadd.f32 %v2008, %v2120
    %v2122 = vpop.f32.mrf.mxu0
    %2123 = vmatprep.mubr.f32.mxu0 0.0
    %v2124 = vand.u32 %v2030, 4294901760
    %v2125 = vsub.f32 %v2030, %v2124
    %v2126 = vand.u32 %v2125, 4294901760
    %v2127 = vsub.f32 %v2125, %v2126
    %v2128 = vand.u32 %v2127, 4294901760
    %2129 = vmatmul.mubr.f32.gmra.mxu0 %v2128
    %v2130 = vpop.f32.mrf.mxu0
    %v2131 = vadd.f32 %v2014, %v2130
    %v2132 = vpop.f32.mrf.mxu0
    %2133 = vmatprep.mubr.f32.mxu0 0.0
    %v2134 = vand.u32 %v2033, 4294901760
    %v2135 = vsub.f32 %v2033, %v2134
    %v2136 = vand.u32 %v2135, 4294901760
    %v2137 = vsub.f32 %v2135, %v2136
    %v2138 = vand.u32 %v2137, 4294901760
    %2139 = vmatmul.mubr.f32.gmra.mxu0 %v2138
    %v2140 = vpop.f32.mrf.mxu0
    %v2141 = vadd.f32 %v2020, %v2140
    %v2142 = vpop.f32.mrf.mxu0
    %2143 = vdwg.mxu0
    %2144 = vmatprep.subr.mxu0 0.0
    %2145 = vmatpush1.msra.mxu0 0.0
    %2146 = vmatprep.subr.mxu0 0.0
    %2147 = vmatpush1.msra.mxu0 0.0
    %2148 = vmatprep.subr.mxu0 0.0
    %2149 = vmatpush1.msra.mxu0 0.0
    %2150 = vmatprep.subr.mxu0 0.0
    %2151 = vmatpush1.msra.mxu0 0.0
    %2152 = vmatprep.subr.mxu0 0.0
    %2153 = vmatpush1.msra.mxu0 0.0
    %2154 = vmatprep.subr.mxu0 0.0
    %2155 = vmatpush1.msra.mxu0 0.0
    %2156 = vmatprep.subr.mxu0 0.0
    %2157 = vmatpush1.msra.mxu0 0.0
    %2158 = vmatprep.subr.mxu0 0.0
    %2159 = vmatpush1.msra.mxu0 0.0
    %2160 = vmatprep.subr.mxu0 0.0
    %2161 = vmatpush1.msra.mxu0 0.0
    %2162 = vmatprep.subr.mxu0 0.0
    %2163 = vmatpush1.msra.mxu0 0.0
    %2164 = vmatprep.subr.mxu0 0.0
    %2165 = vmatpush1.msra.mxu0 0.0
    %2166 = vmatprep.subr.mxu0 0.0
    %2167 = vmatpush1.msra.mxu0 0.0
    %2168 = vmatprep.subr.mxu0 0.0
    %v2169 = vand.u32 %v123, 4294901760
    %v2170 = vsub.f32 %v123, %v2169
    %v2171 = vand.u32 %v2170, 4294901760
    %v2172 = vsub.f32 %v2170, %v2171
    %v2173 = vand.u32 %v2172, 4294901760
    %2174 = vmatpush1.msra.mxu0 %v2173
    %2175 = vmatprep.subr.mxu0 0.0
    %v2176 = vand.u32 %v122, 4294901760
    %v2177 = vsub.f32 %v122, %v2176
    %v2178 = vand.u32 %v2177, 4294901760
    %v2179 = vsub.f32 %v2177, %v2178
    %v2180 = vand.u32 %v2179, 4294901760
    %2181 = vmatpush1.msra.mxu0 %v2180
    %2182 = vmatprep.subr.mxu0 0.0
    %v2183 = vand.u32 %v121, 4294901760
    %v2184 = vsub.f32 %v121, %v2183
    %v2185 = vand.u32 %v2184, 4294901760
    %v2186 = vsub.f32 %v2184, %v2185
    %v2187 = vand.u32 %v2186, 4294901760
    %2188 = vmatpush1.msra.mxu0 %v2187
    %2189 = vmatprep.subr.mxu0 0.0
    %v2190 = vand.u32 %v120, 4294901760
    %v2191 = vsub.f32 %v120, %v2190
    %v2192 = vand.u32 %v2191, 4294901760
    %v2193 = vsub.f32 %v2191, %v2192
    %v2194 = vand.u32 %v2193, 4294901760
    %2195 = vmatpush1.msra.mxu0 %v2194
    %2196 = vmatprep.subr.mxu0 0.0
    %2197 = vmatpush2.msra.mxu0 0.0
    %2198 = vmatprep.subr.mxu0 0.0
    %2199 = vmatpush2.msra.mxu0 0.0
    %2200 = vmatprep.subr.mxu0 0.0
    %2201 = vmatpush2.msra.mxu0 0.0
    %2202 = vmatprep.subr.mxu0 0.0
    %2203 = vmatpush2.msra.mxu0 0.0
    %2204 = vmatprep.subr.mxu0 0.0
    %2205 = vmatpush2.msra.mxu0 0.0
    %2206 = vmatprep.subr.mxu0 0.0
    %2207 = vmatpush2.msra.mxu0 0.0
    %2208 = vmatprep.subr.mxu0 0.0
    %2209 = vmatpush2.msra.mxu0 0.0
    %2210 = vmatprep.subr.mxu0 0.0
    %2211 = vmatpush2.msra.mxu0 0.0
    %2212 = vmatprep.subr.mxu0 0.0
    %2213 = vmatpush2.msra.mxu0 0.0
    %2214 = vmatprep.subr.mxu0 0.0
    %2215 = vmatpush2.msra.mxu0 0.0
    %2216 = vmatprep.subr.mxu0 0.0
    %2217 = vmatpush2.msra.mxu0 0.0
    %2218 = vmatprep.subr.mxu0 0.0
    %2219 = vmatpush2.msra.mxu0 0.0
    %2220 = vmatprep.subr.mxu0 0.0
    %2221 = vmatpush2.msra.mxu0 0.0
    %2222 = vmatprep.subr.mxu0 0.0
    %2223 = vmatpush2.msra.mxu0 0.0
    %2224 = vmatprep.subr.mxu0 0.0
    %2225 = vmatpush2.msra.mxu0 0.0
    %2226 = vmatprep.subr.mxu0 0.0
    %2227 = vmatpush2.msra.mxu0 0.0
    %2228 = vmatprep.mubr.f32.mxu0 0.0
    %v2229 = vand.u32 %v2024, 4294901760
    %2230 = vmatmul.mubr.f32.gmra.mxu0 %v2229
    %v2231 = vpop.f32.mrf.mxu0
    %v2232 = vadd.f32 %v2111, %v2231
    %v2233 = vpop.f32.mrf.mxu0
    %2234 = vmatprep.mubr.f32.mxu0 0.0
    %v2235 = vand.u32 %v2027, 4294901760
    %2236 = vmatmul.mubr.f32.gmra.mxu0 %v2235
    %v2237 = vpop.f32.mrf.mxu0
    %v2238 = vadd.f32 %v2121, %v2237
    %v2239 = vpop.f32.mrf.mxu0
    %2240 = vmatprep.mubr.f32.mxu0 0.0
    %v2241 = vand.u32 %v2030, 4294901760
    %2242 = vmatmul.mubr.f32.gmra.mxu0 %v2241
    %v2243 = vpop.f32.mrf.mxu0
    %v2244 = vadd.f32 %v2131, %v2243
    %v2245 = vpop.f32.mrf.mxu0
    %2246 = vmatprep.mubr.f32.mxu0 0.0
    %v2247 = vand.u32 %v2033, 4294901760
    %2248 = vmatmul.mubr.f32.gmra.mxu0 %v2247
    %v2249 = vpop.f32.mrf.mxu0
    %v2250 = vadd.f32 %v2141, %v2249
    %v2251 = vpop.f32.mrf.mxu0
    %2252 = vdwg.mxu0
    %2253 = vmatprep.subr.mxu0 0.0
    %2254 = vmatpush1.msra.mxu0 0.0
    %2255 = vmatprep.subr.mxu0 0.0
    %2256 = vmatpush1.msra.mxu0 0.0
    %2257 = vmatprep.subr.mxu0 0.0
    %2258 = vmatpush1.msra.mxu0 0.0
    %2259 = vmatprep.subr.mxu0 0.0
    %2260 = vmatpush1.msra.mxu0 0.0
    %2261 = vmatprep.subr.mxu0 0.0
    %2262 = vmatpush1.msra.mxu0 0.0
    %2263 = vmatprep.subr.mxu0 0.0
    %2264 = vmatpush1.msra.mxu0 0.0
    %2265 = vmatprep.subr.mxu0 0.0
    %2266 = vmatpush1.msra.mxu0 0.0
    %2267 = vmatprep.subr.mxu0 0.0
    %2268 = vmatpush1.msra.mxu0 0.0
    %2269 = vmatprep.subr.mxu0 0.0
    %2270 = vmatpush1.msra.mxu0 0.0
    %2271 = vmatprep.subr.mxu0 0.0
    %2272 = vmatpush1.msra.mxu0 0.0
    %2273 = vmatprep.subr.mxu0 0.0
    %2274 = vmatpush1.msra.mxu0 0.0
    %2275 = vmatprep.subr.mxu0 0.0
    %2276 = vmatpush1.msra.mxu0 0.0
    %2277 = vmatprep.subr.mxu0 0.0
    %v2278 = vand.u32 %v123, 4294901760
    %v2279 = vsub.f32 %v123, %v2278
    %2280 = vmatpush1.msra.mxu0 %v2279
    %2281 = vmatprep.subr.mxu0 0.0
    %v2282 = vand.u32 %v122, 4294901760
    %v2283 = vsub.f32 %v122, %v2282
    %2284 = vmatpush1.msra.mxu0 %v2283
    %2285 = vmatprep.subr.mxu0 0.0
    %v2286 = vand.u32 %v121, 4294901760
    %v2287 = vsub.f32 %v121, %v2286
    %2288 = vmatpush1.msra.mxu0 %v2287
    %2289 = vmatprep.subr.mxu0 0.0
    %v2290 = vand.u32 %v120, 4294901760
    %v2291 = vsub.f32 %v120, %v2290
    %2292 = vmatpush1.msra.mxu0 %v2291
    %2293 = vmatprep.subr.mxu0 0.0
    %2294 = vmatpush2.msra.mxu0 0.0
    %2295 = vmatprep.subr.mxu0 0.0
    %2296 = vmatpush2.msra.mxu0 0.0
    %2297 = vmatprep.subr.mxu0 0.0
    %2298 = vmatpush2.msra.mxu0 0.0
    %2299 = vmatprep.subr.mxu0 0.0
    %2300 = vmatpush2.msra.mxu0 0.0
    %2301 = vmatprep.subr.mxu0 0.0
    %2302 = vmatpush2.msra.mxu0 0.0
    %2303 = vmatprep.subr.mxu0 0.0
    %2304 = vmatpush2.msra.mxu0 0.0
    %2305 = vmatprep.subr.mxu0 0.0
    %2306 = vmatpush2.msra.mxu0 0.0
    %2307 = vmatprep.subr.mxu0 0.0
    %2308 = vmatpush2.msra.mxu0 0.0
    %2309 = vmatprep.subr.mxu0 0.0
    %2310 = vmatpush2.msra.mxu0 0.0
    %2311 = vmatprep.subr.mxu0 0.0
    %2312 = vmatpush2.msra.mxu0 0.0
    %2313 = vmatprep.subr.mxu0 0.0
    %2314 = vmatpush2.msra.mxu0 0.0
    %2315 = vmatprep.subr.mxu0 0.0
    %2316 = vmatpush2.msra.mxu0 0.0
    %2317 = vmatprep.subr.mxu0 0.0
    %2318 = vmatpush2.msra.mxu0 0.0
    %2319 = vmatprep.subr.mxu0 0.0
    %2320 = vmatpush2.msra.mxu0 0.0
    %2321 = vmatprep.subr.mxu0 0.0
    %2322 = vmatpush2.msra.mxu0 0.0
    %2323 = vmatprep.subr.mxu0 0.0
    %2324 = vmatpush2.msra.mxu0 0.0
    %2325 = vmatprep.mubr.f32.mxu0 0.0
    %v2326 = vand.u32 %v2024, 4294901760
    %v2327 = vsub.f32 %v2024, %v2326
    %2328 = vmatmul.mubr.f32.gmra.mxu0 %v2327
    %v2329 = vpop.f32.mrf.mxu0
    %v2330 = vadd.f32 %v2232, %v2329
    %v2331 = vpop.f32.mrf.mxu0
    %2332 = vmatprep.mubr.f32.mxu0 0.0
    %v2333 = vand.u32 %v2027, 4294901760
    %v2334 = vsub.f32 %v2027, %v2333
    %2335 = vmatmul.mubr.f32.gmra.mxu0 %v2334
    %v2336 = vpop.f32.mrf.mxu0
    %v2337 = vadd.f32 %v2238, %v2336
    %v2338 = vpop.f32.mrf.mxu0
    %2339 = vmatprep.mubr.f32.mxu0 0.0
    %v2340 = vand.u32 %v2030, 4294901760
    %v2341 = vsub.f32 %v2030, %v2340
    %2342 = vmatmul.mubr.f32.gmra.mxu0 %v2341
    %v2343 = vpop.f32.mrf.mxu0
    %v2344 = vadd.f32 %v2244, %v2343
    %v2345 = vpop.f32.mrf.mxu0
    %2346 = vmatprep.mubr.f32.mxu0 0.0
    %v2347 = vand.u32 %v2033, 4294901760
    %v2348 = vsub.f32 %v2033, %v2347
    %2349 = vmatmul.mubr.f32.gmra.mxu0 %v2348
    %v2350 = vpop.f32.mrf.mxu0
    %v2351 = vadd.f32 %v2250, %v2350
    %v2352 = vpop.f32.mrf.mxu0
    %2353 = vdwg.mxu0
    %2354 = vmatprep.subr.mxu0 0.0
    %2355 = vmatpush1.msra.mxu0 0.0
    %2356 = vmatprep.subr.mxu0 0.0
    %2357 = vmatpush1.msra.mxu0 0.0
    %2358 = vmatprep.subr.mxu0 0.0
    %2359 = vmatpush1.msra.mxu0 0.0
    %2360 = vmatprep.subr.mxu0 0.0
    %2361 = vmatpush1.msra.mxu0 0.0
    %2362 = vmatprep.subr.mxu0 0.0
    %2363 = vmatpush1.msra.mxu0 0.0
    %2364 = vmatprep.subr.mxu0 0.0
    %2365 = vmatpush1.msra.mxu0 0.0
    %2366 = vmatprep.subr.mxu0 0.0
    %2367 = vmatpush1.msra.mxu0 0.0
    %2368 = vmatprep.subr.mxu0 0.0
    %2369 = vmatpush1.msra.mxu0 0.0
    %2370 = vmatprep.subr.mxu0 0.0
    %2371 = vmatpush1.msra.mxu0 0.0
    %2372 = vmatprep.subr.mxu0 0.0
    %2373 = vmatpush1.msra.mxu0 0.0
    %2374 = vmatprep.subr.mxu0 0.0
    %2375 = vmatpush1.msra.mxu0 0.0
    %2376 = vmatprep.subr.mxu0 0.0
    %2377 = vmatpush1.msra.mxu0 0.0
    %2378 = vmatprep.subr.mxu0 0.0
    %v2379 = vand.u32 %v123, 4294901760
    %2380 = vmatpush1.msra.mxu0 %v2379
    %2381 = vmatprep.subr.mxu0 0.0
    %v2382 = vand.u32 %v122, 4294901760
    %2383 = vmatpush1.msra.mxu0 %v2382
    %2384 = vmatprep.subr.mxu0 0.0
    %v2385 = vand.u32 %v121, 4294901760
    %2386 = vmatpush1.msra.mxu0 %v2385
    %2387 = vmatprep.subr.mxu0 0.0
    %v2388 = vand.u32 %v120, 4294901760
    %2389 = vmatpush1.msra.mxu0 %v2388
    %2390 = vmatprep.subr.mxu0 0.0
    %2391 = vmatpush2.msra.mxu0 0.0
    %2392 = vmatprep.subr.mxu0 0.0
    %2393 = vmatpush2.msra.mxu0 0.0
    %2394 = vmatprep.subr.mxu0 0.0
    %2395 = vmatpush2.msra.mxu0 0.0
    %2396 = vmatprep.subr.mxu0 0.0
    %2397 = vmatpush2.msra.mxu0 0.0
    %2398 = vmatprep.subr.mxu0 0.0
    %2399 = vmatpush2.msra.mxu0 0.0
    %2400 = vmatprep.subr.mxu0 0.0
    %2401 = vmatpush2.msra.mxu0 0.0
    %2402 = vmatprep.subr.mxu0 0.0
    %2403 = vmatpush2.msra.mxu0 0.0
    %2404 = vmatprep.subr.mxu0 0.0
    %2405 = vmatpush2.msra.mxu0 0.0
    %2406 = vmatprep.subr.mxu0 0.0
    %2407 = vmatpush2.msra.mxu0 0.0
    %2408 = vmatprep.subr.mxu0 0.0
    %2409 = vmatpush2.msra.mxu0 0.0
    %2410 = vmatprep.subr.mxu0 0.0
    %2411 = vmatpush2.msra.mxu0 0.0
    %2412 = vmatprep.subr.mxu0 0.0
    %2413 = vmatpush2.msra.mxu0 0.0
    %2414 = vmatprep.subr.mxu0 0.0
    %2415 = vmatpush2.msra.mxu0 0.0
    %2416 = vmatprep.subr.mxu0 0.0
    %2417 = vmatpush2.msra.mxu0 0.0
    %2418 = vmatprep.subr.mxu0 0.0
    %2419 = vmatpush2.msra.mxu0 0.0
    %2420 = vmatprep.subr.mxu0 0.0
    %2421 = vmatpush2.msra.mxu0 0.0
    %2422 = vmatprep.mubr.f32.mxu0 0.0
    %v2423 = vand.u32 %v2024, 4294901760
    %v2424 = vsub.f32 %v2024, %v2423
    %v2425 = vand.u32 %v2424, 4294901760
    %2426 = vmatmul.mubr.f32.gmra.mxu0 %v2425
    %v2427 = vpop.f32.mrf.mxu0
    %v2428 = vadd.f32 %v2330, %v2427
    %v2429 = vpop.f32.mrf.mxu0
    %2430 = vmatprep.mubr.f32.mxu0 0.0
    %v2431 = vand.u32 %v2027, 4294901760
    %v2432 = vsub.f32 %v2027, %v2431
    %v2433 = vand.u32 %v2432, 4294901760
    %2434 = vmatmul.mubr.f32.gmra.mxu0 %v2433
    %v2435 = vpop.f32.mrf.mxu0
    %v2436 = vadd.f32 %v2337, %v2435
    %v2437 = vpop.f32.mrf.mxu0
    %2438 = vmatprep.mubr.f32.mxu0 0.0
    %v2439 = vand.u32 %v2030, 4294901760
    %v2440 = vsub.f32 %v2030, %v2439
    %v2441 = vand.u32 %v2440, 4294901760
    %2442 = vmatmul.mubr.f32.gmra.mxu0 %v2441
    %v2443 = vpop.f32.mrf.mxu0
    %v2444 = vadd.f32 %v2344, %v2443
    %v2445 = vpop.f32.mrf.mxu0
    %2446 = vmatprep.mubr.f32.mxu0 0.0
    %v2447 = vand.u32 %v2033, 4294901760
    %v2448 = vsub.f32 %v2033, %v2447
    %v2449 = vand.u32 %v2448, 4294901760
    %2450 = vmatmul.mubr.f32.gmra.mxu0 %v2449
    %v2451 = vpop.f32.mrf.mxu0
    %v2452 = vadd.f32 %v2351, %v2451
    %v2453 = vpop.f32.mrf.mxu0
    %2454 = vdwg.mxu0
    %2455 = vmatprep.subr.mxu0 0.0
    %2456 = vmatpush1.msra.mxu0 0.0
    %2457 = vmatprep.subr.mxu0 0.0
    %2458 = vmatpush1.msra.mxu0 0.0
    %2459 = vmatprep.subr.mxu0 0.0
    %2460 = vmatpush1.msra.mxu0 0.0
    %2461 = vmatprep.subr.mxu0 0.0
    %2462 = vmatpush1.msra.mxu0 0.0
    %2463 = vmatprep.subr.mxu0 0.0
    %2464 = vmatpush1.msra.mxu0 0.0
    %2465 = vmatprep.subr.mxu0 0.0
    %2466 = vmatpush1.msra.mxu0 0.0
    %2467 = vmatprep.subr.mxu0 0.0
    %2468 = vmatpush1.msra.mxu0 0.0
    %2469 = vmatprep.subr.mxu0 0.0
    %2470 = vmatpush1.msra.mxu0 0.0
    %2471 = vmatprep.subr.mxu0 0.0
    %2472 = vmatpush1.msra.mxu0 0.0
    %2473 = vmatprep.subr.mxu0 0.0
    %2474 = vmatpush1.msra.mxu0 0.0
    %2475 = vmatprep.subr.mxu0 0.0
    %2476 = vmatpush1.msra.mxu0 0.0
    %2477 = vmatprep.subr.mxu0 0.0
    %2478 = vmatpush1.msra.mxu0 0.0
    %2479 = vmatprep.subr.mxu0 0.0
    %v2480 = vand.u32 %v123, 4294901760
    %v2481 = vsub.f32 %v123, %v2480
    %v2482 = vand.u32 %v2481, 4294901760
    %2483 = vmatpush1.msra.mxu0 %v2482
    %2484 = vmatprep.subr.mxu0 0.0
    %v2485 = vand.u32 %v122, 4294901760
    %v2486 = vsub.f32 %v122, %v2485
    %v2487 = vand.u32 %v2486, 4294901760
    %2488 = vmatpush1.msra.mxu0 %v2487
    %2489 = vmatprep.subr.mxu0 0.0
    %v2490 = vand.u32 %v121, 4294901760
    %v2491 = vsub.f32 %v121, %v2490
    %v2492 = vand.u32 %v2491, 4294901760
    %2493 = vmatpush1.msra.mxu0 %v2492
    %2494 = vmatprep.subr.mxu0 0.0
    %v2495 = vand.u32 %v120, 4294901760
    %v2496 = vsub.f32 %v120, %v2495
    %v2497 = vand.u32 %v2496, 4294901760
    %2498 = vmatpush1.msra.mxu0 %v2497
    %2499 = vmatprep.subr.mxu0 0.0
    %2500 = vmatpush2.msra.mxu0 0.0
    %2501 = vmatprep.subr.mxu0 0.0
    %2502 = vmatpush2.msra.mxu0 0.0
    %2503 = vmatprep.subr.mxu0 0.0
    %2504 = vmatpush2.msra.mxu0 0.0
    %2505 = vmatprep.subr.mxu0 0.0
    %2506 = vmatpush2.msra.mxu0 0.0
    %2507 = vmatprep.subr.mxu0 0.0
    %2508 = vmatpush2.msra.mxu0 0.0
    %2509 = vmatprep.subr.mxu0 0.0
    %2510 = vmatpush2.msra.mxu0 0.0
    %2511 = vmatprep.subr.mxu0 0.0
    %2512 = vmatpush2.msra.mxu0 0.0
    %2513 = vmatprep.subr.mxu0 0.0
    %2514 = vmatpush2.msra.mxu0 0.0
    %2515 = vmatprep.subr.mxu0 0.0
    %2516 = vmatpush2.msra.mxu0 0.0
    %2517 = vmatprep.subr.mxu0 0.0
    %2518 = vmatpush2.msra.mxu0 0.0
    %2519 = vmatprep.subr.mxu0 0.0
    %2520 = vmatpush2.msra.mxu0 0.0
    %2521 = vmatprep.subr.mxu0 0.0
    %2522 = vmatpush2.msra.mxu0 0.0
    %2523 = vmatprep.subr.mxu0 0.0
    %2524 = vmatpush2.msra.mxu0 0.0
    %2525 = vmatprep.subr.mxu0 0.0
    %2526 = vmatpush2.msra.mxu0 0.0
    %2527 = vmatprep.subr.mxu0 0.0
    %2528 = vmatpush2.msra.mxu0 0.0
    %2529 = vmatprep.subr.mxu0 0.0
    %2530 = vmatpush2.msra.mxu0 0.0
    %2531 = vmatprep.mubr.f32.mxu0 0.0
    %v2532 = vand.u32 %v2024, 4294901760
    %2533 = vmatmul.mubr.f32.gmra.mxu0 %v2532
    %v2534 = vpop.f32.mrf.mxu0
    %v2535 = vadd.f32 %v2428, %v2534
    %v2536 = vpop.f32.mrf.mxu0
    %2537 = vmatprep.mubr.f32.mxu0 0.0
    %v2538 = vand.u32 %v2027, 4294901760
    %2539 = vmatmul.mubr.f32.gmra.mxu0 %v2538
    %v2540 = vpop.f32.mrf.mxu0
    %v2541 = vadd.f32 %v2436, %v2540
    %v2542 = vpop.f32.mrf.mxu0
    %2543 = vmatprep.mubr.f32.mxu0 0.0
    %v2544 = vand.u32 %v2030, 4294901760
    %2545 = vmatmul.mubr.f32.gmra.mxu0 %v2544
    %v2546 = vpop.f32.mrf.mxu0
    %v2547 = vadd.f32 %v2444, %v2546
    %v2548 = vpop.f32.mrf.mxu0
    %2549 = vmatprep.mubr.f32.mxu0 0.0
    %v2550 = vand.u32 %v2033, 4294901760
    %2551 = vmatmul.mubr.f32.gmra.mxu0 %v2550
    %v2552 = vpop.f32.mrf.mxu0
    %v2553 = vadd.f32 %v2452, %v2552
    %v2554 = vpop.f32.mrf.mxu0
    %2555 = vdwg.mxu0
    %2556 = vmatprep.subr.mxu0 0.0
    %2557 = vmatpush1.msra.mxu0 0.0
    %2558 = vmatprep.subr.mxu0 0.0
    %2559 = vmatpush1.msra.mxu0 0.0
    %2560 = vmatprep.subr.mxu0 0.0
    %2561 = vmatpush1.msra.mxu0 0.0
    %2562 = vmatprep.subr.mxu0 0.0
    %2563 = vmatpush1.msra.mxu0 0.0
    %2564 = vmatprep.subr.mxu0 0.0
    %2565 = vmatpush1.msra.mxu0 0.0
    %2566 = vmatprep.subr.mxu0 0.0
    %2567 = vmatpush1.msra.mxu0 0.0
    %2568 = vmatprep.subr.mxu0 0.0
    %2569 = vmatpush1.msra.mxu0 0.0
    %2570 = vmatprep.subr.mxu0 0.0
    %2571 = vmatpush1.msra.mxu0 0.0
    %2572 = vmatprep.subr.mxu0 0.0
    %2573 = vmatpush1.msra.mxu0 0.0
    %2574 = vmatprep.subr.mxu0 0.0
    %2575 = vmatpush1.msra.mxu0 0.0
    %2576 = vmatprep.subr.mxu0 0.0
    %2577 = vmatpush1.msra.mxu0 0.0
    %2578 = vmatprep.subr.mxu0 0.0
    %2579 = vmatpush1.msra.mxu0 0.0
    %2580 = vmatprep.subr.mxu0 0.0
    %v2581 = vand.u32 %v123, 4294901760
    %2582 = vmatpush1.msra.mxu0 %v2581
    %2583 = vmatprep.subr.mxu0 0.0
    %v2584 = vand.u32 %v122, 4294901760
    %2585 = vmatpush1.msra.mxu0 %v2584
    %2586 = vmatprep.subr.mxu0 0.0
    %v2587 = vand.u32 %v121, 4294901760
    %2588 = vmatpush1.msra.mxu0 %v2587
    %2589 = vmatprep.subr.mxu0 0.0
    %v2590 = vand.u32 %v120, 4294901760
    %2591 = vmatpush1.msra.mxu0 %v2590
    %2592 = vmatprep.subr.mxu0 0.0
    %2593 = vmatpush2.msra.mxu0 0.0
    %2594 = vmatprep.subr.mxu0 0.0
    %2595 = vmatpush2.msra.mxu0 0.0
    %2596 = vmatprep.subr.mxu0 0.0
    %2597 = vmatpush2.msra.mxu0 0.0
    %2598 = vmatprep.subr.mxu0 0.0
    %2599 = vmatpush2.msra.mxu0 0.0
    %2600 = vmatprep.subr.mxu0 0.0
    %2601 = vmatpush2.msra.mxu0 0.0
    %2602 = vmatprep.subr.mxu0 0.0
    %2603 = vmatpush2.msra.mxu0 0.0
    %2604 = vmatprep.subr.mxu0 0.0
    %2605 = vmatpush2.msra.mxu0 0.0
    %2606 = vmatprep.subr.mxu0 0.0
    %2607 = vmatpush2.msra.mxu0 0.0
    %2608 = vmatprep.subr.mxu0 0.0
    %2609 = vmatpush2.msra.mxu0 0.0
    %2610 = vmatprep.subr.mxu0 0.0
    %2611 = vmatpush2.msra.mxu0 0.0
    %2612 = vmatprep.subr.mxu0 0.0
    %2613 = vmatpush2.msra.mxu0 0.0
    %2614 = vmatprep.subr.mxu0 0.0
    %2615 = vmatpush2.msra.mxu0 0.0
    %2616 = vmatprep.subr.mxu0 0.0
    %2617 = vmatpush2.msra.mxu0 0.0
    %2618 = vmatprep.subr.mxu0 0.0
    %2619 = vmatpush2.msra.mxu0 0.0
    %2620 = vmatprep.subr.mxu0 0.0
    %2621 = vmatpush2.msra.mxu0 0.0
    %2622 = vmatprep.subr.mxu0 0.0
    %2623 = vmatpush2.msra.mxu0 0.0
    %2624 = vmatprep.mubr.f32.mxu0 0.0
    %v2625 = vand.u32 %v2024, 4294901760
    %2626 = vmatmul.mubr.f32.gmra.mxu0 %v2625
    %v2627 = vpop.f32.mrf.mxu0
    %v2628 = vadd.f32 %v2535, %v2627
    %v2629 = vpop.f32.mrf.mxu0
    %2630 = vmatprep.mubr.f32.mxu0 0.0
    %v2631 = vand.u32 %v2027, 4294901760
    %2632 = vmatmul.mubr.f32.gmra.mxu0 %v2631
    %v2633 = vpop.f32.mrf.mxu0
    %v2634 = vadd.f32 %v2541, %v2633
    %v2635 = vpop.f32.mrf.mxu0
    %2636 = vmatprep.mubr.f32.mxu0 0.0
    %v2637 = vand.u32 %v2030, 4294901760
    %2638 = vmatmul.mubr.f32.gmra.mxu0 %v2637
    %v2639 = vpop.f32.mrf.mxu0
    %v2640 = vadd.f32 %v2547, %v2639
    %v2641 = vpop.f32.mrf.mxu0
    %2642 = vmatprep.mubr.f32.mxu0 0.0
    %v2643 = vand.u32 %v2033, 4294901760
    %2644 = vmatmul.mubr.f32.gmra.mxu0 %v2643
    %v2645 = vpop.f32.mrf.mxu0
    %v2646 = vadd.f32 %v2553, %v2645
    %v2647 = vpop.f32.mrf.mxu0
    %2648 = vdwg.mxu0
    %s2649 = scalar_lea.vmem %s1, 64
    %v2650 = vld [vmem:[%s2649] sm:$0xff]
    %v2651 = vld [vmem:[%s2649 + $0x8] sm:$0xff]
    %v2652 = vld [vmem:[%s2649 + $0x10] sm:$0xff]
    %v2653 = vld [vmem:[%s2649 + $0x18] sm:$0xff]
    %v2654 = vld [vmem:[#allocation2 + $0x2] sm:$0xff]
    %v2655 = vld [vmem:[#allocation2 + $0xa] sm:$0xff]
    %v2656 = vld [vmem:[#allocation2 + $0x12] sm:$0xff]
    %v2657 = vld [vmem:[#allocation2 + $0x1a] sm:$0xff]
    %v2659 = vsel %vm34, %v2654, 0
    %v2662 = vsel %vm34, %v2655, 0
    %v2665 = vsel %vm34, %v2656, 0
    %v2668 = vsel %vm34, %v2657, 0
    %2670 = vmatprep.subr.mxu0 0.0
    %2671 = vmatpush1.msra.mxu0 0.0
    %2672 = vmatprep.subr.mxu0 0.0
    %2673 = vmatpush1.msra.mxu0 0.0
    %2674 = vmatprep.subr.mxu0 0.0
    %2675 = vmatpush1.msra.mxu0 0.0
    %2676 = vmatprep.subr.mxu0 0.0
    %2677 = vmatpush1.msra.mxu0 0.0
    %2678 = vmatprep.subr.mxu0 0.0
    %2679 = vmatpush1.msra.mxu0 0.0
    %2680 = vmatprep.subr.mxu0 0.0
    %2681 = vmatpush1.msra.mxu0 0.0
    %2682 = vmatprep.subr.mxu0 0.0
    %2683 = vmatpush1.msra.mxu0 0.0
    %2684 = vmatprep.subr.mxu0 0.0
    %2685 = vmatpush1.msra.mxu0 0.0
    %2686 = vmatprep.subr.mxu0 0.0
    %2687 = vmatpush1.msra.mxu0 0.0
    %2688 = vmatprep.subr.mxu0 0.0
    %2689 = vmatpush1.msra.mxu0 0.0
    %2690 = vmatprep.subr.mxu0 0.0
    %2691 = vmatpush1.msra.mxu0 0.0
    %2692 = vmatprep.subr.mxu0 0.0
    %2693 = vmatpush1.msra.mxu0 0.0
    %2694 = vmatprep.subr.mxu0 0.0
    %v2695 = vand.u32 %v2653, 4294901760
    %2696 = vmatpush1.msra.mxu0 %v2695
    %2697 = vmatprep.subr.mxu0 0.0
    %v2698 = vand.u32 %v2652, 4294901760
    %2699 = vmatpush1.msra.mxu0 %v2698
    %2700 = vmatprep.subr.mxu0 0.0
    %v2701 = vand.u32 %v2651, 4294901760
    %2702 = vmatpush1.msra.mxu0 %v2701
    %2703 = vmatprep.subr.mxu0 0.0
    %v2704 = vand.u32 %v2650, 4294901760
    %2705 = vmatpush1.msra.mxu0 %v2704
    %2706 = vmatprep.subr.mxu0 0.0
    %2707 = vmatpush2.msra.mxu0 0.0
    %2708 = vmatprep.subr.mxu0 0.0
    %2709 = vmatpush2.msra.mxu0 0.0
    %2710 = vmatprep.subr.mxu0 0.0
    %2711 = vmatpush2.msra.mxu0 0.0
    %2712 = vmatprep.subr.mxu0 0.0
    %2713 = vmatpush2.msra.mxu0 0.0
    %2714 = vmatprep.subr.mxu0 0.0
    %2715 = vmatpush2.msra.mxu0 0.0
    %2716 = vmatprep.subr.mxu0 0.0
    %2717 = vmatpush2.msra.mxu0 0.0
    %2718 = vmatprep.subr.mxu0 0.0
    %2719 = vmatpush2.msra.mxu0 0.0
    %2720 = vmatprep.subr.mxu0 0.0
    %2721 = vmatpush2.msra.mxu0 0.0
    %2722 = vmatprep.subr.mxu0 0.0
    %2723 = vmatpush2.msra.mxu0 0.0
    %2724 = vmatprep.subr.mxu0 0.0
    %2725 = vmatpush2.msra.mxu0 0.0
    %2726 = vmatprep.subr.mxu0 0.0
    %2727 = vmatpush2.msra.mxu0 0.0
    %2728 = vmatprep.subr.mxu0 0.0
    %2729 = vmatpush2.msra.mxu0 0.0
    %2730 = vmatprep.subr.mxu0 0.0
    %2731 = vmatpush2.msra.mxu0 0.0
    %2732 = vmatprep.subr.mxu0 0.0
    %2733 = vmatpush2.msra.mxu0 0.0
    %2734 = vmatprep.subr.mxu0 0.0
    %2735 = vmatpush2.msra.mxu0 0.0
    %2736 = vmatprep.subr.mxu0 0.0
    %2737 = vmatpush2.msra.mxu0 0.0
    %2738 = vmatprep.mubr.f32.mxu0 0.0
    %v2739 = vand.u32 %v2659, 4294901760
    %v2740 = vsub.f32 %v2659, %v2739
    %v2741 = vand.u32 %v2740, 4294901760
    %v2742 = vsub.f32 %v2740, %v2741
    %v2743 = vand.u32 %v2742, 4294901760
    %2744 = vmatmul.mubr.f32.gmra.mxu0 %v2743
    %v2745 = vpop.f32.mrf.mxu0
    %v2746 = vadd.f32 0.0, %v2745
    %v2747 = vpop.f32.mrf.mxu0
    %2748 = vmatprep.mubr.f32.mxu0 0.0
    %v2749 = vand.u32 %v2662, 4294901760
    %v2750 = vsub.f32 %v2662, %v2749
    %v2751 = vand.u32 %v2750, 4294901760
    %v2752 = vsub.f32 %v2750, %v2751
    %v2753 = vand.u32 %v2752, 4294901760
    %2754 = vmatmul.mubr.f32.gmra.mxu0 %v2753
    %v2755 = vpop.f32.mrf.mxu0
    %v2756 = vadd.f32 0.0, %v2755
    %v2757 = vpop.f32.mrf.mxu0
    %2758 = vmatprep.mubr.f32.mxu0 0.0
    %v2759 = vand.u32 %v2665, 4294901760
    %v2760 = vsub.f32 %v2665, %v2759
    %v2761 = vand.u32 %v2760, 4294901760
    %v2762 = vsub.f32 %v2760, %v2761
    %v2763 = vand.u32 %v2762, 4294901760
    %2764 = vmatmul.mubr.f32.gmra.mxu0 %v2763
    %v2765 = vpop.f32.mrf.mxu0
    %v2766 = vadd.f32 0.0, %v2765
    %v2767 = vpop.f32.mrf.mxu0
    %2768 = vmatprep.mubr.f32.mxu0 0.0
    %v2769 = vand.u32 %v2668, 4294901760
    %v2770 = vsub.f32 %v2668, %v2769
    %v2771 = vand.u32 %v2770, 4294901760
    %v2772 = vsub.f32 %v2770, %v2771
    %v2773 = vand.u32 %v2772, 4294901760
    %2774 = vmatmul.mubr.f32.gmra.mxu0 %v2773
    %v2775 = vpop.f32.mrf.mxu0
    %v2776 = vadd.f32 0.0, %v2775
    %v2777 = vpop.f32.mrf.mxu0
    %2778 = vdwg.mxu0
    %2779 = vmatprep.subr.mxu0 0.0
    %2780 = vmatpush1.msra.mxu0 0.0
    %2781 = vmatprep.subr.mxu0 0.0
    %2782 = vmatpush1.msra.mxu0 0.0
    %2783 = vmatprep.subr.mxu0 0.0
    %2784 = vmatpush1.msra.mxu0 0.0
    %2785 = vmatprep.subr.mxu0 0.0
    %2786 = vmatpush1.msra.mxu0 0.0
    %2787 = vmatprep.subr.mxu0 0.0
    %2788 = vmatpush1.msra.mxu0 0.0
    %2789 = vmatprep.subr.mxu0 0.0
    %2790 = vmatpush1.msra.mxu0 0.0
    %2791 = vmatprep.subr.mxu0 0.0
    %2792 = vmatpush1.msra.mxu0 0.0
    %2793 = vmatprep.subr.mxu0 0.0
    %2794 = vmatpush1.msra.mxu0 0.0
    %2795 = vmatprep.subr.mxu0 0.0
    %2796 = vmatpush1.msra.mxu0 0.0
    %2797 = vmatprep.subr.mxu0 0.0
    %2798 = vmatpush1.msra.mxu0 0.0
    %2799 = vmatprep.subr.mxu0 0.0
    %2800 = vmatpush1.msra.mxu0 0.0
    %2801 = vmatprep.subr.mxu0 0.0
    %2802 = vmatpush1.msra.mxu0 0.0
    %2803 = vmatprep.subr.mxu0 0.0
    %v2804 = vand.u32 %v2653, 4294901760
    %v2805 = vsub.f32 %v2653, %v2804
    %v2806 = vand.u32 %v2805, 4294901760
    %v2807 = vsub.f32 %v2805, %v2806
    %v2808 = vand.u32 %v2807, 4294901760
    %2809 = vmatpush1.msra.mxu0 %v2808
    %2810 = vmatprep.subr.mxu0 0.0
    %v2811 = vand.u32 %v2652, 4294901760
    %v2812 = vsub.f32 %v2652, %v2811
    %v2813 = vand.u32 %v2812, 4294901760
    %v2814 = vsub.f32 %v2812, %v2813
    %v2815 = vand.u32 %v2814, 4294901760
    %2816 = vmatpush1.msra.mxu0 %v2815
    %2817 = vmatprep.subr.mxu0 0.0
    %v2818 = vand.u32 %v2651, 4294901760
    %v2819 = vsub.f32 %v2651, %v2818
    %v2820 = vand.u32 %v2819, 4294901760
    %v2821 = vsub.f32 %v2819, %v2820
    %v2822 = vand.u32 %v2821, 4294901760
    %2823 = vmatpush1.msra.mxu0 %v2822
    %2824 = vmatprep.subr.mxu0 0.0
    %v2825 = vand.u32 %v2650, 4294901760
    %v2826 = vsub.f32 %v2650, %v2825
    %v2827 = vand.u32 %v2826, 4294901760
    %v2828 = vsub.f32 %v2826, %v2827
    %v2829 = vand.u32 %v2828, 4294901760
    %2830 = vmatpush1.msra.mxu0 %v2829
    %2831 = vmatprep.subr.mxu0 0.0
    %2832 = vmatpush2.msra.mxu0 0.0
    %2833 = vmatprep.subr.mxu0 0.0
    %2834 = vmatpush2.msra.mxu0 0.0
    %2835 = vmatprep.subr.mxu0 0.0
    %2836 = vmatpush2.msra.mxu0 0.0
    %2837 = vmatprep.subr.mxu0 0.0
    %2838 = vmatpush2.msra.mxu0 0.0
    %2839 = vmatprep.subr.mxu0 0.0
    %2840 = vmatpush2.msra.mxu0 0.0
    %2841 = vmatprep.subr.mxu0 0.0
    %2842 = vmatpush2.msra.mxu0 0.0
    %2843 = vmatprep.subr.mxu0 0.0
    %2844 = vmatpush2.msra.mxu0 0.0
    %2845 = vmatprep.subr.mxu0 0.0
    %2846 = vmatpush2.msra.mxu0 0.0
    %2847 = vmatprep.subr.mxu0 0.0
    %2848 = vmatpush2.msra.mxu0 0.0
    %2849 = vmatprep.subr.mxu0 0.0
    %2850 = vmatpush2.msra.mxu0 0.0
    %2851 = vmatprep.subr.mxu0 0.0
    %2852 = vmatpush2.msra.mxu0 0.0
    %2853 = vmatprep.subr.mxu0 0.0
    %2854 = vmatpush2.msra.mxu0 0.0
    %2855 = vmatprep.subr.mxu0 0.0
    %2856 = vmatpush2.msra.mxu0 0.0
    %2857 = vmatprep.subr.mxu0 0.0
    %2858 = vmatpush2.msra.mxu0 0.0
    %2859 = vmatprep.subr.mxu0 0.0
    %2860 = vmatpush2.msra.mxu0 0.0
    %2861 = vmatprep.subr.mxu0 0.0
    %2862 = vmatpush2.msra.mxu0 0.0
    %2863 = vmatprep.mubr.f32.mxu0 0.0
    %v2864 = vand.u32 %v2659, 4294901760
    %2865 = vmatmul.mubr.f32.gmra.mxu0 %v2864
    %v2866 = vpop.f32.mrf.mxu0
    %v2867 = vadd.f32 %v2746, %v2866
    %v2868 = vpop.f32.mrf.mxu0
    %2869 = vmatprep.mubr.f32.mxu0 0.0
    %v2870 = vand.u32 %v2662, 4294901760
    %2871 = vmatmul.mubr.f32.gmra.mxu0 %v2870
    %v2872 = vpop.f32.mrf.mxu0
    %v2873 = vadd.f32 %v2756, %v2872
    %v2874 = vpop.f32.mrf.mxu0
    %2875 = vmatprep.mubr.f32.mxu0 0.0
    %v2876 = vand.u32 %v2665, 4294901760
    %2877 = vmatmul.mubr.f32.gmra.mxu0 %v2876
    %v2878 = vpop.f32.mrf.mxu0
    %v2879 = vadd.f32 %v2766, %v2878
    %v2880 = vpop.f32.mrf.mxu0
    %2881 = vmatprep.mubr.f32.mxu0 0.0
    %v2882 = vand.u32 %v2668, 4294901760
    %2883 = vmatmul.mubr.f32.gmra.mxu0 %v2882
    %v2884 = vpop.f32.mrf.mxu0
    %v2885 = vadd.f32 %v2776, %v2884
    %v2886 = vpop.f32.mrf.mxu0
    %2887 = vdwg.mxu0
    %2888 = vmatprep.subr.mxu0 0.0
    %2889 = vmatpush1.msra.mxu0 0.0
    %2890 = vmatprep.subr.mxu0 0.0
    %2891 = vmatpush1.msra.mxu0 0.0
    %2892 = vmatprep.subr.mxu0 0.0
    %2893 = vmatpush1.msra.mxu0 0.0
    %2894 = vmatprep.subr.mxu0 0.0
    %2895 = vmatpush1.msra.mxu0 0.0
    %2896 = vmatprep.subr.mxu0 0.0
    %2897 = vmatpush1.msra.mxu0 0.0
    %2898 = vmatprep.subr.mxu0 0.0
    %2899 = vmatpush1.msra.mxu0 0.0
    %2900 = vmatprep.subr.mxu0 0.0
    %2901 = vmatpush1.msra.mxu0 0.0
    %2902 = vmatprep.subr.mxu0 0.0
    %2903 = vmatpush1.msra.mxu0 0.0
    %2904 = vmatprep.subr.mxu0 0.0
    %2905 = vmatpush1.msra.mxu0 0.0
    %2906 = vmatprep.subr.mxu0 0.0
    %2907 = vmatpush1.msra.mxu0 0.0
    %2908 = vmatprep.subr.mxu0 0.0
    %2909 = vmatpush1.msra.mxu0 0.0
    %2910 = vmatprep.subr.mxu0 0.0
    %2911 = vmatpush1.msra.mxu0 0.0
    %2912 = vmatprep.subr.mxu0 0.0
    %v2913 = vand.u32 %v2653, 4294901760
    %v2914 = vsub.f32 %v2653, %v2913
    %2915 = vmatpush1.msra.mxu0 %v2914
    %2916 = vmatprep.subr.mxu0 0.0
    %v2917 = vand.u32 %v2652, 4294901760
    %v2918 = vsub.f32 %v2652, %v2917
    %2919 = vmatpush1.msra.mxu0 %v2918
    %2920 = vmatprep.subr.mxu0 0.0
    %v2921 = vand.u32 %v2651, 4294901760
    %v2922 = vsub.f32 %v2651, %v2921
    %2923 = vmatpush1.msra.mxu0 %v2922
    %2924 = vmatprep.subr.mxu0 0.0
    %v2925 = vand.u32 %v2650, 4294901760
    %v2926 = vsub.f32 %v2650, %v2925
    %2927 = vmatpush1.msra.mxu0 %v2926
    %2928 = vmatprep.subr.mxu0 0.0
    %2929 = vmatpush2.msra.mxu0 0.0
    %2930 = vmatprep.subr.mxu0 0.0
    %2931 = vmatpush2.msra.mxu0 0.0
    %2932 = vmatprep.subr.mxu0 0.0
    %2933 = vmatpush2.msra.mxu0 0.0
    %2934 = vmatprep.subr.mxu0 0.0
    %2935 = vmatpush2.msra.mxu0 0.0
    %2936 = vmatprep.subr.mxu0 0.0
    %2937 = vmatpush2.msra.mxu0 0.0
    %2938 = vmatprep.subr.mxu0 0.0
    %2939 = vmatpush2.msra.mxu0 0.0
    %2940 = vmatprep.subr.mxu0 0.0
    %2941 = vmatpush2.msra.mxu0 0.0
    %2942 = vmatprep.subr.mxu0 0.0
    %2943 = vmatpush2.msra.mxu0 0.0
    %2944 = vmatprep.subr.mxu0 0.0
    %2945 = vmatpush2.msra.mxu0 0.0
    %2946 = vmatprep.subr.mxu0 0.0
    %2947 = vmatpush2.msra.mxu0 0.0
    %2948 = vmatprep.subr.mxu0 0.0
    %2949 = vmatpush2.msra.mxu0 0.0
    %2950 = vmatprep.subr.mxu0 0.0
    %2951 = vmatpush2.msra.mxu0 0.0
    %2952 = vmatprep.subr.mxu0 0.0
    %2953 = vmatpush2.msra.mxu0 0.0
    %2954 = vmatprep.subr.mxu0 0.0
    %2955 = vmatpush2.msra.mxu0 0.0
    %2956 = vmatprep.subr.mxu0 0.0
    %2957 = vmatpush2.msra.mxu0 0.0
    %2958 = vmatprep.subr.mxu0 0.0
    %2959 = vmatpush2.msra.mxu0 0.0
    %2960 = vmatprep.mubr.f32.mxu0 0.0
    %v2961 = vand.u32 %v2659, 4294901760
    %v2962 = vsub.f32 %v2659, %v2961
    %2963 = vmatmul.mubr.f32.gmra.mxu0 %v2962
    %v2964 = vpop.f32.mrf.mxu0
    %v2965 = vadd.f32 %v2867, %v2964
    %v2966 = vpop.f32.mrf.mxu0
    %2967 = vmatprep.mubr.f32.mxu0 0.0
    %v2968 = vand.u32 %v2662, 4294901760
    %v2969 = vsub.f32 %v2662, %v2968
    %2970 = vmatmul.mubr.f32.gmra.mxu0 %v2969
    %v2971 = vpop.f32.mrf.mxu0
    %v2972 = vadd.f32 %v2873, %v2971
    %v2973 = vpop.f32.mrf.mxu0
    %2974 = vmatprep.mubr.f32.mxu0 0.0
    %v2975 = vand.u32 %v2665, 4294901760
    %v2976 = vsub.f32 %v2665, %v2975
    %2977 = vmatmul.mubr.f32.gmra.mxu0 %v2976
    %v2978 = vpop.f32.mrf.mxu0
    %v2979 = vadd.f32 %v2879, %v2978
    %v2980 = vpop.f32.mrf.mxu0
    %2981 = vmatprep.mubr.f32.mxu0 0.0
    %v2982 = vand.u32 %v2668, 4294901760
    %v2983 = vsub.f32 %v2668, %v2982
    %2984 = vmatmul.mubr.f32.gmra.mxu0 %v2983
    %v2985 = vpop.f32.mrf.mxu0
    %v2986 = vadd.f32 %v2885, %v2985
    %v2987 = vpop.f32.mrf.mxu0
    %2988 = vdwg.mxu0
    %2989 = vmatprep.subr.mxu0 0.0
    %2990 = vmatpush1.msra.mxu0 0.0
    %2991 = vmatprep.subr.mxu0 0.0
    %2992 = vmatpush1.msra.mxu0 0.0
    %2993 = vmatprep.subr.mxu0 0.0
    %2994 = vmatpush1.msra.mxu0 0.0
    %2995 = vmatprep.subr.mxu0 0.0
    %2996 = vmatpush1.msra.mxu0 0.0
    %2997 = vmatprep.subr.mxu0 0.0
    %2998 = vmatpush1.msra.mxu0 0.0
    %2999 = vmatprep.subr.mxu0 0.0
    %3000 = vmatpush1.msra.mxu0 0.0
    %3001 = vmatprep.subr.mxu0 0.0
    %3002 = vmatpush1.msra.mxu0 0.0
    %3003 = vmatprep.subr.mxu0 0.0
    %3004 = vmatpush1.msra.mxu0 0.0
    %3005 = vmatprep.subr.mxu0 0.0
    %3006 = vmatpush1.msra.mxu0 0.0
    %3007 = vmatprep.subr.mxu0 0.0
    %3008 = vmatpush1.msra.mxu0 0.0
    %3009 = vmatprep.subr.mxu0 0.0
    %3010 = vmatpush1.msra.mxu0 0.0
    %3011 = vmatprep.subr.mxu0 0.0
    %3012 = vmatpush1.msra.mxu0 0.0
    %3013 = vmatprep.subr.mxu0 0.0
    %v3014 = vand.u32 %v2653, 4294901760
    %3015 = vmatpush1.msra.mxu0 %v3014
    %3016 = vmatprep.subr.mxu0 0.0
    %v3017 = vand.u32 %v2652, 4294901760
    %3018 = vmatpush1.msra.mxu0 %v3017
    %3019 = vmatprep.subr.mxu0 0.0
    %v3020 = vand.u32 %v2651, 4294901760
    %3021 = vmatpush1.msra.mxu0 %v3020
    %3022 = vmatprep.subr.mxu0 0.0
    %v3023 = vand.u32 %v2650, 4294901760
    %3024 = vmatpush1.msra.mxu0 %v3023
    %3025 = vmatprep.subr.mxu0 0.0
    %3026 = vmatpush2.msra.mxu0 0.0
    %3027 = vmatprep.subr.mxu0 0.0
    %3028 = vmatpush2.msra.mxu0 0.0
    %3029 = vmatprep.subr.mxu0 0.0
    %3030 = vmatpush2.msra.mxu0 0.0
    %3031 = vmatprep.subr.mxu0 0.0
    %3032 = vmatpush2.msra.mxu0 0.0
    %3033 = vmatprep.subr.mxu0 0.0
    %3034 = vmatpush2.msra.mxu0 0.0
    %3035 = vmatprep.subr.mxu0 0.0
    %3036 = vmatpush2.msra.mxu0 0.0
    %3037 = vmatprep.subr.mxu0 0.0
    %3038 = vmatpush2.msra.mxu0 0.0
    %3039 = vmatprep.subr.mxu0 0.0
    %3040 = vmatpush2.msra.mxu0 0.0
    %3041 = vmatprep.subr.mxu0 0.0
    %3042 = vmatpush2.msra.mxu0 0.0
    %3043 = vmatprep.subr.mxu0 0.0
    %3044 = vmatpush2.msra.mxu0 0.0
    %3045 = vmatprep.subr.mxu0 0.0
    %3046 = vmatpush2.msra.mxu0 0.0
    %3047 = vmatprep.subr.mxu0 0.0
    %3048 = vmatpush2.msra.mxu0 0.0
    %3049 = vmatprep.subr.mxu0 0.0
    %3050 = vmatpush2.msra.mxu0 0.0
    %3051 = vmatprep.subr.mxu0 0.0
    %3052 = vmatpush2.msra.mxu0 0.0
    %3053 = vmatprep.subr.mxu0 0.0
    %3054 = vmatpush2.msra.mxu0 0.0
    %3055 = vmatprep.subr.mxu0 0.0
    %3056 = vmatpush2.msra.mxu0 0.0
    %3057 = vmatprep.mubr.f32.mxu0 0.0
    %v3058 = vand.u32 %v2659, 4294901760
    %v3059 = vsub.f32 %v2659, %v3058
    %v3060 = vand.u32 %v3059, 4294901760
    %3061 = vmatmul.mubr.f32.gmra.mxu0 %v3060
    %v3062 = vpop.f32.mrf.mxu0
    %v3063 = vadd.f32 %v2965, %v3062
    %v3064 = vpop.f32.mrf.mxu0
    %3065 = vmatprep.mubr.f32.mxu0 0.0
    %v3066 = vand.u32 %v2662, 4294901760
    %v3067 = vsub.f32 %v2662, %v3066
    %v3068 = vand.u32 %v3067, 4294901760
    %3069 = vmatmul.mubr.f32.gmra.mxu0 %v3068
    %v3070 = vpop.f32.mrf.mxu0
    %v3071 = vadd.f32 %v2972, %v3070
    %v3072 = vpop.f32.mrf.mxu0
    %3073 = vmatprep.mubr.f32.mxu0 0.0
    %v3074 = vand.u32 %v2665, 4294901760
    %v3075 = vsub.f32 %v2665, %v3074
    %v3076 = vand.u32 %v3075, 4294901760
    %3077 = vmatmul.mubr.f32.gmra.mxu0 %v3076
    %v3078 = vpop.f32.mrf.mxu0
    %v3079 = vadd.f32 %v2979, %v3078
    %v3080 = vpop.f32.mrf.mxu0
    %3081 = vmatprep.mubr.f32.mxu0 0.0
    %v3082 = vand.u32 %v2668, 4294901760
    %v3083 = vsub.f32 %v2668, %v3082
    %v3084 = vand.u32 %v3083, 4294901760
    %3085 = vmatmul.mubr.f32.gmra.mxu0 %v3084
    %v3086 = vpop.f32.mrf.mxu0
    %v3087 = vadd.f32 %v2986, %v3086
    %v3088 = vpop.f32.mrf.mxu0
    %3089 = vdwg.mxu0
    %3090 = vmatprep.subr.mxu0 0.0
    %3091 = vmatpush1.msra.mxu0 0.0
    %3092 = vmatprep.subr.mxu0 0.0
    %3093 = vmatpush1.msra.mxu0 0.0
    %3094 = vmatprep.subr.mxu0 0.0
    %3095 = vmatpush1.msra.mxu0 0.0
    %3096 = vmatprep.subr.mxu0 0.0
    %3097 = vmatpush1.msra.mxu0 0.0
    %3098 = vmatprep.subr.mxu0 0.0
    %3099 = vmatpush1.msra.mxu0 0.0
    %3100 = vmatprep.subr.mxu0 0.0
    %3101 = vmatpush1.msra.mxu0 0.0
    %3102 = vmatprep.subr.mxu0 0.0
    %3103 = vmatpush1.msra.mxu0 0.0
    %3104 = vmatprep.subr.mxu0 0.0
    %3105 = vmatpush1.msra.mxu0 0.0
    %3106 = vmatprep.subr.mxu0 0.0
    %3107 = vmatpush1.msra.mxu0 0.0
    %3108 = vmatprep.subr.mxu0 0.0
    %3109 = vmatpush1.msra.mxu0 0.0
    %3110 = vmatprep.subr.mxu0 0.0
    %3111 = vmatpush1.msra.mxu0 0.0
    %3112 = vmatprep.subr.mxu0 0.0
    %3113 = vmatpush1.msra.mxu0 0.0
    %3114 = vmatprep.subr.mxu0 0.0
    %v3115 = vand.u32 %v2653, 4294901760
    %v3116 = vsub.f32 %v2653, %v3115
    %v3117 = vand.u32 %v3116, 4294901760
    %3118 = vmatpush1.msra.mxu0 %v3117
    %3119 = vmatprep.subr.mxu0 0.0
    %v3120 = vand.u32 %v2652, 4294901760
    %v3121 = vsub.f32 %v2652, %v3120
    %v3122 = vand.u32 %v3121, 4294901760
    %3123 = vmatpush1.msra.mxu0 %v3122
    %3124 = vmatprep.subr.mxu0 0.0
    %v3125 = vand.u32 %v2651, 4294901760
    %v3126 = vsub.f32 %v2651, %v3125
    %v3127 = vand.u32 %v3126, 4294901760
    %3128 = vmatpush1.msra.mxu0 %v3127
    %3129 = vmatprep.subr.mxu0 0.0
    %v3130 = vand.u32 %v2650, 4294901760
    %v3131 = vsub.f32 %v2650, %v3130
    %v3132 = vand.u32 %v3131, 4294901760
    %3133 = vmatpush1.msra.mxu0 %v3132
    %3134 = vmatprep.subr.mxu0 0.0
    %3135 = vmatpush2.msra.mxu0 0.0
    %3136 = vmatprep.subr.mxu0 0.0
    %3137 = vmatpush2.msra.mxu0 0.0
    %3138 = vmatprep.subr.mxu0 0.0
    %3139 = vmatpush2.msra.mxu0 0.0
    %3140 = vmatprep.subr.mxu0 0.0
    %3141 = vmatpush2.msra.mxu0 0.0
    %3142 = vmatprep.subr.mxu0 0.0
    %3143 = vmatpush2.msra.mxu0 0.0
    %3144 = vmatprep.subr.mxu0 0.0
    %3145 = vmatpush2.msra.mxu0 0.0
    %3146 = vmatprep.subr.mxu0 0.0
    %3147 = vmatpush2.msra.mxu0 0.0
    %3148 = vmatprep.subr.mxu0 0.0
    %3149 = vmatpush2.msra.mxu0 0.0
    %3150 = vmatprep.subr.mxu0 0.0
    %3151 = vmatpush2.msra.mxu0 0.0
    %3152 = vmatprep.subr.mxu0 0.0
    %3153 = vmatpush2.msra.mxu0 0.0
    %3154 = vmatprep.subr.mxu0 0.0
    %3155 = vmatpush2.msra.mxu0 0.0
    %3156 = vmatprep.subr.mxu0 0.0
    %3157 = vmatpush2.msra.mxu0 0.0
    %3158 = vmatprep.subr.mxu0 0.0
    %3159 = vmatpush2.msra.mxu0 0.0
    %3160 = vmatprep.subr.mxu0 0.0
    %3161 = vmatpush2.msra.mxu0 0.0
    %3162 = vmatprep.subr.mxu0 0.0
    %3163 = vmatpush2.msra.mxu0 0.0
    %3164 = vmatprep.subr.mxu0 0.0
    %3165 = vmatpush2.msra.mxu0 0.0
    %3166 = vmatprep.mubr.f32.mxu0 0.0
    %v3167 = vand.u32 %v2659, 4294901760
    %3168 = vmatmul.mubr.f32.gmra.mxu0 %v3167
    %v3169 = vpop.f32.mrf.mxu0
    %v3170 = vadd.f32 %v3063, %v3169
    %v3171 = vpop.f32.mrf.mxu0
    %3172 = vmatprep.mubr.f32.mxu0 0.0
    %v3173 = vand.u32 %v2662, 4294901760
    %3174 = vmatmul.mubr.f32.gmra.mxu0 %v3173
    %v3175 = vpop.f32.mrf.mxu0
    %v3176 = vadd.f32 %v3071, %v3175
    %v3177 = vpop.f32.mrf.mxu0
    %3178 = vmatprep.mubr.f32.mxu0 0.0
    %v3179 = vand.u32 %v2665, 4294901760
    %3180 = vmatmul.mubr.f32.gmra.mxu0 %v3179
    %v3181 = vpop.f32.mrf.mxu0
    %v3182 = vadd.f32 %v3079, %v3181
    %v3183 = vpop.f32.mrf.mxu0
    %3184 = vmatprep.mubr.f32.mxu0 0.0
    %v3185 = vand.u32 %v2668, 4294901760
    %3186 = vmatmul.mubr.f32.gmra.mxu0 %v3185
    %v3187 = vpop.f32.mrf.mxu0
    %v3188 = vadd.f32 %v3087, %v3187
    %v3189 = vpop.f32.mrf.mxu0
    %3190 = vdwg.mxu0
    %3191 = vmatprep.subr.mxu0 0.0
    %3192 = vmatpush1.msra.mxu0 0.0
    %3193 = vmatprep.subr.mxu0 0.0
    %3194 = vmatpush1.msra.mxu0 0.0
    %3195 = vmatprep.subr.mxu0 0.0
    %3196 = vmatpush1.msra.mxu0 0.0
    %3197 = vmatprep.subr.mxu0 0.0
    %3198 = vmatpush1.msra.mxu0 0.0
    %3199 = vmatprep.subr.mxu0 0.0
    %3200 = vmatpush1.msra.mxu0 0.0
    %3201 = vmatprep.subr.mxu0 0.0
    %3202 = vmatpush1.msra.mxu0 0.0
    %3203 = vmatprep.subr.mxu0 0.0
    %3204 = vmatpush1.msra.mxu0 0.0
    %3205 = vmatprep.subr.mxu0 0.0
    %3206 = vmatpush1.msra.mxu0 0.0
    %3207 = vmatprep.subr.mxu0 0.0
    %3208 = vmatpush1.msra.mxu0 0.0
    %3209 = vmatprep.subr.mxu0 0.0
    %3210 = vmatpush1.msra.mxu0 0.0
    %3211 = vmatprep.subr.mxu0 0.0
    %3212 = vmatpush1.msra.mxu0 0.0
    %3213 = vmatprep.subr.mxu0 0.0
    %3214 = vmatpush1.msra.mxu0 0.0
    %3215 = vmatprep.subr.mxu0 0.0
    %v3216 = vand.u32 %v2653, 4294901760
    %3217 = vmatpush1.msra.mxu0 %v3216
    %3218 = vmatprep.subr.mxu0 0.0
    %v3219 = vand.u32 %v2652, 4294901760
    %3220 = vmatpush1.msra.mxu0 %v3219
    %3221 = vmatprep.subr.mxu0 0.0
    %v3222 = vand.u32 %v2651, 4294901760
    %3223 = vmatpush1.msra.mxu0 %v3222
    %3224 = vmatprep.subr.mxu0 0.0
    %v3225 = vand.u32 %v2650, 4294901760
    %3226 = vmatpush1.msra.mxu0 %v3225
    %3227 = vmatprep.subr.mxu0 0.0
    %3228 = vmatpush2.msra.mxu0 0.0
    %3229 = vmatprep.subr.mxu0 0.0
    %3230 = vmatpush2.msra.mxu0 0.0
    %3231 = vmatprep.subr.mxu0 0.0
    %3232 = vmatpush2.msra.mxu0 0.0
    %3233 = vmatprep.subr.mxu0 0.0
    %3234 = vmatpush2.msra.mxu0 0.0
    %3235 = vmatprep.subr.mxu0 0.0
    %3236 = vmatpush2.msra.mxu0 0.0
    %3237 = vmatprep.subr.mxu0 0.0
    %3238 = vmatpush2.msra.mxu0 0.0
    %3239 = vmatprep.subr.mxu0 0.0
    %3240 = vmatpush2.msra.mxu0 0.0
    %3241 = vmatprep.subr.mxu0 0.0
    %3242 = vmatpush2.msra.mxu0 0.0
    %3243 = vmatprep.subr.mxu0 0.0
    %3244 = vmatpush2.msra.mxu0 0.0
    %3245 = vmatprep.subr.mxu0 0.0
    %3246 = vmatpush2.msra.mxu0 0.0
    %3247 = vmatprep.subr.mxu0 0.0
    %3248 = vmatpush2.msra.mxu0 0.0
    %3249 = vmatprep.subr.mxu0 0.0
    %3250 = vmatpush2.msra.mxu0 0.0
    %3251 = vmatprep.subr.mxu0 0.0
    %3252 = vmatpush2.msra.mxu0 0.0
    %3253 = vmatprep.subr.mxu0 0.0
    %3254 = vmatpush2.msra.mxu0 0.0
    %3255 = vmatprep.subr.mxu0 0.0
    %3256 = vmatpush2.msra.mxu0 0.0
    %3257 = vmatprep.subr.mxu0 0.0
    %3258 = vmatpush2.msra.mxu0 0.0
    %3259 = vmatprep.mubr.f32.mxu0 0.0
    %v3260 = vand.u32 %v2659, 4294901760
    %3261 = vmatmul.mubr.f32.gmra.mxu0 %v3260
    %v3262 = vpop.f32.mrf.mxu0
    %v3263 = vadd.f32 %v3170, %v3262
    %v3264 = vpop.f32.mrf.mxu0
    %3265 = vmatprep.mubr.f32.mxu0 0.0
    %v3266 = vand.u32 %v2662, 4294901760
    %3267 = vmatmul.mubr.f32.gmra.mxu0 %v3266
    %v3268 = vpop.f32.mrf.mxu0
    %v3269 = vadd.f32 %v3176, %v3268
    %v3270 = vpop.f32.mrf.mxu0
    %3271 = vmatprep.mubr.f32.mxu0 0.0
    %v3272 = vand.u32 %v2665, 4294901760
    %3273 = vmatmul.mubr.f32.gmra.mxu0 %v3272
    %v3274 = vpop.f32.mrf.mxu0
    %v3275 = vadd.f32 %v3182, %v3274
    %v3276 = vpop.f32.mrf.mxu0
    %3277 = vmatprep.mubr.f32.mxu0 0.0
    %v3278 = vand.u32 %v2668, 4294901760
    %3279 = vmatmul.mubr.f32.gmra.mxu0 %v3278
    %v3280 = vpop.f32.mrf.mxu0
    %v3281 = vadd.f32 %v3188, %v3280
    %v3282 = vpop.f32.mrf.mxu0
    %3283 = vdwg.mxu0
    %v3284 = vadd.f32 %v1372, %v3263
    %v3285 = vadd.f32 %v1378, %v3269
    %v3286 = vadd.f32 %v1384, %v3275
    %v3287 = vadd.f32 %v1390, %v3281
    %v3288 = vld [vmem:[%s0 + $0x2] sm:$0xff]
    %v3289 = vld [vmem:[%s0 + $0xa] sm:$0xff]
    %v3290 = vld [vmem:[%s0 + $0x12] sm:$0xff]
    %v3291 = vld [vmem:[%s0 + $0x1a] sm:$0xff]
    %v3293 = vsel %vm34, %v3288, 0
    %v3296 = vsel %vm34, %v3289, 0
    %v3299 = vsel %vm34, %v3290, 0
    %v3302 = vsel %vm34, %v3291, 0
    %3304 = vmatprep.subr.mxu0 0.0
    %3305 = vmatpush1.msra.mxu0 0.0
    %3306 = vmatprep.subr.mxu0 0.0
    %3307 = vmatpush1.msra.mxu0 0.0
    %3308 = vmatprep.subr.mxu0 0.0
    %3309 = vmatpush1.msra.mxu0 0.0
    %3310 = vmatprep.subr.mxu0 0.0
    %3311 = vmatpush1.msra.mxu0 0.0
    %3312 = vmatprep.subr.mxu0 0.0
    %3313 = vmatpush1.msra.mxu0 0.0
    %3314 = vmatprep.subr.mxu0 0.0
    %3315 = vmatpush1.msra.mxu0 0.0
    %3316 = vmatprep.subr.mxu0 0.0
    %3317 = vmatpush1.msra.mxu0 0.0
    %3318 = vmatprep.subr.mxu0 0.0
    %3319 = vmatpush1.msra.mxu0 0.0
    %3320 = vmatprep.subr.mxu0 0.0
    %3321 = vmatpush1.msra.mxu0 0.0
    %3322 = vmatprep.subr.mxu0 0.0
    %3323 = vmatpush1.msra.mxu0 0.0
    %3324 = vmatprep.subr.mxu0 0.0
    %3325 = vmatpush1.msra.mxu0 0.0
    %3326 = vmatprep.subr.mxu0 0.0
    %3327 = vmatpush1.msra.mxu0 0.0
    %3328 = vmatprep.subr.mxu0 0.0
    %v3329 = vand.u32 %v2653, 4294901760
    %3330 = vmatpush1.msra.mxu0 %v3329
    %3331 = vmatprep.subr.mxu0 0.0
    %v3332 = vand.u32 %v2652, 4294901760
    %3333 = vmatpush1.msra.mxu0 %v3332
    %3334 = vmatprep.subr.mxu0 0.0
    %v3335 = vand.u32 %v2651, 4294901760
    %3336 = vmatpush1.msra.mxu0 %v3335
    %3337 = vmatprep.subr.mxu0 0.0
    %v3338 = vand.u32 %v2650, 4294901760
    %3339 = vmatpush1.msra.mxu0 %v3338
    %3340 = vmatprep.subr.mxu0 0.0
    %3341 = vmatpush2.msra.mxu0 0.0
    %3342 = vmatprep.subr.mxu0 0.0
    %3343 = vmatpush2.msra.mxu0 0.0
    %3344 = vmatprep.subr.mxu0 0.0
    %3345 = vmatpush2.msra.mxu0 0.0
    %3346 = vmatprep.subr.mxu0 0.0
    %3347 = vmatpush2.msra.mxu0 0.0
    %3348 = vmatprep.subr.mxu0 0.0
    %3349 = vmatpush2.msra.mxu0 0.0
    %3350 = vmatprep.subr.mxu0 0.0
    %3351 = vmatpush2.msra.mxu0 0.0
    %3352 = vmatprep.subr.mxu0 0.0
    %3353 = vmatpush2.msra.mxu0 0.0
    %3354 = vmatprep.subr.mxu0 0.0
    %3355 = vmatpush2.msra.mxu0 0.0
    %3356 = vmatprep.subr.mxu0 0.0
    %3357 = vmatpush2.msra.mxu0 0.0
    %3358 = vmatprep.subr.mxu0 0.0
    %3359 = vmatpush2.msra.mxu0 0.0
    %3360 = vmatprep.subr.mxu0 0.0
    %3361 = vmatpush2.msra.mxu0 0.0
    %3362 = vmatprep.subr.mxu0 0.0
    %3363 = vmatpush2.msra.mxu0 0.0
    %3364 = vmatprep.subr.mxu0 0.0
    %3365 = vmatpush2.msra.mxu0 0.0
    %3366 = vmatprep.subr.mxu0 0.0
    %3367 = vmatpush2.msra.mxu0 0.0
    %3368 = vmatprep.subr.mxu0 0.0
    %3369 = vmatpush2.msra.mxu0 0.0
    %3370 = vmatprep.subr.mxu0 0.0
    %3371 = vmatpush2.msra.mxu0 0.0
    %3372 = vmatprep.mubr.f32.mxu0 0.0
    %v3373 = vand.u32 %v3293, 4294901760
    %v3374 = vsub.f32 %v3293, %v3373
    %v3375 = vand.u32 %v3374, 4294901760
    %v3376 = vsub.f32 %v3374, %v3375
    %v3377 = vand.u32 %v3376, 4294901760
    %3378 = vmatmul.mubr.f32.gmra.mxu0 %v3377
    %v3379 = vpop.f32.mrf.mxu0
    %v3380 = vadd.f32 0.0, %v3379
    %v3381 = vpop.f32.mrf.mxu0
    %3382 = vmatprep.mubr.f32.mxu0 0.0
    %v3383 = vand.u32 %v3296, 4294901760
    %v3384 = vsub.f32 %v3296, %v3383
    %v3385 = vand.u32 %v3384, 4294901760
    %v3386 = vsub.f32 %v3384, %v3385
    %v3387 = vand.u32 %v3386, 4294901760
    %3388 = vmatmul.mubr.f32.gmra.mxu0 %v3387
    %v3389 = vpop.f32.mrf.mxu0
    %v3390 = vadd.f32 0.0, %v3389
    %v3391 = vpop.f32.mrf.mxu0
    %3392 = vmatprep.mubr.f32.mxu0 0.0
    %v3393 = vand.u32 %v3299, 4294901760
    %v3394 = vsub.f32 %v3299, %v3393
    %v3395 = vand.u32 %v3394, 4294901760
    %v3396 = vsub.f32 %v3394, %v3395
    %v3397 = vand.u32 %v3396, 4294901760
    %3398 = vmatmul.mubr.f32.gmra.mxu0 %v3397
    %v3399 = vpop.f32.mrf.mxu0
    %v3400 = vadd.f32 0.0, %v3399
    %v3401 = vpop.f32.mrf.mxu0
    %3402 = vmatprep.mubr.f32.mxu0 0.0
    %v3403 = vand.u32 %v3302, 4294901760
    %v3404 = vsub.f32 %v3302, %v3403
    %v3405 = vand.u32 %v3404, 4294901760
    %v3406 = vsub.f32 %v3404, %v3405
    %v3407 = vand.u32 %v3406, 4294901760
    %3408 = vmatmul.mubr.f32.gmra.mxu0 %v3407
    %v3409 = vpop.f32.mrf.mxu0
    %v3410 = vadd.f32 0.0, %v3409
    %v3411 = vpop.f32.mrf.mxu0
    %3412 = vdwg.mxu0
    %3413 = vmatprep.subr.mxu0 0.0
    %3414 = vmatpush1.msra.mxu0 0.0
    %3415 = vmatprep.subr.mxu0 0.0
    %3416 = vmatpush1.msra.mxu0 0.0
    %3417 = vmatprep.subr.mxu0 0.0
    %3418 = vmatpush1.msra.mxu0 0.0
    %3419 = vmatprep.subr.mxu0 0.0
    %3420 = vmatpush1.msra.mxu0 0.0
    %3421 = vmatprep.subr.mxu0 0.0
    %3422 = vmatpush1.msra.mxu0 0.0
    %3423 = vmatprep.subr.mxu0 0.0
    %3424 = vmatpush1.msra.mxu0 0.0
    %3425 = vmatprep.subr.mxu0 0.0
    %3426 = vmatpush1.msra.mxu0 0.0
    %3427 = vmatprep.subr.mxu0 0.0
    %3428 = vmatpush1.msra.mxu0 0.0
    %3429 = vmatprep.subr.mxu0 0.0
    %3430 = vmatpush1.msra.mxu0 0.0
    %3431 = vmatprep.subr.mxu0 0.0
    %3432 = vmatpush1.msra.mxu0 0.0
    %3433 = vmatprep.subr.mxu0 0.0
    %3434 = vmatpush1.msra.mxu0 0.0
    %3435 = vmatprep.subr.mxu0 0.0
    %3436 = vmatpush1.msra.mxu0 0.0
    %3437 = vmatprep.subr.mxu0 0.0
    %v3438 = vand.u32 %v2653, 4294901760
    %v3439 = vsub.f32 %v2653, %v3438
    %v3440 = vand.u32 %v3439, 4294901760
    %v3441 = vsub.f32 %v3439, %v3440
    %v3442 = vand.u32 %v3441, 4294901760
    %3443 = vmatpush1.msra.mxu0 %v3442
    %3444 = vmatprep.subr.mxu0 0.0
    %v3445 = vand.u32 %v2652, 4294901760
    %v3446 = vsub.f32 %v2652, %v3445
    %v3447 = vand.u32 %v3446, 4294901760
    %v3448 = vsub.f32 %v3446, %v3447
    %v3449 = vand.u32 %v3448, 4294901760
    %3450 = vmatpush1.msra.mxu0 %v3449
    %3451 = vmatprep.subr.mxu0 0.0
    %v3452 = vand.u32 %v2651, 4294901760
    %v3453 = vsub.f32 %v2651, %v3452
    %v3454 = vand.u32 %v3453, 4294901760
    %v3455 = vsub.f32 %v3453, %v3454
    %v3456 = vand.u32 %v3455, 4294901760
    %3457 = vmatpush1.msra.mxu0 %v3456
    %3458 = vmatprep.subr.mxu0 0.0
    %v3459 = vand.u32 %v2650, 4294901760
    %v3460 = vsub.f32 %v2650, %v3459
    %v3461 = vand.u32 %v3460, 4294901760
    %v3462 = vsub.f32 %v3460, %v3461
    %v3463 = vand.u32 %v3462, 4294901760
    %3464 = vmatpush1.msra.mxu0 %v3463
    %3465 = vmatprep.subr.mxu0 0.0
    %3466 = vmatpush2.msra.mxu0 0.0
    %3467 = vmatprep.subr.mxu0 0.0
    %3468 = vmatpush2.msra.mxu0 0.0
    %3469 = vmatprep.subr.mxu0 0.0
    %3470 = vmatpush2.msra.mxu0 0.0
    %3471 = vmatprep.subr.mxu0 0.0
    %3472 = vmatpush2.msra.mxu0 0.0
    %3473 = vmatprep.subr.mxu0 0.0
    %3474 = vmatpush2.msra.mxu0 0.0
    %3475 = vmatprep.subr.mxu0 0.0
    %3476 = vmatpush2.msra.mxu0 0.0
    %3477 = vmatprep.subr.mxu0 0.0
    %3478 = vmatpush2.msra.mxu0 0.0
    %3479 = vmatprep.subr.mxu0 0.0
    %3480 = vmatpush2.msra.mxu0 0.0
    %3481 = vmatprep.subr.mxu0 0.0
    %3482 = vmatpush2.msra.mxu0 0.0
    %3483 = vmatprep.subr.mxu0 0.0
    %3484 = vmatpush2.msra.mxu0 0.0
    %3485 = vmatprep.subr.mxu0 0.0
    %3486 = vmatpush2.msra.mxu0 0.0
    %3487 = vmatprep.subr.mxu0 0.0
    %3488 = vmatpush2.msra.mxu0 0.0
    %3489 = vmatprep.subr.mxu0 0.0
    %3490 = vmatpush2.msra.mxu0 0.0
    %3491 = vmatprep.subr.mxu0 0.0
    %3492 = vmatpush2.msra.mxu0 0.0
    %3493 = vmatprep.subr.mxu0 0.0
    %3494 = vmatpush2.msra.mxu0 0.0
    %3495 = vmatprep.subr.mxu0 0.0
    %3496 = vmatpush2.msra.mxu0 0.0
    %3497 = vmatprep.mubr.f32.mxu0 0.0
    %v3498 = vand.u32 %v3293, 4294901760
    %3499 = vmatmul.mubr.f32.gmra.mxu0 %v3498
    %v3500 = vpop.f32.mrf.mxu0
    %v3501 = vadd.f32 %v3380, %v3500
    %v3502 = vpop.f32.mrf.mxu0
    %3503 = vmatprep.mubr.f32.mxu0 0.0
    %v3504 = vand.u32 %v3296, 4294901760
    %3505 = vmatmul.mubr.f32.gmra.mxu0 %v3504
    %v3506 = vpop.f32.mrf.mxu0
    %v3507 = vadd.f32 %v3390, %v3506
    %v3508 = vpop.f32.mrf.mxu0
    %3509 = vmatprep.mubr.f32.mxu0 0.0
    %v3510 = vand.u32 %v3299, 4294901760
    %3511 = vmatmul.mubr.f32.gmra.mxu0 %v3510
    %v3512 = vpop.f32.mrf.mxu0
    %v3513 = vadd.f32 %v3400, %v3512
    %v3514 = vpop.f32.mrf.mxu0
    %3515 = vmatprep.mubr.f32.mxu0 0.0
    %v3516 = vand.u32 %v3302, 4294901760
    %3517 = vmatmul.mubr.f32.gmra.mxu0 %v3516
    %v3518 = vpop.f32.mrf.mxu0
    %v3519 = vadd.f32 %v3410, %v3518
    %v3520 = vpop.f32.mrf.mxu0
    %3521 = vdwg.mxu0
    %3522 = vmatprep.subr.mxu0 0.0
    %3523 = vmatpush1.msra.mxu0 0.0
    %3524 = vmatprep.subr.mxu0 0.0
    %3525 = vmatpush1.msra.mxu0 0.0
    %3526 = vmatprep.subr.mxu0 0.0
    %3527 = vmatpush1.msra.mxu0 0.0
    %3528 = vmatprep.subr.mxu0 0.0
    %3529 = vmatpush1.msra.mxu0 0.0
    %3530 = vmatprep.subr.mxu0 0.0
    %3531 = vmatpush1.msra.mxu0 0.0
    %3532 = vmatprep.subr.mxu0 0.0
    %3533 = vmatpush1.msra.mxu0 0.0
    %3534 = vmatprep.subr.mxu0 0.0
    %3535 = vmatpush1.msra.mxu0 0.0
    %3536 = vmatprep.subr.mxu0 0.0
    %3537 = vmatpush1.msra.mxu0 0.0
    %3538 = vmatprep.subr.mxu0 0.0
    %3539 = vmatpush1.msra.mxu0 0.0
    %3540 = vmatprep.subr.mxu0 0.0
    %3541 = vmatpush1.msra.mxu0 0.0
    %3542 = vmatprep.subr.mxu0 0.0
    %3543 = vmatpush1.msra.mxu0 0.0
    %3544 = vmatprep.subr.mxu0 0.0
    %3545 = vmatpush1.msra.mxu0 0.0
    %3546 = vmatprep.subr.mxu0 0.0
    %v3547 = vand.u32 %v2653, 4294901760
    %v3548 = vsub.f32 %v2653, %v3547
    %3549 = vmatpush1.msra.mxu0 %v3548
    %3550 = vmatprep.subr.mxu0 0.0
    %v3551 = vand.u32 %v2652, 4294901760
    %v3552 = vsub.f32 %v2652, %v3551
    %3553 = vmatpush1.msra.mxu0 %v3552
    %3554 = vmatprep.subr.mxu0 0.0
    %v3555 = vand.u32 %v2651, 4294901760
    %v3556 = vsub.f32 %v2651, %v3555
    %3557 = vmatpush1.msra.mxu0 %v3556
    %3558 = vmatprep.subr.mxu0 0.0
    %v3559 = vand.u32 %v2650, 4294901760
    %v3560 = vsub.f32 %v2650, %v3559
    %3561 = vmatpush1.msra.mxu0 %v3560
    %3562 = vmatprep.subr.mxu0 0.0
    %3563 = vmatpush2.msra.mxu0 0.0
    %3564 = vmatprep.subr.mxu0 0.0
    %3565 = vmatpush2.msra.mxu0 0.0
    %3566 = vmatprep.subr.mxu0 0.0
    %3567 = vmatpush2.msra.mxu0 0.0
    %3568 = vmatprep.subr.mxu0 0.0
    %3569 = vmatpush2.msra.mxu0 0.0
    %3570 = vmatprep.subr.mxu0 0.0
    %3571 = vmatpush2.msra.mxu0 0.0
    %3572 = vmatprep.subr.mxu0 0.0
    %3573 = vmatpush2.msra.mxu0 0.0
    %3574 = vmatprep.subr.mxu0 0.0
    %3575 = vmatpush2.msra.mxu0 0.0
    %3576 = vmatprep.subr.mxu0 0.0
    %3577 = vmatpush2.msra.mxu0 0.0
    %3578 = vmatprep.subr.mxu0 0.0
    %3579 = vmatpush2.msra.mxu0 0.0
    %3580 = vmatprep.subr.mxu0 0.0
    %3581 = vmatpush2.msra.mxu0 0.0
    %3582 = vmatprep.subr.mxu0 0.0
    %3583 = vmatpush2.msra.mxu0 0.0
    %3584 = vmatprep.subr.mxu0 0.0
    %3585 = vmatpush2.msra.mxu0 0.0
    %3586 = vmatprep.subr.mxu0 0.0
    %3587 = vmatpush2.msra.mxu0 0.0
    %3588 = vmatprep.subr.mxu0 0.0
    %3589 = vmatpush2.msra.mxu0 0.0
    %3590 = vmatprep.subr.mxu0 0.0
    %3591 = vmatpush2.msra.mxu0 0.0
    %3592 = vmatprep.subr.mxu0 0.0
    %3593 = vmatpush2.msra.mxu0 0.0
    %3594 = vmatprep.mubr.f32.mxu0 0.0
    %v3595 = vand.u32 %v3293, 4294901760
    %v3596 = vsub.f32 %v3293, %v3595
    %3597 = vmatmul.mubr.f32.gmra.mxu0 %v3596
    %v3598 = vpop.f32.mrf.mxu0
    %v3599 = vadd.f32 %v3501, %v3598
    %v3600 = vpop.f32.mrf.mxu0
    %3601 = vmatprep.mubr.f32.mxu0 0.0
    %v3602 = vand.u32 %v3296, 4294901760
    %v3603 = vsub.f32 %v3296, %v3602
    %3604 = vmatmul.mubr.f32.gmra.mxu0 %v3603
    %v3605 = vpop.f32.mrf.mxu0
    %v3606 = vadd.f32 %v3507, %v3605
    %v3607 = vpop.f32.mrf.mxu0
    %3608 = vmatprep.mubr.f32.mxu0 0.0
    %v3609 = vand.u32 %v3299, 4294901760
    %v3610 = vsub.f32 %v3299, %v3609
    %3611 = vmatmul.mubr.f32.gmra.mxu0 %v3610
    %v3612 = vpop.f32.mrf.mxu0
    %v3613 = vadd.f32 %v3513, %v3612
    %v3614 = vpop.f32.mrf.mxu0
    %3615 = vmatprep.mubr.f32.mxu0 0.0
    %v3616 = vand.u32 %v3302, 4294901760
    %v3617 = vsub.f32 %v3302, %v3616
    %3618 = vmatmul.mubr.f32.gmra.mxu0 %v3617
    %v3619 = vpop.f32.mrf.mxu0
    %v3620 = vadd.f32 %v3519, %v3619
    %v3621 = vpop.f32.mrf.mxu0
    %3622 = vdwg.mxu0
    %3623 = vmatprep.subr.mxu0 0.0
    %3624 = vmatpush1.msra.mxu0 0.0
    %3625 = vmatprep.subr.mxu0 0.0
    %3626 = vmatpush1.msra.mxu0 0.0
    %3627 = vmatprep.subr.mxu0 0.0
    %3628 = vmatpush1.msra.mxu0 0.0
    %3629 = vmatprep.subr.mxu0 0.0
    %3630 = vmatpush1.msra.mxu0 0.0
    %3631 = vmatprep.subr.mxu0 0.0
    %3632 = vmatpush1.msra.mxu0 0.0
    %3633 = vmatprep.subr.mxu0 0.0
    %3634 = vmatpush1.msra.mxu0 0.0
    %3635 = vmatprep.subr.mxu0 0.0
    %3636 = vmatpush1.msra.mxu0 0.0
    %3637 = vmatprep.subr.mxu0 0.0
    %3638 = vmatpush1.msra.mxu0 0.0
    %3639 = vmatprep.subr.mxu0 0.0
    %3640 = vmatpush1.msra.mxu0 0.0
    %3641 = vmatprep.subr.mxu0 0.0
    %3642 = vmatpush1.msra.mxu0 0.0
    %3643 = vmatprep.subr.mxu0 0.0
    %3644 = vmatpush1.msra.mxu0 0.0
    %3645 = vmatprep.subr.mxu0 0.0
    %3646 = vmatpush1.msra.mxu0 0.0
    %3647 = vmatprep.subr.mxu0 0.0
    %v3648 = vand.u32 %v2653, 4294901760
    %3649 = vmatpush1.msra.mxu0 %v3648
    %3650 = vmatprep.subr.mxu0 0.0
    %v3651 = vand.u32 %v2652, 4294901760
    %3652 = vmatpush1.msra.mxu0 %v3651
    %3653 = vmatprep.subr.mxu0 0.0
    %v3654 = vand.u32 %v2651, 4294901760
    %3655 = vmatpush1.msra.mxu0 %v3654
    %3656 = vmatprep.subr.mxu0 0.0
    %v3657 = vand.u32 %v2650, 4294901760
    %3658 = vmatpush1.msra.mxu0 %v3657
    %3659 = vmatprep.subr.mxu0 0.0
    %3660 = vmatpush2.msra.mxu0 0.0
    %3661 = vmatprep.subr.mxu0 0.0
    %3662 = vmatpush2.msra.mxu0 0.0
    %3663 = vmatprep.subr.mxu0 0.0
    %3664 = vmatpush2.msra.mxu0 0.0
    %3665 = vmatprep.subr.mxu0 0.0
    %3666 = vmatpush2.msra.mxu0 0.0
    %3667 = vmatprep.subr.mxu0 0.0
    %3668 = vmatpush2.msra.mxu0 0.0
    %3669 = vmatprep.subr.mxu0 0.0
    %3670 = vmatpush2.msra.mxu0 0.0
    %3671 = vmatprep.subr.mxu0 0.0
    %3672 = vmatpush2.msra.mxu0 0.0
    %3673 = vmatprep.subr.mxu0 0.0
    %3674 = vmatpush2.msra.mxu0 0.0
    %3675 = vmatprep.subr.mxu0 0.0
    %3676 = vmatpush2.msra.mxu0 0.0
    %3677 = vmatprep.subr.mxu0 0.0
    %3678 = vmatpush2.msra.mxu0 0.0
    %3679 = vmatprep.subr.mxu0 0.0
    %3680 = vmatpush2.msra.mxu0 0.0
    %3681 = vmatprep.subr.mxu0 0.0
    %3682 = vmatpush2.msra.mxu0 0.0
    %3683 = vmatprep.subr.mxu0 0.0
    %3684 = vmatpush2.msra.mxu0 0.0
    %3685 = vmatprep.subr.mxu0 0.0
    %3686 = vmatpush2.msra.mxu0 0.0
    %3687 = vmatprep.subr.mxu0 0.0
    %3688 = vmatpush2.msra.mxu0 0.0
    %3689 = vmatprep.subr.mxu0 0.0
    %3690 = vmatpush2.msra.mxu0 0.0
    %3691 = vmatprep.mubr.f32.mxu0 0.0
    %v3692 = vand.u32 %v3293, 4294901760
    %v3693 = vsub.f32 %v3293, %v3692
    %v3694 = vand.u32 %v3693, 4294901760
    %3695 = vmatmul.mubr.f32.gmra.mxu0 %v3694
    %v3696 = vpop.f32.mrf.mxu0
    %v3697 = vadd.f32 %v3599, %v3696
    %v3698 = vpop.f32.mrf.mxu0
    %3699 = vmatprep.mubr.f32.mxu0 0.0
    %v3700 = vand.u32 %v3296, 4294901760
    %v3701 = vsub.f32 %v3296, %v3700
    %v3702 = vand.u32 %v3701, 4294901760
    %3703 = vmatmul.mubr.f32.gmra.mxu0 %v3702
    %v3704 = vpop.f32.mrf.mxu0
    %v3705 = vadd.f32 %v3606, %v3704
    %v3706 = vpop.f32.mrf.mxu0
    %3707 = vmatprep.mubr.f32.mxu0 0.0
    %v3708 = vand.u32 %v3299, 4294901760
    %v3709 = vsub.f32 %v3299, %v3708
    %v3710 = vand.u32 %v3709, 4294901760
    %3711 = vmatmul.mubr.f32.gmra.mxu0 %v3710
    %v3712 = vpop.f32.mrf.mxu0
    %v3713 = vadd.f32 %v3613, %v3712
    %v3714 = vpop.f32.mrf.mxu0
    %3715 = vmatprep.mubr.f32.mxu0 0.0
    %v3716 = vand.u32 %v3302, 4294901760
    %v3717 = vsub.f32 %v3302, %v3716
    %v3718 = vand.u32 %v3717, 4294901760
    %3719 = vmatmul.mubr.f32.gmra.mxu0 %v3718
    %v3720 = vpop.f32.mrf.mxu0
    %v3721 = vadd.f32 %v3620, %v3720
    %v3722 = vpop.f32.mrf.mxu0
    %3723 = vdwg.mxu0
    %3724 = vmatprep.subr.mxu0 0.0
    %3725 = vmatpush1.msra.mxu0 0.0
    %3726 = vmatprep.subr.mxu0 0.0
    %3727 = vmatpush1.msra.mxu0 0.0
    %3728 = vmatprep.subr.mxu0 0.0
    %3729 = vmatpush1.msra.mxu0 0.0
    %3730 = vmatprep.subr.mxu0 0.0
    %3731 = vmatpush1.msra.mxu0 0.0
    %3732 = vmatprep.subr.mxu0 0.0
    %3733 = vmatpush1.msra.mxu0 0.0
    %3734 = vmatprep.subr.mxu0 0.0
    %3735 = vmatpush1.msra.mxu0 0.0
    %3736 = vmatprep.subr.mxu0 0.0
    %3737 = vmatpush1.msra.mxu0 0.0
    %3738 = vmatprep.subr.mxu0 0.0
    %3739 = vmatpush1.msra.mxu0 0.0
    %3740 = vmatprep.subr.mxu0 0.0
    %3741 = vmatpush1.msra.mxu0 0.0
    %3742 = vmatprep.subr.mxu0 0.0
    %3743 = vmatpush1.msra.mxu0 0.0
    %3744 = vmatprep.subr.mxu0 0.0
    %3745 = vmatpush1.msra.mxu0 0.0
    %3746 = vmatprep.subr.mxu0 0.0
    %3747 = vmatpush1.msra.mxu0 0.0
    %3748 = vmatprep.subr.mxu0 0.0
    %v3749 = vand.u32 %v2653, 4294901760
    %v3750 = vsub.f32 %v2653, %v3749
    %v3751 = vand.u32 %v3750, 4294901760
    %3752 = vmatpush1.msra.mxu0 %v3751
    %3753 = vmatprep.subr.mxu0 0.0
    %v3754 = vand.u32 %v2652, 4294901760
    %v3755 = vsub.f32 %v2652, %v3754
    %v3756 = vand.u32 %v3755, 4294901760
    %3757 = vmatpush1.msra.mxu0 %v3756
    %3758 = vmatprep.subr.mxu0 0.0
    %v3759 = vand.u32 %v2651, 4294901760
    %v3760 = vsub.f32 %v2651, %v3759
    %v3761 = vand.u32 %v3760, 4294901760
    %3762 = vmatpush1.msra.mxu0 %v3761
    %3763 = vmatprep.subr.mxu0 0.0
    %v3764 = vand.u32 %v2650, 4294901760
    %v3765 = vsub.f32 %v2650, %v3764
    %v3766 = vand.u32 %v3765, 4294901760
    %3767 = vmatpush1.msra.mxu0 %v3766
    %3768 = vmatprep.subr.mxu0 0.0
    %3769 = vmatpush2.msra.mxu0 0.0
    %3770 = vmatprep.subr.mxu0 0.0
    %3771 = vmatpush2.msra.mxu0 0.0
    %3772 = vmatprep.subr.mxu0 0.0
    %3773 = vmatpush2.msra.mxu0 0.0
    %3774 = vmatprep.subr.mxu0 0.0
    %3775 = vmatpush2.msra.mxu0 0.0
    %3776 = vmatprep.subr.mxu0 0.0
    %3777 = vmatpush2.msra.mxu0 0.0
    %3778 = vmatprep.subr.mxu0 0.0
    %3779 = vmatpush2.msra.mxu0 0.0
    %3780 = vmatprep.subr.mxu0 0.0
    %3781 = vmatpush2.msra.mxu0 0.0
    %3782 = vmatprep.subr.mxu0 0.0
    %3783 = vmatpush2.msra.mxu0 0.0
    %3784 = vmatprep.subr.mxu0 0.0
    %3785 = vmatpush2.msra.mxu0 0.0
    %3786 = vmatprep.subr.mxu0 0.0
    %3787 = vmatpush2.msra.mxu0 0.0
    %3788 = vmatprep.subr.mxu0 0.0
    %3789 = vmatpush2.msra.mxu0 0.0
    %3790 = vmatprep.subr.mxu0 0.0
    %3791 = vmatpush2.msra.mxu0 0.0
    %3792 = vmatprep.subr.mxu0 0.0
    %3793 = vmatpush2.msra.mxu0 0.0
    %3794 = vmatprep.subr.mxu0 0.0
    %3795 = vmatpush2.msra.mxu0 0.0
    %3796 = vmatprep.subr.mxu0 0.0
    %3797 = vmatpush2.msra.mxu0 0.0
    %3798 = vmatprep.subr.mxu0 0.0
    %3799 = vmatpush2.msra.mxu0 0.0
    %3800 = vmatprep.mubr.f32.mxu0 0.0
    %v3801 = vand.u32 %v3293, 4294901760
    %3802 = vmatmul.mubr.f32.gmra.mxu0 %v3801
    %v3803 = vpop.f32.mrf.mxu0
    %v3804 = vadd.f32 %v3697, %v3803
    %v3805 = vpop.f32.mrf.mxu0
    %3806 = vmatprep.mubr.f32.mxu0 0.0
    %v3807 = vand.u32 %v3296, 4294901760
    %3808 = vmatmul.mubr.f32.gmra.mxu0 %v3807
    %v3809 = vpop.f32.mrf.mxu0
    %v3810 = vadd.f32 %v3705, %v3809
    %v3811 = vpop.f32.mrf.mxu0
    %3812 = vmatprep.mubr.f32.mxu0 0.0
    %v3813 = vand.u32 %v3299, 4294901760
    %3814 = vmatmul.mubr.f32.gmra.mxu0 %v3813
    %v3815 = vpop.f32.mrf.mxu0
    %v3816 = vadd.f32 %v3713, %v3815
    %v3817 = vpop.f32.mrf.mxu0
    %3818 = vmatprep.mubr.f32.mxu0 0.0
    %v3819 = vand.u32 %v3302, 4294901760
    %3820 = vmatmul.mubr.f32.gmra.mxu0 %v3819
    %v3821 = vpop.f32.mrf.mxu0
    %v3822 = vadd.f32 %v3721, %v3821
    %v3823 = vpop.f32.mrf.mxu0
    %3824 = vdwg.mxu0
    %3825 = vmatprep.subr.mxu0 0.0
    %3826 = vmatpush1.msra.mxu0 0.0
    %3827 = vmatprep.subr.mxu0 0.0
    %3828 = vmatpush1.msra.mxu0 0.0
    %3829 = vmatprep.subr.mxu0 0.0
    %3830 = vmatpush1.msra.mxu0 0.0
    %3831 = vmatprep.subr.mxu0 0.0
    %3832 = vmatpush1.msra.mxu0 0.0
    %3833 = vmatprep.subr.mxu0 0.0
    %3834 = vmatpush1.msra.mxu0 0.0
    %3835 = vmatprep.subr.mxu0 0.0
    %3836 = vmatpush1.msra.mxu0 0.0
    %3837 = vmatprep.subr.mxu0 0.0
    %3838 = vmatpush1.msra.mxu0 0.0
    %3839 = vmatprep.subr.mxu0 0.0
    %3840 = vmatpush1.msra.mxu0 0.0
    %3841 = vmatprep.subr.mxu0 0.0
    %3842 = vmatpush1.msra.mxu0 0.0
    %3843 = vmatprep.subr.mxu0 0.0
    %3844 = vmatpush1.msra.mxu0 0.0
    %3845 = vmatprep.subr.mxu0 0.0
    %3846 = vmatpush1.msra.mxu0 0.0
    %3847 = vmatprep.subr.mxu0 0.0
    %3848 = vmatpush1.msra.mxu0 0.0
    %3849 = vmatprep.subr.mxu0 0.0
    %v3850 = vand.u32 %v2653, 4294901760
    %3851 = vmatpush1.msra.mxu0 %v3850
    %3852 = vmatprep.subr.mxu0 0.0
    %v3853 = vand.u32 %v2652, 4294901760
    %3854 = vmatpush1.msra.mxu0 %v3853
    %3855 = vmatprep.subr.mxu0 0.0
    %v3856 = vand.u32 %v2651, 4294901760
    %3857 = vmatpush1.msra.mxu0 %v3856
    %3858 = vmatprep.subr.mxu0 0.0
    %v3859 = vand.u32 %v2650, 4294901760
    %3860 = vmatpush1.msra.mxu0 %v3859
    %3861 = vmatprep.subr.mxu0 0.0
    %3862 = vmatpush2.msra.mxu0 0.0
    %3863 = vmatprep.subr.mxu0 0.0
    %3864 = vmatpush2.msra.mxu0 0.0
    %3865 = vmatprep.subr.mxu0 0.0
    %3866 = vmatpush2.msra.mxu0 0.0
    %3867 = vmatprep.subr.mxu0 0.0
    %3868 = vmatpush2.msra.mxu0 0.0
    %3869 = vmatprep.subr.mxu0 0.0
    %3870 = vmatpush2.msra.mxu0 0.0
    %3871 = vmatprep.subr.mxu0 0.0
    %3872 = vmatpush2.msra.mxu0 0.0
    %3873 = vmatprep.subr.mxu0 0.0
    %3874 = vmatpush2.msra.mxu0 0.0
    %3875 = vmatprep.subr.mxu0 0.0
    %3876 = vmatpush2.msra.mxu0 0.0
    %3877 = vmatprep.subr.mxu0 0.0
    %3878 = vmatpush2.msra.mxu0 0.0
    %3879 = vmatprep.subr.mxu0 0.0
    %3880 = vmatpush2.msra.mxu0 0.0
    %3881 = vmatprep.subr.mxu0 0.0
    %3882 = vmatpush2.msra.mxu0 0.0
    %3883 = vmatprep.subr.mxu0 0.0
    %3884 = vmatpush2.msra.mxu0 0.0
    %3885 = vmatprep.subr.mxu0 0.0
    %3886 = vmatpush2.msra.mxu0 0.0
    %3887 = vmatprep.subr.mxu0 0.0
    %3888 = vmatpush2.msra.mxu0 0.0
    %3889 = vmatprep.subr.mxu0 0.0
    %3890 = vmatpush2.msra.mxu0 0.0
    %3891 = vmatprep.subr.mxu0 0.0
    %3892 = vmatpush2.msra.mxu0 0.0
    %3893 = vmatprep.mubr.f32.mxu0 0.0
    %v3894 = vand.u32 %v3293, 4294901760
    %3895 = vmatmul.mubr.f32.gmra.mxu0 %v3894
    %v3896 = vpop.f32.mrf.mxu0
    %v3897 = vadd.f32 %v3804, %v3896
    %v3898 = vpop.f32.mrf.mxu0
    %3899 = vmatprep.mubr.f32.mxu0 0.0
    %v3900 = vand.u32 %v3296, 4294901760
    %3901 = vmatmul.mubr.f32.gmra.mxu0 %v3900
    %v3902 = vpop.f32.mrf.mxu0
    %v3903 = vadd.f32 %v3810, %v3902
    %v3904 = vpop.f32.mrf.mxu0
    %3905 = vmatprep.mubr.f32.mxu0 0.0
    %v3906 = vand.u32 %v3299, 4294901760
    %3907 = vmatmul.mubr.f32.gmra.mxu0 %v3906
    %v3908 = vpop.f32.mrf.mxu0
    %v3909 = vadd.f32 %v3816, %v3908
    %v3910 = vpop.f32.mrf.mxu0
    %3911 = vmatprep.mubr.f32.mxu0 0.0
    %v3912 = vand.u32 %v3302, 4294901760
    %3913 = vmatmul.mubr.f32.gmra.mxu0 %v3912
    %v3914 = vpop.f32.mrf.mxu0
    %v3915 = vadd.f32 %v3822, %v3914
    %v3916 = vpop.f32.mrf.mxu0
    %3917 = vdwg.mxu0
    %v3918 = vadd.f32 %v2628, %v3897
    %v3919 = vadd.f32 %v2634, %v3903
    %v3920 = vadd.f32 %v2640, %v3909
    %v3921 = vadd.f32 %v2646, %v3915
    %s3922 = scalar_lea.vmem %s1, 96
    %v3923 = vld [vmem:[%s3922] sm:$0xff]
    %v3924 = vld [vmem:[%s3922 + $0x8] sm:$0xff]
    %v3925 = vld [vmem:[%s3922 + $0x10] sm:$0xff]
    %v3926 = vld [vmem:[%s3922 + $0x18] sm:$0xff]
    %v3927 = vld [vmem:[#allocation2 + $0x3] sm:$0xff]
    %v3928 = vld [vmem:[#allocation2 + $0xb] sm:$0xff]
    %v3929 = vld [vmem:[#allocation2 + $0x13] sm:$0xff]
    %v3930 = vld [vmem:[#allocation2 + $0x1b] sm:$0xff]
    %v3932 = vsel %vm34, %v3927, 0
    %v3935 = vsel %vm34, %v3928, 0
    %v3938 = vsel %vm34, %v3929, 0
    %v3941 = vsel %vm34, %v3930, 0
    %3943 = vmatprep.subr.mxu0 0.0
    %3944 = vmatpush1.msra.mxu0 0.0
    %3945 = vmatprep.subr.mxu0 0.0
    %3946 = vmatpush1.msra.mxu0 0.0
    %3947 = vmatprep.subr.mxu0 0.0
    %3948 = vmatpush1.msra.mxu0 0.0
    %3949 = vmatprep.subr.mxu0 0.0
    %3950 = vmatpush1.msra.mxu0 0.0
    %3951 = vmatprep.subr.mxu0 0.0
    %3952 = vmatpush1.msra.mxu0 0.0
    %3953 = vmatprep.subr.mxu0 0.0
    %3954 = vmatpush1.msra.mxu0 0.0
    %3955 = vmatprep.subr.mxu0 0.0
    %3956 = vmatpush1.msra.mxu0 0.0
    %3957 = vmatprep.subr.mxu0 0.0
    %3958 = vmatpush1.msra.mxu0 0.0
    %3959 = vmatprep.subr.mxu0 0.0
    %3960 = vmatpush1.msra.mxu0 0.0
    %3961 = vmatprep.subr.mxu0 0.0
    %3962 = vmatpush1.msra.mxu0 0.0
    %3963 = vmatprep.subr.mxu0 0.0
    %3964 = vmatpush1.msra.mxu0 0.0
    %3965 = vmatprep.subr.mxu0 0.0
    %3966 = vmatpush1.msra.mxu0 0.0
    %3967 = vmatprep.subr.mxu0 0.0
    %v3968 = vand.u32 %v3926, 4294901760
    %3969 = vmatpush1.msra.mxu0 %v3968
    %3970 = vmatprep.subr.mxu0 0.0
    %v3971 = vand.u32 %v3925, 4294901760
    %3972 = vmatpush1.msra.mxu0 %v3971
    %3973 = vmatprep.subr.mxu0 0.0
    %v3974 = vand.u32 %v3924, 4294901760
    %3975 = vmatpush1.msra.mxu0 %v3974
    %3976 = vmatprep.subr.mxu0 0.0
    %v3977 = vand.u32 %v3923, 4294901760
    %3978 = vmatpush1.msra.mxu0 %v3977
    %3979 = vmatprep.subr.mxu0 0.0
    %3980 = vmatpush2.msra.mxu0 0.0
    %3981 = vmatprep.subr.mxu0 0.0
    %3982 = vmatpush2.msra.mxu0 0.0
    %3983 = vmatprep.subr.mxu0 0.0
    %3984 = vmatpush2.msra.mxu0 0.0
    %3985 = vmatprep.subr.mxu0 0.0
    %3986 = vmatpush2.msra.mxu0 0.0
    %3987 = vmatprep.subr.mxu0 0.0
    %3988 = vmatpush2.msra.mxu0 0.0
    %3989 = vmatprep.subr.mxu0 0.0
    %3990 = vmatpush2.msra.mxu0 0.0
    %3991 = vmatprep.subr.mxu0 0.0
    %3992 = vmatpush2.msra.mxu0 0.0
    %3993 = vmatprep.subr.mxu0 0.0
    %3994 = vmatpush2.msra.mxu0 0.0
    %3995 = vmatprep.subr.mxu0 0.0
    %3996 = vmatpush2.msra.mxu0 0.0
    %3997 = vmatprep.subr.mxu0 0.0
    %3998 = vmatpush2.msra.mxu0 0.0
    %3999 = vmatprep.subr.mxu0 0.0
    %4000 = vmatpush2.msra.mxu0 0.0
    %4001 = vmatprep.subr.mxu0 0.0
    %4002 = vmatpush2.msra.mxu0 0.0
    %4003 = vmatprep.subr.mxu0 0.0
    %4004 = vmatpush2.msra.mxu0 0.0
    %4005 = vmatprep.subr.mxu0 0.0
    %4006 = vmatpush2.msra.mxu0 0.0
    %4007 = vmatprep.subr.mxu0 0.0
    %4008 = vmatpush2.msra.mxu0 0.0
    %4009 = vmatprep.subr.mxu0 0.0
    %4010 = vmatpush2.msra.mxu0 0.0
    %4011 = vmatprep.mubr.f32.mxu0 0.0
    %v4012 = vand.u32 %v3932, 4294901760
    %v4013 = vsub.f32 %v3932, %v4012
    %v4014 = vand.u32 %v4013, 4294901760
    %v4015 = vsub.f32 %v4013, %v4014
    %v4016 = vand.u32 %v4015, 4294901760
    %4017 = vmatmul.mubr.f32.gmra.mxu0 %v4016
    %v4018 = vpop.f32.mrf.mxu0
    %v4019 = vadd.f32 0.0, %v4018
    %v4020 = vpop.f32.mrf.mxu0
    %4021 = vmatprep.mubr.f32.mxu0 0.0
    %v4022 = vand.u32 %v3935, 4294901760
    %v4023 = vsub.f32 %v3935, %v4022
    %v4024 = vand.u32 %v4023, 4294901760
    %v4025 = vsub.f32 %v4023, %v4024
    %v4026 = vand.u32 %v4025, 4294901760
    %4027 = vmatmul.mubr.f32.gmra.mxu0 %v4026
    %v4028 = vpop.f32.mrf.mxu0
    %v4029 = vadd.f32 0.0, %v4028
    %v4030 = vpop.f32.mrf.mxu0
    %4031 = vmatprep.mubr.f32.mxu0 0.0
    %v4032 = vand.u32 %v3938, 4294901760
    %v4033 = vsub.f32 %v3938, %v4032
    %v4034 = vand.u32 %v4033, 4294901760
    %v4035 = vsub.f32 %v4033, %v4034
    %v4036 = vand.u32 %v4035, 4294901760
    %4037 = vmatmul.mubr.f32.gmra.mxu0 %v4036
    %v4038 = vpop.f32.mrf.mxu0
    %v4039 = vadd.f32 0.0, %v4038
    %v4040 = vpop.f32.mrf.mxu0
    %4041 = vmatprep.mubr.f32.mxu0 0.0
    %v4042 = vand.u32 %v3941, 4294901760
    %v4043 = vsub.f32 %v3941, %v4042
    %v4044 = vand.u32 %v4043, 4294901760
    %v4045 = vsub.f32 %v4043, %v4044
    %v4046 = vand.u32 %v4045, 4294901760
    %4047 = vmatmul.mubr.f32.gmra.mxu0 %v4046
    %v4048 = vpop.f32.mrf.mxu0
    %v4049 = vadd.f32 0.0, %v4048
    %v4050 = vpop.f32.mrf.mxu0
    %4051 = vdwg.mxu0
    %4052 = vmatprep.subr.mxu0 0.0
    %4053 = vmatpush1.msra.mxu0 0.0
    %4054 = vmatprep.subr.mxu0 0.0
    %4055 = vmatpush1.msra.mxu0 0.0
    %4056 = vmatprep.subr.mxu0 0.0
    %4057 = vmatpush1.msra.mxu0 0.0
    %4058 = vmatprep.subr.mxu0 0.0
    %4059 = vmatpush1.msra.mxu0 0.0
    %4060 = vmatprep.subr.mxu0 0.0
    %4061 = vmatpush1.msra.mxu0 0.0
    %4062 = vmatprep.subr.mxu0 0.0
    %4063 = vmatpush1.msra.mxu0 0.0
    %4064 = vmatprep.subr.mxu0 0.0
    %4065 = vmatpush1.msra.mxu0 0.0
    %4066 = vmatprep.subr.mxu0 0.0
    %4067 = vmatpush1.msra.mxu0 0.0
    %4068 = vmatprep.subr.mxu0 0.0
    %4069 = vmatpush1.msra.mxu0 0.0
    %4070 = vmatprep.subr.mxu0 0.0
    %4071 = vmatpush1.msra.mxu0 0.0
    %4072 = vmatprep.subr.mxu0 0.0
    %4073 = vmatpush1.msra.mxu0 0.0
    %4074 = vmatprep.subr.mxu0 0.0
    %4075 = vmatpush1.msra.mxu0 0.0
    %4076 = vmatprep.subr.mxu0 0.0
    %v4077 = vand.u32 %v3926, 4294901760
    %v4078 = vsub.f32 %v3926, %v4077
    %v4079 = vand.u32 %v4078, 4294901760
    %v4080 = vsub.f32 %v4078, %v4079
    %v4081 = vand.u32 %v4080, 4294901760
    %4082 = vmatpush1.msra.mxu0 %v4081
    %4083 = vmatprep.subr.mxu0 0.0
    %v4084 = vand.u32 %v3925, 4294901760
    %v4085 = vsub.f32 %v3925, %v4084
    %v4086 = vand.u32 %v4085, 4294901760
    %v4087 = vsub.f32 %v4085, %v4086
    %v4088 = vand.u32 %v4087, 4294901760
    %4089 = vmatpush1.msra.mxu0 %v4088
    %4090 = vmatprep.subr.mxu0 0.0
    %v4091 = vand.u32 %v3924, 4294901760
    %v4092 = vsub.f32 %v3924, %v4091
    %v4093 = vand.u32 %v4092, 4294901760
    %v4094 = vsub.f32 %v4092, %v4093
    %v4095 = vand.u32 %v4094, 4294901760
    %4096 = vmatpush1.msra.mxu0 %v4095
    %4097 = vmatprep.subr.mxu0 0.0
    %v4098 = vand.u32 %v3923, 4294901760
    %v4099 = vsub.f32 %v3923, %v4098
    %v4100 = vand.u32 %v4099, 4294901760
    %v4101 = vsub.f32 %v4099, %v4100
    %v4102 = vand.u32 %v4101, 4294901760
    %4103 = vmatpush1.msra.mxu0 %v4102
    %4104 = vmatprep.subr.mxu0 0.0
    %4105 = vmatpush2.msra.mxu0 0.0
    %4106 = vmatprep.subr.mxu0 0.0
    %4107 = vmatpush2.msra.mxu0 0.0
    %4108 = vmatprep.subr.mxu0 0.0
    %4109 = vmatpush2.msra.mxu0 0.0
    %4110 = vmatprep.subr.mxu0 0.0
    %4111 = vmatpush2.msra.mxu0 0.0
    %4112 = vmatprep.subr.mxu0 0.0
    %4113 = vmatpush2.msra.mxu0 0.0
    %4114 = vmatprep.subr.mxu0 0.0
    %4115 = vmatpush2.msra.mxu0 0.0
    %4116 = vmatprep.subr.mxu0 0.0
    %4117 = vmatpush2.msra.mxu0 0.0
    %4118 = vmatprep.subr.mxu0 0.0
    %4119 = vmatpush2.msra.mxu0 0.0
    %4120 = vmatprep.subr.mxu0 0.0
    %4121 = vmatpush2.msra.mxu0 0.0
    %4122 = vmatprep.subr.mxu0 0.0
    %4123 = vmatpush2.msra.mxu0 0.0
    %4124 = vmatprep.subr.mxu0 0.0
    %4125 = vmatpush2.msra.mxu0 0.0
    %4126 = vmatprep.subr.mxu0 0.0
    %4127 = vmatpush2.msra.mxu0 0.0
    %4128 = vmatprep.subr.mxu0 0.0
    %4129 = vmatpush2.msra.mxu0 0.0
    %4130 = vmatprep.subr.mxu0 0.0
    %4131 = vmatpush2.msra.mxu0 0.0
    %4132 = vmatprep.subr.mxu0 0.0
    %4133 = vmatpush2.msra.mxu0 0.0
    %4134 = vmatprep.subr.mxu0 0.0
    %4135 = vmatpush2.msra.mxu0 0.0
    %4136 = vmatprep.mubr.f32.mxu0 0.0
    %v4137 = vand.u32 %v3932, 4294901760
    %4138 = vmatmul.mubr.f32.gmra.mxu0 %v4137
    %v4139 = vpop.f32.mrf.mxu0
    %v4140 = vadd.f32 %v4019, %v4139
    %v4141 = vpop.f32.mrf.mxu0
    %4142 = vmatprep.mubr.f32.mxu0 0.0
    %v4143 = vand.u32 %v3935, 4294901760
    %4144 = vmatmul.mubr.f32.gmra.mxu0 %v4143
    %v4145 = vpop.f32.mrf.mxu0
    %v4146 = vadd.f32 %v4029, %v4145
    %v4147 = vpop.f32.mrf.mxu0
    %4148 = vmatprep.mubr.f32.mxu0 0.0
    %v4149 = vand.u32 %v3938, 4294901760
    %4150 = vmatmul.mubr.f32.gmra.mxu0 %v4149
    %v4151 = vpop.f32.mrf.mxu0
    %v4152 = vadd.f32 %v4039, %v4151
    %v4153 = vpop.f32.mrf.mxu0
    %4154 = vmatprep.mubr.f32.mxu0 0.0
    %v4155 = vand.u32 %v3941, 4294901760
    %4156 = vmatmul.mubr.f32.gmra.mxu0 %v4155
    %v4157 = vpop.f32.mrf.mxu0
    %v4158 = vadd.f32 %v4049, %v4157
    %v4159 = vpop.f32.mrf.mxu0
    %4160 = vdwg.mxu0
    %4161 = vmatprep.subr.mxu0 0.0
    %4162 = vmatpush1.msra.mxu0 0.0
    %4163 = vmatprep.subr.mxu0 0.0
    %4164 = vmatpush1.msra.mxu0 0.0
    %4165 = vmatprep.subr.mxu0 0.0
    %4166 = vmatpush1.msra.mxu0 0.0
    %4167 = vmatprep.subr.mxu0 0.0
    %4168 = vmatpush1.msra.mxu0 0.0
    %4169 = vmatprep.subr.mxu0 0.0
    %4170 = vmatpush1.msra.mxu0 0.0
    %4171 = vmatprep.subr.mxu0 0.0
    %4172 = vmatpush1.msra.mxu0 0.0
    %4173 = vmatprep.subr.mxu0 0.0
    %4174 = vmatpush1.msra.mxu0 0.0
    %4175 = vmatprep.subr.mxu0 0.0
    %4176 = vmatpush1.msra.mxu0 0.0
    %4177 = vmatprep.subr.mxu0 0.0
    %4178 = vmatpush1.msra.mxu0 0.0
    %4179 = vmatprep.subr.mxu0 0.0
    %4180 = vmatpush1.msra.mxu0 0.0
    %4181 = vmatprep.subr.mxu0 0.0
    %4182 = vmatpush1.msra.mxu0 0.0
    %4183 = vmatprep.subr.mxu0 0.0
    %4184 = vmatpush1.msra.mxu0 0.0
    %4185 = vmatprep.subr.mxu0 0.0
    %v4186 = vand.u32 %v3926, 4294901760
    %v4187 = vsub.f32 %v3926, %v4186
    %4188 = vmatpush1.msra.mxu0 %v4187
    %4189 = vmatprep.subr.mxu0 0.0
    %v4190 = vand.u32 %v3925, 4294901760
    %v4191 = vsub.f32 %v3925, %v4190
    %4192 = vmatpush1.msra.mxu0 %v4191
    %4193 = vmatprep.subr.mxu0 0.0
    %v4194 = vand.u32 %v3924, 4294901760
    %v4195 = vsub.f32 %v3924, %v4194
    %4196 = vmatpush1.msra.mxu0 %v4195
    %4197 = vmatprep.subr.mxu0 0.0
    %v4198 = vand.u32 %v3923, 4294901760
    %v4199 = vsub.f32 %v3923, %v4198
    %4200 = vmatpush1.msra.mxu0 %v4199
    %4201 = vmatprep.subr.mxu0 0.0
    %4202 = vmatpush2.msra.mxu0 0.0
    %4203 = vmatprep.subr.mxu0 0.0
    %4204 = vmatpush2.msra.mxu0 0.0
    %4205 = vmatprep.subr.mxu0 0.0
    %4206 = vmatpush2.msra.mxu0 0.0
    %4207 = vmatprep.subr.mxu0 0.0
    %4208 = vmatpush2.msra.mxu0 0.0
    %4209 = vmatprep.subr.mxu0 0.0
    %4210 = vmatpush2.msra.mxu0 0.0
    %4211 = vmatprep.subr.mxu0 0.0
    %4212 = vmatpush2.msra.mxu0 0.0
    %4213 = vmatprep.subr.mxu0 0.0
    %4214 = vmatpush2.msra.mxu0 0.0
    %4215 = vmatprep.subr.mxu0 0.0
    %4216 = vmatpush2.msra.mxu0 0.0
    %4217 = vmatprep.subr.mxu0 0.0
    %4218 = vmatpush2.msra.mxu0 0.0
    %4219 = vmatprep.subr.mxu0 0.0
    %4220 = vmatpush2.msra.mxu0 0.0
    %4221 = vmatprep.subr.mxu0 0.0
    %4222 = vmatpush2.msra.mxu0 0.0
    %4223 = vmatprep.subr.mxu0 0.0
    %4224 = vmatpush2.msra.mxu0 0.0
    %4225 = vmatprep.subr.mxu0 0.0
    %4226 = vmatpush2.msra.mxu0 0.0
    %4227 = vmatprep.subr.mxu0 0.0
    %4228 = vmatpush2.msra.mxu0 0.0
    %4229 = vmatprep.subr.mxu0 0.0
    %4230 = vmatpush2.msra.mxu0 0.0
    %4231 = vmatprep.subr.mxu0 0.0
    %4232 = vmatpush2.msra.mxu0 0.0
    %4233 = vmatprep.mubr.f32.mxu0 0.0
    %v4234 = vand.u32 %v3932, 4294901760
    %v4235 = vsub.f32 %v3932, %v4234
    %4236 = vmatmul.mubr.f32.gmra.mxu0 %v4235
    %v4237 = vpop.f32.mrf.mxu0
    %v4238 = vadd.f32 %v4140, %v4237
    %v4239 = vpop.f32.mrf.mxu0
    %4240 = vmatprep.mubr.f32.mxu0 0.0
    %v4241 = vand.u32 %v3935, 4294901760
    %v4242 = vsub.f32 %v3935, %v4241
    %4243 = vmatmul.mubr.f32.gmra.mxu0 %v4242
    %v4244 = vpop.f32.mrf.mxu0
    %v4245 = vadd.f32 %v4146, %v4244
    %v4246 = vpop.f32.mrf.mxu0
    %4247 = vmatprep.mubr.f32.mxu0 0.0
    %v4248 = vand.u32 %v3938, 4294901760
    %v4249 = vsub.f32 %v3938, %v4248
    %4250 = vmatmul.mubr.f32.gmra.mxu0 %v4249
    %v4251 = vpop.f32.mrf.mxu0
    %v4252 = vadd.f32 %v4152, %v4251
    %v4253 = vpop.f32.mrf.mxu0
    %4254 = vmatprep.mubr.f32.mxu0 0.0
    %v4255 = vand.u32 %v3941, 4294901760
    %v4256 = vsub.f32 %v3941, %v4255
    %4257 = vmatmul.mubr.f32.gmra.mxu0 %v4256
    %v4258 = vpop.f32.mrf.mxu0
    %v4259 = vadd.f32 %v4158, %v4258
    %v4260 = vpop.f32.mrf.mxu0
    %4261 = vdwg.mxu0
    %4262 = vmatprep.subr.mxu0 0.0
    %4263 = vmatpush1.msra.mxu0 0.0
    %4264 = vmatprep.subr.mxu0 0.0
    %4265 = vmatpush1.msra.mxu0 0.0
    %4266 = vmatprep.subr.mxu0 0.0
    %4267 = vmatpush1.msra.mxu0 0.0
    %4268 = vmatprep.subr.mxu0 0.0
    %4269 = vmatpush1.msra.mxu0 0.0
    %4270 = vmatprep.subr.mxu0 0.0
    %4271 = vmatpush1.msra.mxu0 0.0
    %4272 = vmatprep.subr.mxu0 0.0
    %4273 = vmatpush1.msra.mxu0 0.0
    %4274 = vmatprep.subr.mxu0 0.0
    %4275 = vmatpush1.msra.mxu0 0.0
    %4276 = vmatprep.subr.mxu0 0.0
    %4277 = vmatpush1.msra.mxu0 0.0
    %4278 = vmatprep.subr.mxu0 0.0
    %4279 = vmatpush1.msra.mxu0 0.0
    %4280 = vmatprep.subr.mxu0 0.0
    %4281 = vmatpush1.msra.mxu0 0.0
    %4282 = vmatprep.subr.mxu0 0.0
    %4283 = vmatpush1.msra.mxu0 0.0
    %4284 = vmatprep.subr.mxu0 0.0
    %4285 = vmatpush1.msra.mxu0 0.0
    %4286 = vmatprep.subr.mxu0 0.0
    %v4287 = vand.u32 %v3926, 4294901760
    %4288 = vmatpush1.msra.mxu0 %v4287
    %4289 = vmatprep.subr.mxu0 0.0
    %v4290 = vand.u32 %v3925, 4294901760
    %4291 = vmatpush1.msra.mxu0 %v4290
    %4292 = vmatprep.subr.mxu0 0.0
    %v4293 = vand.u32 %v3924, 4294901760
    %4294 = vmatpush1.msra.mxu0 %v4293
    %4295 = vmatprep.subr.mxu0 0.0
    %v4296 = vand.u32 %v3923, 4294901760
    %4297 = vmatpush1.msra.mxu0 %v4296
    %4298 = vmatprep.subr.mxu0 0.0
    %4299 = vmatpush2.msra.mxu0 0.0
    %4300 = vmatprep.subr.mxu0 0.0
    %4301 = vmatpush2.msra.mxu0 0.0
    %4302 = vmatprep.subr.mxu0 0.0
    %4303 = vmatpush2.msra.mxu0 0.0
    %4304 = vmatprep.subr.mxu0 0.0
    %4305 = vmatpush2.msra.mxu0 0.0
    %4306 = vmatprep.subr.mxu0 0.0
    %4307 = vmatpush2.msra.mxu0 0.0
    %4308 = vmatprep.subr.mxu0 0.0
    %4309 = vmatpush2.msra.mxu0 0.0
    %4310 = vmatprep.subr.mxu0 0.0
    %4311 = vmatpush2.msra.mxu0 0.0
    %4312 = vmatprep.subr.mxu0 0.0
    %4313 = vmatpush2.msra.mxu0 0.0
    %4314 = vmatprep.subr.mxu0 0.0
    %4315 = vmatpush2.msra.mxu0 0.0
    %4316 = vmatprep.subr.mxu0 0.0
    %4317 = vmatpush2.msra.mxu0 0.0
    %4318 = vmatprep.subr.mxu0 0.0
    %4319 = vmatpush2.msra.mxu0 0.0
    %4320 = vmatprep.subr.mxu0 0.0
    %4321 = vmatpush2.msra.mxu0 0.0
    %4322 = vmatprep.subr.mxu0 0.0
    %4323 = vmatpush2.msra.mxu0 0.0
    %4324 = vmatprep.subr.mxu0 0.0
    %4325 = vmatpush2.msra.mxu0 0.0
    %4326 = vmatprep.subr.mxu0 0.0
    %4327 = vmatpush2.msra.mxu0 0.0
    %4328 = vmatprep.subr.mxu0 0.0
    %4329 = vmatpush2.msra.mxu0 0.0
    %4330 = vmatprep.mubr.f32.mxu0 0.0
    %v4331 = vand.u32 %v3932, 4294901760
    %v4332 = vsub.f32 %v3932, %v4331
    %v4333 = vand.u32 %v4332, 4294901760
    %4334 = vmatmul.mubr.f32.gmra.mxu0 %v4333
    %v4335 = vpop.f32.mrf.mxu0
    %v4336 = vadd.f32 %v4238, %v4335
    %v4337 = vpop.f32.mrf.mxu0
    %4338 = vmatprep.mubr.f32.mxu0 0.0
    %v4339 = vand.u32 %v3935, 4294901760
    %v4340 = vsub.f32 %v3935, %v4339
    %v4341 = vand.u32 %v4340, 4294901760
    %4342 = vmatmul.mubr.f32.gmra.mxu0 %v4341
    %v4343 = vpop.f32.mrf.mxu0
    %v4344 = vadd.f32 %v4245, %v4343
    %v4345 = vpop.f32.mrf.mxu0
    %4346 = vmatprep.mubr.f32.mxu0 0.0
    %v4347 = vand.u32 %v3938, 4294901760
    %v4348 = vsub.f32 %v3938, %v4347
    %v4349 = vand.u32 %v4348, 4294901760
    %4350 = vmatmul.mubr.f32.gmra.mxu0 %v4349
    %v4351 = vpop.f32.mrf.mxu0
    %v4352 = vadd.f32 %v4252, %v4351
    %v4353 = vpop.f32.mrf.mxu0
    %4354 = vmatprep.mubr.f32.mxu0 0.0
    %v4355 = vand.u32 %v3941, 4294901760
    %v4356 = vsub.f32 %v3941, %v4355
    %v4357 = vand.u32 %v4356, 4294901760
    %4358 = vmatmul.mubr.f32.gmra.mxu0 %v4357
    %v4359 = vpop.f32.mrf.mxu0
    %v4360 = vadd.f32 %v4259, %v4359
    %v4361 = vpop.f32.mrf.mxu0
    %4362 = vdwg.mxu0
    %4363 = vmatprep.subr.mxu0 0.0
    %4364 = vmatpush1.msra.mxu0 0.0
    %4365 = vmatprep.subr.mxu0 0.0
    %4366 = vmatpush1.msra.mxu0 0.0
    %4367 = vmatprep.subr.mxu0 0.0
    %4368 = vmatpush1.msra.mxu0 0.0
    %4369 = vmatprep.subr.mxu0 0.0
    %4370 = vmatpush1.msra.mxu0 0.0
    %4371 = vmatprep.subr.mxu0 0.0
    %4372 = vmatpush1.msra.mxu0 0.0
    %4373 = vmatprep.subr.mxu0 0.0
    %4374 = vmatpush1.msra.mxu0 0.0
    %4375 = vmatprep.subr.mxu0 0.0
    %4376 = vmatpush1.msra.mxu0 0.0
    %4377 = vmatprep.subr.mxu0 0.0
    %4378 = vmatpush1.msra.mxu0 0.0
    %4379 = vmatprep.subr.mxu0 0.0
    %4380 = vmatpush1.msra.mxu0 0.0
    %4381 = vmatprep.subr.mxu0 0.0
    %4382 = vmatpush1.msra.mxu0 0.0
    %4383 = vmatprep.subr.mxu0 0.0
    %4384 = vmatpush1.msra.mxu0 0.0
    %4385 = vmatprep.subr.mxu0 0.0
    %4386 = vmatpush1.msra.mxu0 0.0
    %4387 = vmatprep.subr.mxu0 0.0
    %v4388 = vand.u32 %v3926, 4294901760
    %v4389 = vsub.f32 %v3926, %v4388
    %v4390 = vand.u32 %v4389, 4294901760
    %4391 = vmatpush1.msra.mxu0 %v4390
    %4392 = vmatprep.subr.mxu0 0.0
    %v4393 = vand.u32 %v3925, 4294901760
    %v4394 = vsub.f32 %v3925, %v4393
    %v4395 = vand.u32 %v4394, 4294901760
    %4396 = vmatpush1.msra.mxu0 %v4395
    %4397 = vmatprep.subr.mxu0 0.0
    %v4398 = vand.u32 %v3924, 4294901760
    %v4399 = vsub.f32 %v3924, %v4398
    %v4400 = vand.u32 %v4399, 4294901760
    %4401 = vmatpush1.msra.mxu0 %v4400
    %4402 = vmatprep.subr.mxu0 0.0
    %v4403 = vand.u32 %v3923, 4294901760
    %v4404 = vsub.f32 %v3923, %v4403
    %v4405 = vand.u32 %v4404, 4294901760
    %4406 = vmatpush1.msra.mxu0 %v4405
    %4407 = vmatprep.subr.mxu0 0.0
    %4408 = vmatpush2.msra.mxu0 0.0
    %4409 = vmatprep.subr.mxu0 0.0
    %4410 = vmatpush2.msra.mxu0 0.0
    %4411 = vmatprep.subr.mxu0 0.0
    %4412 = vmatpush2.msra.mxu0 0.0
    %4413 = vmatprep.subr.mxu0 0.0
    %4414 = vmatpush2.msra.mxu0 0.0
    %4415 = vmatprep.subr.mxu0 0.0
    %4416 = vmatpush2.msra.mxu0 0.0
    %4417 = vmatprep.subr.mxu0 0.0
    %4418 = vmatpush2.msra.mxu0 0.0
    %4419 = vmatprep.subr.mxu0 0.0
    %4420 = vmatpush2.msra.mxu0 0.0
    %4421 = vmatprep.subr.mxu0 0.0
    %4422 = vmatpush2.msra.mxu0 0.0
    %4423 = vmatprep.subr.mxu0 0.0
    %4424 = vmatpush2.msra.mxu0 0.0
    %4425 = vmatprep.subr.mxu0 0.0
    %4426 = vmatpush2.msra.mxu0 0.0
    %4427 = vmatprep.subr.mxu0 0.0
    %4428 = vmatpush2.msra.mxu0 0.0
    %4429 = vmatprep.subr.mxu0 0.0
    %4430 = vmatpush2.msra.mxu0 0.0
    %4431 = vmatprep.subr.mxu0 0.0
    %4432 = vmatpush2.msra.mxu0 0.0
    %4433 = vmatprep.subr.mxu0 0.0
    %4434 = vmatpush2.msra.mxu0 0.0
    %4435 = vmatprep.subr.mxu0 0.0
    %4436 = vmatpush2.msra.mxu0 0.0
    %4437 = vmatprep.subr.mxu0 0.0
    %4438 = vmatpush2.msra.mxu0 0.0
    %4439 = vmatprep.mubr.f32.mxu0 0.0
    %v4440 = vand.u32 %v3932, 4294901760
    %4441 = vmatmul.mubr.f32.gmra.mxu0 %v4440
    %v4442 = vpop.f32.mrf.mxu0
    %v4443 = vadd.f32 %v4336, %v4442
    %v4444 = vpop.f32.mrf.mxu0
    %4445 = vmatprep.mubr.f32.mxu0 0.0
    %v4446 = vand.u32 %v3935, 4294901760
    %4447 = vmatmul.mubr.f32.gmra.mxu0 %v4446
    %v4448 = vpop.f32.mrf.mxu0
    %v4449 = vadd.f32 %v4344, %v4448
    %v4450 = vpop.f32.mrf.mxu0
    %4451 = vmatprep.mubr.f32.mxu0 0.0
    %v4452 = vand.u32 %v3938, 4294901760
    %4453 = vmatmul.mubr.f32.gmra.mxu0 %v4452
    %v4454 = vpop.f32.mrf.mxu0
    %v4455 = vadd.f32 %v4352, %v4454
    %v4456 = vpop.f32.mrf.mxu0
    %4457 = vmatprep.mubr.f32.mxu0 0.0
    %v4458 = vand.u32 %v3941, 4294901760
    %4459 = vmatmul.mubr.f32.gmra.mxu0 %v4458
    %v4460 = vpop.f32.mrf.mxu0
    %v4461 = vadd.f32 %v4360, %v4460
    %v4462 = vpop.f32.mrf.mxu0
    %4463 = vdwg.mxu0
    %4464 = vmatprep.subr.mxu0 0.0
    %4465 = vmatpush1.msra.mxu0 0.0
    %4466 = vmatprep.subr.mxu0 0.0
    %4467 = vmatpush1.msra.mxu0 0.0
    %4468 = vmatprep.subr.mxu0 0.0
    %4469 = vmatpush1.msra.mxu0 0.0
    %4470 = vmatprep.subr.mxu0 0.0
    %4471 = vmatpush1.msra.mxu0 0.0
    %4472 = vmatprep.subr.mxu0 0.0
    %4473 = vmatpush1.msra.mxu0 0.0
    %4474 = vmatprep.subr.mxu0 0.0
    %4475 = vmatpush1.msra.mxu0 0.0
    %4476 = vmatprep.subr.mxu0 0.0
    %4477 = vmatpush1.msra.mxu0 0.0
    %4478 = vmatprep.subr.mxu0 0.0
    %4479 = vmatpush1.msra.mxu0 0.0
    %4480 = vmatprep.subr.mxu0 0.0
    %4481 = vmatpush1.msra.mxu0 0.0
    %4482 = vmatprep.subr.mxu0 0.0
    %4483 = vmatpush1.msra.mxu0 0.0
    %4484 = vmatprep.subr.mxu0 0.0
    %4485 = vmatpush1.msra.mxu0 0.0
    %4486 = vmatprep.subr.mxu0 0.0
    %4487 = vmatpush1.msra.mxu0 0.0
    %4488 = vmatprep.subr.mxu0 0.0
    %v4489 = vand.u32 %v3926, 4294901760
    %4490 = vmatpush1.msra.mxu0 %v4489
    %4491 = vmatprep.subr.mxu0 0.0
    %v4492 = vand.u32 %v3925, 4294901760
    %4493 = vmatpush1.msra.mxu0 %v4492
    %4494 = vmatprep.subr.mxu0 0.0
    %v4495 = vand.u32 %v3924, 4294901760
    %4496 = vmatpush1.msra.mxu0 %v4495
    %4497 = vmatprep.subr.mxu0 0.0
    %v4498 = vand.u32 %v3923, 4294901760
    %4499 = vmatpush1.msra.mxu0 %v4498
    %4500 = vmatprep.subr.mxu0 0.0
    %4501 = vmatpush2.msra.mxu0 0.0
    %4502 = vmatprep.subr.mxu0 0.0
    %4503 = vmatpush2.msra.mxu0 0.0
    %4504 = vmatprep.subr.mxu0 0.0
    %4505 = vmatpush2.msra.mxu0 0.0
    %4506 = vmatprep.subr.mxu0 0.0
    %4507 = vmatpush2.msra.mxu0 0.0
    %4508 = vmatprep.subr.mxu0 0.0
    %4509 = vmatpush2.msra.mxu0 0.0
    %4510 = vmatprep.subr.mxu0 0.0
    %4511 = vmatpush2.msra.mxu0 0.0
    %4512 = vmatprep.subr.mxu0 0.0
    %4513 = vmatpush2.msra.mxu0 0.0
    %4514 = vmatprep.subr.mxu0 0.0
    %4515 = vmatpush2.msra.mxu0 0.0
    %4516 = vmatprep.subr.mxu0 0.0
    %4517 = vmatpush2.msra.mxu0 0.0
    %4518 = vmatprep.subr.mxu0 0.0
    %4519 = vmatpush2.msra.mxu0 0.0
    %4520 = vmatprep.subr.mxu0 0.0
    %4521 = vmatpush2.msra.mxu0 0.0
    %4522 = vmatprep.subr.mxu0 0.0
    %4523 = vmatpush2.msra.mxu0 0.0
    %4524 = vmatprep.subr.mxu0 0.0
    %4525 = vmatpush2.msra.mxu0 0.0
    %4526 = vmatprep.subr.mxu0 0.0
    %4527 = vmatpush2.msra.mxu0 0.0
    %4528 = vmatprep.subr.mxu0 0.0
    %4529 = vmatpush2.msra.mxu0 0.0
    %4530 = vmatprep.subr.mxu0 0.0
    %4531 = vmatpush2.msra.mxu0 0.0
    %4532 = vmatprep.mubr.f32.mxu0 0.0
    %v4533 = vand.u32 %v3932, 4294901760
    %4534 = vmatmul.mubr.f32.gmra.mxu0 %v4533
    %v4535 = vpop.f32.mrf.mxu0
    %v4536 = vadd.f32 %v4443, %v4535
    %v4537 = vpop.f32.mrf.mxu0
    %4538 = vmatprep.mubr.f32.mxu0 0.0
    %v4539 = vand.u32 %v3935, 4294901760
    %4540 = vmatmul.mubr.f32.gmra.mxu0 %v4539
    %v4541 = vpop.f32.mrf.mxu0
    %v4542 = vadd.f32 %v4449, %v4541
    %v4543 = vpop.f32.mrf.mxu0
    %4544 = vmatprep.mubr.f32.mxu0 0.0
    %v4545 = vand.u32 %v3938, 4294901760
    %4546 = vmatmul.mubr.f32.gmra.mxu0 %v4545
    %v4547 = vpop.f32.mrf.mxu0
    %v4548 = vadd.f32 %v4455, %v4547
    %v4549 = vpop.f32.mrf.mxu0
    %4550 = vmatprep.mubr.f32.mxu0 0.0
    %v4551 = vand.u32 %v3941, 4294901760
    %4552 = vmatmul.mubr.f32.gmra.mxu0 %v4551
    %v4553 = vpop.f32.mrf.mxu0
    %v4554 = vadd.f32 %v4461, %v4553
    %v4555 = vpop.f32.mrf.mxu0
    %4556 = vdwg.mxu0
    %v4557 = vadd.f32 %v3284, %v4536
    %v4558 = vadd.f32 %v3285, %v4542
    %v4559 = vadd.f32 %v3286, %v4548
    %v4560 = vadd.f32 %v3287, %v4554
    %v4561 = vld [vmem:[%s0 + $0x3] sm:$0xff]
    %v4562 = vld [vmem:[%s0 + $0xb] sm:$0xff]
    %v4563 = vld [vmem:[%s0 + $0x13] sm:$0xff]
    %v4564 = vld [vmem:[%s0 + $0x1b] sm:$0xff]
    %v4566 = vsel %vm34, %v4561, 0
    %v4569 = vsel %vm34, %v4562, 0
    %v4572 = vsel %vm34, %v4563, 0
    %v4575 = vsel %vm34, %v4564, 0
    %4577 = vmatprep.subr.mxu0 0.0
    %4578 = vmatpush1.msra.mxu0 0.0
    %4579 = vmatprep.subr.mxu0 0.0
    %4580 = vmatpush1.msra.mxu0 0.0
    %4581 = vmatprep.subr.mxu0 0.0
    %4582 = vmatpush1.msra.mxu0 0.0
    %4583 = vmatprep.subr.mxu0 0.0
    %4584 = vmatpush1.msra.mxu0 0.0
    %4585 = vmatprep.subr.mxu0 0.0
    %4586 = vmatpush1.msra.mxu0 0.0
    %4587 = vmatprep.subr.mxu0 0.0
    %4588 = vmatpush1.msra.mxu0 0.0
    %4589 = vmatprep.subr.mxu0 0.0
    %4590 = vmatpush1.msra.mxu0 0.0
    %4591 = vmatprep.subr.mxu0 0.0
    %4592 = vmatpush1.msra.mxu0 0.0
    %4593 = vmatprep.subr.mxu0 0.0
    %4594 = vmatpush1.msra.mxu0 0.0
    %4595 = vmatprep.subr.mxu0 0.0
    %4596 = vmatpush1.msra.mxu0 0.0
    %4597 = vmatprep.subr.mxu0 0.0
    %4598 = vmatpush1.msra.mxu0 0.0
    %4599 = vmatprep.subr.mxu0 0.0
    %4600 = vmatpush1.msra.mxu0 0.0
    %4601 = vmatprep.subr.mxu0 0.0
    %v4602 = vand.u32 %v3926, 4294901760
    %4603 = vmatpush1.msra.mxu0 %v4602
    %4604 = vmatprep.subr.mxu0 0.0
    %v4605 = vand.u32 %v3925, 4294901760
    %4606 = vmatpush1.msra.mxu0 %v4605
    %4607 = vmatprep.subr.mxu0 0.0
    %v4608 = vand.u32 %v3924, 4294901760
    %4609 = vmatpush1.msra.mxu0 %v4608
    %4610 = vmatprep.subr.mxu0 0.0
    %v4611 = vand.u32 %v3923, 4294901760
    %4612 = vmatpush1.msra.mxu0 %v4611
    %4613 = vmatprep.subr.mxu0 0.0
    %4614 = vmatpush2.msra.mxu0 0.0
    %4615 = vmatprep.subr.mxu0 0.0
    %4616 = vmatpush2.msra.mxu0 0.0
    %4617 = vmatprep.subr.mxu0 0.0
    %4618 = vmatpush2.msra.mxu0 0.0
    %4619 = vmatprep.subr.mxu0 0.0
    %4620 = vmatpush2.msra.mxu0 0.0
    %4621 = vmatprep.subr.mxu0 0.0
    %4622 = vmatpush2.msra.mxu0 0.0
    %4623 = vmatprep.subr.mxu0 0.0
    %4624 = vmatpush2.msra.mxu0 0.0
    %4625 = vmatprep.subr.mxu0 0.0
    %4626 = vmatpush2.msra.mxu0 0.0
    %4627 = vmatprep.subr.mxu0 0.0
    %4628 = vmatpush2.msra.mxu0 0.0
    %4629 = vmatprep.subr.mxu0 0.0
    %4630 = vmatpush2.msra.mxu0 0.0
    %4631 = vmatprep.subr.mxu0 0.0
    %4632 = vmatpush2.msra.mxu0 0.0
    %4633 = vmatprep.subr.mxu0 0.0
    %4634 = vmatpush2.msra.mxu0 0.0
    %4635 = vmatprep.subr.mxu0 0.0
    %4636 = vmatpush2.msra.mxu0 0.0
    %4637 = vmatprep.subr.mxu0 0.0
    %4638 = vmatpush2.msra.mxu0 0.0
    %4639 = vmatprep.subr.mxu0 0.0
    %4640 = vmatpush2.msra.mxu0 0.0
    %4641 = vmatprep.subr.mxu0 0.0
    %4642 = vmatpush2.msra.mxu0 0.0
    %4643 = vmatprep.subr.mxu0 0.0
    %4644 = vmatpush2.msra.mxu0 0.0
    %4645 = vmatprep.mubr.f32.mxu0 0.0
    %v4646 = vand.u32 %v4566, 4294901760
    %v4647 = vsub.f32 %v4566, %v4646
    %v4648 = vand.u32 %v4647, 4294901760
    %v4649 = vsub.f32 %v4647, %v4648
    %v4650 = vand.u32 %v4649, 4294901760
    %4651 = vmatmul.mubr.f32.gmra.mxu0 %v4650
    %v4652 = vpop.f32.mrf.mxu0
    %v4653 = vadd.f32 0.0, %v4652
    %v4654 = vpop.f32.mrf.mxu0
    %4655 = vmatprep.mubr.f32.mxu0 0.0
    %v4656 = vand.u32 %v4569, 4294901760
    %v4657 = vsub.f32 %v4569, %v4656
    %v4658 = vand.u32 %v4657, 4294901760
    %v4659 = vsub.f32 %v4657, %v4658
    %v4660 = vand.u32 %v4659, 4294901760
    %4661 = vmatmul.mubr.f32.gmra.mxu0 %v4660
    %v4662 = vpop.f32.mrf.mxu0
    %v4663 = vadd.f32 0.0, %v4662
    %v4664 = vpop.f32.mrf.mxu0
    %4665 = vmatprep.mubr.f32.mxu0 0.0
    %v4666 = vand.u32 %v4572, 4294901760
    %v4667 = vsub.f32 %v4572, %v4666
    %v4668 = vand.u32 %v4667, 4294901760
    %v4669 = vsub.f32 %v4667, %v4668
    %v4670 = vand.u32 %v4669, 4294901760
    %4671 = vmatmul.mubr.f32.gmra.mxu0 %v4670
    %v4672 = vpop.f32.mrf.mxu0
    %v4673 = vadd.f32 0.0, %v4672
    %v4674 = vpop.f32.mrf.mxu0
    %4675 = vmatprep.mubr.f32.mxu0 0.0
    %v4676 = vand.u32 %v4575, 4294901760
    %v4677 = vsub.f32 %v4575, %v4676
    %v4678 = vand.u32 %v4677, 4294901760
    %v4679 = vsub.f32 %v4677, %v4678
    %v4680 = vand.u32 %v4679, 4294901760
    %4681 = vmatmul.mubr.f32.gmra.mxu0 %v4680
    %v4682 = vpop.f32.mrf.mxu0
    %v4683 = vadd.f32 0.0, %v4682
    %v4684 = vpop.f32.mrf.mxu0
    %4685 = vdwg.mxu0
    %4686 = vmatprep.subr.mxu0 0.0
    %4687 = vmatpush1.msra.mxu0 0.0
    %4688 = vmatprep.subr.mxu0 0.0
    %4689 = vmatpush1.msra.mxu0 0.0
    %4690 = vmatprep.subr.mxu0 0.0
    %4691 = vmatpush1.msra.mxu0 0.0
    %4692 = vmatprep.subr.mxu0 0.0
    %4693 = vmatpush1.msra.mxu0 0.0
    %4694 = vmatprep.subr.mxu0 0.0
    %4695 = vmatpush1.msra.mxu0 0.0
    %4696 = vmatprep.subr.mxu0 0.0
    %4697 = vmatpush1.msra.mxu0 0.0
    %4698 = vmatprep.subr.mxu0 0.0
    %4699 = vmatpush1.msra.mxu0 0.0
    %4700 = vmatprep.subr.mxu0 0.0
    %4701 = vmatpush1.msra.mxu0 0.0
    %4702 = vmatprep.subr.mxu0 0.0
    %4703 = vmatpush1.msra.mxu0 0.0
    %4704 = vmatprep.subr.mxu0 0.0
    %4705 = vmatpush1.msra.mxu0 0.0
    %4706 = vmatprep.subr.mxu0 0.0
    %4707 = vmatpush1.msra.mxu0 0.0
    %4708 = vmatprep.subr.mxu0 0.0
    %4709 = vmatpush1.msra.mxu0 0.0
    %4710 = vmatprep.subr.mxu0 0.0
    %v4711 = vand.u32 %v3926, 4294901760
    %v4712 = vsub.f32 %v3926, %v4711
    %v4713 = vand.u32 %v4712, 4294901760
    %v4714 = vsub.f32 %v4712, %v4713
    %v4715 = vand.u32 %v4714, 4294901760
    %4716 = vmatpush1.msra.mxu0 %v4715
    %4717 = vmatprep.subr.mxu0 0.0
    %v4718 = vand.u32 %v3925, 4294901760
    %v4719 = vsub.f32 %v3925, %v4718
    %v4720 = vand.u32 %v4719, 4294901760
    %v4721 = vsub.f32 %v4719, %v4720
    %v4722 = vand.u32 %v4721, 4294901760
    %4723 = vmatpush1.msra.mxu0 %v4722
    %4724 = vmatprep.subr.mxu0 0.0
    %v4725 = vand.u32 %v3924, 4294901760
    %v4726 = vsub.f32 %v3924, %v4725
    %v4727 = vand.u32 %v4726, 4294901760
    %v4728 = vsub.f32 %v4726, %v4727
    %v4729 = vand.u32 %v4728, 4294901760
    %4730 = vmatpush1.msra.mxu0 %v4729
    %4731 = vmatprep.subr.mxu0 0.0
    %v4732 = vand.u32 %v3923, 4294901760
    %v4733 = vsub.f32 %v3923, %v4732
    %v4734 = vand.u32 %v4733, 4294901760
    %v4735 = vsub.f32 %v4733, %v4734
    %v4736 = vand.u32 %v4735, 4294901760
    %4737 = vmatpush1.msra.mxu0 %v4736
    %4738 = vmatprep.subr.mxu0 0.0
    %4739 = vmatpush2.msra.mxu0 0.0
    %4740 = vmatprep.subr.mxu0 0.0
    %4741 = vmatpush2.msra.mxu0 0.0
    %4742 = vmatprep.subr.mxu0 0.0
    %4743 = vmatpush2.msra.mxu0 0.0
    %4744 = vmatprep.subr.mxu0 0.0
    %4745 = vmatpush2.msra.mxu0 0.0
    %4746 = vmatprep.subr.mxu0 0.0
    %4747 = vmatpush2.msra.mxu0 0.0
    %4748 = vmatprep.subr.mxu0 0.0
    %4749 = vmatpush2.msra.mxu0 0.0
    %4750 = vmatprep.subr.mxu0 0.0
    %4751 = vmatpush2.msra.mxu0 0.0
    %4752 = vmatprep.subr.mxu0 0.0
    %4753 = vmatpush2.msra.mxu0 0.0
    %4754 = vmatprep.subr.mxu0 0.0
    %4755 = vmatpush2.msra.mxu0 0.0
    %4756 = vmatprep.subr.mxu0 0.0
    %4757 = vmatpush2.msra.mxu0 0.0
    %4758 = vmatprep.subr.mxu0 0.0
    %4759 = vmatpush2.msra.mxu0 0.0
    %4760 = vmatprep.subr.mxu0 0.0
    %4761 = vmatpush2.msra.mxu0 0.0
    %4762 = vmatprep.subr.mxu0 0.0
    %4763 = vmatpush2.msra.mxu0 0.0
    %4764 = vmatprep.subr.mxu0 0.0
    %4765 = vmatpush2.msra.mxu0 0.0
    %4766 = vmatprep.subr.mxu0 0.0
    %4767 = vmatpush2.msra.mxu0 0.0
    %4768 = vmatprep.subr.mxu0 0.0
    %4769 = vmatpush2.msra.mxu0 0.0
    %4770 = vmatprep.mubr.f32.mxu0 0.0
    %v4771 = vand.u32 %v4566, 4294901760
    %4772 = vmatmul.mubr.f32.gmra.mxu0 %v4771
    %v4773 = vpop.f32.mrf.mxu0
    %v4774 = vadd.f32 %v4653, %v4773
    %v4775 = vpop.f32.mrf.mxu0
    %4776 = vmatprep.mubr.f32.mxu0 0.0
    %v4777 = vand.u32 %v4569, 4294901760
    %4778 = vmatmul.mubr.f32.gmra.mxu0 %v4777
    %v4779 = vpop.f32.mrf.mxu0
    %v4780 = vadd.f32 %v4663, %v4779
    %v4781 = vpop.f32.mrf.mxu0
    %4782 = vmatprep.mubr.f32.mxu0 0.0
    %v4783 = vand.u32 %v4572, 4294901760
    %4784 = vmatmul.mubr.f32.gmra.mxu0 %v4783
    %v4785 = vpop.f32.mrf.mxu0
    %v4786 = vadd.f32 %v4673, %v4785
    %v4787 = vpop.f32.mrf.mxu0
    %4788 = vmatprep.mubr.f32.mxu0 0.0
    %v4789 = vand.u32 %v4575, 4294901760
    %4790 = vmatmul.mubr.f32.gmra.mxu0 %v4789
    %v4791 = vpop.f32.mrf.mxu0
    %v4792 = vadd.f32 %v4683, %v4791
    %v4793 = vpop.f32.mrf.mxu0
    %4794 = vdwg.mxu0
    %4795 = vmatprep.subr.mxu0 0.0
    %4796 = vmatpush1.msra.mxu0 0.0
    %4797 = vmatprep.subr.mxu0 0.0
    %4798 = vmatpush1.msra.mxu0 0.0
    %4799 = vmatprep.subr.mxu0 0.0
    %4800 = vmatpush1.msra.mxu0 0.0
    %4801 = vmatprep.subr.mxu0 0.0
    %4802 = vmatpush1.msra.mxu0 0.0
    %4803 = vmatprep.subr.mxu0 0.0
    %4804 = vmatpush1.msra.mxu0 0.0
    %4805 = vmatprep.subr.mxu0 0.0
    %4806 = vmatpush1.msra.mxu0 0.0
    %4807 = vmatprep.subr.mxu0 0.0
    %4808 = vmatpush1.msra.mxu0 0.0
    %4809 = vmatprep.subr.mxu0 0.0
    %4810 = vmatpush1.msra.mxu0 0.0
    %4811 = vmatprep.subr.mxu0 0.0
    %4812 = vmatpush1.msra.mxu0 0.0
    %4813 = vmatprep.subr.mxu0 0.0
    %4814 = vmatpush1.msra.mxu0 0.0
    %4815 = vmatprep.subr.mxu0 0.0
    %4816 = vmatpush1.msra.mxu0 0.0
    %4817 = vmatprep.subr.mxu0 0.0
    %4818 = vmatpush1.msra.mxu0 0.0
    %4819 = vmatprep.subr.mxu0 0.0
    %v4820 = vand.u32 %v3926, 4294901760
    %v4821 = vsub.f32 %v3926, %v4820
    %4822 = vmatpush1.msra.mxu0 %v4821
    %4823 = vmatprep.subr.mxu0 0.0
    %v4824 = vand.u32 %v3925, 4294901760
    %v4825 = vsub.f32 %v3925, %v4824
    %4826 = vmatpush1.msra.mxu0 %v4825
    %4827 = vmatprep.subr.mxu0 0.0
    %v4828 = vand.u32 %v3924, 4294901760
    %v4829 = vsub.f32 %v3924, %v4828
    %4830 = vmatpush1.msra.mxu0 %v4829
    %4831 = vmatprep.subr.mxu0 0.0
    %v4832 = vand.u32 %v3923, 4294901760
    %v4833 = vsub.f32 %v3923, %v4832
    %4834 = vmatpush1.msra.mxu0 %v4833
    %4835 = vmatprep.subr.mxu0 0.0
    %4836 = vmatpush2.msra.mxu0 0.0
    %4837 = vmatprep.subr.mxu0 0.0
    %4838 = vmatpush2.msra.mxu0 0.0
    %4839 = vmatprep.subr.mxu0 0.0
    %4840 = vmatpush2.msra.mxu0 0.0
    %4841 = vmatprep.subr.mxu0 0.0
    %4842 = vmatpush2.msra.mxu0 0.0
    %4843 = vmatprep.subr.mxu0 0.0
    %4844 = vmatpush2.msra.mxu0 0.0
    %4845 = vmatprep.subr.mxu0 0.0
    %4846 = vmatpush2.msra.mxu0 0.0
    %4847 = vmatprep.subr.mxu0 0.0
    %4848 = vmatpush2.msra.mxu0 0.0
    %4849 = vmatprep.subr.mxu0 0.0
    %4850 = vmatpush2.msra.mxu0 0.0
    %4851 = vmatprep.subr.mxu0 0.0
    %4852 = vmatpush2.msra.mxu0 0.0
    %4853 = vmatprep.subr.mxu0 0.0
    %4854 = vmatpush2.msra.mxu0 0.0
    %4855 = vmatprep.subr.mxu0 0.0
    %4856 = vmatpush2.msra.mxu0 0.0
    %4857 = vmatprep.subr.mxu0 0.0
    %4858 = vmatpush2.msra.mxu0 0.0
    %4859 = vmatprep.subr.mxu0 0.0
    %4860 = vmatpush2.msra.mxu0 0.0
    %4861 = vmatprep.subr.mxu0 0.0
    %4862 = vmatpush2.msra.mxu0 0.0
    %4863 = vmatprep.subr.mxu0 0.0
    %4864 = vmatpush2.msra.mxu0 0.0
    %4865 = vmatprep.subr.mxu0 0.0
    %4866 = vmatpush2.msra.mxu0 0.0
    %4867 = vmatprep.mubr.f32.mxu0 0.0
    %v4868 = vand.u32 %v4566, 4294901760
    %v4869 = vsub.f32 %v4566, %v4868
    %4870 = vmatmul.mubr.f32.gmra.mxu0 %v4869
    %v4871 = vpop.f32.mrf.mxu0
    %v4872 = vadd.f32 %v4774, %v4871
    %v4873 = vpop.f32.mrf.mxu0
    %4874 = vmatprep.mubr.f32.mxu0 0.0
    %v4875 = vand.u32 %v4569, 4294901760
    %v4876 = vsub.f32 %v4569, %v4875
    %4877 = vmatmul.mubr.f32.gmra.mxu0 %v4876
    %v4878 = vpop.f32.mrf.mxu0
    %v4879 = vadd.f32 %v4780, %v4878
    %v4880 = vpop.f32.mrf.mxu0
    %4881 = vmatprep.mubr.f32.mxu0 0.0
    %v4882 = vand.u32 %v4572, 4294901760
    %v4883 = vsub.f32 %v4572, %v4882
    %4884 = vmatmul.mubr.f32.gmra.mxu0 %v4883
    %v4885 = vpop.f32.mrf.mxu0
    %v4886 = vadd.f32 %v4786, %v4885
    %v4887 = vpop.f32.mrf.mxu0
    %4888 = vmatprep.mubr.f32.mxu0 0.0
    %v4889 = vand.u32 %v4575, 4294901760
    %v4890 = vsub.f32 %v4575, %v4889
    %4891 = vmatmul.mubr.f32.gmra.mxu0 %v4890
    %v4892 = vpop.f32.mrf.mxu0
    %v4893 = vadd.f32 %v4792, %v4892
    %v4894 = vpop.f32.mrf.mxu0
    %4895 = vdwg.mxu0
    %4896 = vmatprep.subr.mxu0 0.0
    %4897 = vmatpush1.msra.mxu0 0.0
    %4898 = vmatprep.subr.mxu0 0.0
    %4899 = vmatpush1.msra.mxu0 0.0
    %4900 = vmatprep.subr.mxu0 0.0
    %4901 = vmatpush1.msra.mxu0 0.0
    %4902 = vmatprep.subr.mxu0 0.0
    %4903 = vmatpush1.msra.mxu0 0.0
    %4904 = vmatprep.subr.mxu0 0.0
    %4905 = vmatpush1.msra.mxu0 0.0
    %4906 = vmatprep.subr.mxu0 0.0
    %4907 = vmatpush1.msra.mxu0 0.0
    %4908 = vmatprep.subr.mxu0 0.0
    %4909 = vmatpush1.msra.mxu0 0.0
    %4910 = vmatprep.subr.mxu0 0.0
    %4911 = vmatpush1.msra.mxu0 0.0
    %4912 = vmatprep.subr.mxu0 0.0
    %4913 = vmatpush1.msra.mxu0 0.0
    %4914 = vmatprep.subr.mxu0 0.0
    %4915 = vmatpush1.msra.mxu0 0.0
    %4916 = vmatprep.subr.mxu0 0.0
    %4917 = vmatpush1.msra.mxu0 0.0
    %4918 = vmatprep.subr.mxu0 0.0
    %4919 = vmatpush1.msra.mxu0 0.0
    %4920 = vmatprep.subr.mxu0 0.0
    %v4921 = vand.u32 %v3926, 4294901760
    %4922 = vmatpush1.msra.mxu0 %v4921
    %4923 = vmatprep.subr.mxu0 0.0
    %v4924 = vand.u32 %v3925, 4294901760
    %4925 = vmatpush1.msra.mxu0 %v4924
    %4926 = vmatprep.subr.mxu0 0.0
    %v4927 = vand.u32 %v3924, 4294901760
    %4928 = vmatpush1.msra.mxu0 %v4927
    %4929 = vmatprep.subr.mxu0 0.0
    %v4930 = vand.u32 %v3923, 4294901760
    %4931 = vmatpush1.msra.mxu0 %v4930
    %4932 = vmatprep.subr.mxu0 0.0
    %4933 = vmatpush2.msra.mxu0 0.0
    %4934 = vmatprep.subr.mxu0 0.0
    %4935 = vmatpush2.msra.mxu0 0.0
    %4936 = vmatprep.subr.mxu0 0.0
    %4937 = vmatpush2.msra.mxu0 0.0
    %4938 = vmatprep.subr.mxu0 0.0
    %4939 = vmatpush2.msra.mxu0 0.0
    %4940 = vmatprep.subr.mxu0 0.0
    %4941 = vmatpush2.msra.mxu0 0.0
    %4942 = vmatprep.subr.mxu0 0.0
    %4943 = vmatpush2.msra.mxu0 0.0
    %4944 = vmatprep.subr.mxu0 0.0
    %4945 = vmatpush2.msra.mxu0 0.0
    %4946 = vmatprep.subr.mxu0 0.0
    %4947 = vmatpush2.msra.mxu0 0.0
    %4948 = vmatprep.subr.mxu0 0.0
    %4949 = vmatpush2.msra.mxu0 0.0
    %4950 = vmatprep.subr.mxu0 0.0
    %4951 = vmatpush2.msra.mxu0 0.0
    %4952 = vmatprep.subr.mxu0 0.0
    %4953 = vmatpush2.msra.mxu0 0.0
    %4954 = vmatprep.subr.mxu0 0.0
    %4955 = vmatpush2.msra.mxu0 0.0
    %4956 = vmatprep.subr.mxu0 0.0
    %4957 = vmatpush2.msra.mxu0 0.0
    %4958 = vmatprep.subr.mxu0 0.0
    %4959 = vmatpush2.msra.mxu0 0.0
    %4960 = vmatprep.subr.mxu0 0.0
    %4961 = vmatpush2.msra.mxu0 0.0
    %4962 = vmatprep.subr.mxu0 0.0
    %4963 = vmatpush2.msra.mxu0 0.0
    %4964 = vmatprep.mubr.f32.mxu0 0.0
    %v4965 = vand.u32 %v4566, 4294901760
    %v4966 = vsub.f32 %v4566, %v4965
    %v4967 = vand.u32 %v4966, 4294901760
    %4968 = vmatmul.mubr.f32.gmra.mxu0 %v4967
    %v4969 = vpop.f32.mrf.mxu0
    %v4970 = vadd.f32 %v4872, %v4969
    %v4971 = vpop.f32.mrf.mxu0
    %4972 = vmatprep.mubr.f32.mxu0 0.0
    %v4973 = vand.u32 %v4569, 4294901760
    %v4974 = vsub.f32 %v4569, %v4973
    %v4975 = vand.u32 %v4974, 4294901760
    %4976 = vmatmul.mubr.f32.gmra.mxu0 %v4975
    %v4977 = vpop.f32.mrf.mxu0
    %v4978 = vadd.f32 %v4879, %v4977
    %v4979 = vpop.f32.mrf.mxu0
    %4980 = vmatprep.mubr.f32.mxu0 0.0
    %v4981 = vand.u32 %v4572, 4294901760
    %v4982 = vsub.f32 %v4572, %v4981
    %v4983 = vand.u32 %v4982, 4294901760
    %4984 = vmatmul.mubr.f32.gmra.mxu0 %v4983
    %v4985 = vpop.f32.mrf.mxu0
    %v4986 = vadd.f32 %v4886, %v4985
    %v4987 = vpop.f32.mrf.mxu0
    %4988 = vmatprep.mubr.f32.mxu0 0.0
    %v4989 = vand.u32 %v4575, 4294901760
    %v4990 = vsub.f32 %v4575, %v4989
    %v4991 = vand.u32 %v4990, 4294901760
    %4992 = vmatmul.mubr.f32.gmra.mxu0 %v4991
    %v4993 = vpop.f32.mrf.mxu0
    %v4994 = vadd.f32 %v4893, %v4993
    %v4995 = vpop.f32.mrf.mxu0
    %4996 = vdwg.mxu0
    %4997 = vmatprep.subr.mxu0 0.0
    %4998 = vmatpush1.msra.mxu0 0.0
    %4999 = vmatprep.subr.mxu0 0.0
    %5000 = vmatpush1.msra.mxu0 0.0
    %5001 = vmatprep.subr.mxu0 0.0
    %5002 = vmatpush1.msra.mxu0 0.0
    %5003 = vmatprep.subr.mxu0 0.0
    %5004 = vmatpush1.msra.mxu0 0.0
    %5005 = vmatprep.subr.mxu0 0.0
    %5006 = vmatpush1.msra.mxu0 0.0
    %5007 = vmatprep.subr.mxu0 0.0
    %5008 = vmatpush1.msra.mxu0 0.0
    %5009 = vmatprep.subr.mxu0 0.0
    %5010 = vmatpush1.msra.mxu0 0.0
    %5011 = vmatprep.subr.mxu0 0.0
    %5012 = vmatpush1.msra.mxu0 0.0
    %5013 = vmatprep.subr.mxu0 0.0
    %5014 = vmatpush1.msra.mxu0 0.0
    %5015 = vmatprep.subr.mxu0 0.0
    %5016 = vmatpush1.msra.mxu0 0.0
    %5017 = vmatprep.subr.mxu0 0.0
    %5018 = vmatpush1.msra.mxu0 0.0
    %5019 = vmatprep.subr.mxu0 0.0
    %5020 = vmatpush1.msra.mxu0 0.0
    %5021 = vmatprep.subr.mxu0 0.0
    %v5022 = vand.u32 %v3926, 4294901760
    %v5023 = vsub.f32 %v3926, %v5022
    %v5024 = vand.u32 %v5023, 4294901760
    %5025 = vmatpush1.msra.mxu0 %v5024
    %5026 = vmatprep.subr.mxu0 0.0
    %v5027 = vand.u32 %v3925, 4294901760
    %v5028 = vsub.f32 %v3925, %v5027
    %v5029 = vand.u32 %v5028, 4294901760
    %5030 = vmatpush1.msra.mxu0 %v5029
    %5031 = vmatprep.subr.mxu0 0.0
    %v5032 = vand.u32 %v3924, 4294901760
    %v5033 = vsub.f32 %v3924, %v5032
    %v5034 = vand.u32 %v5033, 4294901760
    %5035 = vmatpush1.msra.mxu0 %v5034
    %5036 = vmatprep.subr.mxu0 0.0
    %v5037 = vand.u32 %v3923, 4294901760
    %v5038 = vsub.f32 %v3923, %v5037
    %v5039 = vand.u32 %v5038, 4294901760
    %5040 = vmatpush1.msra.mxu0 %v5039
    %5041 = vmatprep.subr.mxu0 0.0
    %5042 = vmatpush2.msra.mxu0 0.0
    %5043 = vmatprep.subr.mxu0 0.0
    %5044 = vmatpush2.msra.mxu0 0.0
    %5045 = vmatprep.subr.mxu0 0.0
    %5046 = vmatpush2.msra.mxu0 0.0
    %5047 = vmatprep.subr.mxu0 0.0
    %5048 = vmatpush2.msra.mxu0 0.0
    %5049 = vmatprep.subr.mxu0 0.0
    %5050 = vmatpush2.msra.mxu0 0.0
    %5051 = vmatprep.subr.mxu0 0.0
    %5052 = vmatpush2.msra.mxu0 0.0
    %5053 = vmatprep.subr.mxu0 0.0
    %5054 = vmatpush2.msra.mxu0 0.0
    %5055 = vmatprep.subr.mxu0 0.0
    %5056 = vmatpush2.msra.mxu0 0.0
    %5057 = vmatprep.subr.mxu0 0.0
    %5058 = vmatpush2.msra.mxu0 0.0
    %5059 = vmatprep.subr.mxu0 0.0
    %5060 = vmatpush2.msra.mxu0 0.0
    %5061 = vmatprep.subr.mxu0 0.0
    %5062 = vmatpush2.msra.mxu0 0.0
    %5063 = vmatprep.subr.mxu0 0.0
    %5064 = vmatpush2.msra.mxu0 0.0
    %5065 = vmatprep.subr.mxu0 0.0
    %5066 = vmatpush2.msra.mxu0 0.0
    %5067 = vmatprep.subr.mxu0 0.0
    %5068 = vmatpush2.msra.mxu0 0.0
    %5069 = vmatprep.subr.mxu0 0.0
    %5070 = vmatpush2.msra.mxu0 0.0
    %5071 = vmatprep.subr.mxu0 0.0
    %5072 = vmatpush2.msra.mxu0 0.0
    %5073 = vmatprep.mubr.f32.mxu0 0.0
    %v5074 = vand.u32 %v4566, 4294901760
    %5075 = vmatmul.mubr.f32.gmra.mxu0 %v5074
    %v5076 = vpop.f32.mrf.mxu0
    %v5077 = vadd.f32 %v4970, %v5076
    %v5078 = vpop.f32.mrf.mxu0
    %5079 = vmatprep.mubr.f32.mxu0 0.0
    %v5080 = vand.u32 %v4569, 4294901760
    %5081 = vmatmul.mubr.f32.gmra.mxu0 %v5080
    %v5082 = vpop.f32.mrf.mxu0
    %v5083 = vadd.f32 %v4978, %v5082
    %v5084 = vpop.f32.mrf.mxu0
    %5085 = vmatprep.mubr.f32.mxu0 0.0
    %v5086 = vand.u32 %v4572, 4294901760
    %5087 = vmatmul.mubr.f32.gmra.mxu0 %v5086
    %v5088 = vpop.f32.mrf.mxu0
    %v5089 = vadd.f32 %v4986, %v5088
    %v5090 = vpop.f32.mrf.mxu0
    %5091 = vmatprep.mubr.f32.mxu0 0.0
    %v5092 = vand.u32 %v4575, 4294901760
    %5093 = vmatmul.mubr.f32.gmra.mxu0 %v5092
    %v5094 = vpop.f32.mrf.mxu0
    %v5095 = vadd.f32 %v4994, %v5094
    %v5096 = vpop.f32.mrf.mxu0
    %5097 = vdwg.mxu0
    %5098 = vmatprep.subr.mxu0 0.0
    %5099 = vmatpush1.msra.mxu0 0.0
    %5100 = vmatprep.subr.mxu0 0.0
    %5101 = vmatpush1.msra.mxu0 0.0
    %5102 = vmatprep.subr.mxu0 0.0
    %5103 = vmatpush1.msra.mxu0 0.0
    %5104 = vmatprep.subr.mxu0 0.0
    %5105 = vmatpush1.msra.mxu0 0.0
    %5106 = vmatprep.subr.mxu0 0.0
    %5107 = vmatpush1.msra.mxu0 0.0
    %5108 = vmatprep.subr.mxu0 0.0
    %5109 = vmatpush1.msra.mxu0 0.0
    %5110 = vmatprep.subr.mxu0 0.0
    %5111 = vmatpush1.msra.mxu0 0.0
    %5112 = vmatprep.subr.mxu0 0.0
    %5113 = vmatpush1.msra.mxu0 0.0
    %5114 = vmatprep.subr.mxu0 0.0
    %5115 = vmatpush1.msra.mxu0 0.0
    %5116 = vmatprep.subr.mxu0 0.0
    %5117 = vmatpush1.msra.mxu0 0.0
    %5118 = vmatprep.subr.mxu0 0.0
    %5119 = vmatpush1.msra.mxu0 0.0
    %5120 = vmatprep.subr.mxu0 0.0
    %5121 = vmatpush1.msra.mxu0 0.0
    %5122 = vmatprep.subr.mxu0 0.0
    %v5123 = vand.u32 %v3926, 4294901760
    %5124 = vmatpush1.msra.mxu0 %v5123
    %5125 = vmatprep.subr.mxu0 0.0
    %v5126 = vand.u32 %v3925, 4294901760
    %5127 = vmatpush1.msra.mxu0 %v5126
    %5128 = vmatprep.subr.mxu0 0.0
    %v5129 = vand.u32 %v3924, 4294901760
    %5130 = vmatpush1.msra.mxu0 %v5129
    %5131 = vmatprep.subr.mxu0 0.0
    %v5132 = vand.u32 %v3923, 4294901760
    %5133 = vmatpush1.msra.mxu0 %v5132
    %5134 = vmatprep.subr.mxu0 0.0
    %5135 = vmatpush2.msra.mxu0 0.0
    %5136 = vmatprep.subr.mxu0 0.0
    %5137 = vmatpush2.msra.mxu0 0.0
    %5138 = vmatprep.subr.mxu0 0.0
    %5139 = vmatpush2.msra.mxu0 0.0
    %5140 = vmatprep.subr.mxu0 0.0
    %5141 = vmatpush2.msra.mxu0 0.0
    %5142 = vmatprep.subr.mxu0 0.0
    %5143 = vmatpush2.msra.mxu0 0.0
    %5144 = vmatprep.subr.mxu0 0.0
    %5145 = vmatpush2.msra.mxu0 0.0
    %5146 = vmatprep.subr.mxu0 0.0
    %5147 = vmatpush2.msra.mxu0 0.0
    %5148 = vmatprep.subr.mxu0 0.0
    %5149 = vmatpush2.msra.mxu0 0.0
    %5150 = vmatprep.subr.mxu0 0.0
    %5151 = vmatpush2.msra.mxu0 0.0
    %5152 = vmatprep.subr.mxu0 0.0
    %5153 = vmatpush2.msra.mxu0 0.0
    %5154 = vmatprep.subr.mxu0 0.0
    %5155 = vmatpush2.msra.mxu0 0.0
    %5156 = vmatprep.subr.mxu0 0.0
    %5157 = vmatpush2.msra.mxu0 0.0
    %5158 = vmatprep.subr.mxu0 0.0
    %5159 = vmatpush2.msra.mxu0 0.0
    %5160 = vmatprep.subr.mxu0 0.0
    %5161 = vmatpush2.msra.mxu0 0.0
    %5162 = vmatprep.subr.mxu0 0.0
    %5163 = vmatpush2.msra.mxu0 0.0
    %5164 = vmatprep.subr.mxu0 0.0
    %5165 = vmatpush2.msra.mxu0 0.0
    %5166 = vmatprep.mubr.f32.mxu0 0.0
    %v5167 = vand.u32 %v4566, 4294901760
    %5168 = vmatmul.mubr.f32.gmra.mxu0 %v5167
    %v5169 = vpop.f32.mrf.mxu0
    %v5170 = vadd.f32 %v5077, %v5169
    %v5171 = vpop.f32.mrf.mxu0
    %5172 = vmatprep.mubr.f32.mxu0 0.0
    %v5173 = vand.u32 %v4569, 4294901760
    %5174 = vmatmul.mubr.f32.gmra.mxu0 %v5173
    %v5175 = vpop.f32.mrf.mxu0
    %v5176 = vadd.f32 %v5083, %v5175
    %v5177 = vpop.f32.mrf.mxu0
    %5178 = vmatprep.mubr.f32.mxu0 0.0
    %v5179 = vand.u32 %v4572, 4294901760
    %5180 = vmatmul.mubr.f32.gmra.mxu0 %v5179
    %v5181 = vpop.f32.mrf.mxu0
    %v5182 = vadd.f32 %v5089, %v5181
    %v5183 = vpop.f32.mrf.mxu0
    %5184 = vmatprep.mubr.f32.mxu0 0.0
    %v5185 = vand.u32 %v4575, 4294901760
    %5186 = vmatmul.mubr.f32.gmra.mxu0 %v5185
    %v5187 = vpop.f32.mrf.mxu0
    %v5188 = vadd.f32 %v5095, %v5187
    %v5189 = vpop.f32.mrf.mxu0
    %5190 = vdwg.mxu0
    %v5191 = vadd.f32 %v3918, %v5170
    %v5192 = vadd.f32 %v3919, %v5176
    %v5193 = vadd.f32 %v3920, %v5182
    %v5194 = vadd.f32 %v3921, %v5188
    %s5195 = scalar_lea.vmem %s1, 128
    %v5196 = vld [vmem:[%s5195] sm:$0xff]
    %v5197 = vld [vmem:[%s5195 + $0x8] sm:$0xff]
    %v5198 = vld [vmem:[%s5195 + $0x10] sm:$0xff]
    %v5199 = vld [vmem:[%s5195 + $0x18] sm:$0xff]
    %v5200 = vld [vmem:[#allocation2 + $0x4] sm:$0xff]
    %v5201 = vld [vmem:[#allocation2 + $0xc] sm:$0xff]
    %v5202 = vld [vmem:[#allocation2 + $0x14] sm:$0xff]
    %v5203 = vld [vmem:[#allocation2 + $0x1c] sm:$0xff]
    %v5205 = vsel %vm34, %v5200, 0
    %v5208 = vsel %vm34, %v5201, 0
    %v5211 = vsel %vm34, %v5202, 0
    %v5214 = vsel %vm34, %v5203, 0
    %5216 = vmatprep.subr.mxu0 0.0
    %5217 = vmatpush1.msra.mxu0 0.0
    %5218 = vmatprep.subr.mxu0 0.0
    %5219 = vmatpush1.msra.mxu0 0.0
    %5220 = vmatprep.subr.mxu0 0.0
    %5221 = vmatpush1.msra.mxu0 0.0
    %5222 = vmatprep.subr.mxu0 0.0
    %5223 = vmatpush1.msra.mxu0 0.0
    %5224 = vmatprep.subr.mxu0 0.0
    %5225 = vmatpush1.msra.mxu0 0.0
    %5226 = vmatprep.subr.mxu0 0.0
    %5227 = vmatpush1.msra.mxu0 0.0
    %5228 = vmatprep.subr.mxu0 0.0
    %5229 = vmatpush1.msra.mxu0 0.0
    %5230 = vmatprep.subr.mxu0 0.0
    %5231 = vmatpush1.msra.mxu0 0.0
    %5232 = vmatprep.subr.mxu0 0.0
    %5233 = vmatpush1.msra.mxu0 0.0
    %5234 = vmatprep.subr.mxu0 0.0
    %5235 = vmatpush1.msra.mxu0 0.0
    %5236 = vmatprep.subr.mxu0 0.0
    %5237 = vmatpush1.msra.mxu0 0.0
    %5238 = vmatprep.subr.mxu0 0.0
    %5239 = vmatpush1.msra.mxu0 0.0
    %5240 = vmatprep.subr.mxu0 0.0
    %v5241 = vand.u32 %v5199, 4294901760
    %5242 = vmatpush1.msra.mxu0 %v5241
    %5243 = vmatprep.subr.mxu0 0.0
    %v5244 = vand.u32 %v5198, 4294901760
    %5245 = vmatpush1.msra.mxu0 %v5244
    %5246 = vmatprep.subr.mxu0 0.0
    %v5247 = vand.u32 %v5197, 4294901760
    %5248 = vmatpush1.msra.mxu0 %v5247
    %5249 = vmatprep.subr.mxu0 0.0
    %v5250 = vand.u32 %v5196, 4294901760
    %5251 = vmatpush1.msra.mxu0 %v5250
    %5252 = vmatprep.subr.mxu0 0.0
    %5253 = vmatpush2.msra.mxu0 0.0
    %5254 = vmatprep.subr.mxu0 0.0
    %5255 = vmatpush2.msra.mxu0 0.0
    %5256 = vmatprep.subr.mxu0 0.0
    %5257 = vmatpush2.msra.mxu0 0.0
    %5258 = vmatprep.subr.mxu0 0.0
    %5259 = vmatpush2.msra.mxu0 0.0
    %5260 = vmatprep.subr.mxu0 0.0
    %5261 = vmatpush2.msra.mxu0 0.0
    %5262 = vmatprep.subr.mxu0 0.0
    %5263 = vmatpush2.msra.mxu0 0.0
    %5264 = vmatprep.subr.mxu0 0.0
    %5265 = vmatpush2.msra.mxu0 0.0
    %5266 = vmatprep.subr.mxu0 0.0
    %5267 = vmatpush2.msra.mxu0 0.0
    %5268 = vmatprep.subr.mxu0 0.0
    %5269 = vmatpush2.msra.mxu0 0.0
    %5270 = vmatprep.subr.mxu0 0.0
    %5271 = vmatpush2.msra.mxu0 0.0
    %5272 = vmatprep.subr.mxu0 0.0
    %5273 = vmatpush2.msra.mxu0 0.0
    %5274 = vmatprep.subr.mxu0 0.0
    %5275 = vmatpush2.msra.mxu0 0.0
    %5276 = vmatprep.subr.mxu0 0.0
    %5277 = vmatpush2.msra.mxu0 0.0
    %5278 = vmatprep.subr.mxu0 0.0
    %5279 = vmatpush2.msra.mxu0 0.0
    %5280 = vmatprep.subr.mxu0 0.0
    %5281 = vmatpush2.msra.mxu0 0.0
    %5282 = vmatprep.subr.mxu0 0.0
    %5283 = vmatpush2.msra.mxu0 0.0
    %5284 = vmatprep.mubr.f32.mxu0 0.0
    %v5285 = vand.u32 %v5205, 4294901760
    %v5286 = vsub.f32 %v5205, %v5285
    %v5287 = vand.u32 %v5286, 4294901760
    %v5288 = vsub.f32 %v5286, %v5287
    %v5289 = vand.u32 %v5288, 4294901760
    %5290 = vmatmul.mubr.f32.gmra.mxu0 %v5289
    %v5291 = vpop.f32.mrf.mxu0
    %v5292 = vadd.f32 0.0, %v5291
    %v5293 = vpop.f32.mrf.mxu0
    %5294 = vmatprep.mubr.f32.mxu0 0.0
    %v5295 = vand.u32 %v5208, 4294901760
    %v5296 = vsub.f32 %v5208, %v5295
    %v5297 = vand.u32 %v5296, 4294901760
    %v5298 = vsub.f32 %v5296, %v5297
    %v5299 = vand.u32 %v5298, 4294901760
    %5300 = vmatmul.mubr.f32.gmra.mxu0 %v5299
    %v5301 = vpop.f32.mrf.mxu0
    %v5302 = vadd.f32 0.0, %v5301
    %v5303 = vpop.f32.mrf.mxu0
    %5304 = vmatprep.mubr.f32.mxu0 0.0
    %v5305 = vand.u32 %v5211, 4294901760
    %v5306 = vsub.f32 %v5211, %v5305
    %v5307 = vand.u32 %v5306, 4294901760
    %v5308 = vsub.f32 %v5306, %v5307
    %v5309 = vand.u32 %v5308, 4294901760
    %5310 = vmatmul.mubr.f32.gmra.mxu0 %v5309
    %v5311 = vpop.f32.mrf.mxu0
    %v5312 = vadd.f32 0.0, %v5311
    %v5313 = vpop.f32.mrf.mxu0
    %5314 = vmatprep.mubr.f32.mxu0 0.0
    %v5315 = vand.u32 %v5214, 4294901760
    %v5316 = vsub.f32 %v5214, %v5315
    %v5317 = vand.u32 %v5316, 4294901760
    %v5318 = vsub.f32 %v5316, %v5317
    %v5319 = vand.u32 %v5318, 4294901760
    %5320 = vmatmul.mubr.f32.gmra.mxu0 %v5319
    %v5321 = vpop.f32.mrf.mxu0
    %v5322 = vadd.f32 0.0, %v5321
    %v5323 = vpop.f32.mrf.mxu0
    %5324 = vdwg.mxu0
    %5325 = vmatprep.subr.mxu0 0.0
    %5326 = vmatpush1.msra.mxu0 0.0
    %5327 = vmatprep.subr.mxu0 0.0
    %5328 = vmatpush1.msra.mxu0 0.0
    %5329 = vmatprep.subr.mxu0 0.0
    %5330 = vmatpush1.msra.mxu0 0.0
    %5331 = vmatprep.subr.mxu0 0.0
    %5332 = vmatpush1.msra.mxu0 0.0
    %5333 = vmatprep.subr.mxu0 0.0
    %5334 = vmatpush1.msra.mxu0 0.0
    %5335 = vmatprep.subr.mxu0 0.0
    %5336 = vmatpush1.msra.mxu0 0.0
    %5337 = vmatprep.subr.mxu0 0.0
    %5338 = vmatpush1.msra.mxu0 0.0
    %5339 = vmatprep.subr.mxu0 0.0
    %5340 = vmatpush1.msra.mxu0 0.0
    %5341 = vmatprep.subr.mxu0 0.0
    %5342 = vmatpush1.msra.mxu0 0.0
    %5343 = vmatprep.subr.mxu0 0.0
    %5344 = vmatpush1.msra.mxu0 0.0
    %5345 = vmatprep.subr.mxu0 0.0
    %5346 = vmatpush1.msra.mxu0 0.0
    %5347 = vmatprep.subr.mxu0 0.0
    %5348 = vmatpush1.msra.mxu0 0.0
    %5349 = vmatprep.subr.mxu0 0.0
    %v5350 = vand.u32 %v5199, 4294901760
    %v5351 = vsub.f32 %v5199, %v5350
    %v5352 = vand.u32 %v5351, 4294901760
    %v5353 = vsub.f32 %v5351, %v5352
    %v5354 = vand.u32 %v5353, 4294901760
    %5355 = vmatpush1.msra.mxu0 %v5354
    %5356 = vmatprep.subr.mxu0 0.0
    %v5357 = vand.u32 %v5198, 4294901760
    %v5358 = vsub.f32 %v5198, %v5357
    %v5359 = vand.u32 %v5358, 4294901760
    %v5360 = vsub.f32 %v5358, %v5359
    %v5361 = vand.u32 %v5360, 4294901760
    %5362 = vmatpush1.msra.mxu0 %v5361
    %5363 = vmatprep.subr.mxu0 0.0
    %v5364 = vand.u32 %v5197, 4294901760
    %v5365 = vsub.f32 %v5197, %v5364
    %v5366 = vand.u32 %v5365, 4294901760
    %v5367 = vsub.f32 %v5365, %v5366
    %v5368 = vand.u32 %v5367, 4294901760
    %5369 = vmatpush1.msra.mxu0 %v5368
    %5370 = vmatprep.subr.mxu0 0.0
    %v5371 = vand.u32 %v5196, 4294901760
    %v5372 = vsub.f32 %v5196, %v5371
    %v5373 = vand.u32 %v5372, 4294901760
    %v5374 = vsub.f32 %v5372, %v5373
    %v5375 = vand.u32 %v5374, 4294901760
    %5376 = vmatpush1.msra.mxu0 %v5375
    %5377 = vmatprep.subr.mxu0 0.0
    %5378 = vmatpush2.msra.mxu0 0.0
    %5379 = vmatprep.subr.mxu0 0.0
    %5380 = vmatpush2.msra.mxu0 0.0
    %5381 = vmatprep.subr.mxu0 0.0
    %5382 = vmatpush2.msra.mxu0 0.0
    %5383 = vmatprep.subr.mxu0 0.0
    %5384 = vmatpush2.msra.mxu0 0.0
    %5385 = vmatprep.subr.mxu0 0.0
    %5386 = vmatpush2.msra.mxu0 0.0
    %5387 = vmatprep.subr.mxu0 0.0
    %5388 = vmatpush2.msra.mxu0 0.0
    %5389 = vmatprep.subr.mxu0 0.0
    %5390 = vmatpush2.msra.mxu0 0.0
    %5391 = vmatprep.subr.mxu0 0.0
    %5392 = vmatpush2.msra.mxu0 0.0
    %5393 = vmatprep.subr.mxu0 0.0
    %5394 = vmatpush2.msra.mxu0 0.0
    %5395 = vmatprep.subr.mxu0 0.0
    %5396 = vmatpush2.msra.mxu0 0.0
    %5397 = vmatprep.subr.mxu0 0.0
    %5398 = vmatpush2.msra.mxu0 0.0
    %5399 = vmatprep.subr.mxu0 0.0
    %5400 = vmatpush2.msra.mxu0 0.0
    %5401 = vmatprep.subr.mxu0 0.0
    %5402 = vmatpush2.msra.mxu0 0.0
    %5403 = vmatprep.subr.mxu0 0.0
    %5404 = vmatpush2.msra.mxu0 0.0
    %5405 = vmatprep.subr.mxu0 0.0
    %5406 = vmatpush2.msra.mxu0 0.0
    %5407 = vmatprep.subr.mxu0 0.0
    %5408 = vmatpush2.msra.mxu0 0.0
    %5409 = vmatprep.mubr.f32.mxu0 0.0
    %v5410 = vand.u32 %v5205, 4294901760
    %5411 = vmatmul.mubr.f32.gmra.mxu0 %v5410
    %v5412 = vpop.f32.mrf.mxu0
    %v5413 = vadd.f32 %v5292, %v5412
    %v5414 = vpop.f32.mrf.mxu0
    %5415 = vmatprep.mubr.f32.mxu0 0.0
    %v5416 = vand.u32 %v5208, 4294901760
    %5417 = vmatmul.mubr.f32.gmra.mxu0 %v5416
    %v5418 = vpop.f32.mrf.mxu0
    %v5419 = vadd.f32 %v5302, %v5418
    %v5420 = vpop.f32.mrf.mxu0
    %5421 = vmatprep.mubr.f32.mxu0 0.0
    %v5422 = vand.u32 %v5211, 4294901760
    %5423 = vmatmul.mubr.f32.gmra.mxu0 %v5422
    %v5424 = vpop.f32.mrf.mxu0
    %v5425 = vadd.f32 %v5312, %v5424
    %v5426 = vpop.f32.mrf.mxu0
    %5427 = vmatprep.mubr.f32.mxu0 0.0
    %v5428 = vand.u32 %v5214, 4294901760
    %5429 = vmatmul.mubr.f32.gmra.mxu0 %v5428
    %v5430 = vpop.f32.mrf.mxu0
    %v5431 = vadd.f32 %v5322, %v5430
    %v5432 = vpop.f32.mrf.mxu0
    %5433 = vdwg.mxu0
    %5434 = vmatprep.subr.mxu0 0.0
    %5435 = vmatpush1.msra.mxu0 0.0
    %5436 = vmatprep.subr.mxu0 0.0
    %5437 = vmatpush1.msra.mxu0 0.0
    %5438 = vmatprep.subr.mxu0 0.0
    %5439 = vmatpush1.msra.mxu0 0.0
    %5440 = vmatprep.subr.mxu0 0.0
    %5441 = vmatpush1.msra.mxu0 0.0
    %5442 = vmatprep.subr.mxu0 0.0
    %5443 = vmatpush1.msra.mxu0 0.0
    %5444 = vmatprep.subr.mxu0 0.0
    %5445 = vmatpush1.msra.mxu0 0.0
    %5446 = vmatprep.subr.mxu0 0.0
    %5447 = vmatpush1.msra.mxu0 0.0
    %5448 = vmatprep.subr.mxu0 0.0
    %5449 = vmatpush1.msra.mxu0 0.0
    %5450 = vmatprep.subr.mxu0 0.0
    %5451 = vmatpush1.msra.mxu0 0.0
    %5452 = vmatprep.subr.mxu0 0.0
    %5453 = vmatpush1.msra.mxu0 0.0
    %5454 = vmatprep.subr.mxu0 0.0
    %5455 = vmatpush1.msra.mxu0 0.0
    %5456 = vmatprep.subr.mxu0 0.0
    %5457 = vmatpush1.msra.mxu0 0.0
    %5458 = vmatprep.subr.mxu0 0.0
    %v5459 = vand.u32 %v5199, 4294901760
    %v5460 = vsub.f32 %v5199, %v5459
    %5461 = vmatpush1.msra.mxu0 %v5460
    %5462 = vmatprep.subr.mxu0 0.0
    %v5463 = vand.u32 %v5198, 4294901760
    %v5464 = vsub.f32 %v5198, %v5463
    %5465 = vmatpush1.msra.mxu0 %v5464
    %5466 = vmatprep.subr.mxu0 0.0
    %v5467 = vand.u32 %v5197, 4294901760
    %v5468 = vsub.f32 %v5197, %v5467
    %5469 = vmatpush1.msra.mxu0 %v5468
    %5470 = vmatprep.subr.mxu0 0.0
    %v5471 = vand.u32 %v5196, 4294901760
    %v5472 = vsub.f32 %v5196, %v5471
    %5473 = vmatpush1.msra.mxu0 %v5472
    %5474 = vmatprep.subr.mxu0 0.0
    %5475 = vmatpush2.msra.mxu0 0.0
    %5476 = vmatprep.subr.mxu0 0.0
    %5477 = vmatpush2.msra.mxu0 0.0
    %5478 = vmatprep.subr.mxu0 0.0
    %5479 = vmatpush2.msra.mxu0 0.0
    %5480 = vmatprep.subr.mxu0 0.0
    %5481 = vmatpush2.msra.mxu0 0.0
    %5482 = vmatprep.subr.mxu0 0.0
    %5483 = vmatpush2.msra.mxu0 0.0
    %5484 = vmatprep.subr.mxu0 0.0
    %5485 = vmatpush2.msra.mxu0 0.0
    %5486 = vmatprep.subr.mxu0 0.0
    %5487 = vmatpush2.msra.mxu0 0.0
    %5488 = vmatprep.subr.mxu0 0.0
    %5489 = vmatpush2.msra.mxu0 0.0
    %5490 = vmatprep.subr.mxu0 0.0
    %5491 = vmatpush2.msra.mxu0 0.0
    %5492 = vmatprep.subr.mxu0 0.0
    %5493 = vmatpush2.msra.mxu0 0.0
    %5494 = vmatprep.subr.mxu0 0.0
    %5495 = vmatpush2.msra.mxu0 0.0
    %5496 = vmatprep.subr.mxu0 0.0
    %5497 = vmatpush2.msra.mxu0 0.0
    %5498 = vmatprep.subr.mxu0 0.0
    %5499 = vmatpush2.msra.mxu0 0.0
    %5500 = vmatprep.subr.mxu0 0.0
    %5501 = vmatpush2.msra.mxu0 0.0
    %5502 = vmatprep.subr.mxu0 0.0
    %5503 = vmatpush2.msra.mxu0 0.0
    %5504 = vmatprep.subr.mxu0 0.0
    %5505 = vmatpush2.msra.mxu0 0.0
    %5506 = vmatprep.mubr.f32.mxu0 0.0
    %v5507 = vand.u32 %v5205, 4294901760
    %v5508 = vsub.f32 %v5205, %v5507
    %5509 = vmatmul.mubr.f32.gmra.mxu0 %v5508
    %v5510 = vpop.f32.mrf.mxu0
    %v5511 = vadd.f32 %v5413, %v5510
    %v5512 = vpop.f32.mrf.mxu0
    %5513 = vmatprep.mubr.f32.mxu0 0.0
    %v5514 = vand.u32 %v5208, 4294901760
    %v5515 = vsub.f32 %v5208, %v5514
    %5516 = vmatmul.mubr.f32.gmra.mxu0 %v5515
    %v5517 = vpop.f32.mrf.mxu0
    %v5518 = vadd.f32 %v5419, %v5517
    %v5519 = vpop.f32.mrf.mxu0
    %5520 = vmatprep.mubr.f32.mxu0 0.0
    %v5521 = vand.u32 %v5211, 4294901760
    %v5522 = vsub.f32 %v5211, %v5521
    %5523 = vmatmul.mubr.f32.gmra.mxu0 %v5522
    %v5524 = vpop.f32.mrf.mxu0
    %v5525 = vadd.f32 %v5425, %v5524
    %v5526 = vpop.f32.mrf.mxu0
    %5527 = vmatprep.mubr.f32.mxu0 0.0
    %v5528 = vand.u32 %v5214, 4294901760
    %v5529 = vsub.f32 %v5214, %v5528
    %5530 = vmatmul.mubr.f32.gmra.mxu0 %v5529
    %v5531 = vpop.f32.mrf.mxu0
    %v5532 = vadd.f32 %v5431, %v5531
    %v5533 = vpop.f32.mrf.mxu0
    %5534 = vdwg.mxu0
    %5535 = vmatprep.subr.mxu0 0.0
    %5536 = vmatpush1.msra.mxu0 0.0
    %5537 = vmatprep.subr.mxu0 0.0
    %5538 = vmatpush1.msra.mxu0 0.0
    %5539 = vmatprep.subr.mxu0 0.0
    %5540 = vmatpush1.msra.mxu0 0.0
    %5541 = vmatprep.subr.mxu0 0.0
    %5542 = vmatpush1.msra.mxu0 0.0
    %5543 = vmatprep.subr.mxu0 0.0
    %5544 = vmatpush1.msra.mxu0 0.0
    %5545 = vmatprep.subr.mxu0 0.0
    %5546 = vmatpush1.msra.mxu0 0.0
    %5547 = vmatprep.subr.mxu0 0.0
    %5548 = vmatpush1.msra.mxu0 0.0
    %5549 = vmatprep.subr.mxu0 0.0
    %5550 = vmatpush1.msra.mxu0 0.0
    %5551 = vmatprep.subr.mxu0 0.0
    %5552 = vmatpush1.msra.mxu0 0.0
    %5553 = vmatprep.subr.mxu0 0.0
    %5554 = vmatpush1.msra.mxu0 0.0
    %5555 = vmatprep.subr.mxu0 0.0
    %5556 = vmatpush1.msra.mxu0 0.0
    %5557 = vmatprep.subr.mxu0 0.0
    %5558 = vmatpush1.msra.mxu0 0.0
    %5559 = vmatprep.subr.mxu0 0.0
    %v5560 = vand.u32 %v5199, 4294901760
    %5561 = vmatpush1.msra.mxu0 %v5560
    %5562 = vmatprep.subr.mxu0 0.0
    %v5563 = vand.u32 %v5198, 4294901760
    %5564 = vmatpush1.msra.mxu0 %v5563
    %5565 = vmatprep.subr.mxu0 0.0
    %v5566 = vand.u32 %v5197, 4294901760
    %5567 = vmatpush1.msra.mxu0 %v5566
    %5568 = vmatprep.subr.mxu0 0.0
    %v5569 = vand.u32 %v5196, 4294901760
    %5570 = vmatpush1.msra.mxu0 %v5569
    %5571 = vmatprep.subr.mxu0 0.0
    %5572 = vmatpush2.msra.mxu0 0.0
    %5573 = vmatprep.subr.mxu0 0.0
    %5574 = vmatpush2.msra.mxu0 0.0
    %5575 = vmatprep.subr.mxu0 0.0
    %5576 = vmatpush2.msra.mxu0 0.0
    %5577 = vmatprep.subr.mxu0 0.0
    %5578 = vmatpush2.msra.mxu0 0.0
    %5579 = vmatprep.subr.mxu0 0.0
    %5580 = vmatpush2.msra.mxu0 0.0
    %5581 = vmatprep.subr.mxu0 0.0
    %5582 = vmatpush2.msra.mxu0 0.0
    %5583 = vmatprep.subr.mxu0 0.0
    %5584 = vmatpush2.msra.mxu0 0.0
    %5585 = vmatprep.subr.mxu0 0.0
    %5586 = vmatpush2.msra.mxu0 0.0
    %5587 = vmatprep.subr.mxu0 0.0
    %5588 = vmatpush2.msra.mxu0 0.0
    %5589 = vmatprep.subr.mxu0 0.0
    %5590 = vmatpush2.msra.mxu0 0.0
    %5591 = vmatprep.subr.mxu0 0.0
    %5592 = vmatpush2.msra.mxu0 0.0
    %5593 = vmatprep.subr.mxu0 0.0
    %5594 = vmatpush2.msra.mxu0 0.0
    %5595 = vmatprep.subr.mxu0 0.0
    %5596 = vmatpush2.msra.mxu0 0.0
    %5597 = vmatprep.subr.mxu0 0.0
    %5598 = vmatpush2.msra.mxu0 0.0
    %5599 = vmatprep.subr.mxu0 0.0
    %5600 = vmatpush2.msra.mxu0 0.0
    %5601 = vmatprep.subr.mxu0 0.0
    %5602 = vmatpush2.msra.mxu0 0.0
    %5603 = vmatprep.mubr.f32.mxu0 0.0
    %v5604 = vand.u32 %v5205, 4294901760
    %v5605 = vsub.f32 %v5205, %v5604
    %v5606 = vand.u32 %v5605, 4294901760
    %5607 = vmatmul.mubr.f32.gmra.mxu0 %v5606
    %v5608 = vpop.f32.mrf.mxu0
    %v5609 = vadd.f32 %v5511, %v5608
    %v5610 = vpop.f32.mrf.mxu0
    %5611 = vmatprep.mubr.f32.mxu0 0.0
    %v5612 = vand.u32 %v5208, 4294901760
    %v5613 = vsub.f32 %v5208, %v5612
    %v5614 = vand.u32 %v5613, 4294901760
    %5615 = vmatmul.mubr.f32.gmra.mxu0 %v5614
    %v5616 = vpop.f32.mrf.mxu0
    %v5617 = vadd.f32 %v5518, %v5616
    %v5618 = vpop.f32.mrf.mxu0
    %5619 = vmatprep.mubr.f32.mxu0 0.0
    %v5620 = vand.u32 %v5211, 4294901760
    %v5621 = vsub.f32 %v5211, %v5620
    %v5622 = vand.u32 %v5621, 4294901760
    %5623 = vmatmul.mubr.f32.gmra.mxu0 %v5622
    %v5624 = vpop.f32.mrf.mxu0
    %v5625 = vadd.f32 %v5525, %v5624
    %v5626 = vpop.f32.mrf.mxu0
    %5627 = vmatprep.mubr.f32.mxu0 0.0
    %v5628 = vand.u32 %v5214, 4294901760
    %v5629 = vsub.f32 %v5214, %v5628
    %v5630 = vand.u32 %v5629, 4294901760
    %5631 = vmatmul.mubr.f32.gmra.mxu0 %v5630
    %v5632 = vpop.f32.mrf.mxu0
    %v5633 = vadd.f32 %v5532, %v5632
    %v5634 = vpop.f32.mrf.mxu0
    %5635 = vdwg.mxu0
    %5636 = vmatprep.subr.mxu0 0.0
    %5637 = vmatpush1.msra.mxu0 0.0
    %5638 = vmatprep.subr.mxu0 0.0
    %5639 = vmatpush1.msra.mxu0 0.0
    %5640 = vmatprep.subr.mxu0 0.0
    %5641 = vmatpush1.msra.mxu0 0.0
    %5642 = vmatprep.subr.mxu0 0.0
    %5643 = vmatpush1.msra.mxu0 0.0
    %5644 = vmatprep.subr.mxu0 0.0
    %5645 = vmatpush1.msra.mxu0 0.0
    %5646 = vmatprep.subr.mxu0 0.0
    %5647 = vmatpush1.msra.mxu0 0.0
    %5648 = vmatprep.subr.mxu0 0.0
    %5649 = vmatpush1.msra.mxu0 0.0
    %5650 = vmatprep.subr.mxu0 0.0
    %5651 = vmatpush1.msra.mxu0 0.0
    %5652 = vmatprep.subr.mxu0 0.0
    %5653 = vmatpush1.msra.mxu0 0.0
    %5654 = vmatprep.subr.mxu0 0.0
    %5655 = vmatpush1.msra.mxu0 0.0
    %5656 = vmatprep.subr.mxu0 0.0
    %5657 = vmatpush1.msra.mxu0 0.0
    %5658 = vmatprep.subr.mxu0 0.0
    %5659 = vmatpush1.msra.mxu0 0.0
    %5660 = vmatprep.subr.mxu0 0.0
    %v5661 = vand.u32 %v5199, 4294901760
    %v5662 = vsub.f32 %v5199, %v5661
    %v5663 = vand.u32 %v5662, 4294901760
    %5664 = vmatpush1.msra.mxu0 %v5663
    %5665 = vmatprep.subr.mxu0 0.0
    %v5666 = vand.u32 %v5198, 4294901760
    %v5667 = vsub.f32 %v5198, %v5666
    %v5668 = vand.u32 %v5667, 4294901760
    %5669 = vmatpush1.msra.mxu0 %v5668
    %5670 = vmatprep.subr.mxu0 0.0
    %v5671 = vand.u32 %v5197, 4294901760
    %v5672 = vsub.f32 %v5197, %v5671
    %v5673 = vand.u32 %v5672, 4294901760
    %5674 = vmatpush1.msra.mxu0 %v5673
    %5675 = vmatprep.subr.mxu0 0.0
    %v5676 = vand.u32 %v5196, 4294901760
    %v5677 = vsub.f32 %v5196, %v5676
    %v5678 = vand.u32 %v5677, 4294901760
    %5679 = vmatpush1.msra.mxu0 %v5678
    %5680 = vmatprep.subr.mxu0 0.0
    %5681 = vmatpush2.msra.mxu0 0.0
    %5682 = vmatprep.subr.mxu0 0.0
    %5683 = vmatpush2.msra.mxu0 0.0
    %5684 = vmatprep.subr.mxu0 0.0
    %5685 = vmatpush2.msra.mxu0 0.0
    %5686 = vmatprep.subr.mxu0 0.0
    %5687 = vmatpush2.msra.mxu0 0.0
    %5688 = vmatprep.subr.mxu0 0.0
    %5689 = vmatpush2.msra.mxu0 0.0
    %5690 = vmatprep.subr.mxu0 0.0
    %5691 = vmatpush2.msra.mxu0 0.0
    %5692 = vmatprep.subr.mxu0 0.0
    %5693 = vmatpush2.msra.mxu0 0.0
    %5694 = vmatprep.subr.mxu0 0.0
    %5695 = vmatpush2.msra.mxu0 0.0
    %5696 = vmatprep.subr.mxu0 0.0
    %5697 = vmatpush2.msra.mxu0 0.0
    %5698 = vmatprep.subr.mxu0 0.0
    %5699 = vmatpush2.msra.mxu0 0.0
    %5700 = vmatprep.subr.mxu0 0.0
    %5701 = vmatpush2.msra.mxu0 0.0
    %5702 = vmatprep.subr.mxu0 0.0
    %5703 = vmatpush2.msra.mxu0 0.0
    %5704 = vmatprep.subr.mxu0 0.0
    %5705 = vmatpush2.msra.mxu0 0.0
    %5706 = vmatprep.subr.mxu0 0.0
    %5707 = vmatpush2.msra.mxu0 0.0
    %5708 = vmatprep.subr.mxu0 0.0
    %5709 = vmatpush2.msra.mxu0 0.0
    %5710 = vmatprep.subr.mxu0 0.0
    %5711 = vmatpush2.msra.mxu0 0.0
    %5712 = vmatprep.mubr.f32.mxu0 0.0
    %v5713 = vand.u32 %v5205, 4294901760
    %5714 = vmatmul.mubr.f32.gmra.mxu0 %v5713
    %v5715 = vpop.f32.mrf.mxu0
    %v5716 = vadd.f32 %v5609, %v5715
    %v5717 = vpop.f32.mrf.mxu0
    %5718 = vmatprep.mubr.f32.mxu0 0.0
    %v5719 = vand.u32 %v5208, 4294901760
    %5720 = vmatmul.mubr.f32.gmra.mxu0 %v5719
    %v5721 = vpop.f32.mrf.mxu0
    %v5722 = vadd.f32 %v5617, %v5721
    %v5723 = vpop.f32.mrf.mxu0
    %5724 = vmatprep.mubr.f32.mxu0 0.0
    %v5725 = vand.u32 %v5211, 4294901760
    %5726 = vmatmul.mubr.f32.gmra.mxu0 %v5725
    %v5727 = vpop.f32.mrf.mxu0
    %v5728 = vadd.f32 %v5625, %v5727
    %v5729 = vpop.f32.mrf.mxu0
    %5730 = vmatprep.mubr.f32.mxu0 0.0
    %v5731 = vand.u32 %v5214, 4294901760
    %5732 = vmatmul.mubr.f32.gmra.mxu0 %v5731
    %v5733 = vpop.f32.mrf.mxu0
    %v5734 = vadd.f32 %v5633, %v5733
    %v5735 = vpop.f32.mrf.mxu0
    %5736 = vdwg.mxu0
    %5737 = vmatprep.subr.mxu0 0.0
    %5738 = vmatpush1.msra.mxu0 0.0
    %5739 = vmatprep.subr.mxu0 0.0
    %5740 = vmatpush1.msra.mxu0 0.0
    %5741 = vmatprep.subr.mxu0 0.0
    %5742 = vmatpush1.msra.mxu0 0.0
    %5743 = vmatprep.subr.mxu0 0.0
    %5744 = vmatpush1.msra.mxu0 0.0
    %5745 = vmatprep.subr.mxu0 0.0
    %5746 = vmatpush1.msra.mxu0 0.0
    %5747 = vmatprep.subr.mxu0 0.0
    %5748 = vmatpush1.msra.mxu0 0.0
    %5749 = vmatprep.subr.mxu0 0.0
    %5750 = vmatpush1.msra.mxu0 0.0
    %5751 = vmatprep.subr.mxu0 0.0
    %5752 = vmatpush1.msra.mxu0 0.0
    %5753 = vmatprep.subr.mxu0 0.0
    %5754 = vmatpush1.msra.mxu0 0.0
    %5755 = vmatprep.subr.mxu0 0.0
    %5756 = vmatpush1.msra.mxu0 0.0
    %5757 = vmatprep.subr.mxu0 0.0
    %5758 = vmatpush1.msra.mxu0 0.0
    %5759 = vmatprep.subr.mxu0 0.0
    %5760 = vmatpush1.msra.mxu0 0.0
    %5761 = vmatprep.subr.mxu0 0.0
    %v5762 = vand.u32 %v5199, 4294901760
    %5763 = vmatpush1.msra.mxu0 %v5762
    %5764 = vmatprep.subr.mxu0 0.0
    %v5765 = vand.u32 %v5198, 4294901760
    %5766 = vmatpush1.msra.mxu0 %v5765
    %5767 = vmatprep.subr.mxu0 0.0
    %v5768 = vand.u32 %v5197, 4294901760
    %5769 = vmatpush1.msra.mxu0 %v5768
    %5770 = vmatprep.subr.mxu0 0.0
    %v5771 = vand.u32 %v5196, 4294901760
    %5772 = vmatpush1.msra.mxu0 %v5771
    %5773 = vmatprep.subr.mxu0 0.0
    %5774 = vmatpush2.msra.mxu0 0.0
    %5775 = vmatprep.subr.mxu0 0.0
    %5776 = vmatpush2.msra.mxu0 0.0
    %5777 = vmatprep.subr.mxu0 0.0
    %5778 = vmatpush2.msra.mxu0 0.0
    %5779 = vmatprep.subr.mxu0 0.0
    %5780 = vmatpush2.msra.mxu0 0.0
    %5781 = vmatprep.subr.mxu0 0.0
    %5782 = vmatpush2.msra.mxu0 0.0
    %5783 = vmatprep.subr.mxu0 0.0
    %5784 = vmatpush2.msra.mxu0 0.0
    %5785 = vmatprep.subr.mxu0 0.0
    %5786 = vmatpush2.msra.mxu0 0.0
    %5787 = vmatprep.subr.mxu0 0.0
    %5788 = vmatpush2.msra.mxu0 0.0
    %5789 = vmatprep.subr.mxu0 0.0
    %5790 = vmatpush2.msra.mxu0 0.0
    %5791 = vmatprep.subr.mxu0 0.0
    %5792 = vmatpush2.msra.mxu0 0.0
    %5793 = vmatprep.subr.mxu0 0.0
    %5794 = vmatpush2.msra.mxu0 0.0
    %5795 = vmatprep.subr.mxu0 0.0
    %5796 = vmatpush2.msra.mxu0 0.0
    %5797 = vmatprep.subr.mxu0 0.0
    %5798 = vmatpush2.msra.mxu0 0.0
    %5799 = vmatprep.subr.mxu0 0.0
    %5800 = vmatpush2.msra.mxu0 0.0
    %5801 = vmatprep.subr.mxu0 0.0
    %5802 = vmatpush2.msra.mxu0 0.0
    %5803 = vmatprep.subr.mxu0 0.0
    %5804 = vmatpush2.msra.mxu0 0.0
    %5805 = vmatprep.mubr.f32.mxu0 0.0
    %v5806 = vand.u32 %v5205, 4294901760
    %5807 = vmatmul.mubr.f32.gmra.mxu0 %v5806
    %v5808 = vpop.f32.mrf.mxu0
    %v5809 = vadd.f32 %v5716, %v5808
    %v5810 = vpop.f32.mrf.mxu0
    %5811 = vmatprep.mubr.f32.mxu0 0.0
    %v5812 = vand.u32 %v5208, 4294901760
    %5813 = vmatmul.mubr.f32.gmra.mxu0 %v5812
    %v5814 = vpop.f32.mrf.mxu0
    %v5815 = vadd.f32 %v5722, %v5814
    %v5816 = vpop.f32.mrf.mxu0
    %5817 = vmatprep.mubr.f32.mxu0 0.0
    %v5818 = vand.u32 %v5211, 4294901760
    %5819 = vmatmul.mubr.f32.gmra.mxu0 %v5818
    %v5820 = vpop.f32.mrf.mxu0
    %v5821 = vadd.f32 %v5728, %v5820
    %v5822 = vpop.f32.mrf.mxu0
    %5823 = vmatprep.mubr.f32.mxu0 0.0
    %v5824 = vand.u32 %v5214, 4294901760
    %5825 = vmatmul.mubr.f32.gmra.mxu0 %v5824
    %v5826 = vpop.f32.mrf.mxu0
    %v5827 = vadd.f32 %v5734, %v5826
    %v5828 = vpop.f32.mrf.mxu0
    %5829 = vdwg.mxu0
    %v5830 = vadd.f32 %v4557, %v5809
    %v5831 = vadd.f32 %v4558, %v5815
    %v5832 = vadd.f32 %v4559, %v5821
    %v5833 = vadd.f32 %v4560, %v5827
    %v5834 = vld [vmem:[%s0 + $0x4] sm:$0xff]
    %v5835 = vld [vmem:[%s0 + $0xc] sm:$0xff]
    %v5836 = vld [vmem:[%s0 + $0x14] sm:$0xff]
    %v5837 = vld [vmem:[%s0 + $0x1c] sm:$0xff]
    %v5839 = vsel %vm34, %v5834, 0
    %v5842 = vsel %vm34, %v5835, 0
    %v5845 = vsel %vm34, %v5836, 0
    %v5848 = vsel %vm34, %v5837, 0
    %5850 = vmatprep.subr.mxu0 0.0
    %5851 = vmatpush1.msra.mxu0 0.0
    %5852 = vmatprep.subr.mxu0 0.0
    %5853 = vmatpush1.msra.mxu0 0.0
    %5854 = vmatprep.subr.mxu0 0.0
    %5855 = vmatpush1.msra.mxu0 0.0
    %5856 = vmatprep.subr.mxu0 0.0
    %5857 = vmatpush1.msra.mxu0 0.0
    %5858 = vmatprep.subr.mxu0 0.0
    %5859 = vmatpush1.msra.mxu0 0.0
    %5860 = vmatprep.subr.mxu0 0.0
    %5861 = vmatpush1.msra.mxu0 0.0
    %5862 = vmatprep.subr.mxu0 0.0
    %5863 = vmatpush1.msra.mxu0 0.0
    %5864 = vmatprep.subr.mxu0 0.0
    %5865 = vmatpush1.msra.mxu0 0.0
    %5866 = vmatprep.subr.mxu0 0.0
    %5867 = vmatpush1.msra.mxu0 0.0
    %5868 = vmatprep.subr.mxu0 0.0
    %5869 = vmatpush1.msra.mxu0 0.0
    %5870 = vmatprep.subr.mxu0 0.0
    %5871 = vmatpush1.msra.mxu0 0.0
    %5872 = vmatprep.subr.mxu0 0.0
    %5873 = vmatpush1.msra.mxu0 0.0
    %5874 = vmatprep.subr.mxu0 0.0
    %v5875 = vand.u32 %v5199, 4294901760
    %5876 = vmatpush1.msra.mxu0 %v5875
    %5877 = vmatprep.subr.mxu0 0.0
    %v5878 = vand.u32 %v5198, 4294901760
    %5879 = vmatpush1.msra.mxu0 %v5878
    %5880 = vmatprep.subr.mxu0 0.0
    %v5881 = vand.u32 %v5197, 4294901760
    %5882 = vmatpush1.msra.mxu0 %v5881
    %5883 = vmatprep.subr.mxu0 0.0
    %v5884 = vand.u32 %v5196, 4294901760
    %5885 = vmatpush1.msra.mxu0 %v5884
    %5886 = vmatprep.subr.mxu0 0.0
    %5887 = vmatpush2.msra.mxu0 0.0
    %5888 = vmatprep.subr.mxu0 0.0
    %5889 = vmatpush2.msra.mxu0 0.0
    %5890 = vmatprep.subr.mxu0 0.0
    %5891 = vmatpush2.msra.mxu0 0.0
    %5892 = vmatprep.subr.mxu0 0.0
    %5893 = vmatpush2.msra.mxu0 0.0
    %5894 = vmatprep.subr.mxu0 0.0
    %5895 = vmatpush2.msra.mxu0 0.0
    %5896 = vmatprep.subr.mxu0 0.0
    %5897 = vmatpush2.msra.mxu0 0.0
    %5898 = vmatprep.subr.mxu0 0.0
    %5899 = vmatpush2.msra.mxu0 0.0
    %5900 = vmatprep.subr.mxu0 0.0
    %5901 = vmatpush2.msra.mxu0 0.0
    %5902 = vmatprep.subr.mxu0 0.0
    %5903 = vmatpush2.msra.mxu0 0.0
    %5904 = vmatprep.subr.mxu0 0.0
    %5905 = vmatpush2.msra.mxu0 0.0
    %5906 = vmatprep.subr.mxu0 0.0
    %5907 = vmatpush2.msra.mxu0 0.0
    %5908 = vmatprep.subr.mxu0 0.0
    %5909 = vmatpush2.msra.mxu0 0.0
    %5910 = vmatprep.subr.mxu0 0.0
    %5911 = vmatpush2.msra.mxu0 0.0
    %5912 = vmatprep.subr.mxu0 0.0
    %5913 = vmatpush2.msra.mxu0 0.0
    %5914 = vmatprep.subr.mxu0 0.0
    %5915 = vmatpush2.msra.mxu0 0.0
    %5916 = vmatprep.subr.mxu0 0.0
    %5917 = vmatpush2.msra.mxu0 0.0
    %5918 = vmatprep.mubr.f32.mxu0 0.0
    %v5919 = vand.u32 %v5839, 4294901760
    %v5920 = vsub.f32 %v5839, %v5919
    %v5921 = vand.u32 %v5920, 4294901760
    %v5922 = vsub.f32 %v5920, %v5921
    %v5923 = vand.u32 %v5922, 4294901760
    %5924 = vmatmul.mubr.f32.gmra.mxu0 %v5923
    %v5925 = vpop.f32.mrf.mxu0
    %v5926 = vadd.f32 0.0, %v5925
    %v5927 = vpop.f32.mrf.mxu0
    %5928 = vmatprep.mubr.f32.mxu0 0.0
    %v5929 = vand.u32 %v5842, 4294901760
    %v5930 = vsub.f32 %v5842, %v5929
    %v5931 = vand.u32 %v5930, 4294901760
    %v5932 = vsub.f32 %v5930, %v5931
    %v5933 = vand.u32 %v5932, 4294901760
    %5934 = vmatmul.mubr.f32.gmra.mxu0 %v5933
    %v5935 = vpop.f32.mrf.mxu0
    %v5936 = vadd.f32 0.0, %v5935
    %v5937 = vpop.f32.mrf.mxu0
    %5938 = vmatprep.mubr.f32.mxu0 0.0
    %v5939 = vand.u32 %v5845, 4294901760
    %v5940 = vsub.f32 %v5845, %v5939
    %v5941 = vand.u32 %v5940, 4294901760
    %v5942 = vsub.f32 %v5940, %v5941
    %v5943 = vand.u32 %v5942, 4294901760
    %5944 = vmatmul.mubr.f32.gmra.mxu0 %v5943
    %v5945 = vpop.f32.mrf.mxu0
    %v5946 = vadd.f32 0.0, %v5945
    %v5947 = vpop.f32.mrf.mxu0
    %5948 = vmatprep.mubr.f32.mxu0 0.0
    %v5949 = vand.u32 %v5848, 4294901760
    %v5950 = vsub.f32 %v5848, %v5949
    %v5951 = vand.u32 %v5950, 4294901760
    %v5952 = vsub.f32 %v5950, %v5951
    %v5953 = vand.u32 %v5952, 4294901760
    %5954 = vmatmul.mubr.f32.gmra.mxu0 %v5953
    %v5955 = vpop.f32.mrf.mxu0
    %v5956 = vadd.f32 0.0, %v5955
    %v5957 = vpop.f32.mrf.mxu0
    %5958 = vdwg.mxu0
    %5959 = vmatprep.subr.mxu0 0.0
    %5960 = vmatpush1.msra.mxu0 0.0
    %5961 = vmatprep.subr.mxu0 0.0
    %5962 = vmatpush1.msra.mxu0 0.0
    %5963 = vmatprep.subr.mxu0 0.0
    %5964 = vmatpush1.msra.mxu0 0.0
    %5965 = vmatprep.subr.mxu0 0.0
    %5966 = vmatpush1.msra.mxu0 0.0
    %5967 = vmatprep.subr.mxu0 0.0
    %5968 = vmatpush1.msra.mxu0 0.0
    %5969 = vmatprep.subr.mxu0 0.0
    %5970 = vmatpush1.msra.mxu0 0.0
    %5971 = vmatprep.subr.mxu0 0.0
    %5972 = vmatpush1.msra.mxu0 0.0
    %5973 = vmatprep.subr.mxu0 0.0
    %5974 = vmatpush1.msra.mxu0 0.0
    %5975 = vmatprep.subr.mxu0 0.0
    %5976 = vmatpush1.msra.mxu0 0.0
    %5977 = vmatprep.subr.mxu0 0.0
    %5978 = vmatpush1.msra.mxu0 0.0
    %5979 = vmatprep.subr.mxu0 0.0
    %5980 = vmatpush1.msra.mxu0 0.0
    %5981 = vmatprep.subr.mxu0 0.0
    %5982 = vmatpush1.msra.mxu0 0.0
    %5983 = vmatprep.subr.mxu0 0.0
    %v5984 = vand.u32 %v5199, 4294901760
    %v5985 = vsub.f32 %v5199, %v5984
    %v5986 = vand.u32 %v5985, 4294901760
    %v5987 = vsub.f32 %v5985, %v5986
    %v5988 = vand.u32 %v5987, 4294901760
    %5989 = vmatpush1.msra.mxu0 %v5988
    %5990 = vmatprep.subr.mxu0 0.0
    %v5991 = vand.u32 %v5198, 4294901760
    %v5992 = vsub.f32 %v5198, %v5991
    %v5993 = vand.u32 %v5992, 4294901760
    %v5994 = vsub.f32 %v5992, %v5993
    %v5995 = vand.u32 %v5994, 4294901760
    %5996 = vmatpush1.msra.mxu0 %v5995
    %5997 = vmatprep.subr.mxu0 0.0
    %v5998 = vand.u32 %v5197, 4294901760
    %v5999 = vsub.f32 %v5197, %v5998
    %v6000 = vand.u32 %v5999, 4294901760
    %v6001 = vsub.f32 %v5999, %v6000
    %v6002 = vand.u32 %v6001, 4294901760
    %6003 = vmatpush1.msra.mxu0 %v6002
    %6004 = vmatprep.subr.mxu0 0.0
    %v6005 = vand.u32 %v5196, 4294901760
    %v6006 = vsub.f32 %v5196, %v6005
    %v6007 = vand.u32 %v6006, 4294901760
    %v6008 = vsub.f32 %v6006, %v6007
    %v6009 = vand.u32 %v6008, 4294901760
    %6010 = vmatpush1.msra.mxu0 %v6009
    %6011 = vmatprep.subr.mxu0 0.0
    %6012 = vmatpush2.msra.mxu0 0.0
    %6013 = vmatprep.subr.mxu0 0.0
    %6014 = vmatpush2.msra.mxu0 0.0
    %6015 = vmatprep.subr.mxu0 0.0
    %6016 = vmatpush2.msra.mxu0 0.0
    %6017 = vmatprep.subr.mxu0 0.0
    %6018 = vmatpush2.msra.mxu0 0.0
    %6019 = vmatprep.subr.mxu0 0.0
    %6020 = vmatpush2.msra.mxu0 0.0
    %6021 = vmatprep.subr.mxu0 0.0
    %6022 = vmatpush2.msra.mxu0 0.0
    %6023 = vmatprep.subr.mxu0 0.0
    %6024 = vmatpush2.msra.mxu0 0.0
    %6025 = vmatprep.subr.mxu0 0.0
    %6026 = vmatpush2.msra.mxu0 0.0
    %6027 = vmatprep.subr.mxu0 0.0
    %6028 = vmatpush2.msra.mxu0 0.0
    %6029 = vmatprep.subr.mxu0 0.0
    %6030 = vmatpush2.msra.mxu0 0.0
    %6031 = vmatprep.subr.mxu0 0.0
    %6032 = vmatpush2.msra.mxu0 0.0
    %6033 = vmatprep.subr.mxu0 0.0
    %6034 = vmatpush2.msra.mxu0 0.0
    %6035 = vmatprep.subr.mxu0 0.0
    %6036 = vmatpush2.msra.mxu0 0.0
    %6037 = vmatprep.subr.mxu0 0.0
    %6038 = vmatpush2.msra.mxu0 0.0
    %6039 = vmatprep.subr.mxu0 0.0
    %6040 = vmatpush2.msra.mxu0 0.0
    %6041 = vmatprep.subr.mxu0 0.0
    %6042 = vmatpush2.msra.mxu0 0.0
    %6043 = vmatprep.mubr.f32.mxu0 0.0
    %v6044 = vand.u32 %v5839, 4294901760
    %6045 = vmatmul.mubr.f32.gmra.mxu0 %v6044
    %v6046 = vpop.f32.mrf.mxu0
    %v6047 = vadd.f32 %v5926, %v6046
    %v6048 = vpop.f32.mrf.mxu0
    %6049 = vmatprep.mubr.f32.mxu0 0.0
    %v6050 = vand.u32 %v5842, 4294901760
    %6051 = vmatmul.mubr.f32.gmra.mxu0 %v6050
    %v6052 = vpop.f32.mrf.mxu0
    %v6053 = vadd.f32 %v5936, %v6052
    %v6054 = vpop.f32.mrf.mxu0
    %6055 = vmatprep.mubr.f32.mxu0 0.0
    %v6056 = vand.u32 %v5845, 4294901760
    %6057 = vmatmul.mubr.f32.gmra.mxu0 %v6056
    %v6058 = vpop.f32.mrf.mxu0
    %v6059 = vadd.f32 %v5946, %v6058
    %v6060 = vpop.f32.mrf.mxu0
    %6061 = vmatprep.mubr.f32.mxu0 0.0
    %v6062 = vand.u32 %v5848, 4294901760
    %6063 = vmatmul.mubr.f32.gmra.mxu0 %v6062
    %v6064 = vpop.f32.mrf.mxu0
    %v6065 = vadd.f32 %v5956, %v6064
    %v6066 = vpop.f32.mrf.mxu0
    %6067 = vdwg.mxu0
    %6068 = vmatprep.subr.mxu0 0.0
    %6069 = vmatpush1.msra.mxu0 0.0
    %6070 = vmatprep.subr.mxu0 0.0
    %6071 = vmatpush1.msra.mxu0 0.0
    %6072 = vmatprep.subr.mxu0 0.0
    %6073 = vmatpush1.msra.mxu0 0.0
    %6074 = vmatprep.subr.mxu0 0.0
    %6075 = vmatpush1.msra.mxu0 0.0
    %6076 = vmatprep.subr.mxu0 0.0
    %6077 = vmatpush1.msra.mxu0 0.0
    %6078 = vmatprep.subr.mxu0 0.0
    %6079 = vmatpush1.msra.mxu0 0.0
    %6080 = vmatprep.subr.mxu0 0.0
    %6081 = vmatpush1.msra.mxu0 0.0
    %6082 = vmatprep.subr.mxu0 0.0
    %6083 = vmatpush1.msra.mxu0 0.0
    %6084 = vmatprep.subr.mxu0 0.0
    %6085 = vmatpush1.msra.mxu0 0.0
    %6086 = vmatprep.subr.mxu0 0.0
    %6087 = vmatpush1.msra.mxu0 0.0
    %6088 = vmatprep.subr.mxu0 0.0
    %6089 = vmatpush1.msra.mxu0 0.0
    %6090 = vmatprep.subr.mxu0 0.0
    %6091 = vmatpush1.msra.mxu0 0.0
    %6092 = vmatprep.subr.mxu0 0.0
    %v6093 = vand.u32 %v5199, 4294901760
    %v6094 = vsub.f32 %v5199, %v6093
    %6095 = vmatpush1.msra.mxu0 %v6094
    %6096 = vmatprep.subr.mxu0 0.0
    %v6097 = vand.u32 %v5198, 4294901760
    %v6098 = vsub.f32 %v5198, %v6097
    %6099 = vmatpush1.msra.mxu0 %v6098
    %6100 = vmatprep.subr.mxu0 0.0
    %v6101 = vand.u32 %v5197, 4294901760
    %v6102 = vsub.f32 %v5197, %v6101
    %6103 = vmatpush1.msra.mxu0 %v6102
    %6104 = vmatprep.subr.mxu0 0.0
    %v6105 = vand.u32 %v5196, 4294901760
    %v6106 = vsub.f32 %v5196, %v6105
    %6107 = vmatpush1.msra.mxu0 %v6106
    %6108 = vmatprep.subr.mxu0 0.0
    %6109 = vmatpush2.msra.mxu0 0.0
    %6110 = vmatprep.subr.mxu0 0.0
    %6111 = vmatpush2.msra.mxu0 0.0
    %6112 = vmatprep.subr.mxu0 0.0
    %6113 = vmatpush2.msra.mxu0 0.0
    %6114 = vmatprep.subr.mxu0 0.0
    %6115 = vmatpush2.msra.mxu0 0.0
    %6116 = vmatprep.subr.mxu0 0.0
    %6117 = vmatpush2.msra.mxu0 0.0
    %6118 = vmatprep.subr.mxu0 0.0
    %6119 = vmatpush2.msra.mxu0 0.0
    %6120 = vmatprep.subr.mxu0 0.0
    %6121 = vmatpush2.msra.mxu0 0.0
    %6122 = vmatprep.subr.mxu0 0.0
    %6123 = vmatpush2.msra.mxu0 0.0
    %6124 = vmatprep.subr.mxu0 0.0
    %6125 = vmatpush2.msra.mxu0 0.0
    %6126 = vmatprep.subr.mxu0 0.0
    %6127 = vmatpush2.msra.mxu0 0.0
    %6128 = vmatprep.subr.mxu0 0.0
    %6129 = vmatpush2.msra.mxu0 0.0
    %6130 = vmatprep.subr.mxu0 0.0
    %6131 = vmatpush2.msra.mxu0 0.0
    %6132 = vmatprep.subr.mxu0 0.0
    %6133 = vmatpush2.msra.mxu0 0.0
    %6134 = vmatprep.subr.mxu0 0.0
    %6135 = vmatpush2.msra.mxu0 0.0
    %6136 = vmatprep.subr.mxu0 0.0
    %6137 = vmatpush2.msra.mxu0 0.0
    %6138 = vmatprep.subr.mxu0 0.0
    %6139 = vmatpush2.msra.mxu0 0.0
    %6140 = vmatprep.mubr.f32.mxu0 0.0
    %v6141 = vand.u32 %v5839, 4294901760
    %v6142 = vsub.f32 %v5839, %v6141
    %6143 = vmatmul.mubr.f32.gmra.mxu0 %v6142
    %v6144 = vpop.f32.mrf.mxu0
    %v6145 = vadd.f32 %v6047, %v6144
    %v6146 = vpop.f32.mrf.mxu0
    %6147 = vmatprep.mubr.f32.mxu0 0.0
    %v6148 = vand.u32 %v5842, 4294901760
    %v6149 = vsub.f32 %v5842, %v6148
    %6150 = vmatmul.mubr.f32.gmra.mxu0 %v6149
    %v6151 = vpop.f32.mrf.mxu0
    %v6152 = vadd.f32 %v6053, %v6151
    %v6153 = vpop.f32.mrf.mxu0
    %6154 = vmatprep.mubr.f32.mxu0 0.0
    %v6155 = vand.u32 %v5845, 4294901760
    %v6156 = vsub.f32 %v5845, %v6155
    %6157 = vmatmul.mubr.f32.gmra.mxu0 %v6156
    %v6158 = vpop.f32.mrf.mxu0
    %v6159 = vadd.f32 %v6059, %v6158
    %v6160 = vpop.f32.mrf.mxu0
    %6161 = vmatprep.mubr.f32.mxu0 0.0
    %v6162 = vand.u32 %v5848, 4294901760
    %v6163 = vsub.f32 %v5848, %v6162
    %6164 = vmatmul.mubr.f32.gmra.mxu0 %v6163
    %v6165 = vpop.f32.mrf.mxu0
    %v6166 = vadd.f32 %v6065, %v6165
    %v6167 = vpop.f32.mrf.mxu0
    %6168 = vdwg.mxu0
    %6169 = vmatprep.subr.mxu0 0.0
    %6170 = vmatpush1.msra.mxu0 0.0
    %6171 = vmatprep.subr.mxu0 0.0
    %6172 = vmatpush1.msra.mxu0 0.0
    %6173 = vmatprep.subr.mxu0 0.0
    %6174 = vmatpush1.msra.mxu0 0.0
    %6175 = vmatprep.subr.mxu0 0.0
    %6176 = vmatpush1.msra.mxu0 0.0
    %6177 = vmatprep.subr.mxu0 0.0
    %6178 = vmatpush1.msra.mxu0 0.0
    %6179 = vmatprep.subr.mxu0 0.0
    %6180 = vmatpush1.msra.mxu0 0.0
    %6181 = vmatprep.subr.mxu0 0.0
    %6182 = vmatpush1.msra.mxu0 0.0
    %6183 = vmatprep.subr.mxu0 0.0
    %6184 = vmatpush1.msra.mxu0 0.0
    %6185 = vmatprep.subr.mxu0 0.0
    %6186 = vmatpush1.msra.mxu0 0.0
    %6187 = vmatprep.subr.mxu0 0.0
    %6188 = vmatpush1.msra.mxu0 0.0
    %6189 = vmatprep.subr.mxu0 0.0
    %6190 = vmatpush1.msra.mxu0 0.0
    %6191 = vmatprep.subr.mxu0 0.0
    %6192 = vmatpush1.msra.mxu0 0.0
    %6193 = vmatprep.subr.mxu0 0.0
    %v6194 = vand.u32 %v5199, 4294901760
    %6195 = vmatpush1.msra.mxu0 %v6194
    %6196 = vmatprep.subr.mxu0 0.0
    %v6197 = vand.u32 %v5198, 4294901760
    %6198 = vmatpush1.msra.mxu0 %v6197
    %6199 = vmatprep.subr.mxu0 0.0
    %v6200 = vand.u32 %v5197, 4294901760
    %6201 = vmatpush1.msra.mxu0 %v6200
    %6202 = vmatprep.subr.mxu0 0.0
    %v6203 = vand.u32 %v5196, 4294901760
    %6204 = vmatpush1.msra.mxu0 %v6203
    %6205 = vmatprep.subr.mxu0 0.0
    %6206 = vmatpush2.msra.mxu0 0.0
    %6207 = vmatprep.subr.mxu0 0.0
    %6208 = vmatpush2.msra.mxu0 0.0
    %6209 = vmatprep.subr.mxu0 0.0
    %6210 = vmatpush2.msra.mxu0 0.0
    %6211 = vmatprep.subr.mxu0 0.0
    %6212 = vmatpush2.msra.mxu0 0.0
    %6213 = vmatprep.subr.mxu0 0.0
    %6214 = vmatpush2.msra.mxu0 0.0
    %6215 = vmatprep.subr.mxu0 0.0
    %6216 = vmatpush2.msra.mxu0 0.0
    %6217 = vmatprep.subr.mxu0 0.0
    %6218 = vmatpush2.msra.mxu0 0.0
    %6219 = vmatprep.subr.mxu0 0.0
    %6220 = vmatpush2.msra.mxu0 0.0
    %6221 = vmatprep.subr.mxu0 0.0
    %6222 = vmatpush2.msra.mxu0 0.0
    %6223 = vmatprep.subr.mxu0 0.0
    %6224 = vmatpush2.msra.mxu0 0.0
    %6225 = vmatprep.subr.mxu0 0.0
    %6226 = vmatpush2.msra.mxu0 0.0
    %6227 = vmatprep.subr.mxu0 0.0
    %6228 = vmatpush2.msra.mxu0 0.0
    %6229 = vmatprep.subr.mxu0 0.0
    %6230 = vmatpush2.msra.mxu0 0.0
    %6231 = vmatprep.subr.mxu0 0.0
    %6232 = vmatpush2.msra.mxu0 0.0
    %6233 = vmatprep.subr.mxu0 0.0
    %6234 = vmatpush2.msra.mxu0 0.0
    %6235 = vmatprep.subr.mxu0 0.0
    %6236 = vmatpush2.msra.mxu0 0.0
    %6237 = vmatprep.mubr.f32.mxu0 0.0
    %v6238 = vand.u32 %v5839, 4294901760
    %v6239 = vsub.f32 %v5839, %v6238
    %v6240 = vand.u32 %v6239, 4294901760
    %6241 = vmatmul.mubr.f32.gmra.mxu0 %v6240
    %v6242 = vpop.f32.mrf.mxu0
    %v6243 = vadd.f32 %v6145, %v6242
    %v6244 = vpop.f32.mrf.mxu0
    %6245 = vmatprep.mubr.f32.mxu0 0.0
    %v6246 = vand.u32 %v5842, 4294901760
    %v6247 = vsub.f32 %v5842, %v6246
    %v6248 = vand.u32 %v6247, 4294901760
    %6249 = vmatmul.mubr.f32.gmra.mxu0 %v6248
    %v6250 = vpop.f32.mrf.mxu0
    %v6251 = vadd.f32 %v6152, %v6250
    %v6252 = vpop.f32.mrf.mxu0
    %6253 = vmatprep.mubr.f32.mxu0 0.0
    %v6254 = vand.u32 %v5845, 4294901760
    %v6255 = vsub.f32 %v5845, %v6254
    %v6256 = vand.u32 %v6255, 4294901760
    %6257 = vmatmul.mubr.f32.gmra.mxu0 %v6256
    %v6258 = vpop.f32.mrf.mxu0
    %v6259 = vadd.f32 %v6159, %v6258
    %v6260 = vpop.f32.mrf.mxu0
    %6261 = vmatprep.mubr.f32.mxu0 0.0
    %v6262 = vand.u32 %v5848, 4294901760
    %v6263 = vsub.f32 %v5848, %v6262
    %v6264 = vand.u32 %v6263, 4294901760
    %6265 = vmatmul.mubr.f32.gmra.mxu0 %v6264
    %v6266 = vpop.f32.mrf.mxu0
    %v6267 = vadd.f32 %v6166, %v6266
    %v6268 = vpop.f32.mrf.mxu0
    %6269 = vdwg.mxu0
    %6270 = vmatprep.subr.mxu0 0.0
    %6271 = vmatpush1.msra.mxu0 0.0
    %6272 = vmatprep.subr.mxu0 0.0
    %6273 = vmatpush1.msra.mxu0 0.0
    %6274 = vmatprep.subr.mxu0 0.0
    %6275 = vmatpush1.msra.mxu0 0.0
    %6276 = vmatprep.subr.mxu0 0.0
    %6277 = vmatpush1.msra.mxu0 0.0
    %6278 = vmatprep.subr.mxu0 0.0
    %6279 = vmatpush1.msra.mxu0 0.0
    %6280 = vmatprep.subr.mxu0 0.0
    %6281 = vmatpush1.msra.mxu0 0.0
    %6282 = vmatprep.subr.mxu0 0.0
    %6283 = vmatpush1.msra.mxu0 0.0
    %6284 = vmatprep.subr.mxu0 0.0
    %6285 = vmatpush1.msra.mxu0 0.0
    %6286 = vmatprep.subr.mxu0 0.0
    %6287 = vmatpush1.msra.mxu0 0.0
    %6288 = vmatprep.subr.mxu0 0.0
    %6289 = vmatpush1.msra.mxu0 0.0
    %6290 = vmatprep.subr.mxu0 0.0
    %6291 = vmatpush1.msra.mxu0 0.0
    %6292 = vmatprep.subr.mxu0 0.0
    %6293 = vmatpush1.msra.mxu0 0.0
    %6294 = vmatprep.subr.mxu0 0.0
    %v6295 = vand.u32 %v5199, 4294901760
    %v6296 = vsub.f32 %v5199, %v6295
    %v6297 = vand.u32 %v6296, 4294901760
    %6298 = vmatpush1.msra.mxu0 %v6297
    %6299 = vmatprep.subr.mxu0 0.0
    %v6300 = vand.u32 %v5198, 4294901760
    %v6301 = vsub.f32 %v5198, %v6300
    %v6302 = vand.u32 %v6301, 4294901760
    %6303 = vmatpush1.msra.mxu0 %v6302
    %6304 = vmatprep.subr.mxu0 0.0
    %v6305 = vand.u32 %v5197, 4294901760
    %v6306 = vsub.f32 %v5197, %v6305
    %v6307 = vand.u32 %v6306, 4294901760
    %6308 = vmatpush1.msra.mxu0 %v6307
    %6309 = vmatprep.subr.mxu0 0.0
    %v6310 = vand.u32 %v5196, 4294901760
    %v6311 = vsub.f32 %v5196, %v6310
    %v6312 = vand.u32 %v6311, 4294901760
    %6313 = vmatpush1.msra.mxu0 %v6312
    %6314 = vmatprep.subr.mxu0 0.0
    %6315 = vmatpush2.msra.mxu0 0.0
    %6316 = vmatprep.subr.mxu0 0.0
    %6317 = vmatpush2.msra.mxu0 0.0
    %6318 = vmatprep.subr.mxu0 0.0
    %6319 = vmatpush2.msra.mxu0 0.0
    %6320 = vmatprep.subr.mxu0 0.0
    %6321 = vmatpush2.msra.mxu0 0.0
    %6322 = vmatprep.subr.mxu0 0.0
    %6323 = vmatpush2.msra.mxu0 0.0
    %6324 = vmatprep.subr.mxu0 0.0
    %6325 = vmatpush2.msra.mxu0 0.0
    %6326 = vmatprep.subr.mxu0 0.0
    %6327 = vmatpush2.msra.mxu0 0.0
    %6328 = vmatprep.subr.mxu0 0.0
    %6329 = vmatpush2.msra.mxu0 0.0
    %6330 = vmatprep.subr.mxu0 0.0
    %6331 = vmatpush2.msra.mxu0 0.0
    %6332 = vmatprep.subr.mxu0 0.0
    %6333 = vmatpush2.msra.mxu0 0.0
    %6334 = vmatprep.subr.mxu0 0.0
    %6335 = vmatpush2.msra.mxu0 0.0
    %6336 = vmatprep.subr.mxu0 0.0
    %6337 = vmatpush2.msra.mxu0 0.0
    %6338 = vmatprep.subr.mxu0 0.0
    %6339 = vmatpush2.msra.mxu0 0.0
    %6340 = vmatprep.subr.mxu0 0.0
    %6341 = vmatpush2.msra.mxu0 0.0
    %6342 = vmatprep.subr.mxu0 0.0
    %6343 = vmatpush2.msra.mxu0 0.0
    %6344 = vmatprep.subr.mxu0 0.0
    %6345 = vmatpush2.msra.mxu0 0.0
    %6346 = vmatprep.mubr.f32.mxu0 0.0
    %v6347 = vand.u32 %v5839, 4294901760
    %6348 = vmatmul.mubr.f32.gmra.mxu0 %v6347
    %v6349 = vpop.f32.mrf.mxu0
    %v6350 = vadd.f32 %v6243, %v6349
    %v6351 = vpop.f32.mrf.mxu0
    %6352 = vmatprep.mubr.f32.mxu0 0.0
    %v6353 = vand.u32 %v5842, 4294901760
    %6354 = vmatmul.mubr.f32.gmra.mxu0 %v6353
    %v6355 = vpop.f32.mrf.mxu0
    %v6356 = vadd.f32 %v6251, %v6355
    %v6357 = vpop.f32.mrf.mxu0
    %6358 = vmatprep.mubr.f32.mxu0 0.0
    %v6359 = vand.u32 %v5845, 4294901760
    %6360 = vmatmul.mubr.f32.gmra.mxu0 %v6359
    %v6361 = vpop.f32.mrf.mxu0
    %v6362 = vadd.f32 %v6259, %v6361
    %v6363 = vpop.f32.mrf.mxu0
    %6364 = vmatprep.mubr.f32.mxu0 0.0
    %v6365 = vand.u32 %v5848, 4294901760
    %6366 = vmatmul.mubr.f32.gmra.mxu0 %v6365
    %v6367 = vpop.f32.mrf.mxu0
    %v6368 = vadd.f32 %v6267, %v6367
    %v6369 = vpop.f32.mrf.mxu0
    %6370 = vdwg.mxu0
    %6371 = vmatprep.subr.mxu0 0.0
    %6372 = vmatpush1.msra.mxu0 0.0
    %6373 = vmatprep.subr.mxu0 0.0
    %6374 = vmatpush1.msra.mxu0 0.0
    %6375 = vmatprep.subr.mxu0 0.0
    %6376 = vmatpush1.msra.mxu0 0.0
    %6377 = vmatprep.subr.mxu0 0.0
    %6378 = vmatpush1.msra.mxu0 0.0
    %6379 = vmatprep.subr.mxu0 0.0
    %6380 = vmatpush1.msra.mxu0 0.0
    %6381 = vmatprep.subr.mxu0 0.0
    %6382 = vmatpush1.msra.mxu0 0.0
    %6383 = vmatprep.subr.mxu0 0.0
    %6384 = vmatpush1.msra.mxu0 0.0
    %6385 = vmatprep.subr.mxu0 0.0
    %6386 = vmatpush1.msra.mxu0 0.0
    %6387 = vmatprep.subr.mxu0 0.0
    %6388 = vmatpush1.msra.mxu0 0.0
    %6389 = vmatprep.subr.mxu0 0.0
    %6390 = vmatpush1.msra.mxu0 0.0
    %6391 = vmatprep.subr.mxu0 0.0
    %6392 = vmatpush1.msra.mxu0 0.0
    %6393 = vmatprep.subr.mxu0 0.0
    %6394 = vmatpush1.msra.mxu0 0.0
    %6395 = vmatprep.subr.mxu0 0.0
    %v6396 = vand.u32 %v5199, 4294901760
    %6397 = vmatpush1.msra.mxu0 %v6396
    %6398 = vmatprep.subr.mxu0 0.0
    %v6399 = vand.u32 %v5198, 4294901760
    %6400 = vmatpush1.msra.mxu0 %v6399
    %6401 = vmatprep.subr.mxu0 0.0
    %v6402 = vand.u32 %v5197, 4294901760
    %6403 = vmatpush1.msra.mxu0 %v6402
    %6404 = vmatprep.subr.mxu0 0.0
    %v6405 = vand.u32 %v5196, 4294901760
    %6406 = vmatpush1.msra.mxu0 %v6405
    %6407 = vmatprep.subr.mxu0 0.0
    %6408 = vmatpush2.msra.mxu0 0.0
    %6409 = vmatprep.subr.mxu0 0.0
    %6410 = vmatpush2.msra.mxu0 0.0
    %6411 = vmatprep.subr.mxu0 0.0
    %6412 = vmatpush2.msra.mxu0 0.0
    %6413 = vmatprep.subr.mxu0 0.0
    %6414 = vmatpush2.msra.mxu0 0.0
    %6415 = vmatprep.subr.mxu0 0.0
    %6416 = vmatpush2.msra.mxu0 0.0
    %6417 = vmatprep.subr.mxu0 0.0
    %6418 = vmatpush2.msra.mxu0 0.0
    %6419 = vmatprep.subr.mxu0 0.0
    %6420 = vmatpush2.msra.mxu0 0.0
    %6421 = vmatprep.subr.mxu0 0.0
    %6422 = vmatpush2.msra.mxu0 0.0
    %6423 = vmatprep.subr.mxu0 0.0
    %6424 = vmatpush2.msra.mxu0 0.0
    %6425 = vmatprep.subr.mxu0 0.0
    %6426 = vmatpush2.msra.mxu0 0.0
    %6427 = vmatprep.subr.mxu0 0.0
    %6428 = vmatpush2.msra.mxu0 0.0
    %6429 = vmatprep.subr.mxu0 0.0
    %6430 = vmatpush2.msra.mxu0 0.0
    %6431 = vmatprep.subr.mxu0 0.0
    %6432 = vmatpush2.msra.mxu0 0.0
    %6433 = vmatprep.subr.mxu0 0.0
    %6434 = vmatpush2.msra.mxu0 0.0
    %6435 = vmatprep.subr.mxu0 0.0
    %6436 = vmatpush2.msra.mxu0 0.0
    %6437 = vmatprep.subr.mxu0 0.0
    %6438 = vmatpush2.msra.mxu0 0.0
    %6439 = vmatprep.mubr.f32.mxu0 0.0
    %v6440 = vand.u32 %v5839, 4294901760
    %6441 = vmatmul.mubr.f32.gmra.mxu0 %v6440
    %v6442 = vpop.f32.mrf.mxu0
    %v6443 = vadd.f32 %v6350, %v6442
    %v6444 = vpop.f32.mrf.mxu0
    %6445 = vmatprep.mubr.f32.mxu0 0.0
    %v6446 = vand.u32 %v5842, 4294901760
    %6447 = vmatmul.mubr.f32.gmra.mxu0 %v6446
    %v6448 = vpop.f32.mrf.mxu0
    %v6449 = vadd.f32 %v6356, %v6448
    %v6450 = vpop.f32.mrf.mxu0
    %6451 = vmatprep.mubr.f32.mxu0 0.0
    %v6452 = vand.u32 %v5845, 4294901760
    %6453 = vmatmul.mubr.f32.gmra.mxu0 %v6452
    %v6454 = vpop.f32.mrf.mxu0
    %v6455 = vadd.f32 %v6362, %v6454
    %v6456 = vpop.f32.mrf.mxu0
    %6457 = vmatprep.mubr.f32.mxu0 0.0
    %v6458 = vand.u32 %v5848, 4294901760
    %6459 = vmatmul.mubr.f32.gmra.mxu0 %v6458
    %v6460 = vpop.f32.mrf.mxu0
    %v6461 = vadd.f32 %v6368, %v6460
    %v6462 = vpop.f32.mrf.mxu0
    %6463 = vdwg.mxu0
    %v6464 = vadd.f32 %v5191, %v6443
    %v6465 = vadd.f32 %v5192, %v6449
    %v6466 = vadd.f32 %v5193, %v6455
    %v6467 = vadd.f32 %v5194, %v6461
    %v6468 = vld [vmem:[%s2] sm:$0x1]
    %v6470 = vlaneseq
    %v6471 = vshrl.u32 %v6470, 7
    %v6472 = vsub.s32 0, %v6471
    %v6473 = vrot.slane %v6468, %v6472
    %v6475 = vadd.f32 %v5830, %v6473
    %v6476 = vadd.f32 %v5831, %v6473
    %v6477 = vadd.f32 %v5832, %v6473
    %v6478 = vadd.f32 %v5833, %v6473
    %v6479 = vmax.f32 %v6475, 0.0
    %v6480 = vmax.f32 %v6476, 0.0
    %v6481 = vmax.f32 %v6477, 0.0
    %v6482 = vmax.f32 %v6478, 0.0
    %v6483 = vadd.f32 %v6464, %v6473
    %v6484 = vadd.f32 %v6465, %v6473
    %v6485 = vadd.f32 %v6466, %v6473
    %v6486 = vadd.f32 %v6467, %v6473
    %v6487 = vmax.f32 %v6483, 0.0
    %v6488 = vmax.f32 %v6484, 0.0
    %v6489 = vmax.f32 %v6485, 0.0
    %v6490 = vmax.f32 %v6486, 0.0
    %v6491 = vadd.f32 %v6479, %v6487
    %v6492 = vadd.f32 %v6480, %v6488
    %v6493 = vadd.f32 %v6481, %v6489
    %v6494 = vadd.f32 %v6482, %v6490
    %v6495 = vlaneseq
    %v6496 = vshrl.u32 %v6495, 7
    %v6497 = vadd.s32 %v6496, 8
    %v6498 = vld [vmem:[%s3] sm:$0x1]
    %v6499 = vlaneseq
    %v6500 = vshrl.u32 %v6499, 7
    %v6501 = vsub.s32 0, %v6500
    %v6502 = vrot.slane %v6498, %v6501
    %vm6503 = vcmp.lt.s32.totalorder %v6496, %v6502
    %vm6504 = vcmp.lt.s32.totalorder %v6497, %v6502
    %v6505 = vsel %vm6503, 1, 0
    %v6506 = vsel %vm6504, 1, 0
    %vm6507 = vcmp.eq.s32.totalorder %v6505, 1
    %vm6508 = vcmp.eq.s32.totalorder %v6506, 1
    %v6509 = vsel %vm6507, %v6491, 0.0
    %v6510 = vsel %vm6508, %v6492, 0.0
    %v6511 = vsel %vm6507, %v6493, 0.0
    %v6512 = vsel %vm6508, %v6494, 0.0
    %v6513 = vmax.f32 %v6509, %v6510
    %v6514 = vrot.slane %v6513, 4
    %v6515 = vmax.f32 %v6513, %v6514
    %v6516 = vrot.slane %v6515, 2
    %v6517 = vmax.f32 %v6515, %v6516
    %v6518 = vrot.slane %v6517, 1
    %v6519 = vmax.f32 %v6517, %v6518
    %v6520 = vmax.f32 %v6511, %v6512
    %v6521 = vrot.slane %v6520, 4
    %v6522 = vmax.f32 %v6520, %v6521
    %v6523 = vrot.slane %v6522, 2
    %v6524 = vmax.f32 %v6522, %v6523
    %v6525 = vrot.slane %v6524, 1
    %v6526 = vmax.f32 %v6524, %v6525
    %v6527 = vld [vmem:[%s4] sm:$0xff]
    %v6528 = vld [vmem:[%s4 + $0x8] sm:$0xff]
    %v6529 = vld [vmem:[%s4 + $0x10] sm:$0xff]
    %v6530 = vld [vmem:[%s4 + $0x18] sm:$0xff]
    %v6531 = vld [vmem:[%s4 + $0x20] sm:$0xff]
    %v6532 = vld [vmem:[%s4 + $0x28] sm:$0xff]
    %v6533 = vld [vmem:[%s4 + $0x30] sm:$0xff]
    %v6534 = vld [vmem:[%s4 + $0x38] sm:$0xff]
    %v6535 = vld [vmem:[%s4 + $0x40] sm:$0xff]
    %v6536 = vld [vmem:[%s4 + $0x48] sm:$0xff]
    %v6537 = vld [vmem:[%s4 + $0x50] sm:$0xff]
    %v6538 = vld [vmem:[%s4 + $0x58] sm:$0xff]
    %v6539 = vld [vmem:[%s4 + $0x60] sm:$0xff]
    %v6540 = vld [vmem:[%s4 + $0x68] sm:$0xff]
    %v6541 = vld [vmem:[%s4 + $0x70] sm:$0xff]
    %v6542 = vld [vmem:[%s4 + $0x78] sm:$0xff]
    %v6543 = vld [vmem:[%s5] sm:$0x1]
    %v6545 = vlaneseq
    %v6546 = vshrl.u32 %v6545, 7
    %v6547 = vsub.s32 0, %v6546
    %v6548 = vrot.slane %v6543, %v6547
    %vm6552 = vcmask 1041409
    %v6553 = vsel %vm6552, %v6526, %v6519
    %6555 = vmatprep.subr.mxu0 0.0
    %v6556 = vand.u32 %v6542, 4294901760
    %6557 = vmatpush1.msra.mxu0 %v6556
    %6558 = vmatprep.subr.mxu0 0.0
    %v6559 = vand.u32 %v6541, 4294901760
    %6560 = vmatpush1.msra.mxu0 %v6559
    %6561 = vmatprep.subr.mxu0 0.0
    %v6562 = vand.u32 %v6540, 4294901760
    %6563 = vmatpush1.msra.mxu0 %v6562
    %6564 = vmatprep.subr.mxu0 0.0
    %v6565 = vand.u32 %v6539, 4294901760
    %6566 = vmatpush1.msra.mxu0 %v6565
    %6567 = vmatprep.subr.mxu0 0.0
    %v6568 = vand.u32 %v6538, 4294901760
    %6569 = vmatpush1.msra.mxu0 %v6568
    %6570 = vmatprep.subr.mxu0 0.0
    %v6571 = vand.u32 %v6537, 4294901760
    %6572 = vmatpush1.msra.mxu0 %v6571
    %6573 = vmatprep.subr.mxu0 0.0
    %v6574 = vand.u32 %v6536, 4294901760
    %6575 = vmatpush1.msra.mxu0 %v6574
    %6576 = vmatprep.subr.mxu0 0.0
    %v6577 = vand.u32 %v6535, 4294901760
    %6578 = vmatpush1.msra.mxu0 %v6577
    %6579 = vmatprep.subr.mxu0 0.0
    %v6580 = vand.u32 %v6534, 4294901760
    %6581 = vmatpush1.msra.mxu0 %v6580
    %6582 = vmatprep.subr.mxu0 0.0
    %v6583 = vand.u32 %v6533, 4294901760
    %6584 = vmatpush1.msra.mxu0 %v6583
    %6585 = vmatprep.subr.mxu0 0.0
    %v6586 = vand.u32 %v6532, 4294901760
    %6587 = vmatpush1.msra.mxu0 %v6586
    %6588 = vmatprep.subr.mxu0 0.0
    %v6589 = vand.u32 %v6531, 4294901760
    %6590 = vmatpush1.msra.mxu0 %v6589
    %6591 = vmatprep.subr.mxu0 0.0
    %v6592 = vand.u32 %v6530, 4294901760
    %6593 = vmatpush1.msra.mxu0 %v6592
    %6594 = vmatprep.subr.mxu0 0.0
    %v6595 = vand.u32 %v6529, 4294901760
    %6596 = vmatpush1.msra.mxu0 %v6595
    %6597 = vmatprep.subr.mxu0 0.0
    %v6598 = vand.u32 %v6528, 4294901760
    %6599 = vmatpush1.msra.mxu0 %v6598
    %6600 = vmatprep.subr.mxu0 0.0
    %v6601 = vand.u32 %v6527, 4294901760
    %6602 = vmatpush1.msra.mxu0 %v6601
    %6603 = vmatprep.subr.mxu0 0.0
    %6604 = vmatpush2.msra.mxu0 0.0
    %6605 = vmatprep.subr.mxu0 0.0
    %6606 = vmatpush2.msra.mxu0 0.0
    %6607 = vmatprep.subr.mxu0 0.0
    %6608 = vmatpush2.msra.mxu0 0.0
    %6609 = vmatprep.subr.mxu0 0.0
    %6610 = vmatpush2.msra.mxu0 0.0
    %6611 = vmatprep.subr.mxu0 0.0
    %6612 = vmatpush2.msra.mxu0 0.0
    %6613 = vmatprep.subr.mxu0 0.0
    %6614 = vmatpush2.msra.mxu0 0.0
    %6615 = vmatprep.subr.mxu0 0.0
    %6616 = vmatpush2.msra.mxu0 0.0
    %6617 = vmatprep.subr.mxu0 0.0
    %6618 = vmatpush2.msra.mxu0 0.0
    %6619 = vmatprep.subr.mxu0 0.0
    %6620 = vmatpush2.msra.mxu0 0.0
    %6621 = vmatprep.subr.mxu0 0.0
    %6622 = vmatpush2.msra.mxu0 0.0
    %6623 = vmatprep.subr.mxu0 0.0
    %6624 = vmatpush2.msra.mxu0 0.0
    %6625 = vmatprep.subr.mxu0 0.0
    %6626 = vmatpush2.msra.mxu0 0.0
    %6627 = vmatprep.subr.mxu0 0.0
    %6628 = vmatpush2.msra.mxu0 0.0
    %6629 = vmatprep.subr.mxu0 0.0
    %6630 = vmatpush2.msra.mxu0 0.0
    %6631 = vmatprep.subr.mxu0 0.0
    %6632 = vmatpush2.msra.mxu0 0.0
    %6633 = vmatprep.subr.mxu0 0.0
    %6634 = vmatpush2.msra.mxu0 0.0
    %6635 = vmatprep.mubr.f32.mxu0 0.0
    %v6636 = vand.u32 %v6553, 4294901760
    %v6637 = vsub.f32 %v6553, %v6636
    %v6638 = vand.u32 %v6637, 4294901760
    %v6639 = vsub.f32 %v6637, %v6638
    %v6640 = vand.u32 %v6639, 4294901760
    %6641 = vmatmul.mubr.f32.gmra.mxu0 %v6640
    %v6642 = vpop.f32.mrf.mxu0
    %v6643 = vadd.f32 %v6548, %v6642
    %v6644 = vpop.f32.mrf.mxu0
    %6645 = vdwg.mxu0
    %6646 = vmatprep.subr.mxu0 0.0
    %v6647 = vand.u32 %v6542, 4294901760
    %v6648 = vsub.f32 %v6542, %v6647
    %v6649 = vand.u32 %v6648, 4294901760
    %v6650 = vsub.f32 %v6648, %v6649
    %v6651 = vand.u32 %v6650, 4294901760
    %6652 = vmatpush1.msra.mxu0 %v6651
    %6653 = vmatprep.subr.mxu0 0.0
    %v6654 = vand.u32 %v6541, 4294901760
    %v6655 = vsub.f32 %v6541, %v6654
    %v6656 = vand.u32 %v6655, 4294901760
    %v6657 = vsub.f32 %v6655, %v6656
    %v6658 = vand.u32 %v6657, 4294901760
    %6659 = vmatpush1.msra.mxu0 %v6658
    %6660 = vmatprep.subr.mxu0 0.0
    %v6661 = vand.u32 %v6540, 4294901760
    %v6662 = vsub.f32 %v6540, %v6661
    %v6663 = vand.u32 %v6662, 4294901760
    %v6664 = vsub.f32 %v6662, %v6663
    %v6665 = vand.u32 %v6664, 4294901760
    %6666 = vmatpush1.msra.mxu0 %v6665
    %6667 = vmatprep.subr.mxu0 0.0
    %v6668 = vand.u32 %v6539, 4294901760
    %v6669 = vsub.f32 %v6539, %v6668
    %v6670 = vand.u32 %v6669, 4294901760
    %v6671 = vsub.f32 %v6669, %v6670
    %v6672 = vand.u32 %v6671, 4294901760
    %6673 = vmatpush1.msra.mxu0 %v6672
    %6674 = vmatprep.subr.mxu0 0.0
    %v6675 = vand.u32 %v6538, 4294901760
    %v6676 = vsub.f32 %v6538, %v6675
    %v6677 = vand.u32 %v6676, 4294901760
    %v6678 = vsub.f32 %v6676, %v6677
    %v6679 = vand.u32 %v6678, 4294901760
    %6680 = vmatpush1.msra.mxu0 %v6679
    %6681 = vmatprep.subr.mxu0 0.0
    %v6682 = vand.u32 %v6537, 4294901760
    %v6683 = vsub.f32 %v6537, %v6682
    %v6684 = vand.u32 %v6683, 4294901760
    %v6685 = vsub.f32 %v6683, %v6684
    %v6686 = vand.u32 %v6685, 4294901760
    %6687 = vmatpush1.msra.mxu0 %v6686
    %6688 = vmatprep.subr.mxu0 0.0
    %v6689 = vand.u32 %v6536, 4294901760
    %v6690 = vsub.f32 %v6536, %v6689
    %v6691 = vand.u32 %v6690, 4294901760
    %v6692 = vsub.f32 %v6690, %v6691
    %v6693 = vand.u32 %v6692, 4294901760
    %6694 = vmatpush1.msra.mxu0 %v6693
    %6695 = vmatprep.subr.mxu0 0.0
    %v6696 = vand.u32 %v6535, 4294901760
    %v6697 = vsub.f32 %v6535, %v6696
    %v6698 = vand.u32 %v6697, 4294901760
    %v6699 = vsub.f32 %v6697, %v6698
    %v6700 = vand.u32 %v6699, 4294901760
    %6701 = vmatpush1.msra.mxu0 %v6700
    %6702 = vmatprep.subr.mxu0 0.0
    %v6703 = vand.u32 %v6534, 4294901760
    %v6704 = vsub.f32 %v6534, %v6703
    %v6705 = vand.u32 %v6704, 4294901760
    %v6706 = vsub.f32 %v6704, %v6705
    %v6707 = vand.u32 %v6706, 4294901760
    %6708 = vmatpush1.msra.mxu0 %v6707
    %6709 = vmatprep.subr.mxu0 0.0
    %v6710 = vand.u32 %v6533, 4294901760
    %v6711 = vsub.f32 %v6533, %v6710
    %v6712 = vand.u32 %v6711, 4294901760
    %v6713 = vsub.f32 %v6711, %v6712
    %v6714 = vand.u32 %v6713, 4294901760
    %6715 = vmatpush1.msra.mxu0 %v6714
    %6716 = vmatprep.subr.mxu0 0.0
    %v6717 = vand.u32 %v6532, 4294901760
    %v6718 = vsub.f32 %v6532, %v6717
    %v6719 = vand.u32 %v6718, 4294901760
    %v6720 = vsub.f32 %v6718, %v6719
    %v6721 = vand.u32 %v6720, 4294901760
    %6722 = vmatpush1.msra.mxu0 %v6721
    %6723 = vmatprep.subr.mxu0 0.0
    %v6724 = vand.u32 %v6531, 4294901760
    %v6725 = vsub.f32 %v6531, %v6724
    %v6726 = vand.u32 %v6725, 4294901760
    %v6727 = vsub.f32 %v6725, %v6726
    %v6728 = vand.u32 %v6727, 4294901760
    %6729 = vmatpush1.msra.mxu0 %v6728
    %6730 = vmatprep.subr.mxu0 0.0
    %v6731 = vand.u32 %v6530, 4294901760
    %v6732 = vsub.f32 %v6530, %v6731
    %v6733 = vand.u32 %v6732, 4294901760
    %v6734 = vsub.f32 %v6732, %v6733
    %v6735 = vand.u32 %v6734, 4294901760
    %6736 = vmatpush1.msra.mxu0 %v6735
    %6737 = vmatprep.subr.mxu0 0.0
    %v6738 = vand.u32 %v6529, 4294901760
    %v6739 = vsub.f32 %v6529, %v6738
    %v6740 = vand.u32 %v6739, 4294901760
    %v6741 = vsub.f32 %v6739, %v6740
    %v6742 = vand.u32 %v6741, 4294901760
    %6743 = vmatpush1.msra.mxu0 %v6742
    %6744 = vmatprep.subr.mxu0 0.0
    %v6745 = vand.u32 %v6528, 4294901760
    %v6746 = vsub.f32 %v6528, %v6745
    %v6747 = vand.u32 %v6746, 4294901760
    %v6748 = vsub.f32 %v6746, %v6747
    %v6749 = vand.u32 %v6748, 4294901760
    %6750 = vmatpush1.msra.mxu0 %v6749
    %6751 = vmatprep.subr.mxu0 0.0
    %v6752 = vand.u32 %v6527, 4294901760
    %v6753 = vsub.f32 %v6527, %v6752
    %v6754 = vand.u32 %v6753, 4294901760
    %v6755 = vsub.f32 %v6753, %v6754
    %v6756 = vand.u32 %v6755, 4294901760
    %6757 = vmatpush1.msra.mxu0 %v6756
    %6758 = vmatprep.subr.mxu0 0.0
    %6759 = vmatpush2.msra.mxu0 0.0
    %6760 = vmatprep.subr.mxu0 0.0
    %6761 = vmatpush2.msra.mxu0 0.0
    %6762 = vmatprep.subr.mxu0 0.0
    %6763 = vmatpush2.msra.mxu0 0.0
    %6764 = vmatprep.subr.mxu0 0.0
    %6765 = vmatpush2.msra.mxu0 0.0
    %6766 = vmatprep.subr.mxu0 0.0
    %6767 = vmatpush2.msra.mxu0 0.0
    %6768 = vmatprep.subr.mxu0 0.0
    %6769 = vmatpush2.msra.mxu0 0.0
    %6770 = vmatprep.subr.mxu0 0.0
    %6771 = vmatpush2.msra.mxu0 0.0
    %6772 = vmatprep.subr.mxu0 0.0
    %6773 = vmatpush2.msra.mxu0 0.0
    %6774 = vmatprep.subr.mxu0 0.0
    %6775 = vmatpush2.msra.mxu0 0.0
    %6776 = vmatprep.subr.mxu0 0.0
    %6777 = vmatpush2.msra.mxu0 0.0
    %6778 = vmatprep.subr.mxu0 0.0
    %6779 = vmatpush2.msra.mxu0 0.0
    %6780 = vmatprep.subr.mxu0 0.0
    %6781 = vmatpush2.msra.mxu0 0.0
    %6782 = vmatprep.subr.mxu0 0.0
    %6783 = vmatpush2.msra.mxu0 0.0
    %6784 = vmatprep.subr.mxu0 0.0
    %6785 = vmatpush2.msra.mxu0 0.0
    %6786 = vmatprep.subr.mxu0 0.0
    %6787 = vmatpush2.msra.mxu0 0.0
    %6788 = vmatprep.subr.mxu0 0.0
    %6789 = vmatpush2.msra.mxu0 0.0
    %6790 = vmatprep.mubr.f32.mxu0 0.0
    %v6791 = vand.u32 %v6553, 4294901760
    %6792 = vmatmul.mubr.f32.gmra.mxu0 %v6791
    %v6793 = vpop.f32.mrf.mxu0
    %v6794 = vadd.f32 %v6643, %v6793
    %v6795 = vpop.f32.mrf.mxu0
    %6796 = vdwg.mxu0
    %6797 = vmatprep.subr.mxu0 0.0
    %v6798 = vand.u32 %v6542, 4294901760
    %v6799 = vsub.f32 %v6542, %v6798
    %6800 = vmatpush1.msra.mxu0 %v6799
    %6801 = vmatprep.subr.mxu0 0.0
    %v6802 = vand.u32 %v6541, 4294901760
    %v6803 = vsub.f32 %v6541, %v6802
    %6804 = vmatpush1.msra.mxu0 %v6803
    %6805 = vmatprep.subr.mxu0 0.0
    %v6806 = vand.u32 %v6540, 4294901760
    %v6807 = vsub.f32 %v6540, %v6806
    %6808 = vmatpush1.msra.mxu0 %v6807
    %6809 = vmatprep.subr.mxu0 0.0
    %v6810 = vand.u32 %v6539, 4294901760
    %v6811 = vsub.f32 %v6539, %v6810
    %6812 = vmatpush1.msra.mxu0 %v6811
    %6813 = vmatprep.subr.mxu0 0.0
    %v6814 = vand.u32 %v6538, 4294901760
    %v6815 = vsub.f32 %v6538, %v6814
    %6816 = vmatpush1.msra.mxu0 %v6815
    %6817 = vmatprep.subr.mxu0 0.0
    %v6818 = vand.u32 %v6537, 4294901760
    %v6819 = vsub.f32 %v6537, %v6818
    %6820 = vmatpush1.msra.mxu0 %v6819
    %6821 = vmatprep.subr.mxu0 0.0
    %v6822 = vand.u32 %v6536, 4294901760
    %v6823 = vsub.f32 %v6536, %v6822
    %6824 = vmatpush1.msra.mxu0 %v6823
    %6825 = vmatprep.subr.mxu0 0.0
    %v6826 = vand.u32 %v6535, 4294901760
    %v6827 = vsub.f32 %v6535, %v6826
    %6828 = vmatpush1.msra.mxu0 %v6827
    %6829 = vmatprep.subr.mxu0 0.0
    %v6830 = vand.u32 %v6534, 4294901760
    %v6831 = vsub.f32 %v6534, %v6830
    %6832 = vmatpush1.msra.mxu0 %v6831
    %6833 = vmatprep.subr.mxu0 0.0
    %v6834 = vand.u32 %v6533, 4294901760
    %v6835 = vsub.f32 %v6533, %v6834
    %6836 = vmatpush1.msra.mxu0 %v6835
    %6837 = vmatprep.subr.mxu0 0.0
    %v6838 = vand.u32 %v6532, 4294901760
    %v6839 = vsub.f32 %v6532, %v6838
    %6840 = vmatpush1.msra.mxu0 %v6839
    %6841 = vmatprep.subr.mxu0 0.0
    %v6842 = vand.u32 %v6531, 4294901760
    %v6843 = vsub.f32 %v6531, %v6842
    %6844 = vmatpush1.msra.mxu0 %v6843
    %6845 = vmatprep.subr.mxu0 0.0
    %v6846 = vand.u32 %v6530, 4294901760
    %v6847 = vsub.f32 %v6530, %v6846
    %6848 = vmatpush1.msra.mxu0 %v6847
    %6849 = vmatprep.subr.mxu0 0.0
    %v6850 = vand.u32 %v6529, 4294901760
    %v6851 = vsub.f32 %v6529, %v6850
    %6852 = vmatpush1.msra.mxu0 %v6851
    %6853 = vmatprep.subr.mxu0 0.0
    %v6854 = vand.u32 %v6528, 4294901760
    %v6855 = vsub.f32 %v6528, %v6854
    %6856 = vmatpush1.msra.mxu0 %v6855
    %6857 = vmatprep.subr.mxu0 0.0
    %v6858 = vand.u32 %v6527, 4294901760
    %v6859 = vsub.f32 %v6527, %v6858
    %6860 = vmatpush1.msra.mxu0 %v6859
    %6861 = vmatprep.subr.mxu0 0.0
    %6862 = vmatpush2.msra.mxu0 0.0
    %6863 = vmatprep.subr.mxu0 0.0
    %6864 = vmatpush2.msra.mxu0 0.0
    %6865 = vmatprep.subr.mxu0 0.0
    %6866 = vmatpush2.msra.mxu0 0.0
    %6867 = vmatprep.subr.mxu0 0.0
    %6868 = vmatpush2.msra.mxu0 0.0
    %6869 = vmatprep.subr.mxu0 0.0
    %6870 = vmatpush2.msra.mxu0 0.0
    %6871 = vmatprep.subr.mxu0 0.0
    %6872 = vmatpush2.msra.mxu0 0.0
    %6873 = vmatprep.subr.mxu0 0.0
    %6874 = vmatpush2.msra.mxu0 0.0
    %6875 = vmatprep.subr.mxu0 0.0
    %6876 = vmatpush2.msra.mxu0 0.0
    %6877 = vmatprep.subr.mxu0 0.0
    %6878 = vmatpush2.msra.mxu0 0.0
    %6879 = vmatprep.subr.mxu0 0.0
    %6880 = vmatpush2.msra.mxu0 0.0
    %6881 = vmatprep.subr.mxu0 0.0
    %6882 = vmatpush2.msra.mxu0 0.0
    %6883 = vmatprep.subr.mxu0 0.0
    %6884 = vmatpush2.msra.mxu0 0.0
    %6885 = vmatprep.subr.mxu0 0.0
    %6886 = vmatpush2.msra.mxu0 0.0
    %6887 = vmatprep.subr.mxu0 0.0
    %6888 = vmatpush2.msra.mxu0 0.0
    %6889 = vmatprep.subr.mxu0 0.0
    %6890 = vmatpush2.msra.mxu0 0.0
    %6891 = vmatprep.subr.mxu0 0.0
    %6892 = vmatpush2.msra.mxu0 0.0
    %6893 = vmatprep.mubr.f32.mxu0 0.0
    %v6894 = vand.u32 %v6553, 4294901760
    %v6895 = vsub.f32 %v6553, %v6894
    %6896 = vmatmul.mubr.f32.gmra.mxu0 %v6895
    %v6897 = vpop.f32.mrf.mxu0
    %v6898 = vadd.f32 %v6794, %v6897
    %v6899 = vpop.f32.mrf.mxu0
    %6900 = vdwg.mxu0
    %6901 = vmatprep.subr.mxu0 0.0
    %v6902 = vand.u32 %v6542, 4294901760
    %6903 = vmatpush1.msra.mxu0 %v6902
    %6904 = vmatprep.subr.mxu0 0.0
    %v6905 = vand.u32 %v6541, 4294901760
    %6906 = vmatpush1.msra.mxu0 %v6905
    %6907 = vmatprep.subr.mxu0 0.0
    %v6908 = vand.u32 %v6540, 4294901760
    %6909 = vmatpush1.msra.mxu0 %v6908
    %6910 = vmatprep.subr.mxu0 0.0
    %v6911 = vand.u32 %v6539, 4294901760
    %6912 = vmatpush1.msra.mxu0 %v6911
    %6913 = vmatprep.subr.mxu0 0.0
    %v6914 = vand.u32 %v6538, 4294901760
    %6915 = vmatpush1.msra.mxu0 %v6914
    %6916 = vmatprep.subr.mxu0 0.0
    %v6917 = vand.u32 %v6537, 4294901760
    %6918 = vmatpush1.msra.mxu0 %v6917
    %6919 = vmatprep.subr.mxu0 0.0
    %v6920 = vand.u32 %v6536, 4294901760
    %6921 = vmatpush1.msra.mxu0 %v6920
    %6922 = vmatprep.subr.mxu0 0.0
    %v6923 = vand.u32 %v6535, 4294901760
    %6924 = vmatpush1.msra.mxu0 %v6923
    %6925 = vmatprep.subr.mxu0 0.0
    %v6926 = vand.u32 %v6534, 4294901760
    %6927 = vmatpush1.msra.mxu0 %v6926
    %6928 = vmatprep.subr.mxu0 0.0
    %v6929 = vand.u32 %v6533, 4294901760
    %6930 = vmatpush1.msra.mxu0 %v6929
    %6931 = vmatprep.subr.mxu0 0.0
    %v6932 = vand.u32 %v6532, 4294901760
    %6933 = vmatpush1.msra.mxu0 %v6932
    %6934 = vmatprep.subr.mxu0 0.0
    %v6935 = vand.u32 %v6531, 4294901760
    %6936 = vmatpush1.msra.mxu0 %v6935
    %6937 = vmatprep.subr.mxu0 0.0
    %v6938 = vand.u32 %v6530, 4294901760
    %6939 = vmatpush1.msra.mxu0 %v6938
    %6940 = vmatprep.subr.mxu0 0.0
    %v6941 = vand.u32 %v6529, 4294901760
    %6942 = vmatpush1.msra.mxu0 %v6941
    %6943 = vmatprep.subr.mxu0 0.0
    %v6944 = vand.u32 %v6528, 4294901760
    %6945 = vmatpush1.msra.mxu0 %v6944
    %6946 = vmatprep.subr.mxu0 0.0
    %v6947 = vand.u32 %v6527, 4294901760
    %6948 = vmatpush1.msra.mxu0 %v6947
    %6949 = vmatprep.subr.mxu0 0.0
    %6950 = vmatpush2.msra.mxu0 0.0
    %6951 = vmatprep.subr.mxu0 0.0
    %6952 = vmatpush2.msra.mxu0 0.0
    %6953 = vmatprep.subr.mxu0 0.0
    %6954 = vmatpush2.msra.mxu0 0.0
    %6955 = vmatprep.subr.mxu0 0.0
    %6956 = vmatpush2.msra.mxu0 0.0
    %6957 = vmatprep.subr.mxu0 0.0
    %6958 = vmatpush2.msra.mxu0 0.0
    %6959 = vmatprep.subr.mxu0 0.0
    %6960 = vmatpush2.msra.mxu0 0.0
    %6961 = vmatprep.subr.mxu0 0.0
    %6962 = vmatpush2.msra.mxu0 0.0
    %6963 = vmatprep.subr.mxu0 0.0
    %6964 = vmatpush2.msra.mxu0 0.0
    %6965 = vmatprep.subr.mxu0 0.0
    %6966 = vmatpush2.msra.mxu0 0.0
    %6967 = vmatprep.subr.mxu0 0.0
    %6968 = vmatpush2.msra.mxu0 0.0
    %6969 = vmatprep.subr.mxu0 0.0
    %6970 = vmatpush2.msra.mxu0 0.0
    %6971 = vmatprep.subr.mxu0 0.0
    %6972 = vmatpush2.msra.mxu0 0.0
    %6973 = vmatprep.subr.mxu0 0.0
    %6974 = vmatpush2.msra.mxu0 0.0
    %6975 = vmatprep.subr.mxu0 0.0
    %6976 = vmatpush2.msra.mxu0 0.0
    %6977 = vmatprep.subr.mxu0 0.0
    %6978 = vmatpush2.msra.mxu0 0.0
    %6979 = vmatprep.subr.mxu0 0.0
    %6980 = vmatpush2.msra.mxu0 0.0
    %6981 = vmatprep.mubr.f32.mxu0 0.0
    %v6982 = vand.u32 %v6553, 4294901760
    %v6983 = vsub.f32 %v6553, %v6982
    %v6984 = vand.u32 %v6983, 4294901760
    %6985 = vmatmul.mubr.f32.gmra.mxu0 %v6984
    %v6986 = vpop.f32.mrf.mxu0
    %v6987 = vadd.f32 %v6898, %v6986
    %v6988 = vpop.f32.mrf.mxu0
    %6989 = vdwg.mxu0
    %6990 = vmatprep.subr.mxu0 0.0
    %v6991 = vand.u32 %v6542, 4294901760
    %v6992 = vsub.f32 %v6542, %v6991
    %v6993 = vand.u32 %v6992, 4294901760
    %6994 = vmatpush1.msra.mxu0 %v6993
    %6995 = vmatprep.subr.mxu0 0.0
    %v6996 = vand.u32 %v6541, 4294901760
    %v6997 = vsub.f32 %v6541, %v6996
    %v6998 = vand.u32 %v6997, 4294901760
    %6999 = vmatpush1.msra.mxu0 %v6998
    %7000 = vmatprep.subr.mxu0 0.0
    %v7001 = vand.u32 %v6540, 4294901760
    %v7002 = vsub.f32 %v6540, %v7001
    %v7003 = vand.u32 %v7002, 4294901760
    %7004 = vmatpush1.msra.mxu0 %v7003
    %7005 = vmatprep.subr.mxu0 0.0
    %v7006 = vand.u32 %v6539, 4294901760
    %v7007 = vsub.f32 %v6539, %v7006
    %v7008 = vand.u32 %v7007, 4294901760
    %7009 = vmatpush1.msra.mxu0 %v7008
    %7010 = vmatprep.subr.mxu0 0.0
    %v7011 = vand.u32 %v6538, 4294901760
    %v7012 = vsub.f32 %v6538, %v7011
    %v7013 = vand.u32 %v7012, 4294901760
    %7014 = vmatpush1.msra.mxu0 %v7013
    %7015 = vmatprep.subr.mxu0 0.0
    %v7016 = vand.u32 %v6537, 4294901760
    %v7017 = vsub.f32 %v6537, %v7016
    %v7018 = vand.u32 %v7017, 4294901760
    %7019 = vmatpush1.msra.mxu0 %v7018
    %7020 = vmatprep.subr.mxu0 0.0
    %v7021 = vand.u32 %v6536, 4294901760
    %v7022 = vsub.f32 %v6536, %v7021
    %v7023 = vand.u32 %v7022, 4294901760
    %7024 = vmatpush1.msra.mxu0 %v7023
    %7025 = vmatprep.subr.mxu0 0.0
    %v7026 = vand.u32 %v6535, 4294901760
    %v7027 = vsub.f32 %v6535, %v7026
    %v7028 = vand.u32 %v7027, 4294901760
    %7029 = vmatpush1.msra.mxu0 %v7028
    %7030 = vmatprep.subr.mxu0 0.0
    %v7031 = vand.u32 %v6534, 4294901760
    %v7032 = vsub.f32 %v6534, %v7031
    %v7033 = vand.u32 %v7032, 4294901760
    %7034 = vmatpush1.msra.mxu0 %v7033
    %7035 = vmatprep.subr.mxu0 0.0
    %v7036 = vand.u32 %v6533, 4294901760
    %v7037 = vsub.f32 %v6533, %v7036
    %v7038 = vand.u32 %v7037, 4294901760
    %7039 = vmatpush1.msra.mxu0 %v7038
    %7040 = vmatprep.subr.mxu0 0.0
    %v7041 = vand.u32 %v6532, 4294901760
    %v7042 = vsub.f32 %v6532, %v7041
    %v7043 = vand.u32 %v7042, 4294901760
    %7044 = vmatpush1.msra.mxu0 %v7043
    %7045 = vmatprep.subr.mxu0 0.0
    %v7046 = vand.u32 %v6531, 4294901760
    %v7047 = vsub.f32 %v6531, %v7046
    %v7048 = vand.u32 %v7047, 4294901760
    %7049 = vmatpush1.msra.mxu0 %v7048
    %7050 = vmatprep.subr.mxu0 0.0
    %v7051 = vand.u32 %v6530, 4294901760
    %v7052 = vsub.f32 %v6530, %v7051
    %v7053 = vand.u32 %v7052, 4294901760
    %7054 = vmatpush1.msra.mxu0 %v7053
    %7055 = vmatprep.subr.mxu0 0.0
    %v7056 = vand.u32 %v6529, 4294901760
    %v7057 = vsub.f32 %v6529, %v7056
    %v7058 = vand.u32 %v7057, 4294901760
    %7059 = vmatpush1.msra.mxu0 %v7058
    %7060 = vmatprep.subr.mxu0 0.0
    %v7061 = vand.u32 %v6528, 4294901760
    %v7062 = vsub.f32 %v6528, %v7061
    %v7063 = vand.u32 %v7062, 4294901760
    %7064 = vmatpush1.msra.mxu0 %v7063
    %7065 = vmatprep.subr.mxu0 0.0
    %v7066 = vand.u32 %v6527, 4294901760
    %v7067 = vsub.f32 %v6527, %v7066
    %v7068 = vand.u32 %v7067, 4294901760
    %7069 = vmatpush1.msra.mxu0 %v7068
    %7070 = vmatprep.subr.mxu0 0.0
    %7071 = vmatpush2.msra.mxu0 0.0
    %7072 = vmatprep.subr.mxu0 0.0
    %7073 = vmatpush2.msra.mxu0 0.0
    %7074 = vmatprep.subr.mxu0 0.0
    %7075 = vmatpush2.msra.mxu0 0.0
    %7076 = vmatprep.subr.mxu0 0.0
    %7077 = vmatpush2.msra.mxu0 0.0
    %7078 = vmatprep.subr.mxu0 0.0
    %7079 = vmatpush2.msra.mxu0 0.0
    %7080 = vmatprep.subr.mxu0 0.0
    %7081 = vmatpush2.msra.mxu0 0.0
    %7082 = vmatprep.subr.mxu0 0.0
    %7083 = vmatpush2.msra.mxu0 0.0
    %7084 = vmatprep.subr.mxu0 0.0
    %7085 = vmatpush2.msra.mxu0 0.0
    %7086 = vmatprep.subr.mxu0 0.0
    %7087 = vmatpush2.msra.mxu0 0.0
    %7088 = vmatprep.subr.mxu0 0.0
    %7089 = vmatpush2.msra.mxu0 0.0
    %7090 = vmatprep.subr.mxu0 0.0
    %7091 = vmatpush2.msra.mxu0 0.0
    %7092 = vmatprep.subr.mxu0 0.0
    %7093 = vmatpush2.msra.mxu0 0.0
    %7094 = vmatprep.subr.mxu0 0.0
    %7095 = vmatpush2.msra.mxu0 0.0
    %7096 = vmatprep.subr.mxu0 0.0
    %7097 = vmatpush2.msra.mxu0 0.0
    %7098 = vmatprep.subr.mxu0 0.0
    %7099 = vmatpush2.msra.mxu0 0.0
    %7100 = vmatprep.subr.mxu0 0.0
    %7101 = vmatpush2.msra.mxu0 0.0
    %7102 = vmatprep.mubr.f32.mxu0 0.0
    %v7103 = vand.u32 %v6553, 4294901760
    %7104 = vmatmul.mubr.f32.gmra.mxu0 %v7103
    %v7105 = vpop.f32.mrf.mxu0
    %v7106 = vadd.f32 %v6987, %v7105
    %v7107 = vpop.f32.mrf.mxu0
    %7108 = vdwg.mxu0
    %7109 = vmatprep.subr.mxu0 0.0
    %v7110 = vand.u32 %v6542, 4294901760
    %7111 = vmatpush1.msra.mxu0 %v7110
    %7112 = vmatprep.subr.mxu0 0.0
    %v7113 = vand.u32 %v6541, 4294901760
    %7114 = vmatpush1.msra.mxu0 %v7113
    %7115 = vmatprep.subr.mxu0 0.0
    %v7116 = vand.u32 %v6540, 4294901760
    %7117 = vmatpush1.msra.mxu0 %v7116
    %7118 = vmatprep.subr.mxu0 0.0
    %v7119 = vand.u32 %v6539, 4294901760
    %7120 = vmatpush1.msra.mxu0 %v7119
    %7121 = vmatprep.subr.mxu0 0.0
    %v7122 = vand.u32 %v6538, 4294901760
    %7123 = vmatpush1.msra.mxu0 %v7122
    %7124 = vmatprep.subr.mxu0 0.0
    %v7125 = vand.u32 %v6537, 4294901760
    %7126 = vmatpush1.msra.mxu0 %v7125
    %7127 = vmatprep.subr.mxu0 0.0
    %v7128 = vand.u32 %v6536, 4294901760
    %7129 = vmatpush1.msra.mxu0 %v7128
    %7130 = vmatprep.subr.mxu0 0.0
    %v7131 = vand.u32 %v6535, 4294901760
    %7132 = vmatpush1.msra.mxu0 %v7131
    %7133 = vmatprep.subr.mxu0 0.0
    %v7134 = vand.u32 %v6534, 4294901760
    %7135 = vmatpush1.msra.mxu0 %v7134
    %7136 = vmatprep.subr.mxu0 0.0
    %v7137 = vand.u32 %v6533, 4294901760
    %7138 = vmatpush1.msra.mxu0 %v7137
    %7139 = vmatprep.subr.mxu0 0.0
    %v7140 = vand.u32 %v6532, 4294901760
    %7141 = vmatpush1.msra.mxu0 %v7140
    %7142 = vmatprep.subr.mxu0 0.0
    %v7143 = vand.u32 %v6531, 4294901760
    %7144 = vmatpush1.msra.mxu0 %v7143
    %7145 = vmatprep.subr.mxu0 0.0
    %v7146 = vand.u32 %v6530, 4294901760
    %7147 = vmatpush1.msra.mxu0 %v7146
    %7148 = vmatprep.subr.mxu0 0.0
    %v7149 = vand.u32 %v6529, 4294901760
    %7150 = vmatpush1.msra.mxu0 %v7149
    %7151 = vmatprep.subr.mxu0 0.0
    %v7152 = vand.u32 %v6528, 4294901760
    %7153 = vmatpush1.msra.mxu0 %v7152
    %7154 = vmatprep.subr.mxu0 0.0
    %v7155 = vand.u32 %v6527, 4294901760
    %7156 = vmatpush1.msra.mxu0 %v7155
    %7157 = vmatprep.subr.mxu0 0.0
    %7158 = vmatpush2.msra.mxu0 0.0
    %7159 = vmatprep.subr.mxu0 0.0
    %7160 = vmatpush2.msra.mxu0 0.0
    %7161 = vmatprep.subr.mxu0 0.0
    %7162 = vmatpush2.msra.mxu0 0.0
    %7163 = vmatprep.subr.mxu0 0.0
    %7164 = vmatpush2.msra.mxu0 0.0
    %7165 = vmatprep.subr.mxu0 0.0
    %7166 = vmatpush2.msra.mxu0 0.0
    %7167 = vmatprep.subr.mxu0 0.0
    %7168 = vmatpush2.msra.mxu0 0.0
    %7169 = vmatprep.subr.mxu0 0.0
    %7170 = vmatpush2.msra.mxu0 0.0
    %7171 = vmatprep.subr.mxu0 0.0
    %7172 = vmatpush2.msra.mxu0 0.0
    %7173 = vmatprep.subr.mxu0 0.0
    %7174 = vmatpush2.msra.mxu0 0.0
    %7175 = vmatprep.subr.mxu0 0.0
    %7176 = vmatpush2.msra.mxu0 0.0
    %7177 = vmatprep.subr.mxu0 0.0
    %7178 = vmatpush2.msra.mxu0 0.0
    %7179 = vmatprep.subr.mxu0 0.0
    %7180 = vmatpush2.msra.mxu0 0.0
    %7181 = vmatprep.subr.mxu0 0.0
    %7182 = vmatpush2.msra.mxu0 0.0
    %7183 = vmatprep.subr.mxu0 0.0
    %7184 = vmatpush2.msra.mxu0 0.0
    %7185 = vmatprep.subr.mxu0 0.0
    %7186 = vmatpush2.msra.mxu0 0.0
    %7187 = vmatprep.subr.mxu0 0.0
    %7188 = vmatpush2.msra.mxu0 0.0
    %7189 = vmatprep.mubr.f32.mxu0 0.0
    %v7190 = vand.u32 %v6553, 4294901760
    %7191 = vmatmul.mubr.f32.gmra.mxu0 %v7190
    %v7192 = vpop.f32.mrf.mxu0
    %v7193 = vadd.f32 %v7106, %v7192
    %v7194 = vpop.f32.mrf.mxu0
    %7195 = vdwg.mxu0
    %7196 = vst [vmem:[#allocation3] sm:$0x3] %v7193
    // Predicated region
    $region26: #{cnn_forward.1} parent=1 // pred_check
      _
    $region27: #{cnn_forward.1} parent=1 // pred_check_branch
      %7198 = sbr.rel (0) target = $region29
    $region28: #{cnn_forward.1} parent=1 // pred_region
      %s7200 = ssub.s32 32, 32
      %7201 = vsyncadd [#allocation4], %s7200
      %s7203 = sshll.u32 [#allocation3], 4
      %s7204 = int_to_ptr.vmem [resolvable:$true] %s7203
      %7206 = dma.vmem_to_hbm [thread:$0]  %s7204, 32, %s6, [#allocation4]
    $region29: #{cnn_forward.1} parent=1 // pred_fallthru
      _
    // Predicated region
    $region30: #{cnn_forward.1} parent=1 // pred_check
      _
    $region31: #{cnn_forward.1} parent=1 // pred_check_branch
      %7208 = sbr.rel (0) target = $region33
    $region32: #{cnn_forward.1} parent=1 // pred_region
      %7209 = dma.done [#allocation4], 32
    $region33: #{cnn_forward.1} parent=1 // pred_fallthru
      _
    %7210 = vsyncpa [#allocation4], 1

</llo_original>
